<compile_context>
chip_gen: v6e
topology: v6e:2x2x1
jax: 0.10.0
libtpu: 0.0.40
codegen_flags: <defaults>
</compile_context>

<pallas_src>
import jax
import jax.numpy as jnp
from jax.experimental import pallas as pl
from jax.experimental.pallas import tpu as pltpu

_EPS = 1e-5
_LANES = 128


def basic_block_kernel(xp_ref, mask_ref, w1_ref, g1_ref, b1_ref,
                       w2_ref, g2_ref, b2_ref, o_ref, mid_ref):
    """Fused BasicBlock forward.

    xp_ref  : (N, Hd+2, Wd+2, Cp) f32  zero-padded input (2-px halo + channel pad)
    mask_ref: (N*Hd*Wd, 1)        f32  1.0 on the real (interior) conv1 outputs
    w*_ref  : (3, 3*Cp, Cp)       bf16 conv weights, (dw, cin) packed on axis 1
    g*/b*   : (1, Cp)             f32  BN gamma / beta (channel-padded)
    o_ref   : (N, H, W, Cp)       f32  output
    mid_ref : (N, Hd, Wd, Cp)     f32  scratch: zero-haloed conv2 input (full-block
                                       aligned store; no border / offset stores)
    """
    N, Hp, Wp, Cp = xp_ref.shape
    Hd, Wd = Hp - 2, Wp - 2                 # conv1 compute domain (incl. 1-px halo)
    _, H, W, _ = o_ref.shape                # real output domain
    M1 = N * Hd * Wd
    M2 = N * H * W
    inv_m = 1.0 / float(M2)                 # BN stats over real positions only

    def conv3x3(src_ref, w_ref, ho, wo):
        # 3 MXU dots (K = 3*Cp), one per dh tap.  Each dw tap window is loaded,
        # reshaped (free: wo is a multiple of 8, f32), cast to bf16, then lane-
        # concatenated -> (rows, 3*Cp) bf16 patch. f32 accumulation on the MXU.
        rows = N * ho * wo
        acc = None
        for dh in range(3):
            taps = [src_ref[:, dh:dh + ho, dw:dw + wo, :]
                    .reshape(rows, Cp).astype(jnp.bfloat16)
                    for dw in range(3)]
            patch = jnp.concatenate(taps, axis=-1)            # (rows, 3*Cp) bf16
            part = jnp.dot(patch, w_ref[dh],
                           preferred_element_type=jnp.float32)
            acc = part if acc is None else acc + part
        return acc                                            # (rows, Cp) f32

    def batchnorm(y, g_ref, b_ref):
        # Train-mode BN, single pass (masked rows are exactly zero so they add
        # nothing to sum / sum-of-squares; divide by the real count M2).
        s = jnp.sum(y, axis=0, keepdims=True)
        ss = jnp.sum(y * y, axis=0, keepdims=True)
        mean = s * inv_m
        var = jnp.maximum(ss * inv_m - mean * mean, 0.0)      # clamp vs. cancellation
        scale = g_ref[...] * jax.lax.rsqrt(var + _EPS)
        shift = b_ref[...] - mean * scale
        return y * scale + shift

    # --- conv1 -> bn1 -> relu over the haloed domain, borders masked to zero -----
    mask = mask_ref[...]                                      # (M1, 1) f32 0/1
    y1 = conv3x3(xp_ref, w1_ref, Hd, Wd) * mask               # (M1, Cp)
    out1 = jnp.maximum(batchnorm(y1, g1_ref, b1_ref), 0.0) * mask
    mid_ref[...] = out1.reshape(N, Hd, Wd, Cp)                # aligned full-block store

    # --- conv2 -> bn2 -------------------------------------------------------------
    out2 = batchnorm(conv3x3(mid_ref, w2_ref, H, W), g2_ref, b2_ref)   # (M2, Cp)

    # --- residual add (identity = interior of the padded input) -> relu ----------
    identity = xp_ref[:, 2:H + 2, 2:W + 2, :].reshape(M2, Cp)
    out = jnp.maximum(out2 + identity, 0.0)
    o_ref[...] = out.reshape(N, H, W, Cp).astype(o_ref.dtype)


def _round_up(x, m):
    return (x + m - 1) // m * m


@jax.jit
def basic_block(x_nchw, w1_oihw, g1, b1, w2_oihw, g2, b2):
    """PyTorch-style NCHW / OIHW in, NCHW out. Compute runs in one Pallas kernel."""
    N, C, H, W = x_nchw.shape
    Cout = w1_oihw.shape[0]
    assert Cout == C, "identity residual requires in_channel == out_channel"
    assert W % 8 == 0, "W must be a multiple of 8 for the no-copy reshapes"
    Cp = _round_up(max(C, _LANES), _LANES)   # lane-dense channel width
    Hd = H + 2                               # conv1 compute domain (1-px halo)
    Wd = _round_up(W + 2, 8)                 # 8-aligned second-minor dim

    # Single pad covers the 2-px spatial halo + channel padding.
    x_nhwc = jnp.transpose(x_nchw, (0, 2, 3, 1))
    xp = jnp.pad(x_nhwc, ((0, 0), (2, 2), (2, Wd - W), (0, Cp - C))).astype(jnp.float32)

    # 0/1 interior mask over the (Hd, Wd) conv1 domain, flattened to (N*Hd*Wd, 1).
    hi = jnp.arange(Hd)
    wi = jnp.arange(Wd)
    interior = (((hi >= 1) & (hi <= H))[:, None] &
                ((wi >= 1) & (wi <= W))[None, :]).astype(jnp.float32)
    maskf = jnp.broadcast_to(interior[None], (N, Hd, Wd)).reshape(N * Hd * Wd, 1)

    def pack_w(w_oihw):
        # OIHW -> HWIO, zero-pad channels, pack (dw, cin) -> K axis, cast to bf16.
        w = jnp.transpose(w_oihw, (2, 3, 1, 0))                       # (3,3,Cin,Cout)
        w = jnp.pad(w, ((0, 0), (0, 0), (0, Cp - w.shape[2]), (0, Cp - w.shape[3])))
        return w.reshape(3, 3 * Cp, Cp).astype(jnp.bfloat16)          # (3, 3*Cp, Cp)

    w1p = pack_w(w1_oihw)
    w2p = pack_w(w2_oihw)
    cpad = (0, Cp - Cout)
    g1p = jnp.pad(g1, cpad).reshape(1, Cp).astype(jnp.float32)
    b1p = jnp.pad(b1, cpad).reshape(1, Cp).astype(jnp.float32)
    g2p = jnp.pad(g2, cpad).reshape(1, Cp).astype(jnp.float32)
    b2p = jnp.pad(b2, cpad).reshape(1, Cp).astype(jnp.float32)

    m1 = N * Hd * Wd
    m2 = N * H * W
    cost = pl.CostEstimate(
        flops=2 * 9 * Cp * Cp * (m1 + m2),
        transcendentals=2 * Cp,
        bytes_accessed=(xp.size + maskf.size) * 4 + (w1p.size + w2p.size) * 2
                       + 4 * Cp * 4 + m2 * Cp * 4)

    out_nhwc = pl.pallas_call(
        basic_block_kernel,
        out_shape=jax.ShapeDtypeStruct((N, H, W, Cp), jnp.float32),
        in_specs=[pl.BlockSpec(memory_space=pltpu.MemorySpace.VMEM)] * 8,
        out_specs=pl.BlockSpec(memory_space=pltpu.MemorySpace.VMEM),
        scratch_shapes=[pltpu.VMEM((N, Hd, Wd, Cp), jnp.float32)],
        compiler_params=pltpu.CompilerParams(vmem_limit_bytes=32 * 1024 * 1024),
        cost_estimate=cost,
    )(xp, maskf, w1p, g1p, b1p, w2p, g2p, b2p)

    # Drop channel padding, back to NCHW.
    return jnp.transpose(out_nhwc[..., :C], (0, 3, 1, 2)).astype(x_nchw.dtype)


def reference_nchw(x_nchw, w1_oihw, g1, b1, w2_oihw, g2, b2):
    """Pure-JAX (f32) reference of the PyTorch forward (train-mode BN)."""
    x = jnp.transpose(x_nchw, (0, 2, 3, 1))
    w1 = jnp.transpose(w1_oihw, (2, 3, 1, 0))
    w2 = jnp.transpose(w2_oihw, (2, 3, 1, 0))

    def conv(x, w):
        return jax.lax.conv_general_dilated(
            x, w, window_strides=(1, 1), padding="SAME",
            dimension_numbers=("NHWC", "HWIO", "NHWC"))

    def bn(x, g, b):
        mean = x.mean(axis=(0, 1, 2))
        var = x.var(axis=(0, 1, 2))          # biased variance, like PyTorch BN
        return (x - mean) * jax.lax.rsqrt(var + _EPS) * g + b

    out = jax.nn.relu(bn(conv(x, w1), g1, b1))
    out = bn(conv(out, w2), g2, b2) + x
    out = jax.nn.relu(out)
    return jnp.transpose(out, (0, 3, 1, 2))


if __name__ == "__main__":
    N, C, H, W = 2, 8, 16, 16          # in_channel == out_channel (downsample=None)

    key = jax.random.PRNGKey(0)
    k1, k2, k3, k4, k5, k6, k7 = jax.random.split(key, 7)
    x = jax.random.normal(k1, (N, C, H, W), jnp.float32)
    w1 = 0.1 * jax.random.normal(k2, (C, C, 3, 3), jnp.float32)    # conv1.weight (OIHW)
    w2 = 0.1 * jax.random.normal(k3, (C, C, 3, 3), jnp.float32)    # conv2.weight (OIHW)
    g1 = 1.0 + 0.1 * jax.random.normal(k4, (C,), jnp.float32)      # bn1.weight
    b1 = 0.1 * jax.random.normal(k5, (C,), jnp.float32)            # bn1.bias
    g2 = 1.0 + 0.1 * jax.random.normal(k6, (C,), jnp.float32)      # bn2.weight
    b2 = 0.1 * jax.random.normal(k7, (C,), jnp.float32)            # bn2.bias

    out = basic_block(x, w1, g1, b1, w2, g2, b2)
    out = jax.block_until_ready(out)

    ref = reference_nchw(x, w1, g1, b1, w2, g2, b2)
    assert out.shape == (N, C, H, W), out.shape
    max_err = float(jnp.max(jnp.abs(out - ref)))
    # Conv operands run on the MXU in bf16 (f32 accumulation); two chained bf16
    # convs on unit-scale normalized data give |err| ~ 1e-2 worst-case vs. the
    # pure-f32 reference, hence the loosened tolerance (f32 operands agree < 1e-4).
    assert jnp.allclose(out, ref, atol=5e-2, rtol=5e-2), max_err

    print("KERNEL_OK")
</pallas_src>

<mosaic_0001>
module attributes {stable_mosaic.version = 11 : i64} {
  func.func @basic_block_kernel(%arg0: memref<2x20x26x128xf32, #tpu.memory_space<vmem>>, %arg1: memref<864x1xf32, #tpu.memory_space<vmem>>, %arg2: memref<3x384x128xbf16, #tpu.memory_space<vmem>>, %arg3: memref<1x128xf32, #tpu.memory_space<vmem>>, %arg4: memref<1x128xf32, #tpu.memory_space<vmem>>, %arg5: memref<3x384x128xbf16, #tpu.memory_space<vmem>>, %arg6: memref<1x128xf32, #tpu.memory_space<vmem>>, %arg7: memref<1x128xf32, #tpu.memory_space<vmem>>, %arg8: memref<2x16x16x128xf32, #tpu.memory_space<vmem>>, %arg9: memref<2x18x24x128xf32, #tpu.memory_space<vmem>>) attributes {dimension_semantics = [], scalar_prefetch = 0 : i64, scratch_operands = 1 : i64, tpu.core_type = #tpu.core_type<tc>} {
    %c0 = arith.constant 0 : index
    %c0_0 = arith.constant 0 : index
    %0 = vector.load %arg1[%c0, %c0_0] : memref<864x1xf32, #tpu.memory_space<vmem>>, vector<864x1xf32>
    %c0_1 = arith.constant 0 : index
    %c0_2 = arith.constant 0 : index
    %c0_3 = arith.constant 0 : index
    %c0_4 = arith.constant 0 : index
    %1 = vector.load %arg0[%c0_1, %c0_2, %c0_3, %c0_4] : memref<2x20x26x128xf32, #tpu.memory_space<vmem>>, vector<2x18x24x128xf32>
    %2 = vector.shape_cast %1 : vector<2x18x24x128xf32> to vector<864x128xf32>
    %3 = arith.truncf %2 : vector<864x128xf32> to vector<864x128xbf16>
    %c0_5 = arith.constant 0 : index
    %c0_6 = arith.constant 0 : index
    %c1 = arith.constant 1 : index
    %c0_7 = arith.constant 0 : index
    %4 = vector.load %arg0[%c0_5, %c0_6, %c1, %c0_7] : memref<2x20x26x128xf32, #tpu.memory_space<vmem>>, vector<2x18x24x128xf32>
    %5 = vector.shape_cast %4 : vector<2x18x24x128xf32> to vector<864x128xf32>
    %6 = arith.truncf %5 : vector<864x128xf32> to vector<864x128xbf16>
    %c0_8 = arith.constant 0 : index
    %c0_9 = arith.constant 0 : index
    %c2 = arith.constant 2 : index
    %c0_10 = arith.constant 0 : index
    %7 = vector.load %arg0[%c0_8, %c0_9, %c2, %c0_10] : memref<2x20x26x128xf32, #tpu.memory_space<vmem>>, vector<2x18x24x128xf32>
    %8 = vector.shape_cast %7 : vector<2x18x24x128xf32> to vector<864x128xf32>
    %9 = arith.truncf %8 : vector<864x128xf32> to vector<864x128xbf16>
    %10 = tpu.concatenate %3, %6, %9 in 1 : vector<864x128xbf16>, vector<864x128xbf16>, vector<864x128xbf16> -> vector<864x384xbf16>
    %c0_11 = arith.constant 0 : index
    %c0_12 = arith.constant 0 : index
    %c0_13 = arith.constant 0 : index
    %11 = vector.load %arg2[%c0_11, %c0_12, %c0_13] : memref<3x384x128xbf16, #tpu.memory_space<vmem>>, vector<1x384x128xbf16>
    %12 = vector.shape_cast %11 : vector<1x384x128xbf16> to vector<384x128xbf16>
    %cst = arith.constant dense<0.000000e+00> : vector<864x128xf32>
    %13 = tpu.matmul %10, %12, %cst {dimension_numbers = #tpu.dot_dimension_numbers<[1], [0], [0], [1], [0, 0, 1, 1], [], []>} : vector<864x384xbf16>, vector<384x128xbf16>, vector<864x128xf32> -> vector<864x128xf32>
    %c0_14 = arith.constant 0 : index
    %c1_15 = arith.constant 1 : index
    %c0_16 = arith.constant 0 : index
    %c0_17 = arith.constant 0 : index
    %14 = vector.load %arg0[%c0_14, %c1_15, %c0_16, %c0_17] : memref<2x20x26x128xf32, #tpu.memory_space<vmem>>, vector<2x18x24x128xf32>
    %15 = vector.shape_cast %14 : vector<2x18x24x128xf32> to vector<864x128xf32>
    %16 = arith.truncf %15 : vector<864x128xf32> to vector<864x128xbf16>
    %c0_18 = arith.constant 0 : index
    %c1_19 = arith.constant 1 : index
    %c1_20 = arith.constant 1 : index
    %c0_21 = arith.constant 0 : index
    %17 = vector.load %arg0[%c0_18, %c1_19, %c1_20, %c0_21] : memref<2x20x26x128xf32, #tpu.memory_space<vmem>>, vector<2x18x24x128xf32>
    %18 = vector.shape_cast %17 : vector<2x18x24x128xf32> to vector<864x128xf32>
    %19 = arith.truncf %18 : vector<864x128xf32> to vector<864x128xbf16>
    %c0_22 = arith.constant 0 : index
    %c1_23 = arith.constant 1 : index
    %c2_24 = arith.constant 2 : index
    %c0_25 = arith.constant 0 : index
    %20 = vector.load %arg0[%c0_22, %c1_23, %c2_24, %c0_25] : memref<2x20x26x128xf32, #tpu.memory_space<vmem>>, vector<2x18x24x128xf32>
    %21 = vector.shape_cast %20 : vector<2x18x24x128xf32> to vector<864x128xf32>
    %22 = arith.truncf %21 : vector<864x128xf32> to vector<864x128xbf16>
    %23 = tpu.concatenate %16, %19, %22 in 1 : vector<864x128xbf16>, vector<864x128xbf16>, vector<864x128xbf16> -> vector<864x384xbf16>
    %c1_26 = arith.constant 1 : index
    %c0_27 = arith.constant 0 : index
    %c0_28 = arith.constant 0 : index
    %24 = vector.load %arg2[%c1_26, %c0_27, %c0_28] : memref<3x384x128xbf16, #tpu.memory_space<vmem>>, vector<1x384x128xbf16>
    %25 = vector.shape_cast %24 : vector<1x384x128xbf16> to vector<384x128xbf16>
    %cst_29 = arith.constant dense<0.000000e+00> : vector<864x128xf32>
    %26 = tpu.matmul %23, %25, %cst_29 {dimension_numbers = #tpu.dot_dimension_numbers<[1], [0], [0], [1], [0, 0, 1, 1], [], []>} : vector<864x384xbf16>, vector<384x128xbf16>, vector<864x128xf32> -> vector<864x128xf32>
    %27 = arith.addf %13, %26 : vector<864x128xf32>
    %c0_30 = arith.constant 0 : index
    %c2_31 = arith.constant 2 : index
    %c0_32 = arith.constant 0 : index
    %c0_33 = arith.constant 0 : index
    %28 = vector.load %arg0[%c0_30, %c2_31, %c0_32, %c0_33] : memref<2x20x26x128xf32, #tpu.memory_space<vmem>>, vector<2x18x24x128xf32>
    %29 = vector.shape_cast %28 : vector<2x18x24x128xf32> to vector<864x128xf32>
    %30 = arith.truncf %29 : vector<864x128xf32> to vector<864x128xbf16>
    %c0_34 = arith.constant 0 : index
    %c2_35 = arith.constant 2 : index
    %c1_36 = arith.constant 1 : index
    %c0_37 = arith.constant 0 : index
    %31 = vector.load %arg0[%c0_34, %c2_35, %c1_36, %c0_37] : memref<2x20x26x128xf32, #tpu.memory_space<vmem>>, vector<2x18x24x128xf32>
    %32 = vector.shape_cast %31 : vector<2x18x24x128xf32> to vector<864x128xf32>
    %33 = arith.truncf %32 : vector<864x128xf32> to vector<864x128xbf16>
    %c0_38 = arith.constant 0 : index
    %c2_39 = arith.constant 2 : index
    %c2_40 = arith.constant 2 : index
    %c0_41 = arith.constant 0 : index
    %34 = vector.load %arg0[%c0_38, %c2_39, %c2_40, %c0_41] : memref<2x20x26x128xf32, #tpu.memory_space<vmem>>, vector<2x18x24x128xf32>
    %35 = vector.shape_cast %34 : vector<2x18x24x128xf32> to vector<864x128xf32>
    %36 = arith.truncf %35 : vector<864x128xf32> to vector<864x128xbf16>
    %37 = tpu.concatenate %30, %33, %36 in 1 : vector<864x128xbf16>, vector<864x128xbf16>, vector<864x128xbf16> -> vector<864x384xbf16>
    %c2_42 = arith.constant 2 : index
    %c0_43 = arith.constant 0 : index
    %c0_44 = arith.constant 0 : index
    %38 = vector.load %arg2[%c2_42, %c0_43, %c0_44] : memref<3x384x128xbf16, #tpu.memory_space<vmem>>, vector<1x384x128xbf16>
    %39 = vector.shape_cast %38 : vector<1x384x128xbf16> to vector<384x128xbf16>
    %cst_45 = arith.constant dense<0.000000e+00> : vector<864x128xf32>
    %40 = tpu.matmul %37, %39, %cst_45 {dimension_numbers = #tpu.dot_dimension_numbers<[1], [0], [0], [1], [0, 0, 1, 1], [], []>} : vector<864x384xbf16>, vector<384x128xbf16>, vector<864x128xf32> -> vector<864x128xf32>
    %41 = arith.addf %27, %40 : vector<864x128xf32>
    %42 = vector.broadcast %0 : vector<864x1xf32> to vector<864x128xf32>
    %43 = arith.mulf %41, %42 : vector<864x128xf32>
    %cst_46 = arith.constant dense<0.000000e+00> : vector<128xf32>
    %44 = vector.multi_reduction <add>, %43, %cst_46 [0] : vector<864x128xf32> to vector<128xf32>
    %45 = vector.shape_cast %44 : vector<128xf32> to vector<1x128xf32>
    %46 = arith.mulf %43, %43 : vector<864x128xf32>
    %cst_47 = arith.constant dense<0.000000e+00> : vector<128xf32>
    %47 = vector.multi_reduction <add>, %46, %cst_47 [0] : vector<864x128xf32> to vector<128xf32>
    %48 = vector.shape_cast %47 : vector<128xf32> to vector<1x128xf32>
    %cst_48 = arith.constant 0.001953125 : f32
    %49 = vector.broadcast %cst_48 : f32 to vector<1x128xf32>
    %50 = arith.mulf %45, %49 : vector<1x128xf32>
    %cst_49 = arith.constant 0.001953125 : f32
    %51 = vector.broadcast %cst_49 : f32 to vector<1x128xf32>
    %52 = arith.mulf %48, %51 : vector<1x128xf32>
    %53 = arith.mulf %50, %50 : vector<1x128xf32>
    %54 = arith.subf %52, %53 : vector<1x128xf32>
    %cst_50 = arith.constant 0.000000e+00 : f32
    %55 = vector.broadcast %cst_50 : f32 to vector<1x128xf32>
    %56 = arith.maximumf %54, %55 : vector<1x128xf32>
    %c0_51 = arith.constant 0 : index
    %c0_52 = arith.constant 0 : index
    %57 = vector.load %arg3[%c0_51, %c0_52] : memref<1x128xf32, #tpu.memory_space<vmem>>, vector<1x128xf32>
    %cst_53 = arith.constant 9.99999974E-6 : f32
    %58 = vector.broadcast %cst_53 : f32 to vector<1x128xf32>
    %59 = arith.addf %56, %58 : vector<1x128xf32>
    %60 = math.rsqrt %59 : vector<1x128xf32>
    %61 = arith.mulf %57, %60 : vector<1x128xf32>
    %c0_54 = arith.constant 0 : index
    %c0_55 = arith.constant 0 : index
    %62 = vector.load %arg4[%c0_54, %c0_55] : memref<1x128xf32, #tpu.memory_space<vmem>>, vector<1x128xf32>
    %63 = arith.mulf %50, %61 : vector<1x128xf32>
    %64 = arith.subf %62, %63 : vector<1x128xf32>
    %65 = vector.broadcast %61 : vector<1x128xf32> to vector<864x128xf32>
    %66 = arith.mulf %43, %65 : vector<864x128xf32>
    %67 = vector.broadcast %64 : vector<1x128xf32> to vector<864x128xf32>
    %68 = arith.addf %66, %67 : vector<864x128xf32>
    %cst_56 = arith.constant 0.000000e+00 : f32
    %69 = vector.broadcast %cst_56 : f32 to vector<864x128xf32>
    %70 = arith.maximumf %68, %69 : vector<864x128xf32>
    %71 = vector.broadcast %0 : vector<864x1xf32> to vector<864x128xf32>
    %72 = arith.mulf %70, %71 : vector<864x128xf32>
    %73 = vector.shape_cast %72 : vector<864x128xf32> to vector<2x18x24x128xf32>
    %c0_57 = arith.constant 0 : index
    %c0_58 = arith.constant 0 : index
    %c0_59 = arith.constant 0 : index
    %c0_60 = arith.constant 0 : index
    %74 = vector.load %arg9[%c0_57, %c0_58, %c0_59, %c0_60] : memref<2x18x24x128xf32, #tpu.memory_space<vmem>>, vector<2x18x24x128xf32>
    tpu.vector_store %arg9[%c0_57, %c0_58, %c0_59, %c0_60], %73 {strides = array<i32>} : memref<2x18x24x128xf32, #tpu.memory_space<vmem>>, vector<2x18x24x128xf32>,
    %c0_61 = arith.constant 0 : index
    %c0_62 = arith.constant 0 : index
    %c0_63 = arith.constant 0 : index
    %c0_64 = arith.constant 0 : index
    %75 = vector.load %arg9[%c0_61, %c0_62, %c0_63, %c0_64] : memref<2x18x24x128xf32, #tpu.memory_space<vmem>>, vector<2x16x16x128xf32>
    %76 = vector.shape_cast %75 : vector<2x16x16x128xf32> to vector<512x128xf32>
    %77 = arith.truncf %76 : vector<512x128xf32> to vector<512x128xbf16>
    %c0_65 = arith.constant 0 : index
    %c0_66 = arith.constant 0 : index
    %c1_67 = arith.constant 1 : index
    %c0_68 = arith.constant 0 : index
    %78 = vector.load %arg9[%c0_65, %c0_66, %c1_67, %c0_68] : memref<2x18x24x128xf32, #tpu.memory_space<vmem>>, vector<2x16x16x128xf32>
    %79 = vector.shape_cast %78 : vector<2x16x16x128xf32> to vector<512x128xf32>
    %80 = arith.truncf %79 : vector<512x128xf32> to vector<512x128xbf16>
    %c0_69 = arith.constant 0 : index
    %c0_70 = arith.constant 0 : index
    %c2_71 = arith.constant 2 : index
    %c0_72 = arith.constant 0 : index
    %81 = vector.load %arg9[%c0_69, %c0_70, %c2_71, %c0_72] : memref<2x18x24x128xf32, #tpu.memory_space<vmem>>, vector<2x16x16x128xf32>
    %82 = vector.shape_cast %81 : vector<2x16x16x128xf32> to vector<512x128xf32>
    %83 = arith.truncf %82 : vector<512x128xf32> to vector<512x128xbf16>
    %84 = tpu.concatenate %77, %80, %83 in 1 : vector<512x128xbf16>, vector<512x128xbf16>, vector<512x128xbf16> -> vector<512x384xbf16>
    %c0_73 = arith.constant 0 : index
    %c0_74 = arith.constant 0 : index
    %c0_75 = arith.constant 0 : index
    %85 = vector.load %arg5[%c0_73, %c0_74, %c0_75] : memref<3x384x128xbf16, #tpu.memory_space<vmem>>, vector<1x384x128xbf16>
    %86 = vector.shape_cast %85 : vector<1x384x128xbf16> to vector<384x128xbf16>
    %cst_76 = arith.constant dense<0.000000e+00> : vector<512x128xf32>
    %87 = tpu.matmul %84, %86, %cst_76 {dimension_numbers = #tpu.dot_dimension_numbers<[1], [0], [0], [1], [0, 0, 1, 1], [], []>} : vector<512x384xbf16>, vector<384x128xbf16>, vector<512x128xf32> -> vector<512x128xf32>
    %c0_77 = arith.constant 0 : index
    %c1_78 = arith.constant 1 : index
    %c0_79 = arith.constant 0 : index
    %c0_80 = arith.constant 0 : index
    %88 = vector.load %arg9[%c0_77, %c1_78, %c0_79, %c0_80] : memref<2x18x24x128xf32, #tpu.memory_space<vmem>>, vector<2x16x16x128xf32>
    %89 = vector.shape_cast %88 : vector<2x16x16x128xf32> to vector<512x128xf32>
    %90 = arith.truncf %89 : vector<512x128xf32> to vector<512x128xbf16>
    %c0_81 = arith.constant 0 : index
    %c1_82 = arith.constant 1 : index
    %c1_83 = arith.constant 1 : index
    %c0_84 = arith.constant 0 : index
    %91 = vector.load %arg9[%c0_81, %c1_82, %c1_83, %c0_84] : memref<2x18x24x128xf32, #tpu.memory_space<vmem>>, vector<2x16x16x128xf32>
    %92 = vector.shape_cast %91 : vector<2x16x16x128xf32> to vector<512x128xf32>
    %93 = arith.truncf %92 : vector<512x128xf32> to vector<512x128xbf16>
    %c0_85 = arith.constant 0 : index
    %c1_86 = arith.constant 1 : index
    %c2_87 = arith.constant 2 : index
    %c0_88 = arith.constant 0 : index
    %94 = vector.load %arg9[%c0_85, %c1_86, %c2_87, %c0_88] : memref<2x18x24x128xf32, #tpu.memory_space<vmem>>, vector<2x16x16x128xf32>
    %95 = vector.shape_cast %94 : vector<2x16x16x128xf32> to vector<512x128xf32>
    %96 = arith.truncf %95 : vector<512x128xf32> to vector<512x128xbf16>
    %97 = tpu.concatenate %90, %93, %96 in 1 : vector<512x128xbf16>, vector<512x128xbf16>, vector<512x128xbf16> -> vector<512x384xbf16>
    %c1_89 = arith.constant 1 : index
    %c0_90 = arith.constant 0 : index
    %c0_91 = arith.constant 0 : index
    %98 = vector.load %arg5[%c1_89, %c0_90, %c0_91] : memref<3x384x128xbf16, #tpu.memory_space<vmem>>, vector<1x384x128xbf16>
    %99 = vector.shape_cast %98 : vector<1x384x128xbf16> to vector<384x128xbf16>
    %cst_92 = arith.constant dense<0.000000e+00> : vector<512x128xf32>
    %100 = tpu.matmul %97, %99, %cst_92 {dimension_numbers = #tpu.dot_dimension_numbers<[1], [0], [0], [1], [0, 0, 1, 1], [], []>} : vector<512x384xbf16>, vector<384x128xbf16>, vector<512x128xf32> -> vector<512x128xf32>
    %101 = arith.addf %87, %100 : vector<512x128xf32>
    %c0_93 = arith.constant 0 : index
    %c2_94 = arith.constant 2 : index
    %c0_95 = arith.constant 0 : index
    %c0_96 = arith.constant 0 : index
    %102 = vector.load %arg9[%c0_93, %c2_94, %c0_95, %c0_96] : memref<2x18x24x128xf32, #tpu.memory_space<vmem>>, vector<2x16x16x128xf32>
    %103 = vector.shape_cast %102 : vector<2x16x16x128xf32> to vector<512x128xf32>
    %104 = arith.truncf %103 : vector<512x128xf32> to vector<512x128xbf16>
    %c0_97 = arith.constant 0 : index
    %c2_98 = arith.constant 2 : index
    %c1_99 = arith.constant 1 : index
    %c0_100 = arith.constant 0 : index
    %105 = vector.load %arg9[%c0_97, %c2_98, %c1_99, %c0_100] : memref<2x18x24x128xf32, #tpu.memory_space<vmem>>, vector<2x16x16x128xf32>
    %106 = vector.shape_cast %105 : vector<2x16x16x128xf32> to vector<512x128xf32>
    %107 = arith.truncf %106 : vector<512x128xf32> to vector<512x128xbf16>
    %c0_101 = arith.constant 0 : index
    %c2_102 = arith.constant 2 : index
    %c2_103 = arith.constant 2 : index
    %c0_104 = arith.constant 0 : index
    %108 = vector.load %arg9[%c0_101, %c2_102, %c2_103, %c0_104] : memref<2x18x24x128xf32, #tpu.memory_space<vmem>>, vector<2x16x16x128xf32>
    %109 = vector.shape_cast %108 : vector<2x16x16x128xf32> to vector<512x128xf32>
    %110 = arith.truncf %109 : vector<512x128xf32> to vector<512x128xbf16>
    %111 = tpu.concatenate %104, %107, %110 in 1 : vector<512x128xbf16>, vector<512x128xbf16>, vector<512x128xbf16> -> vector<512x384xbf16>
    %c2_105 = arith.constant 2 : index
    %c0_106 = arith.constant 0 : index
    %c0_107 = arith.constant 0 : index
    %112 = vector.load %arg5[%c2_105, %c0_106, %c0_107] : memref<3x384x128xbf16, #tpu.memory_space<vmem>>, vector<1x384x128xbf16>
    %113 = vector.shape_cast %112 : vector<1x384x128xbf16> to vector<384x128xbf16>
    %cst_108 = arith.constant dense<0.000000e+00> : vector<512x128xf32>
    %114 = tpu.matmul %111, %113, %cst_108 {dimension_numbers = #tpu.dot_dimension_numbers<[1], [0], [0], [1], [0, 0, 1, 1], [], []>} : vector<512x384xbf16>, vector<384x128xbf16>, vector<512x128xf32> -> vector<512x128xf32>
    %115 = arith.addf %101, %114 : vector<512x128xf32>
    %cst_109 = arith.constant dense<0.000000e+00> : vector<128xf32>
    %116 = vector.multi_reduction <add>, %115, %cst_109 [0] : vector<512x128xf32> to vector<128xf32>
    %117 = vector.shape_cast %116 : vector<128xf32> to vector<1x128xf32>
    %118 = arith.mulf %115, %115 : vector<512x128xf32>
    %cst_110 = arith.constant dense<0.000000e+00> : vector<128xf32>
    %119 = vector.multi_reduction <add>, %118, %cst_110 [0] : vector<512x128xf32> to vector<128xf32>
    %120 = vector.shape_cast %119 : vector<128xf32> to vector<1x128xf32>
    %cst_111 = arith.constant 0.001953125 : f32
    %121 = vector.broadcast %cst_111 : f32 to vector<1x128xf32>
    %122 = arith.mulf %117, %121 : vector<1x128xf32>
    %cst_112 = arith.constant 0.001953125 : f32
    %123 = vector.broadcast %cst_112 : f32 to vector<1x128xf32>
    %124 = arith.mulf %120, %123 : vector<1x128xf32>
    %125 = arith.mulf %122, %122 : vector<1x128xf32>
    %126 = arith.subf %124, %125 : vector<1x128xf32>
    %cst_113 = arith.constant 0.000000e+00 : f32
    %127 = vector.broadcast %cst_113 : f32 to vector<1x128xf32>
    %128 = arith.maximumf %126, %127 : vector<1x128xf32>
    %c0_114 = arith.constant 0 : index
    %c0_115 = arith.constant 0 : index
    %129 = vector.load %arg6[%c0_114, %c0_115] : memref<1x128xf32, #tpu.memory_space<vmem>>, vector<1x128xf32>
    %cst_116 = arith.constant 9.99999974E-6 : f32
    %130 = vector.broadcast %cst_116 : f32 to vector<1x128xf32>
    %131 = arith.addf %128, %130 : vector<1x128xf32>
    %132 = math.rsqrt %131 : vector<1x128xf32>
    %133 = arith.mulf %129, %132 : vector<1x128xf32>
    %c0_117 = arith.constant 0 : index
    %c0_118 = arith.constant 0 : index
    %134 = vector.load %arg7[%c0_117, %c0_118] : memref<1x128xf32, #tpu.memory_space<vmem>>, vector<1x128xf32>
    %135 = arith.mulf %122, %133 : vector<1x128xf32>
    %136 = arith.subf %134, %135 : vector<1x128xf32>
    %137 = vector.broadcast %133 : vector<1x128xf32> to vector<512x128xf32>
    %138 = arith.mulf %115, %137 : vector<512x128xf32>
    %139 = vector.broadcast %136 : vector<1x128xf32> to vector<512x128xf32>
    %140 = arith.addf %138, %139 : vector<512x128xf32>
    %c0_119 = arith.constant 0 : index
    %c2_120 = arith.constant 2 : index
    %c2_121 = arith.constant 2 : index
    %c0_122 = arith.constant 0 : index
    %141 = vector.load %arg0[%c0_119, %c2_120, %c2_121, %c0_122] : memref<2x20x26x128xf32, #tpu.memory_space<vmem>>, vector<2x16x16x128xf32>
    %142 = vector.shape_cast %141 : vector<2x16x16x128xf32> to vector<512x128xf32>
    %143 = arith.addf %140, %142 : vector<512x128xf32>
    %cst_123 = arith.constant 0.000000e+00 : f32
    %144 = vector.broadcast %cst_123 : f32 to vector<512x128xf32>
    %145 = arith.maximumf %143, %144 : vector<512x128xf32>
    %146 = vector.shape_cast %145 : vector<512x128xf32> to vector<2x16x16x128xf32>
    %c0_124 = arith.constant 0 : index
    %c0_125 = arith.constant 0 : index
    %c0_126 = arith.constant 0 : index
    %c0_127 = arith.constant 0 : index
    %147 = vector.load %arg8[%c0_124, %c0_125, %c0_126, %c0_127] : memref<2x16x16x128xf32, #tpu.memory_space<vmem>>, vector<2x16x16x128xf32>
    tpu.vector_store %arg8[%c0_124, %c0_125, %c0_126, %c0_127], %146 {strides = array<i32>} : memref<2x16x16x128xf32, #tpu.memory_space<vmem>>, vector<2x16x16x128xf32>,
    return
  }
}

</mosaic_0001>

<llo_original>
// kernel: basic_block.1
$region0: #{basic_block.1}
  #allocation0 [shape = 'u32[]', space=smem, size = 0x4, offset = 0x4, fixed_abs, tag = 'smem constant byte address 0x4 - core index']
  #allocation1 [shape = 'u32[144,128]{1,0:T(1,128)}', space=vmem, size = 0x12000, scoped, tag = 'internal scratch']
  #allocation2 [shape = 'f32[2,18,24,128]{3,2,1,0:T(8,128)}', space=vmem, size = 0x6c000, scoped, tag = 'scratch operand']
  %s0 = inlined_call_operand.vmem [shape: f32[2,20,26,128], index: 0, kind: input, shape index: {}]
  %s1 = inlined_call_operand.vmem [shape: f32[864,1], index: 1, kind: input, shape index: {}]
  %s2 = inlined_call_operand.vmem [shape: bf16[3,384,128], index: 2, kind: input, shape index: {}]
  %s3 = inlined_call_operand.vmem [shape: f32[1,128], index: 3, kind: input, shape index: {}]
  %s4 = inlined_call_operand.vmem [shape: f32[1,128], index: 4, kind: input, shape index: {}]
  %s5 = inlined_call_operand.vmem [shape: bf16[3,384,128], index: 5, kind: input, shape index: {}]
  %s6 = inlined_call_operand.vmem [shape: f32[1,128], index: 6, kind: input, shape index: {}]
  %s7 = inlined_call_operand.vmem [shape: f32[1,128], index: 7, kind: input, shape index: {}]
  %s8 = inlined_call_operand.vmem [shape: f32[2,16,16,128], index: 8, kind: output, shape index: {}]
  %s9 = sld [smem:[#allocation0]]
  $region42: #{basic_block.1} parent=0
    _
  %s11 = ssub.s32 1, %s9
  %s12 = scalar_select 0, %s11, %s9
  // Predicated region
  $region2: #{basic_block.1} parent=0 // pred_check
    _
  $region3: #{basic_block.1} parent=0 // pred_check_branch
    %14 = sbr.rel (0) target = $region5
  $region4: #{basic_block.1} parent=0 // pred_region
    _
  $region5: #{basic_block.1} parent=0 // pred_fallthru
    _
  // Predicated region
  $region6: #{basic_block.1} parent=0 // pred_check
    _
  $region7: #{basic_block.1} parent=0 // pred_check_branch
    %16 = sbr.rel (0) target = $region9
  $region8: #{basic_block.1} parent=0 // pred_region
    _
  $region9: #{basic_block.1} parent=0 // pred_fallthru
    _
  // Predicated region
  $region10: #{basic_block.1} parent=0 // pred_check
    _
  $region11: #{basic_block.1} parent=0 // pred_check_branch
    %18 = sbr.rel (0) target = $region13
  $region12: #{basic_block.1} parent=0 // pred_region
    _
  $region13: #{basic_block.1} parent=0 // pred_fallthru
    _
  // Predicated region
  $region14: #{basic_block.1} parent=0 // pred_check
    _
  $region15: #{basic_block.1} parent=0 // pred_check_branch
    %20 = sbr.rel (0) target = $region17
  $region16: #{basic_block.1} parent=0 // pred_region
    _
  $region17: #{basic_block.1} parent=0 // pred_fallthru
    _
  // Predicated region
  $region18: #{basic_block.1} parent=0 // pred_check
    _
  $region19: #{basic_block.1} parent=0 // pred_check_branch
    %22 = sbr.rel (0) target = $region21
  $region20: #{basic_block.1} parent=0 // pred_region
    _
  $region21: #{basic_block.1} parent=0 // pred_fallthru
    _
  // Predicated region
  $region22: #{basic_block.1} parent=0 // pred_check
    _
  $region23: #{basic_block.1} parent=0 // pred_check_branch
    %24 = sbr.rel (0) target = $region25
  $region24: #{basic_block.1} parent=0 // pred_region
    _
  $region25: #{basic_block.1} parent=0 // pred_fallthru
    _
  // Predicated region
  $region26: #{basic_block.1} parent=0 // pred_check
    _
  $region27: #{basic_block.1} parent=0 // pred_check_branch
    %26 = sbr.rel (0) target = $region29
  $region28: #{basic_block.1} parent=0 // pred_region
    _
  $region29: #{basic_block.1} parent=0 // pred_fallthru
    _
  // Predicated region
  $region30: #{basic_block.1} parent=0 // pred_check
    _
  $region31: #{basic_block.1} parent=0 // pred_check_branch
    %28 = sbr.rel (0) target = $region33
  $region32: #{basic_block.1} parent=0 // pred_region
    _
  $region33: #{basic_block.1} parent=0 // pred_fallthru
    _
  %v30 = vld [vmem:[%s1] sm:$0xff]
  %v31 = vld [vmem:[%s1 + $0x8] sm:$0xff]
  %v32 = vld [vmem:[%s1 + $0x10] sm:$0xff]
  %v33 = vld [vmem:[%s1 + $0x18] sm:$0xff]
  %v34 = vld [vmem:[%s1 + $0x20] sm:$0xff]
  %v35 = vld [vmem:[%s1 + $0x28] sm:$0xff]
  %v36 = vld [vmem:[%s1 + $0x30] sm:$0xff]
  %v37 = vld [vmem:[%s1 + $0x38] sm:$0xff]
  %v38 = vld [vmem:[%s1 + $0x40] sm:$0xff]
  %v39 = vld [vmem:[%s1 + $0x48] sm:$0xff]
  %v40 = vld [vmem:[%s1 + $0x50] sm:$0xff]
  %v41 = vld [vmem:[%s1 + $0x58] sm:$0xff]
  %v42 = vld [vmem:[%s1 + $0x60] sm:$0xff]
  %v43 = vld [vmem:[%s1 + $0x68] sm:$0xff]
  %v44 = vld [vmem:[%s1 + $0x70] sm:$0xff]
  %v45 = vld [vmem:[%s1 + $0x78] sm:$0xff]
  %v46 = vld [vmem:[%s1 + $0x80] sm:$0xff]
  %v47 = vld [vmem:[%s1 + $0x88] sm:$0xff]
  %v48 = vld [vmem:[%s1 + $0x90] sm:$0xff]
  %v49 = vld [vmem:[%s1 + $0x98] sm:$0xff]
  %v50 = vld [vmem:[%s1 + $0xa0] sm:$0xff]
  %v51 = vld [vmem:[%s1 + $0xa8] sm:$0xff]
  %v52 = vld [vmem:[%s1 + $0xb0] sm:$0xff]
  %v53 = vld [vmem:[%s1 + $0xb8] sm:$0xff]
  %v54 = vld [vmem:[%s1 + $0xc0] sm:$0xff]
  %v55 = vld [vmem:[%s1 + $0xc8] sm:$0xff]
  %v56 = vld [vmem:[%s1 + $0xd0] sm:$0xff]
  %v57 = vld [vmem:[%s1 + $0xd8] sm:$0xff]
  %v58 = vld [vmem:[%s1 + $0xe0] sm:$0xff]
  %v59 = vld [vmem:[%s1 + $0xe8] sm:$0xff]
  %v60 = vld [vmem:[%s1 + $0xf0] sm:$0xff]
  %v61 = vld [vmem:[%s1 + $0xf8] sm:$0xff]
  %v62 = vld [vmem:[%s1 + $0x100] sm:$0xff]
  %v63 = vld [vmem:[%s1 + $0x108] sm:$0xff]
  %v64 = vld [vmem:[%s1 + $0x110] sm:$0xff]
  %v65 = vld [vmem:[%s1 + $0x118] sm:$0xff]
  %v66 = vld [vmem:[%s1 + $0x120] sm:$0xff]
  %v67 = vld [vmem:[%s1 + $0x128] sm:$0xff]
  %v68 = vld [vmem:[%s1 + $0x130] sm:$0xff]
  %v69 = vld [vmem:[%s1 + $0x138] sm:$0xff]
  %v70 = vld [vmem:[%s1 + $0x140] sm:$0xff]
  %v71 = vld [vmem:[%s1 + $0x148] sm:$0xff]
  %v72 = vld [vmem:[%s1 + $0x150] sm:$0xff]
  %v73 = vld [vmem:[%s1 + $0x158] sm:$0xff]
  %v74 = vld [vmem:[%s1 + $0x160] sm:$0xff]
  %v75 = vld [vmem:[%s1 + $0x168] sm:$0xff]
  %v76 = vld [vmem:[%s1 + $0x170] sm:$0xff]
  %v77 = vld [vmem:[%s1 + $0x178] sm:$0xff]
  %v78 = vld [vmem:[%s1 + $0x180] sm:$0xff]
  %v79 = vld [vmem:[%s1 + $0x188] sm:$0xff]
  %v80 = vld [vmem:[%s1 + $0x190] sm:$0xff]
  %v81 = vld [vmem:[%s1 + $0x198] sm:$0xff]
  %v82 = vld [vmem:[%s1 + $0x1a0] sm:$0xff]
  %v83 = vld [vmem:[%s1 + $0x1a8] sm:$0xff]
  %v84 = vld [vmem:[%s1 + $0x1b0] sm:$0xff]
  %v85 = vld [vmem:[%s1 + $0x1b8] sm:$0xff]
  %v86 = vld [vmem:[%s1 + $0x1c0] sm:$0xff]
  %v87 = vld [vmem:[%s1 + $0x1c8] sm:$0xff]
  %v88 = vld [vmem:[%s1 + $0x1d0] sm:$0xff]
  %v89 = vld [vmem:[%s1 + $0x1d8] sm:$0xff]
  %v90 = vld [vmem:[%s1 + $0x1e0] sm:$0xff]
  %v91 = vld [vmem:[%s1 + $0x1e8] sm:$0xff]
  %v92 = vld [vmem:[%s1 + $0x1f0] sm:$0xff]
  %v93 = vld [vmem:[%s1 + $0x1f8] sm:$0xff]
  %v94 = vld [vmem:[%s1 + $0x200] sm:$0xff]
  %v95 = vld [vmem:[%s1 + $0x208] sm:$0xff]
  %v96 = vld [vmem:[%s1 + $0x210] sm:$0xff]
  %v97 = vld [vmem:[%s1 + $0x218] sm:$0xff]
  %v98 = vld [vmem:[%s1 + $0x220] sm:$0xff]
  %v99 = vld [vmem:[%s1 + $0x228] sm:$0xff]
  %v100 = vld [vmem:[%s1 + $0x230] sm:$0xff]
  %v101 = vld [vmem:[%s1 + $0x238] sm:$0xff]
  %v102 = vld [vmem:[%s1 + $0x240] sm:$0xff]
  %v103 = vld [vmem:[%s1 + $0x248] sm:$0xff]
  %v104 = vld [vmem:[%s1 + $0x250] sm:$0xff]
  %v105 = vld [vmem:[%s1 + $0x258] sm:$0xff]
  %v106 = vld [vmem:[%s1 + $0x260] sm:$0xff]
  %v107 = vld [vmem:[%s1 + $0x268] sm:$0xff]
  %v108 = vld [vmem:[%s1 + $0x270] sm:$0xff]
  %v109 = vld [vmem:[%s1 + $0x278] sm:$0xff]
  %v110 = vld [vmem:[%s1 + $0x280] sm:$0xff]
  %v111 = vld [vmem:[%s1 + $0x288] sm:$0xff]
  %v112 = vld [vmem:[%s1 + $0x290] sm:$0xff]
  %v113 = vld [vmem:[%s1 + $0x298] sm:$0xff]
  %v114 = vld [vmem:[%s1 + $0x2a0] sm:$0xff]
  %v115 = vld [vmem:[%s1 + $0x2a8] sm:$0xff]
  %v116 = vld [vmem:[%s1 + $0x2b0] sm:$0xff]
  %v117 = vld [vmem:[%s1 + $0x2b8] sm:$0xff]
  %v118 = vld [vmem:[%s1 + $0x2c0] sm:$0xff]
  %v119 = vld [vmem:[%s1 + $0x2c8] sm:$0xff]
  %v120 = vld [vmem:[%s1 + $0x2d0] sm:$0xff]
  %v121 = vld [vmem:[%s1 + $0x2d8] sm:$0xff]
  %v122 = vld [vmem:[%s1 + $0x2e0] sm:$0xff]
  %v123 = vld [vmem:[%s1 + $0x2e8] sm:$0xff]
  %v124 = vld [vmem:[%s1 + $0x2f0] sm:$0xff]
  %v125 = vld [vmem:[%s1 + $0x2f8] sm:$0xff]
  %v126 = vld [vmem:[%s1 + $0x300] sm:$0xff]
  %v127 = vld [vmem:[%s1 + $0x308] sm:$0xff]
  %v128 = vld [vmem:[%s1 + $0x310] sm:$0xff]
  %v129 = vld [vmem:[%s1 + $0x318] sm:$0xff]
  %v130 = vld [vmem:[%s1 + $0x320] sm:$0xff]
  %v131 = vld [vmem:[%s1 + $0x328] sm:$0xff]
  %v132 = vld [vmem:[%s1 + $0x330] sm:$0xff]
  %v133 = vld [vmem:[%s1 + $0x338] sm:$0xff]
  %v134 = vld [vmem:[%s1 + $0x340] sm:$0xff]
  %v135 = vld [vmem:[%s1 + $0x348] sm:$0xff]
  %v136 = vld [vmem:[%s1 + $0x350] sm:$0xff]
  %v137 = vld [vmem:[%s1 + $0x358] sm:$0xff]
  %v138 = vld [vmem:[%s0] sm:$0xff]
  %v139 = vld [vmem:[%s0 + $0x8] sm:$0xff]
  %v140 = vld [vmem:[%s0 + $0x10] sm:$0xff]
  %v141 = vld [vmem:[%s0 + $0x20] sm:$0xff]
  %v142 = vld [vmem:[%s0 + $0x28] sm:$0xff]
  %v143 = vld [vmem:[%s0 + $0x30] sm:$0xff]
  %v144 = vld [vmem:[%s0 + $0x40] sm:$0xff]
  %v145 = vld [vmem:[%s0 + $0x48] sm:$0xff]
  %v146 = vld [vmem:[%s0 + $0x50] sm:$0xff]
  %v147 = vld [vmem:[%s0 + $0x60] sm:$0xff]
  %v148 = vld [vmem:[%s0 + $0x68] sm:$0xff]
  %v149 = vld [vmem:[%s0 + $0x70] sm:$0xff]
  %v150 = vld [vmem:[%s0 + $0x80] sm:$0xff]
  %v151 = vld [vmem:[%s0 + $0x88] sm:$0xff]
  %v152 = vld [vmem:[%s0 + $0x90] sm:$0xff]
  %v153 = vld [vmem:[%s0 + $0xa0] sm:$0xff]
  %v154 = vld [vmem:[%s0 + $0xa8] sm:$0xff]
  %v155 = vld [vmem:[%s0 + $0xb0] sm:$0xff]
  %v156 = vld [vmem:[%s0 + $0xc0] sm:$0xff]
  %v157 = vld [vmem:[%s0 + $0xc8] sm:$0xff]
  %v158 = vld [vmem:[%s0 + $0xd0] sm:$0xff]
  %v159 = vld [vmem:[%s0 + $0xe0] sm:$0xff]
  %v160 = vld [vmem:[%s0 + $0xe8] sm:$0xff]
  %v161 = vld [vmem:[%s0 + $0xf0] sm:$0xff]
  %v162 = vld [vmem:[%s0 + $0x100] sm:$0xff]
  %v163 = vld [vmem:[%s0 + $0x108] sm:$0xff]
  %v164 = vld [vmem:[%s0 + $0x110] sm:$0xff]
  %v165 = vld [vmem:[%s0 + $0x120] sm:$0xff]
  %v166 = vld [vmem:[%s0 + $0x128] sm:$0xff]
  %v167 = vld [vmem:[%s0 + $0x130] sm:$0xff]
  %v168 = vld [vmem:[%s0 + $0x140] sm:$0xff]
  %v169 = vld [vmem:[%s0 + $0x148] sm:$0xff]
  %v170 = vld [vmem:[%s0 + $0x150] sm:$0xff]
  %v171 = vld [vmem:[%s0 + $0x160] sm:$0xff]
  %v172 = vld [vmem:[%s0 + $0x168] sm:$0xff]
  %v173 = vld [vmem:[%s0 + $0x170] sm:$0xff]
  %v174 = vld [vmem:[%s0 + $0x180] sm:$0xff]
  %v175 = vld [vmem:[%s0 + $0x188] sm:$0xff]
  %v176 = vld [vmem:[%s0 + $0x190] sm:$0xff]
  %v177 = vld [vmem:[%s0 + $0x1a0] sm:$0xff]
  %v178 = vld [vmem:[%s0 + $0x1a8] sm:$0xff]
  %v179 = vld [vmem:[%s0 + $0x1b0] sm:$0xff]
  %v180 = vld [vmem:[%s0 + $0x1c0] sm:$0xff]
  %v181 = vld [vmem:[%s0 + $0x1c8] sm:$0xff]
  %v182 = vld [vmem:[%s0 + $0x1d0] sm:$0xff]
  %v183 = vld [vmem:[%s0 + $0x1e0] sm:$0xff]
  %v184 = vld [vmem:[%s0 + $0x1e8] sm:$0xff]
  %v185 = vld [vmem:[%s0 + $0x1f0] sm:$0xff]
  %v186 = vld [vmem:[%s0 + $0x200] sm:$0xff]
  %v187 = vld [vmem:[%s0 + $0x208] sm:$0xff]
  %v188 = vld [vmem:[%s0 + $0x210] sm:$0xff]
  %v189 = vld [vmem:[%s0 + $0x220] sm:$0xff]
  %v190 = vld [vmem:[%s0 + $0x228] sm:$0xff]
  %v191 = vld [vmem:[%s0 + $0x230] sm:$0xff]
  %v192 = vld [vmem:[%s0 + $0x280] sm:$0xff]
  %v193 = vld [vmem:[%s0 + $0x288] sm:$0xff]
  %v194 = vld [vmem:[%s0 + $0x290] sm:$0xff]
  %v195 = vld [vmem:[%s0 + $0x2a0] sm:$0xff]
  %v196 = vld [vmem:[%s0 + $0x2a8] sm:$0xff]
  %v197 = vld [vmem:[%s0 + $0x2b0] sm:$0xff]
  %v198 = vld [vmem:[%s0 + $0x2c0] sm:$0xff]
  %v199 = vld [vmem:[%s0 + $0x2c8] sm:$0xff]
  %v200 = vld [vmem:[%s0 + $0x2d0] sm:$0xff]
  %v201 = vld [vmem:[%s0 + $0x2e0] sm:$0xff]
  %v202 = vld [vmem:[%s0 + $0x2e8] sm:$0xff]
  %v203 = vld [vmem:[%s0 + $0x2f0] sm:$0xff]
  %v204 = vld [vmem:[%s0 + $0x300] sm:$0xff]
  %v205 = vld [vmem:[%s0 + $0x308] sm:$0xff]
  %v206 = vld [vmem:[%s0 + $0x310] sm:$0xff]
  %v207 = vld [vmem:[%s0 + $0x320] sm:$0xff]
  %v208 = vld [vmem:[%s0 + $0x328] sm:$0xff]
  %v209 = vld [vmem:[%s0 + $0x330] sm:$0xff]
  %v210 = vld [vmem:[%s0 + $0x340] sm:$0xff]
  %v211 = vld [vmem:[%s0 + $0x348] sm:$0xff]
  %v212 = vld [vmem:[%s0 + $0x350] sm:$0xff]
  %v213 = vld [vmem:[%s0 + $0x360] sm:$0xff]
  %v214 = vld [vmem:[%s0 + $0x368] sm:$0xff]
  %v215 = vld [vmem:[%s0 + $0x370] sm:$0xff]
  %v216 = vld [vmem:[%s0 + $0x380] sm:$0xff]
  %v217 = vld [vmem:[%s0 + $0x388] sm:$0xff]
  %v218 = vld [vmem:[%s0 + $0x390] sm:$0xff]
  %v219 = vld [vmem:[%s0 + $0x3a0] sm:$0xff]
  %v220 = vld [vmem:[%s0 + $0x3a8] sm:$0xff]
  %v221 = vld [vmem:[%s0 + $0x3b0] sm:$0xff]
  %v222 = vld [vmem:[%s0 + $0x3c0] sm:$0xff]
  %v223 = vld [vmem:[%s0 + $0x3c8] sm:$0xff]
  %v224 = vld [vmem:[%s0 + $0x3d0] sm:$0xff]
  %v225 = vld [vmem:[%s0 + $0x3e0] sm:$0xff]
  %v226 = vld [vmem:[%s0 + $0x3e8] sm:$0xff]
  %v227 = vld [vmem:[%s0 + $0x3f0] sm:$0xff]
  %v228 = vld [vmem:[%s0 + $0x400] sm:$0xff]
  %v229 = vld [vmem:[%s0 + $0x408] sm:$0xff]
  %v230 = vld [vmem:[%s0 + $0x410] sm:$0xff]
  %v231 = vld [vmem:[%s0 + $0x420] sm:$0xff]
  %v232 = vld [vmem:[%s0 + $0x428] sm:$0xff]
  %v233 = vld [vmem:[%s0 + $0x430] sm:$0xff]
  %v234 = vld [vmem:[%s0 + $0x440] sm:$0xff]
  %v235 = vld [vmem:[%s0 + $0x448] sm:$0xff]
  %v236 = vld [vmem:[%s0 + $0x450] sm:$0xff]
  %v237 = vld [vmem:[%s0 + $0x460] sm:$0xff]
  %v238 = vld [vmem:[%s0 + $0x468] sm:$0xff]
  %v239 = vld [vmem:[%s0 + $0x470] sm:$0xff]
  %v240 = vld [vmem:[%s0 + $0x480] sm:$0xff]
  %v241 = vld [vmem:[%s0 + $0x488] sm:$0xff]
  %v242 = vld [vmem:[%s0 + $0x490] sm:$0xff]
  %v243 = vld [vmem:[%s0 + $0x4a0] sm:$0xff]
  %v244 = vld [vmem:[%s0 + $0x4a8] sm:$0xff]
  %v245 = vld [vmem:[%s0 + $0x4b0] sm:$0xff]
  %v246 = vpack.c.bf16 %v139, %v138
  %v247 = vpack.c.bf16 %v141, %v140
  %v248 = vpack.c.bf16 %v143, %v142
  %v249 = vpack.c.bf16 %v145, %v144
  %v250 = vpack.c.bf16 %v147, %v146
  %v251 = vpack.c.bf16 %v149, %v148
  %v252 = vpack.c.bf16 %v151, %v150
  %v253 = vpack.c.bf16 %v153, %v152
  %v254 = vpack.c.bf16 %v155, %v154
  %v255 = vpack.c.bf16 %v157, %v156
  %v256 = vpack.c.bf16 %v159, %v158
  %v257 = vpack.c.bf16 %v161, %v160
  %v258 = vpack.c.bf16 %v163, %v162
  %v259 = vpack.c.bf16 %v165, %v164
  %v260 = vpack.c.bf16 %v167, %v166
  %v261 = vpack.c.bf16 %v169, %v168
  %v262 = vpack.c.bf16 %v171, %v170
  %v263 = vpack.c.bf16 %v173, %v172
  %v264 = vpack.c.bf16 %v175, %v174
  %v265 = vpack.c.bf16 %v177, %v176
  %v266 = vpack.c.bf16 %v179, %v178
  %v267 = vpack.c.bf16 %v181, %v180
  %v268 = vpack.c.bf16 %v183, %v182
  %v269 = vpack.c.bf16 %v185, %v184
  %v270 = vpack.c.bf16 %v187, %v186
  %v271 = vpack.c.bf16 %v189, %v188
  %v272 = vpack.c.bf16 %v191, %v190
  %v273 = vpack.c.bf16 %v193, %v192
  %v274 = vpack.c.bf16 %v195, %v194
  %v275 = vpack.c.bf16 %v197, %v196
  %v276 = vpack.c.bf16 %v199, %v198
  %v277 = vpack.c.bf16 %v201, %v200
  %v278 = vpack.c.bf16 %v203, %v202
  %v279 = vpack.c.bf16 %v205, %v204
  %v280 = vpack.c.bf16 %v207, %v206
  %v281 = vpack.c.bf16 %v209, %v208
  %v282 = vpack.c.bf16 %v211, %v210
  %v283 = vpack.c.bf16 %v213, %v212
  %v284 = vpack.c.bf16 %v215, %v214
  %v285 = vpack.c.bf16 %v217, %v216
  %v286 = vpack.c.bf16 %v219, %v218
  %v287 = vpack.c.bf16 %v221, %v220
  %v288 = vpack.c.bf16 %v223, %v222
  %v289 = vpack.c.bf16 %v225, %v224
  %v290 = vpack.c.bf16 %v227, %v226
  %v291 = vpack.c.bf16 %v229, %v228
  %v292 = vpack.c.bf16 %v231, %v230
  %v293 = vpack.c.bf16 %v233, %v232
  %v294 = vpack.c.bf16 %v235, %v234
  %v295 = vpack.c.bf16 %v237, %v236
  %v296 = vpack.c.bf16 %v239, %v238
  %v297 = vpack.c.bf16 %v241, %v240
  %v298 = vpack.c.bf16 %v243, %v242
  %v299 = vpack.c.bf16 %v245, %v244
  %v300 = vld [vmem:[%s0 + $0x1] sm:$0xff]
  %v301 = vld [vmem:[%s0 + $0x9] sm:$0xff]
  %v302 = vld [vmem:[%s0 + $0x11] sm:$0xff]
  %v303 = vld [vmem:[%s0 + $0x21] sm:$0xff]
  %v304 = vld [vmem:[%s0 + $0x29] sm:$0xff]
  %v305 = vld [vmem:[%s0 + $0x31] sm:$0xff]
  %v306 = vld [vmem:[%s0 + $0x41] sm:$0xff]
  %v307 = vld [vmem:[%s0 + $0x49] sm:$0xff]
  %v308 = vld [vmem:[%s0 + $0x51] sm:$0xff]
  %v309 = vld [vmem:[%s0 + $0x61] sm:$0xff]
  %v310 = vld [vmem:[%s0 + $0x69] sm:$0xff]
  %v311 = vld [vmem:[%s0 + $0x71] sm:$0xff]
  %v312 = vld [vmem:[%s0 + $0x81] sm:$0xff]
  %v313 = vld [vmem:[%s0 + $0x89] sm:$0xff]
  %v314 = vld [vmem:[%s0 + $0x91] sm:$0xff]
  %v315 = vld [vmem:[%s0 + $0xa1] sm:$0xff]
  %v316 = vld [vmem:[%s0 + $0xa9] sm:$0xff]
  %v317 = vld [vmem:[%s0 + $0xb1] sm:$0xff]
  %v318 = vld [vmem:[%s0 + $0xc1] sm:$0xff]
  %v319 = vld [vmem:[%s0 + $0xc9] sm:$0xff]
  %v320 = vld [vmem:[%s0 + $0xd1] sm:$0xff]
  %v321 = vld [vmem:[%s0 + $0xe1] sm:$0xff]
  %v322 = vld [vmem:[%s0 + $0xe9] sm:$0xff]
  %v323 = vld [vmem:[%s0 + $0xf1] sm:$0xff]
  %v324 = vld [vmem:[%s0 + $0x101] sm:$0xff]
  %v325 = vld [vmem:[%s0 + $0x109] sm:$0xff]
  %v326 = vld [vmem:[%s0 + $0x111] sm:$0xff]
  %v327 = vld [vmem:[%s0 + $0x121] sm:$0xff]
  %v328 = vld [vmem:[%s0 + $0x129] sm:$0xff]
  %v329 = vld [vmem:[%s0 + $0x131] sm:$0xff]
  %v330 = vld [vmem:[%s0 + $0x141] sm:$0xff]
  %v331 = vld [vmem:[%s0 + $0x149] sm:$0xff]
  %v332 = vld [vmem:[%s0 + $0x151] sm:$0xff]
  %v333 = vld [vmem:[%s0 + $0x161] sm:$0xff]
  %v334 = vld [vmem:[%s0 + $0x169] sm:$0xff]
  %v335 = vld [vmem:[%s0 + $0x171] sm:$0xff]
  %v336 = vld [vmem:[%s0 + $0x181] sm:$0xff]
  %v337 = vld [vmem:[%s0 + $0x189] sm:$0xff]
  %v338 = vld [vmem:[%s0 + $0x191] sm:$0xff]
  %v339 = vld [vmem:[%s0 + $0x1a1] sm:$0xff]
  %v340 = vld [vmem:[%s0 + $0x1a9] sm:$0xff]
  %v341 = vld [vmem:[%s0 + $0x1b1] sm:$0xff]
  %v342 = vld [vmem:[%s0 + $0x1c1] sm:$0xff]
  %v343 = vld [vmem:[%s0 + $0x1c9] sm:$0xff]
  %v344 = vld [vmem:[%s0 + $0x1d1] sm:$0xff]
  %v345 = vld [vmem:[%s0 + $0x1e1] sm:$0xff]
  %v346 = vld [vmem:[%s0 + $0x1e9] sm:$0xff]
  %v347 = vld [vmem:[%s0 + $0x1f1] sm:$0xff]
  %v348 = vld [vmem:[%s0 + $0x201] sm:$0xff]
  %v349 = vld [vmem:[%s0 + $0x209] sm:$0xff]
  %v350 = vld [vmem:[%s0 + $0x211] sm:$0xff]
  %v351 = vld [vmem:[%s0 + $0x221] sm:$0xff]
  %v352 = vld [vmem:[%s0 + $0x229] sm:$0xff]
  %v353 = vld [vmem:[%s0 + $0x231] sm:$0xff]
  %v354 = vld [vmem:[%s0 + $0x281] sm:$0xff]
  %v355 = vld [vmem:[%s0 + $0x289] sm:$0xff]
  %v356 = vld [vmem:[%s0 + $0x291] sm:$0xff]
  %v357 = vld [vmem:[%s0 + $0x2a1] sm:$0xff]
  %v358 = vld [vmem:[%s0 + $0x2a9] sm:$0xff]
  %v359 = vld [vmem:[%s0 + $0x2b1] sm:$0xff]
  %v360 = vld [vmem:[%s0 + $0x2c1] sm:$0xff]
  %v361 = vld [vmem:[%s0 + $0x2c9] sm:$0xff]
  %v362 = vld [vmem:[%s0 + $0x2d1] sm:$0xff]
  %v363 = vld [vmem:[%s0 + $0x2e1] sm:$0xff]
  %v364 = vld [vmem:[%s0 + $0x2e9] sm:$0xff]
  %v365 = vld [vmem:[%s0 + $0x2f1] sm:$0xff]
  %v366 = vld [vmem:[%s0 + $0x301] sm:$0xff]
  %v367 = vld [vmem:[%s0 + $0x309] sm:$0xff]
  %v368 = vld [vmem:[%s0 + $0x311] sm:$0xff]
  %v369 = vld [vmem:[%s0 + $0x321] sm:$0xff]
  %v370 = vld [vmem:[%s0 + $0x329] sm:$0xff]
  %v371 = vld [vmem:[%s0 + $0x331] sm:$0xff]
  %v372 = vld [vmem:[%s0 + $0x341] sm:$0xff]
  %v373 = vld [vmem:[%s0 + $0x349] sm:$0xff]
  %v374 = vld [vmem:[%s0 + $0x351] sm:$0xff]
  %v375 = vld [vmem:[%s0 + $0x361] sm:$0xff]
  %v376 = vld [vmem:[%s0 + $0x369] sm:$0xff]
  %v377 = vld [vmem:[%s0 + $0x371] sm:$0xff]
  %v378 = vld [vmem:[%s0 + $0x381] sm:$0xff]
  %v379 = vld [vmem:[%s0 + $0x389] sm:$0xff]
  %v380 = vld [vmem:[%s0 + $0x391] sm:$0xff]
  %v381 = vld [vmem:[%s0 + $0x3a1] sm:$0xff]
  %v382 = vld [vmem:[%s0 + $0x3a9] sm:$0xff]
  %v383 = vld [vmem:[%s0 + $0x3b1] sm:$0xff]
  %v384 = vld [vmem:[%s0 + $0x3c1] sm:$0xff]
  %v385 = vld [vmem:[%s0 + $0x3c9] sm:$0xff]
  %v386 = vld [vmem:[%s0 + $0x3d1] sm:$0xff]
  %v387 = vld [vmem:[%s0 + $0x3e1] sm:$0xff]
  %v388 = vld [vmem:[%s0 + $0x3e9] sm:$0xff]
  %v389 = vld [vmem:[%s0 + $0x3f1] sm:$0xff]
  %v390 = vld [vmem:[%s0 + $0x401] sm:$0xff]
  %v391 = vld [vmem:[%s0 + $0x409] sm:$0xff]
  %v392 = vld [vmem:[%s0 + $0x411] sm:$0xff]
  %v393 = vld [vmem:[%s0 + $0x421] sm:$0xff]
  %v394 = vld [vmem:[%s0 + $0x429] sm:$0xff]
  %v395 = vld [vmem:[%s0 + $0x431] sm:$0xff]
  %v396 = vld [vmem:[%s0 + $0x441] sm:$0xff]
  %v397 = vld [vmem:[%s0 + $0x449] sm:$0xff]
  %v398 = vld [vmem:[%s0 + $0x451] sm:$0xff]
  %v399 = vld [vmem:[%s0 + $0x461] sm:$0xff]
  %v400 = vld [vmem:[%s0 + $0x469] sm:$0xff]
  %v401 = vld [vmem:[%s0 + $0x471] sm:$0xff]
  %v402 = vld [vmem:[%s0 + $0x481] sm:$0xff]
  %v403 = vld [vmem:[%s0 + $0x489] sm:$0xff]
  %v404 = vld [vmem:[%s0 + $0x491] sm:$0xff]
  %v405 = vld [vmem:[%s0 + $0x4a1] sm:$0xff]
  %v406 = vld [vmem:[%s0 + $0x4a9] sm:$0xff]
  %v407 = vld [vmem:[%s0 + $0x4b1] sm:$0xff]
  %v408 = vpack.c.bf16 %v301, %v300
  %v409 = vpack.c.bf16 %v303, %v302
  %v410 = vpack.c.bf16 %v305, %v304
  %v411 = vpack.c.bf16 %v307, %v306
  %v412 = vpack.c.bf16 %v309, %v308
  %v413 = vpack.c.bf16 %v311, %v310
  %v414 = vpack.c.bf16 %v313, %v312
  %v415 = vpack.c.bf16 %v315, %v314
  %v416 = vpack.c.bf16 %v317, %v316
  %v417 = vpack.c.bf16 %v319, %v318
  %v418 = vpack.c.bf16 %v321, %v320
  %v419 = vpack.c.bf16 %v323, %v322
  %v420 = vpack.c.bf16 %v325, %v324
  %v421 = vpack.c.bf16 %v327, %v326
  %v422 = vpack.c.bf16 %v329, %v328
  %v423 = vpack.c.bf16 %v331, %v330
  %v424 = vpack.c.bf16 %v333, %v332
  %v425 = vpack.c.bf16 %v335, %v334
  %v426 = vpack.c.bf16 %v337, %v336
  %v427 = vpack.c.bf16 %v339, %v338
  %v428 = vpack.c.bf16 %v341, %v340
  %v429 = vpack.c.bf16 %v343, %v342
  %v430 = vpack.c.bf16 %v345, %v344
  %v431 = vpack.c.bf16 %v347, %v346
  %v432 = vpack.c.bf16 %v349, %v348
  %v433 = vpack.c.bf16 %v351, %v350
  %v434 = vpack.c.bf16 %v353, %v352
  %v435 = vpack.c.bf16 %v355, %v354
  %v436 = vpack.c.bf16 %v357, %v356
  %v437 = vpack.c.bf16 %v359, %v358
  %v438 = vpack.c.bf16 %v361, %v360
  %v439 = vpack.c.bf16 %v363, %v362
  %v440 = vpack.c.bf16 %v365, %v364
  %v441 = vpack.c.bf16 %v367, %v366
  %v442 = vpack.c.bf16 %v369, %v368
  %v443 = vpack.c.bf16 %v371, %v370
  %v444 = vpack.c.bf16 %v373, %v372
  %v445 = vpack.c.bf16 %v375, %v374
  %v446 = vpack.c.bf16 %v377, %v376
  %v447 = vpack.c.bf16 %v379, %v378
  %v448 = vpack.c.bf16 %v381, %v380
  %v449 = vpack.c.bf16 %v383, %v382
  %v450 = vpack.c.bf16 %v385, %v384
  %v451 = vpack.c.bf16 %v387, %v386
  %v452 = vpack.c.bf16 %v389, %v388
  %v453 = vpack.c.bf16 %v391, %v390
  %v454 = vpack.c.bf16 %v393, %v392
  %v455 = vpack.c.bf16 %v395, %v394
  %v456 = vpack.c.bf16 %v397, %v396
  %v457 = vpack.c.bf16 %v399, %v398
  %v458 = vpack.c.bf16 %v401, %v400
  %v459 = vpack.c.bf16 %v403, %v402
  %v460 = vpack.c.bf16 %v405, %v404
  %v461 = vpack.c.bf16 %v407, %v406
  %v462 = vld [vmem:[%s0 + $0x2] sm:$0xff]
  %v463 = vld [vmem:[%s0 + $0xa] sm:$0xff]
  %v464 = vld [vmem:[%s0 + $0x12] sm:$0xff]
  %v465 = vld [vmem:[%s0 + $0x22] sm:$0xff]
  %v466 = vld [vmem:[%s0 + $0x2a] sm:$0xff]
  %v467 = vld [vmem:[%s0 + $0x32] sm:$0xff]
  %v468 = vld [vmem:[%s0 + $0x42] sm:$0xff]
  %v469 = vld [vmem:[%s0 + $0x4a] sm:$0xff]
  %v470 = vld [vmem:[%s0 + $0x52] sm:$0xff]
  %v471 = vld [vmem:[%s0 + $0x62] sm:$0xff]
  %v472 = vld [vmem:[%s0 + $0x6a] sm:$0xff]
  %v473 = vld [vmem:[%s0 + $0x72] sm:$0xff]
  %v474 = vld [vmem:[%s0 + $0x82] sm:$0xff]
  %v475 = vld [vmem:[%s0 + $0x8a] sm:$0xff]
  %v476 = vld [vmem:[%s0 + $0x92] sm:$0xff]
  %v477 = vld [vmem:[%s0 + $0xa2] sm:$0xff]
  %v478 = vld [vmem:[%s0 + $0xaa] sm:$0xff]
  %v479 = vld [vmem:[%s0 + $0xb2] sm:$0xff]
  %v480 = vld [vmem:[%s0 + $0xc2] sm:$0xff]
  %v481 = vld [vmem:[%s0 + $0xca] sm:$0xff]
  %v482 = vld [vmem:[%s0 + $0xd2] sm:$0xff]
  %v483 = vld [vmem:[%s0 + $0xe2] sm:$0xff]
  %v484 = vld [vmem:[%s0 + $0xea] sm:$0xff]
  %v485 = vld [vmem:[%s0 + $0xf2] sm:$0xff]
  %v486 = vld [vmem:[%s0 + $0x102] sm:$0xff]
  %v487 = vld [vmem:[%s0 + $0x10a] sm:$0xff]
  %v488 = vld [vmem:[%s0 + $0x112] sm:$0xff]
  %v489 = vld [vmem:[%s0 + $0x122] sm:$0xff]
  %v490 = vld [vmem:[%s0 + $0x12a] sm:$0xff]
  %v491 = vld [vmem:[%s0 + $0x132] sm:$0xff]
  %v492 = vld [vmem:[%s0 + $0x142] sm:$0xff]
  %v493 = vld [vmem:[%s0 + $0x14a] sm:$0xff]
  %v494 = vld [vmem:[%s0 + $0x152] sm:$0xff]
  %v495 = vld [vmem:[%s0 + $0x162] sm:$0xff]
  %v496 = vld [vmem:[%s0 + $0x16a] sm:$0xff]
  %v497 = vld [vmem:[%s0 + $0x172] sm:$0xff]
  %v498 = vld [vmem:[%s0 + $0x182] sm:$0xff]
  %v499 = vld [vmem:[%s0 + $0x18a] sm:$0xff]
  %v500 = vld [vmem:[%s0 + $0x192] sm:$0xff]
  %v501 = vld [vmem:[%s0 + $0x1a2] sm:$0xff]
  %v502 = vld [vmem:[%s0 + $0x1aa] sm:$0xff]
  %v503 = vld [vmem:[%s0 + $0x1b2] sm:$0xff]
  %v504 = vld [vmem:[%s0 + $0x1c2] sm:$0xff]
  %v505 = vld [vmem:[%s0 + $0x1ca] sm:$0xff]
  %v506 = vld [vmem:[%s0 + $0x1d2] sm:$0xff]
  %v507 = vld [vmem:[%s0 + $0x1e2] sm:$0xff]
  %v508 = vld [vmem:[%s0 + $0x1ea] sm:$0xff]
  %v509 = vld [vmem:[%s0 + $0x1f2] sm:$0xff]
  %v510 = vld [vmem:[%s0 + $0x202] sm:$0xff]
  %v511 = vld [vmem:[%s0 + $0x20a] sm:$0xff]
  %v512 = vld [vmem:[%s0 + $0x212] sm:$0xff]
  %v513 = vld [vmem:[%s0 + $0x222] sm:$0xff]
  %v514 = vld [vmem:[%s0 + $0x22a] sm:$0xff]
  %v515 = vld [vmem:[%s0 + $0x232] sm:$0xff]
  %v516 = vld [vmem:[%s0 + $0x282] sm:$0xff]
  %v517 = vld [vmem:[%s0 + $0x28a] sm:$0xff]
  %v518 = vld [vmem:[%s0 + $0x292] sm:$0xff]
  %v519 = vld [vmem:[%s0 + $0x2a2] sm:$0xff]
  %v520 = vld [vmem:[%s0 + $0x2aa] sm:$0xff]
  %v521 = vld [vmem:[%s0 + $0x2b2] sm:$0xff]
  %v522 = vld [vmem:[%s0 + $0x2c2] sm:$0xff]
  %v523 = vld [vmem:[%s0 + $0x2ca] sm:$0xff]
  %v524 = vld [vmem:[%s0 + $0x2d2] sm:$0xff]
  %v525 = vld [vmem:[%s0 + $0x2e2] sm:$0xff]
  %v526 = vld [vmem:[%s0 + $0x2ea] sm:$0xff]
  %v527 = vld [vmem:[%s0 + $0x2f2] sm:$0xff]
  %v528 = vld [vmem:[%s0 + $0x302] sm:$0xff]
  %v529 = vld [vmem:[%s0 + $0x30a] sm:$0xff]
  %v530 = vld [vmem:[%s0 + $0x312] sm:$0xff]
  %v531 = vld [vmem:[%s0 + $0x322] sm:$0xff]
  %v532 = vld [vmem:[%s0 + $0x32a] sm:$0xff]
  %v533 = vld [vmem:[%s0 + $0x332] sm:$0xff]
  %v534 = vld [vmem:[%s0 + $0x342] sm:$0xff]
  %v535 = vld [vmem:[%s0 + $0x34a] sm:$0xff]
  %v536 = vld [vmem:[%s0 + $0x352] sm:$0xff]
  %v537 = vld [vmem:[%s0 + $0x362] sm:$0xff]
  %v538 = vld [vmem:[%s0 + $0x36a] sm:$0xff]
  %v539 = vld [vmem:[%s0 + $0x372] sm:$0xff]
  %v540 = vld [vmem:[%s0 + $0x382] sm:$0xff]
  %v541 = vld [vmem:[%s0 + $0x38a] sm:$0xff]
  %v542 = vld [vmem:[%s0 + $0x392] sm:$0xff]
  %v543 = vld [vmem:[%s0 + $0x3a2] sm:$0xff]
  %v544 = vld [vmem:[%s0 + $0x3aa] sm:$0xff]
  %v545 = vld [vmem:[%s0 + $0x3b2] sm:$0xff]
  %v546 = vld [vmem:[%s0 + $0x3c2] sm:$0xff]
  %v547 = vld [vmem:[%s0 + $0x3ca] sm:$0xff]
  %v548 = vld [vmem:[%s0 + $0x3d2] sm:$0xff]
  %v549 = vld [vmem:[%s0 + $0x3e2] sm:$0xff]
  %v550 = vld [vmem:[%s0 + $0x3ea] sm:$0xff]
  %v551 = vld [vmem:[%s0 + $0x3f2] sm:$0xff]
  %v552 = vld [vmem:[%s0 + $0x402] sm:$0xff]
  %v553 = vld [vmem:[%s0 + $0x40a] sm:$0xff]
  %v554 = vld [vmem:[%s0 + $0x412] sm:$0xff]
  %v555 = vld [vmem:[%s0 + $0x422] sm:$0xff]
  %v556 = vld [vmem:[%s0 + $0x42a] sm:$0xff]
  %v557 = vld [vmem:[%s0 + $0x432] sm:$0xff]
  %v558 = vld [vmem:[%s0 + $0x442] sm:$0xff]
  %v559 = vld [vmem:[%s0 + $0x44a] sm:$0xff]
  %v560 = vld [vmem:[%s0 + $0x452] sm:$0xff]
  %v561 = vld [vmem:[%s0 + $0x462] sm:$0xff]
  %v562 = vld [vmem:[%s0 + $0x46a] sm:$0xff]
  %v563 = vld [vmem:[%s0 + $0x472] sm:$0xff]
  %v564 = vld [vmem:[%s0 + $0x482] sm:$0xff]
  %v565 = vld [vmem:[%s0 + $0x48a] sm:$0xff]
  %v566 = vld [vmem:[%s0 + $0x492] sm:$0xff]
  %v567 = vld [vmem:[%s0 + $0x4a2] sm:$0xff]
  %v568 = vld [vmem:[%s0 + $0x4aa] sm:$0xff]
  %v569 = vld [vmem:[%s0 + $0x4b2] sm:$0xff]
  %v570 = vpack.c.bf16 %v463, %v462
  %v571 = vpack.c.bf16 %v465, %v464
  %v572 = vpack.c.bf16 %v467, %v466
  %v573 = vpack.c.bf16 %v469, %v468
  %v574 = vpack.c.bf16 %v471, %v470
  %v575 = vpack.c.bf16 %v473, %v472
  %v576 = vpack.c.bf16 %v475, %v474
  %v577 = vpack.c.bf16 %v477, %v476
  %v578 = vpack.c.bf16 %v479, %v478
  %v579 = vpack.c.bf16 %v481, %v480
  %v580 = vpack.c.bf16 %v483, %v482
  %v581 = vpack.c.bf16 %v485, %v484
  %v582 = vpack.c.bf16 %v487, %v486
  %v583 = vpack.c.bf16 %v489, %v488
  %v584 = vpack.c.bf16 %v491, %v490
  %v585 = vpack.c.bf16 %v493, %v492
  %v586 = vpack.c.bf16 %v495, %v494
  %v587 = vpack.c.bf16 %v497, %v496
  %v588 = vpack.c.bf16 %v499, %v498
  %v589 = vpack.c.bf16 %v501, %v500
  %v590 = vpack.c.bf16 %v503, %v502
  %v591 = vpack.c.bf16 %v505, %v504
  %v592 = vpack.c.bf16 %v507, %v506
  %v593 = vpack.c.bf16 %v509, %v508
  %v594 = vpack.c.bf16 %v511, %v510
  %v595 = vpack.c.bf16 %v513, %v512
  %v596 = vpack.c.bf16 %v515, %v514
  %v597 = vpack.c.bf16 %v517, %v516
  %v598 = vpack.c.bf16 %v519, %v518
  %v599 = vpack.c.bf16 %v521, %v520
  %v600 = vpack.c.bf16 %v523, %v522
  %v601 = vpack.c.bf16 %v525, %v524
  %v602 = vpack.c.bf16 %v527, %v526
  %v603 = vpack.c.bf16 %v529, %v528
  %v604 = vpack.c.bf16 %v531, %v530
  %v605 = vpack.c.bf16 %v533, %v532
  %v606 = vpack.c.bf16 %v535, %v534
  %v607 = vpack.c.bf16 %v537, %v536
  %v608 = vpack.c.bf16 %v539, %v538
  %v609 = vpack.c.bf16 %v541, %v540
  %v610 = vpack.c.bf16 %v543, %v542
  %v611 = vpack.c.bf16 %v545, %v544
  %v612 = vpack.c.bf16 %v547, %v546
  %v613 = vpack.c.bf16 %v549, %v548
  %v614 = vpack.c.bf16 %v551, %v550
  %v615 = vpack.c.bf16 %v553, %v552
  %v616 = vpack.c.bf16 %v555, %v554
  %v617 = vpack.c.bf16 %v557, %v556
  %v618 = vpack.c.bf16 %v559, %v558
  %v619 = vpack.c.bf16 %v561, %v560
  %v620 = vpack.c.bf16 %v563, %v562
  %v621 = vpack.c.bf16 %v565, %v564
  %v622 = vpack.c.bf16 %v567, %v566
  %v623 = vpack.c.bf16 %v569, %v568
  %v624 = vld [vmem:[%s2] sm:$0xf]
  %v625 = vld [vmem:[%s2 + $0x4] sm:$0xf]
  %v626 = vld [vmem:[%s2 + $0x8] sm:$0xf]
  %v627 = vld [vmem:[%s2 + $0xc] sm:$0xf]
  %v628 = vld [vmem:[%s2 + $0x10] sm:$0xf]
  %v629 = vld [vmem:[%s2 + $0x14] sm:$0xf]
  %v630 = vld [vmem:[%s2 + $0x18] sm:$0xf]
  %v631 = vld [vmem:[%s2 + $0x1c] sm:$0xf]
  %v632 = vld [vmem:[%s2 + $0x20] sm:$0xf]
  %v633 = vld [vmem:[%s2 + $0x24] sm:$0xf]
  %v634 = vld [vmem:[%s2 + $0x28] sm:$0xf]
  %v635 = vld [vmem:[%s2 + $0x2c] sm:$0xf]
  %v636 = vld [vmem:[%s2 + $0x30] sm:$0xf]
  %v637 = vld [vmem:[%s2 + $0x34] sm:$0xf]
  %v638 = vld [vmem:[%s2 + $0x38] sm:$0xf]
  %v639 = vld [vmem:[%s2 + $0x3c] sm:$0xf]
  %v640 = vld [vmem:[%s2 + $0x40] sm:$0xf]
  %v641 = vld [vmem:[%s2 + $0x44] sm:$0xf]
  %v642 = vld [vmem:[%s2 + $0x48] sm:$0xf]
  %v643 = vld [vmem:[%s2 + $0x4c] sm:$0xf]
  %v644 = vld [vmem:[%s2 + $0x50] sm:$0xf]
  %v645 = vld [vmem:[%s2 + $0x54] sm:$0xf]
  %v646 = vld [vmem:[%s2 + $0x58] sm:$0xf]
  %v647 = vld [vmem:[%s2 + $0x5c] sm:$0xf]
  %v648 = vld [vmem:[%s2 + $0x60] sm:$0xf]
  %v649 = vld [vmem:[%s2 + $0x64] sm:$0xf]
  %v650 = vld [vmem:[%s2 + $0x68] sm:$0xf]
  %v651 = vld [vmem:[%s2 + $0x6c] sm:$0xf]
  %v652 = vld [vmem:[%s2 + $0x70] sm:$0xf]
  %v653 = vld [vmem:[%s2 + $0x74] sm:$0xf]
  %v654 = vld [vmem:[%s2 + $0x78] sm:$0xf]
  %v655 = vld [vmem:[%s2 + $0x7c] sm:$0xf]
  %v656 = vld [vmem:[%s2 + $0x80] sm:$0xf]
  %v657 = vld [vmem:[%s2 + $0x84] sm:$0xf]
  %v658 = vld [vmem:[%s2 + $0x88] sm:$0xf]
  %v659 = vld [vmem:[%s2 + $0x8c] sm:$0xf]
  %v660 = vld [vmem:[%s2 + $0x90] sm:$0xf]
  %v661 = vld [vmem:[%s2 + $0x94] sm:$0xf]
  %v662 = vld [vmem:[%s2 + $0x98] sm:$0xf]
  %v663 = vld [vmem:[%s2 + $0x9c] sm:$0xf]
  %v664 = vld [vmem:[%s2 + $0xa0] sm:$0xf]
  %v665 = vld [vmem:[%s2 + $0xa4] sm:$0xf]
  %v666 = vld [vmem:[%s2 + $0xa8] sm:$0xf]
  %v667 = vld [vmem:[%s2 + $0xac] sm:$0xf]
  %v668 = vld [vmem:[%s2 + $0xb0] sm:$0xf]
  %v669 = vld [vmem:[%s2 + $0xb4] sm:$0xf]
  %v670 = vld [vmem:[%s2 + $0xb8] sm:$0xf]
  %v671 = vld [vmem:[%s2 + $0xbc] sm:$0xf]
  %s672 = scalar_lea.vmem %s0, 32
  %v673 = vld [vmem:[%s672] sm:$0xff]
  %v674 = vld [vmem:[%s672 + $0x8] sm:$0xff]
  %v675 = vld [vmem:[%s672 + $0x10] sm:$0xff]
  %v676 = vld [vmem:[%s672 + $0x20] sm:$0xff]
  %v677 = vld [vmem:[%s672 + $0x28] sm:$0xff]
  %v678 = vld [vmem:[%s672 + $0x30] sm:$0xff]
  %v679 = vld [vmem:[%s672 + $0x40] sm:$0xff]
  %v680 = vld [vmem:[%s672 + $0x48] sm:$0xff]
  %v681 = vld [vmem:[%s672 + $0x50] sm:$0xff]
  %v682 = vld [vmem:[%s672 + $0x60] sm:$0xff]
  %v683 = vld [vmem:[%s672 + $0x68] sm:$0xff]
  %v684 = vld [vmem:[%s672 + $0x70] sm:$0xff]
  %v685 = vld [vmem:[%s672 + $0x80] sm:$0xff]
  %v686 = vld [vmem:[%s672 + $0x88] sm:$0xff]
  %v687 = vld [vmem:[%s672 + $0x90] sm:$0xff]
  %v688 = vld [vmem:[%s672 + $0xa0] sm:$0xff]
  %v689 = vld [vmem:[%s672 + $0xa8] sm:$0xff]
  %v690 = vld [vmem:[%s672 + $0xb0] sm:$0xff]
  %v691 = vld [vmem:[%s672 + $0xc0] sm:$0xff]
  %v692 = vld [vmem:[%s672 + $0xc8] sm:$0xff]
  %v693 = vld [vmem:[%s672 + $0xd0] sm:$0xff]
  %v694 = vld [vmem:[%s672 + $0xe0] sm:$0xff]
  %v695 = vld [vmem:[%s672 + $0xe8] sm:$0xff]
  %v696 = vld [vmem:[%s672 + $0xf0] sm:$0xff]
  %v697 = vld [vmem:[%s672 + $0x100] sm:$0xff]
  %v698 = vld [vmem:[%s672 + $0x108] sm:$0xff]
  %v699 = vld [vmem:[%s672 + $0x110] sm:$0xff]
  %v700 = vld [vmem:[%s672 + $0x120] sm:$0xff]
  %v701 = vld [vmem:[%s672 + $0x128] sm:$0xff]
  %v702 = vld [vmem:[%s672 + $0x130] sm:$0xff]
  %v703 = vld [vmem:[%s672 + $0x140] sm:$0xff]
  %v704 = vld [vmem:[%s672 + $0x148] sm:$0xff]
  %v705 = vld [vmem:[%s672 + $0x150] sm:$0xff]
  %v706 = vld [vmem:[%s672 + $0x160] sm:$0xff]
  %v707 = vld [vmem:[%s672 + $0x168] sm:$0xff]
  %v708 = vld [vmem:[%s672 + $0x170] sm:$0xff]
  %v709 = vld [vmem:[%s672 + $0x180] sm:$0xff]
  %v710 = vld [vmem:[%s672 + $0x188] sm:$0xff]
  %v711 = vld [vmem:[%s672 + $0x190] sm:$0xff]
  %v712 = vld [vmem:[%s672 + $0x1a0] sm:$0xff]
  %v713 = vld [vmem:[%s672 + $0x1a8] sm:$0xff]
  %v714 = vld [vmem:[%s672 + $0x1b0] sm:$0xff]
  %v715 = vld [vmem:[%s672 + $0x1c0] sm:$0xff]
  %v716 = vld [vmem:[%s672 + $0x1c8] sm:$0xff]
  %v717 = vld [vmem:[%s672 + $0x1d0] sm:$0xff]
  %v718 = vld [vmem:[%s672 + $0x1e0] sm:$0xff]
  %v719 = vld [vmem:[%s672 + $0x1e8] sm:$0xff]
  %v720 = vld [vmem:[%s672 + $0x1f0] sm:$0xff]
  %v721 = vld [vmem:[%s672 + $0x200] sm:$0xff]
  %v722 = vld [vmem:[%s672 + $0x208] sm:$0xff]
  %v723 = vld [vmem:[%s672 + $0x210] sm:$0xff]
  %v724 = vld [vmem:[%s672 + $0x220] sm:$0xff]
  %v725 = vld [vmem:[%s672 + $0x228] sm:$0xff]
  %v726 = vld [vmem:[%s672 + $0x230] sm:$0xff]
  %v727 = vld [vmem:[%s672 + $0x280] sm:$0xff]
  %v728 = vld [vmem:[%s672 + $0x288] sm:$0xff]
  %v729 = vld [vmem:[%s672 + $0x290] sm:$0xff]
  %v730 = vld [vmem:[%s672 + $0x2a0] sm:$0xff]
  %v731 = vld [vmem:[%s672 + $0x2a8] sm:$0xff]
  %v732 = vld [vmem:[%s672 + $0x2b0] sm:$0xff]
  %v733 = vld [vmem:[%s672 + $0x2c0] sm:$0xff]
  %v734 = vld [vmem:[%s672 + $0x2c8] sm:$0xff]
  %v735 = vld [vmem:[%s672 + $0x2d0] sm:$0xff]
  %v736 = vld [vmem:[%s672 + $0x2e0] sm:$0xff]
  %v737 = vld [vmem:[%s672 + $0x2e8] sm:$0xff]
  %v738 = vld [vmem:[%s672 + $0x2f0] sm:$0xff]
  %v739 = vld [vmem:[%s672 + $0x300] sm:$0xff]
  %v740 = vld [vmem:[%s672 + $0x308] sm:$0xff]
  %v741 = vld [vmem:[%s672 + $0x310] sm:$0xff]
  %v742 = vld [vmem:[%s672 + $0x320] sm:$0xff]
  %v743 = vld [vmem:[%s672 + $0x328] sm:$0xff]
  %v744 = vld [vmem:[%s672 + $0x330] sm:$0xff]
  %v745 = vld [vmem:[%s672 + $0x340] sm:$0xff]
  %v746 = vld [vmem:[%s672 + $0x348] sm:$0xff]
  %v747 = vld [vmem:[%s672 + $0x350] sm:$0xff]
  %v748 = vld [vmem:[%s672 + $0x360] sm:$0xff]
  %v749 = vld [vmem:[%s672 + $0x368] sm:$0xff]
  %v750 = vld [vmem:[%s672 + $0x370] sm:$0xff]
  %v751 = vld [vmem:[%s672 + $0x380] sm:$0xff]
  %v752 = vld [vmem:[%s672 + $0x388] sm:$0xff]
  %v753 = vld [vmem:[%s672 + $0x390] sm:$0xff]
  %v754 = vld [vmem:[%s672 + $0x3a0] sm:$0xff]
  %v755 = vld [vmem:[%s672 + $0x3a8] sm:$0xff]
  %v756 = vld [vmem:[%s672 + $0x3b0] sm:$0xff]
  %v757 = vld [vmem:[%s672 + $0x3c0] sm:$0xff]
  %v758 = vld [vmem:[%s672 + $0x3c8] sm:$0xff]
  %v759 = vld [vmem:[%s672 + $0x3d0] sm:$0xff]
  %v760 = vld [vmem:[%s672 + $0x3e0] sm:$0xff]
  %v761 = vld [vmem:[%s672 + $0x3e8] sm:$0xff]
  %v762 = vld [vmem:[%s672 + $0x3f0] sm:$0xff]
  %v763 = vld [vmem:[%s672 + $0x400] sm:$0xff]
  %v764 = vld [vmem:[%s672 + $0x408] sm:$0xff]
  %v765 = vld [vmem:[%s672 + $0x410] sm:$0xff]
  %v766 = vld [vmem:[%s672 + $0x420] sm:$0xff]
  %v767 = vld [vmem:[%s672 + $0x428] sm:$0xff]
  %v768 = vld [vmem:[%s672 + $0x430] sm:$0xff]
  %v769 = vld [vmem:[%s672 + $0x440] sm:$0xff]
  %v770 = vld [vmem:[%s672 + $0x448] sm:$0xff]
  %v771 = vld [vmem:[%s672 + $0x450] sm:$0xff]
  %v772 = vld [vmem:[%s672 + $0x460] sm:$0xff]
  %v773 = vld [vmem:[%s672 + $0x468] sm:$0xff]
  %v774 = vld [vmem:[%s672 + $0x470] sm:$0xff]
  %v775 = vld [vmem:[%s672 + $0x480] sm:$0xff]
  %v776 = vld [vmem:[%s672 + $0x488] sm:$0xff]
  %v777 = vld [vmem:[%s672 + $0x490] sm:$0xff]
  %v778 = vld [vmem:[%s672 + $0x4a0] sm:$0xff]
  %v779 = vld [vmem:[%s672 + $0x4a8] sm:$0xff]
  %v780 = vld [vmem:[%s672 + $0x4b0] sm:$0xff]
  %v781 = vpack.c.bf16 %v674, %v673
  %v782 = vpack.c.bf16 %v676, %v675
  %v783 = vpack.c.bf16 %v678, %v677
  %v784 = vpack.c.bf16 %v680, %v679
  %v785 = vpack.c.bf16 %v682, %v681
  %v786 = vpack.c.bf16 %v684, %v683
  %v787 = vpack.c.bf16 %v686, %v685
  %v788 = vpack.c.bf16 %v688, %v687
  %v789 = vpack.c.bf16 %v690, %v689
  %v790 = vpack.c.bf16 %v692, %v691
  %v791 = vpack.c.bf16 %v694, %v693
  %v792 = vpack.c.bf16 %v696, %v695
  %v793 = vpack.c.bf16 %v698, %v697
  %v794 = vpack.c.bf16 %v700, %v699
  %v795 = vpack.c.bf16 %v702, %v701
  %v796 = vpack.c.bf16 %v704, %v703
  %v797 = vpack.c.bf16 %v706, %v705
  %v798 = vpack.c.bf16 %v708, %v707
  %v799 = vpack.c.bf16 %v710, %v709
  %v800 = vpack.c.bf16 %v712, %v711
  %v801 = vpack.c.bf16 %v714, %v713
  %v802 = vpack.c.bf16 %v716, %v715
  %v803 = vpack.c.bf16 %v718, %v717
  %v804 = vpack.c.bf16 %v720, %v719
  %v805 = vpack.c.bf16 %v722, %v721
  %v806 = vpack.c.bf16 %v724, %v723
  %v807 = vpack.c.bf16 %v726, %v725
  %v808 = vpack.c.bf16 %v728, %v727
  %v809 = vpack.c.bf16 %v730, %v729
  %v810 = vpack.c.bf16 %v732, %v731
  %v811 = vpack.c.bf16 %v734, %v733
  %v812 = vpack.c.bf16 %v736, %v735
  %v813 = vpack.c.bf16 %v738, %v737
  %v814 = vpack.c.bf16 %v740, %v739
  %v815 = vpack.c.bf16 %v742, %v741
  %v816 = vpack.c.bf16 %v744, %v743
  %v817 = vpack.c.bf16 %v746, %v745
  %v818 = vpack.c.bf16 %v748, %v747
  %v819 = vpack.c.bf16 %v750, %v749
  %v820 = vpack.c.bf16 %v752, %v751
  %v821 = vpack.c.bf16 %v754, %v753
  %v822 = vpack.c.bf16 %v756, %v755
  %v823 = vpack.c.bf16 %v758, %v757
  %v824 = vpack.c.bf16 %v760, %v759
  %v825 = vpack.c.bf16 %v762, %v761
  %v826 = vpack.c.bf16 %v764, %v763
  %v827 = vpack.c.bf16 %v766, %v765
  %v828 = vpack.c.bf16 %v768, %v767
  %v829 = vpack.c.bf16 %v770, %v769
  %v830 = vpack.c.bf16 %v772, %v771
  %v831 = vpack.c.bf16 %v774, %v773
  %v832 = vpack.c.bf16 %v776, %v775
  %v833 = vpack.c.bf16 %v778, %v777
  %v834 = vpack.c.bf16 %v780, %v779
  %v835 = vld [vmem:[%s672 + $0x1] sm:$0xff]
  %v836 = vld [vmem:[%s672 + $0x9] sm:$0xff]
  %v837 = vld [vmem:[%s672 + $0x11] sm:$0xff]
  %v838 = vld [vmem:[%s672 + $0x21] sm:$0xff]
  %v839 = vld [vmem:[%s672 + $0x29] sm:$0xff]
  %v840 = vld [vmem:[%s672 + $0x31] sm:$0xff]
  %v841 = vld [vmem:[%s672 + $0x41] sm:$0xff]
  %v842 = vld [vmem:[%s672 + $0x49] sm:$0xff]
  %v843 = vld [vmem:[%s672 + $0x51] sm:$0xff]
  %v844 = vld [vmem:[%s672 + $0x61] sm:$0xff]
  %v845 = vld [vmem:[%s672 + $0x69] sm:$0xff]
  %v846 = vld [vmem:[%s672 + $0x71] sm:$0xff]
  %v847 = vld [vmem:[%s672 + $0x81] sm:$0xff]
  %v848 = vld [vmem:[%s672 + $0x89] sm:$0xff]
  %v849 = vld [vmem:[%s672 + $0x91] sm:$0xff]
  %v850 = vld [vmem:[%s672 + $0xa1] sm:$0xff]
  %v851 = vld [vmem:[%s672 + $0xa9] sm:$0xff]
  %v852 = vld [vmem:[%s672 + $0xb1] sm:$0xff]
  %v853 = vld [vmem:[%s672 + $0xc1] sm:$0xff]
  %v854 = vld [vmem:[%s672 + $0xc9] sm:$0xff]
  %v855 = vld [vmem:[%s672 + $0xd1] sm:$0xff]
  %v856 = vld [vmem:[%s672 + $0xe1] sm:$0xff]
  %v857 = vld [vmem:[%s672 + $0xe9] sm:$0xff]
  %v858 = vld [vmem:[%s672 + $0xf1] sm:$0xff]
  %v859 = vld [vmem:[%s672 + $0x101] sm:$0xff]
  %v860 = vld [vmem:[%s672 + $0x109] sm:$0xff]
  %v861 = vld [vmem:[%s672 + $0x111] sm:$0xff]
  %v862 = vld [vmem:[%s672 + $0x121] sm:$0xff]
  %v863 = vld [vmem:[%s672 + $0x129] sm:$0xff]
  %v864 = vld [vmem:[%s672 + $0x131] sm:$0xff]
  %v865 = vld [vmem:[%s672 + $0x141] sm:$0xff]
  %v866 = vld [vmem:[%s672 + $0x149] sm:$0xff]
  %v867 = vld [vmem:[%s672 + $0x151] sm:$0xff]
  %v868 = vld [vmem:[%s672 + $0x161] sm:$0xff]
  %v869 = vld [vmem:[%s672 + $0x169] sm:$0xff]
  %v870 = vld [vmem:[%s672 + $0x171] sm:$0xff]
  %v871 = vld [vmem:[%s672 + $0x181] sm:$0xff]
  %v872 = vld [vmem:[%s672 + $0x189] sm:$0xff]
  %v873 = vld [vmem:[%s672 + $0x191] sm:$0xff]
  %v874 = vld [vmem:[%s672 + $0x1a1] sm:$0xff]
  %v875 = vld [vmem:[%s672 + $0x1a9] sm:$0xff]
  %v876 = vld [vmem:[%s672 + $0x1b1] sm:$0xff]
  %v877 = vld [vmem:[%s672 + $0x1c1] sm:$0xff]
  %v878 = vld [vmem:[%s672 + $0x1c9] sm:$0xff]
  %v879 = vld [vmem:[%s672 + $0x1d1] sm:$0xff]
  %v880 = vld [vmem:[%s672 + $0x1e1] sm:$0xff]
  %v881 = vld [vmem:[%s672 + $0x1e9] sm:$0xff]
  %v882 = vld [vmem:[%s672 + $0x1f1] sm:$0xff]
  %v883 = vld [vmem:[%s672 + $0x201] sm:$0xff]
  %v884 = vld [vmem:[%s672 + $0x209] sm:$0xff]
  %v885 = vld [vmem:[%s672 + $0x211] sm:$0xff]
  %v886 = vld [vmem:[%s672 + $0x221] sm:$0xff]
  %v887 = vld [vmem:[%s672 + $0x229] sm:$0xff]
  %v888 = vld [vmem:[%s672 + $0x231] sm:$0xff]
  %v889 = vld [vmem:[%s672 + $0x281] sm:$0xff]
  %v890 = vld [vmem:[%s672 + $0x289] sm:$0xff]
  %v891 = vld [vmem:[%s672 + $0x291] sm:$0xff]
  %v892 = vld [vmem:[%s672 + $0x2a1] sm:$0xff]
  %v893 = vld [vmem:[%s672 + $0x2a9] sm:$0xff]
  %v894 = vld [vmem:[%s672 + $0x2b1] sm:$0xff]
  %v895 = vld [vmem:[%s672 + $0x2c1] sm:$0xff]
  %v896 = vld [vmem:[%s672 + $0x2c9] sm:$0xff]
  %v897 = vld [vmem:[%s672 + $0x2d1] sm:$0xff]
  %v898 = vld [vmem:[%s672 + $0x2e1] sm:$0xff]
  %v899 = vld [vmem:[%s672 + $0x2e9] sm:$0xff]
  %v900 = vld [vmem:[%s672 + $0x2f1] sm:$0xff]
  %v901 = vld [vmem:[%s672 + $0x301] sm:$0xff]
  %v902 = vld [vmem:[%s672 + $0x309] sm:$0xff]
  %v903 = vld [vmem:[%s672 + $0x311] sm:$0xff]
  %v904 = vld [vmem:[%s672 + $0x321] sm:$0xff]
  %v905 = vld [vmem:[%s672 + $0x329] sm:$0xff]
  %v906 = vld [vmem:[%s672 + $0x331] sm:$0xff]
  %v907 = vld [vmem:[%s672 + $0x341] sm:$0xff]
  %v908 = vld [vmem:[%s672 + $0x349] sm:$0xff]
  %v909 = vld [vmem:[%s672 + $0x351] sm:$0xff]
  %v910 = vld [vmem:[%s672 + $0x361] sm:$0xff]
  %v911 = vld [vmem:[%s672 + $0x369] sm:$0xff]
  %v912 = vld [vmem:[%s672 + $0x371] sm:$0xff]
  %v913 = vld [vmem:[%s672 + $0x381] sm:$0xff]
  %v914 = vld [vmem:[%s672 + $0x389] sm:$0xff]
  %v915 = vld [vmem:[%s672 + $0x391] sm:$0xff]
  %v916 = vld [vmem:[%s672 + $0x3a1] sm:$0xff]
  %v917 = vld [vmem:[%s672 + $0x3a9] sm:$0xff]
  %v918 = vld [vmem:[%s672 + $0x3b1] sm:$0xff]
  %v919 = vld [vmem:[%s672 + $0x3c1] sm:$0xff]
  %v920 = vld [vmem:[%s672 + $0x3c9] sm:$0xff]
  %v921 = vld [vmem:[%s672 + $0x3d1] sm:$0xff]
  %v922 = vld [vmem:[%s672 + $0x3e1] sm:$0xff]
  %v923 = vld [vmem:[%s672 + $0x3e9] sm:$0xff]
  %v924 = vld [vmem:[%s672 + $0x3f1] sm:$0xff]
  %v925 = vld [vmem:[%s672 + $0x401] sm:$0xff]
  %v926 = vld [vmem:[%s672 + $0x409] sm:$0xff]
  %v927 = vld [vmem:[%s672 + $0x411] sm:$0xff]
  %v928 = vld [vmem:[%s672 + $0x421] sm:$0xff]
  %v929 = vld [vmem:[%s672 + $0x429] sm:$0xff]
  %v930 = vld [vmem:[%s672 + $0x431] sm:$0xff]
  %v931 = vld [vmem:[%s672 + $0x441] sm:$0xff]
  %v932 = vld [vmem:[%s672 + $0x449] sm:$0xff]
  %v933 = vld [vmem:[%s672 + $0x451] sm:$0xff]
  %v934 = vld [vmem:[%s672 + $0x461] sm:$0xff]
  %v935 = vld [vmem:[%s672 + $0x469] sm:$0xff]
  %v936 = vld [vmem:[%s672 + $0x471] sm:$0xff]
  %v937 = vld [vmem:[%s672 + $0x481] sm:$0xff]
  %v938 = vld [vmem:[%s672 + $0x489] sm:$0xff]
  %v939 = vld [vmem:[%s672 + $0x491] sm:$0xff]
  %v940 = vld [vmem:[%s672 + $0x4a1] sm:$0xff]
  %v941 = vld [vmem:[%s672 + $0x4a9] sm:$0xff]
  %v942 = vld [vmem:[%s672 + $0x4b1] sm:$0xff]
  %v943 = vpack.c.bf16 %v836, %v835
  %v944 = vpack.c.bf16 %v838, %v837
  %v945 = vpack.c.bf16 %v840, %v839
  %v946 = vpack.c.bf16 %v842, %v841
  %v947 = vpack.c.bf16 %v844, %v843
  %v948 = vpack.c.bf16 %v846, %v845
  %v949 = vpack.c.bf16 %v848, %v847
  %v950 = vpack.c.bf16 %v850, %v849
  %v951 = vpack.c.bf16 %v852, %v851
  %v952 = vpack.c.bf16 %v854, %v853
  %v953 = vpack.c.bf16 %v856, %v855
  %v954 = vpack.c.bf16 %v858, %v857
  %v955 = vpack.c.bf16 %v860, %v859
  %v956 = vpack.c.bf16 %v862, %v861
  %v957 = vpack.c.bf16 %v864, %v863
  %v958 = vpack.c.bf16 %v866, %v865
  %v959 = vpack.c.bf16 %v868, %v867
  %v960 = vpack.c.bf16 %v870, %v869
  %v961 = vpack.c.bf16 %v872, %v871
  %v962 = vpack.c.bf16 %v874, %v873
  %v963 = vpack.c.bf16 %v876, %v875
  %v964 = vpack.c.bf16 %v878, %v877
  %v965 = vpack.c.bf16 %v880, %v879
  %v966 = vpack.c.bf16 %v882, %v881
  %v967 = vpack.c.bf16 %v884, %v883
  %v968 = vpack.c.bf16 %v886, %v885
  %v969 = vpack.c.bf16 %v888, %v887
  %v970 = vpack.c.bf16 %v890, %v889
  %v971 = vpack.c.bf16 %v892, %v891
  %v972 = vpack.c.bf16 %v894, %v893
  %v973 = vpack.c.bf16 %v896, %v895
  %v974 = vpack.c.bf16 %v898, %v897
  %v975 = vpack.c.bf16 %v900, %v899
  %v976 = vpack.c.bf16 %v902, %v901
  %v977 = vpack.c.bf16 %v904, %v903
  %v978 = vpack.c.bf16 %v906, %v905
  %v979 = vpack.c.bf16 %v908, %v907
  %v980 = vpack.c.bf16 %v910, %v909
  %v981 = vpack.c.bf16 %v912, %v911
  %v982 = vpack.c.bf16 %v914, %v913
  %v983 = vpack.c.bf16 %v916, %v915
  %v984 = vpack.c.bf16 %v918, %v917
  %v985 = vpack.c.bf16 %v920, %v919
  %v986 = vpack.c.bf16 %v922, %v921
  %v987 = vpack.c.bf16 %v924, %v923
  %v988 = vpack.c.bf16 %v926, %v925
  %v989 = vpack.c.bf16 %v928, %v927
  %v990 = vpack.c.bf16 %v930, %v929
  %v991 = vpack.c.bf16 %v932, %v931
  %v992 = vpack.c.bf16 %v934, %v933
  %v993 = vpack.c.bf16 %v936, %v935
  %v994 = vpack.c.bf16 %v938, %v937
  %v995 = vpack.c.bf16 %v940, %v939
  %v996 = vpack.c.bf16 %v942, %v941
  %v997 = vld [vmem:[%s672 + $0x2] sm:$0xff]
  %v998 = vld [vmem:[%s672 + $0xa] sm:$0xff]
  %v999 = vld [vmem:[%s672 + $0x12] sm:$0xff]
  %v1000 = vld [vmem:[%s672 + $0x22] sm:$0xff]
  %v1001 = vld [vmem:[%s672 + $0x2a] sm:$0xff]
  %v1002 = vld [vmem:[%s672 + $0x32] sm:$0xff]
  %v1003 = vld [vmem:[%s672 + $0x42] sm:$0xff]
  %v1004 = vld [vmem:[%s672 + $0x4a] sm:$0xff]
  %v1005 = vld [vmem:[%s672 + $0x52] sm:$0xff]
  %v1006 = vld [vmem:[%s672 + $0x62] sm:$0xff]
  %v1007 = vld [vmem:[%s672 + $0x6a] sm:$0xff]
  %v1008 = vld [vmem:[%s672 + $0x72] sm:$0xff]
  %v1009 = vld [vmem:[%s672 + $0x82] sm:$0xff]
  %v1010 = vld [vmem:[%s672 + $0x8a] sm:$0xff]
  %v1011 = vld [vmem:[%s672 + $0x92] sm:$0xff]
  %v1012 = vld [vmem:[%s672 + $0xa2] sm:$0xff]
  %v1013 = vld [vmem:[%s672 + $0xaa] sm:$0xff]
  %v1014 = vld [vmem:[%s672 + $0xb2] sm:$0xff]
  %v1015 = vld [vmem:[%s672 + $0xc2] sm:$0xff]
  %v1016 = vld [vmem:[%s672 + $0xca] sm:$0xff]
  %v1017 = vld [vmem:[%s672 + $0xd2] sm:$0xff]
  %v1018 = vld [vmem:[%s672 + $0xe2] sm:$0xff]
  %v1019 = vld [vmem:[%s672 + $0xea] sm:$0xff]
  %v1020 = vld [vmem:[%s672 + $0xf2] sm:$0xff]
  %v1021 = vld [vmem:[%s672 + $0x102] sm:$0xff]
  %v1022 = vld [vmem:[%s672 + $0x10a] sm:$0xff]
  %v1023 = vld [vmem:[%s672 + $0x112] sm:$0xff]
  %v1024 = vld [vmem:[%s672 + $0x122] sm:$0xff]
  %v1025 = vld [vmem:[%s672 + $0x12a] sm:$0xff]
  %v1026 = vld [vmem:[%s672 + $0x132] sm:$0xff]
  %v1027 = vld [vmem:[%s672 + $0x142] sm:$0xff]
  %v1028 = vld [vmem:[%s672 + $0x14a] sm:$0xff]
  %v1029 = vld [vmem:[%s672 + $0x152] sm:$0xff]
  %v1030 = vld [vmem:[%s672 + $0x162] sm:$0xff]
  %v1031 = vld [vmem:[%s672 + $0x16a] sm:$0xff]
  %v1032 = vld [vmem:[%s672 + $0x172] sm:$0xff]
  %v1033 = vld [vmem:[%s672 + $0x182] sm:$0xff]
  %v1034 = vld [vmem:[%s672 + $0x18a] sm:$0xff]
  %v1035 = vld [vmem:[%s672 + $0x192] sm:$0xff]
  %v1036 = vld [vmem:[%s672 + $0x1a2] sm:$0xff]
  %v1037 = vld [vmem:[%s672 + $0x1aa] sm:$0xff]
  %v1038 = vld [vmem:[%s672 + $0x1b2] sm:$0xff]
  %v1039 = vld [vmem:[%s672 + $0x1c2] sm:$0xff]
  %v1040 = vld [vmem:[%s672 + $0x1ca] sm:$0xff]
  %v1041 = vld [vmem:[%s672 + $0x1d2] sm:$0xff]
  %v1042 = vld [vmem:[%s672 + $0x1e2] sm:$0xff]
  %v1043 = vld [vmem:[%s672 + $0x1ea] sm:$0xff]
  %v1044 = vld [vmem:[%s672 + $0x1f2] sm:$0xff]
  %v1045 = vld [vmem:[%s672 + $0x202] sm:$0xff]
  %v1046 = vld [vmem:[%s672 + $0x20a] sm:$0xff]
  %v1047 = vld [vmem:[%s672 + $0x212] sm:$0xff]
  %v1048 = vld [vmem:[%s672 + $0x222] sm:$0xff]
  %v1049 = vld [vmem:[%s672 + $0x22a] sm:$0xff]
  %v1050 = vld [vmem:[%s672 + $0x232] sm:$0xff]
  %v1051 = vld [vmem:[%s672 + $0x282] sm:$0xff]
  %v1052 = vld [vmem:[%s672 + $0x28a] sm:$0xff]
  %v1053 = vld [vmem:[%s672 + $0x292] sm:$0xff]
  %v1054 = vld [vmem:[%s672 + $0x2a2] sm:$0xff]
  %v1055 = vld [vmem:[%s672 + $0x2aa] sm:$0xff]
  %v1056 = vld [vmem:[%s672 + $0x2b2] sm:$0xff]
  %v1057 = vld [vmem:[%s672 + $0x2c2] sm:$0xff]
  %v1058 = vld [vmem:[%s672 + $0x2ca] sm:$0xff]
  %v1059 = vld [vmem:[%s672 + $0x2d2] sm:$0xff]
  %v1060 = vld [vmem:[%s672 + $0x2e2] sm:$0xff]
  %v1061 = vld [vmem:[%s672 + $0x2ea] sm:$0xff]
  %v1062 = vld [vmem:[%s672 + $0x2f2] sm:$0xff]
  %v1063 = vld [vmem:[%s672 + $0x302] sm:$0xff]
  %v1064 = vld [vmem:[%s672 + $0x30a] sm:$0xff]
  %v1065 = vld [vmem:[%s672 + $0x312] sm:$0xff]
  %v1066 = vld [vmem:[%s672 + $0x322] sm:$0xff]
  %v1067 = vld [vmem:[%s672 + $0x32a] sm:$0xff]
  %v1068 = vld [vmem:[%s672 + $0x332] sm:$0xff]
  %v1069 = vld [vmem:[%s672 + $0x342] sm:$0xff]
  %v1070 = vld [vmem:[%s672 + $0x34a] sm:$0xff]
  %v1071 = vld [vmem:[%s672 + $0x352] sm:$0xff]
  %v1072 = vld [vmem:[%s672 + $0x362] sm:$0xff]
  %v1073 = vld [vmem:[%s672 + $0x36a] sm:$0xff]
  %v1074 = vld [vmem:[%s672 + $0x372] sm:$0xff]
  %v1075 = vld [vmem:[%s672 + $0x382] sm:$0xff]
  %v1076 = vld [vmem:[%s672 + $0x38a] sm:$0xff]
  %v1077 = vld [vmem:[%s672 + $0x392] sm:$0xff]
  %v1078 = vld [vmem:[%s672 + $0x3a2] sm:$0xff]
  %v1079 = vld [vmem:[%s672 + $0x3aa] sm:$0xff]
  %v1080 = vld [vmem:[%s672 + $0x3b2] sm:$0xff]
  %v1081 = vld [vmem:[%s672 + $0x3c2] sm:$0xff]
  %v1082 = vld [vmem:[%s672 + $0x3ca] sm:$0xff]
  %v1083 = vld [vmem:[%s672 + $0x3d2] sm:$0xff]
  %v1084 = vld [vmem:[%s672 + $0x3e2] sm:$0xff]
  %v1085 = vld [vmem:[%s672 + $0x3ea] sm:$0xff]
  %v1086 = vld [vmem:[%s672 + $0x3f2] sm:$0xff]
  %v1087 = vld [vmem:[%s672 + $0x402] sm:$0xff]
  %v1088 = vld [vmem:[%s672 + $0x40a] sm:$0xff]
  %v1089 = vld [vmem:[%s672 + $0x412] sm:$0xff]
  %v1090 = vld [vmem:[%s672 + $0x422] sm:$0xff]
  %v1091 = vld [vmem:[%s672 + $0x42a] sm:$0xff]
  %v1092 = vld [vmem:[%s672 + $0x432] sm:$0xff]
  %v1093 = vld [vmem:[%s672 + $0x442] sm:$0xff]
  %v1094 = vld [vmem:[%s672 + $0x44a] sm:$0xff]
  %v1095 = vld [vmem:[%s672 + $0x452] sm:$0xff]
  %v1096 = vld [vmem:[%s672 + $0x462] sm:$0xff]
  %v1097 = vld [vmem:[%s672 + $0x46a] sm:$0xff]
  %v1098 = vld [vmem:[%s672 + $0x472] sm:$0xff]
  %v1099 = vld [vmem:[%s672 + $0x482] sm:$0xff]
  %v1100 = vld [vmem:[%s672 + $0x48a] sm:$0xff]
  %v1101 = vld [vmem:[%s672 + $0x492] sm:$0xff]
  %v1102 = vld [vmem:[%s672 + $0x4a2] sm:$0xff]
  %v1103 = vld [vmem:[%s672 + $0x4aa] sm:$0xff]
  %v1104 = vld [vmem:[%s672 + $0x4b2] sm:$0xff]
  %v1105 = vpack.c.bf16 %v998, %v997
  %v1106 = vpack.c.bf16 %v1000, %v999
  %v1107 = vpack.c.bf16 %v1002, %v1001
  %v1108 = vpack.c.bf16 %v1004, %v1003
  %v1109 = vpack.c.bf16 %v1006, %v1005
  %v1110 = vpack.c.bf16 %v1008, %v1007
  %v1111 = vpack.c.bf16 %v1010, %v1009
  %v1112 = vpack.c.bf16 %v1012, %v1011
  %v1113 = vpack.c.bf16 %v1014, %v1013
  %v1114 = vpack.c.bf16 %v1016, %v1015
  %v1115 = vpack.c.bf16 %v1018, %v1017
  %v1116 = vpack.c.bf16 %v1020, %v1019
  %v1117 = vpack.c.bf16 %v1022, %v1021
  %v1118 = vpack.c.bf16 %v1024, %v1023
  %v1119 = vpack.c.bf16 %v1026, %v1025
  %v1120 = vpack.c.bf16 %v1028, %v1027
  %v1121 = vpack.c.bf16 %v1030, %v1029
  %v1122 = vpack.c.bf16 %v1032, %v1031
  %v1123 = vpack.c.bf16 %v1034, %v1033
  %v1124 = vpack.c.bf16 %v1036, %v1035
  %v1125 = vpack.c.bf16 %v1038, %v1037
  %v1126 = vpack.c.bf16 %v1040, %v1039
  %v1127 = vpack.c.bf16 %v1042, %v1041
  %v1128 = vpack.c.bf16 %v1044, %v1043
  %v1129 = vpack.c.bf16 %v1046, %v1045
  %v1130 = vpack.c.bf16 %v1048, %v1047
  %v1131 = vpack.c.bf16 %v1050, %v1049
  %v1132 = vpack.c.bf16 %v1052, %v1051
  %v1133 = vpack.c.bf16 %v1054, %v1053
  %v1134 = vpack.c.bf16 %v1056, %v1055
  %v1135 = vpack.c.bf16 %v1058, %v1057
  %v1136 = vpack.c.bf16 %v1060, %v1059
  %v1137 = vpack.c.bf16 %v1062, %v1061
  %v1138 = vpack.c.bf16 %v1064, %v1063
  %v1139 = vpack.c.bf16 %v1066, %v1065
  %v1140 = vpack.c.bf16 %v1068, %v1067
  %v1141 = vpack.c.bf16 %v1070, %v1069
  %v1142 = vpack.c.bf16 %v1072, %v1071
  %v1143 = vpack.c.bf16 %v1074, %v1073
  %v1144 = vpack.c.bf16 %v1076, %v1075
  %v1145 = vpack.c.bf16 %v1078, %v1077
  %v1146 = vpack.c.bf16 %v1080, %v1079
  %v1147 = vpack.c.bf16 %v1082, %v1081
  %v1148 = vpack.c.bf16 %v1084, %v1083
  %v1149 = vpack.c.bf16 %v1086, %v1085
  %v1150 = vpack.c.bf16 %v1088, %v1087
  %v1151 = vpack.c.bf16 %v1090, %v1089
  %v1152 = vpack.c.bf16 %v1092, %v1091
  %v1153 = vpack.c.bf16 %v1094, %v1093
  %v1154 = vpack.c.bf16 %v1096, %v1095
  %v1155 = vpack.c.bf16 %v1098, %v1097
  %v1156 = vpack.c.bf16 %v1100, %v1099
  %v1157 = vpack.c.bf16 %v1102, %v1101
  %v1158 = vpack.c.bf16 %v1104, %v1103
  %s1159 = scalar_lea.vmem %s2, 192
  %v1160 = vld [vmem:[%s1159] sm:$0xf]
  %v1161 = vld [vmem:[%s1159 + $0x4] sm:$0xf]
  %v1162 = vld [vmem:[%s1159 + $0x8] sm:$0xf]
  %v1163 = vld [vmem:[%s1159 + $0xc] sm:$0xf]
  %v1164 = vld [vmem:[%s1159 + $0x10] sm:$0xf]
  %v1165 = vld [vmem:[%s1159 + $0x14] sm:$0xf]
  %v1166 = vld [vmem:[%s1159 + $0x18] sm:$0xf]
  %v1167 = vld [vmem:[%s1159 + $0x1c] sm:$0xf]
  %v1168 = vld [vmem:[%s1159 + $0x20] sm:$0xf]
  %v1169 = vld [vmem:[%s1159 + $0x24] sm:$0xf]
  %v1170 = vld [vmem:[%s1159 + $0x28] sm:$0xf]
  %v1171 = vld [vmem:[%s1159 + $0x2c] sm:$0xf]
  %v1172 = vld [vmem:[%s1159 + $0x30] sm:$0xf]
  %v1173 = vld [vmem:[%s1159 + $0x34] sm:$0xf]
  %v1174 = vld [vmem:[%s1159 + $0x38] sm:$0xf]
  %v1175 = vld [vmem:[%s1159 + $0x3c] sm:$0xf]
  %v1176 = vld [vmem:[%s1159 + $0x40] sm:$0xf]
  %v1177 = vld [vmem:[%s1159 + $0x44] sm:$0xf]
  %v1178 = vld [vmem:[%s1159 + $0x48] sm:$0xf]
  %v1179 = vld [vmem:[%s1159 + $0x4c] sm:$0xf]
  %v1180 = vld [vmem:[%s1159 + $0x50] sm:$0xf]
  %v1181 = vld [vmem:[%s1159 + $0x54] sm:$0xf]
  %v1182 = vld [vmem:[%s1159 + $0x58] sm:$0xf]
  %v1183 = vld [vmem:[%s1159 + $0x5c] sm:$0xf]
  %v1184 = vld [vmem:[%s1159 + $0x60] sm:$0xf]
  %v1185 = vld [vmem:[%s1159 + $0x64] sm:$0xf]
  %v1186 = vld [vmem:[%s1159 + $0x68] sm:$0xf]
  %v1187 = vld [vmem:[%s1159 + $0x6c] sm:$0xf]
  %v1188 = vld [vmem:[%s1159 + $0x70] sm:$0xf]
  %v1189 = vld [vmem:[%s1159 + $0x74] sm:$0xf]
  %v1190 = vld [vmem:[%s1159 + $0x78] sm:$0xf]
  %v1191 = vld [vmem:[%s1159 + $0x7c] sm:$0xf]
  %v1192 = vld [vmem:[%s1159 + $0x80] sm:$0xf]
  %v1193 = vld [vmem:[%s1159 + $0x84] sm:$0xf]
  %v1194 = vld [vmem:[%s1159 + $0x88] sm:$0xf]
  %v1195 = vld [vmem:[%s1159 + $0x8c] sm:$0xf]
  %v1196 = vld [vmem:[%s1159 + $0x90] sm:$0xf]
  %v1197 = vld [vmem:[%s1159 + $0x94] sm:$0xf]
  %v1198 = vld [vmem:[%s1159 + $0x98] sm:$0xf]
  %v1199 = vld [vmem:[%s1159 + $0x9c] sm:$0xf]
  %v1200 = vld [vmem:[%s1159 + $0xa0] sm:$0xf]
  %v1201 = vld [vmem:[%s1159 + $0xa4] sm:$0xf]
  %v1202 = vld [vmem:[%s1159 + $0xa8] sm:$0xf]
  %v1203 = vld [vmem:[%s1159 + $0xac] sm:$0xf]
  %v1204 = vld [vmem:[%s1159 + $0xb0] sm:$0xf]
  %v1205 = vld [vmem:[%s1159 + $0xb4] sm:$0xf]
  %v1206 = vld [vmem:[%s1159 + $0xb8] sm:$0xf]
  %v1207 = vld [vmem:[%s1159 + $0xbc] sm:$0xf]
  %v1256 = vunpack.c.l.b16 %v1160
  %v1257 = vunpack.c.l.b16 %v1161
  %v1258 = vunpack.c.l.b16 %v1162
  %v1259 = vunpack.c.l.b16 %v1163
  %v1260 = vunpack.c.l.b16 %v1164
  %v1261 = vunpack.c.l.b16 %v1165
  %v1262 = vunpack.c.l.b16 %v1166
  %v1263 = vunpack.c.l.b16 %v1167
  %v1264 = vunpack.c.l.b16 %v1168
  %v1265 = vunpack.c.l.b16 %v1169
  %v1266 = vunpack.c.l.b16 %v1170
  %v1267 = vunpack.c.l.b16 %v1171
  %v1268 = vunpack.c.l.b16 %v1172
  %v1269 = vunpack.c.l.b16 %v1173
  %v1270 = vunpack.c.l.b16 %v1174
  %v1271 = vunpack.c.l.b16 %v1175
  %v1272 = vunpack.c.l.b16 %v1176
  %v1273 = vunpack.c.l.b16 %v1177
  %v1274 = vunpack.c.l.b16 %v1178
  %v1275 = vunpack.c.l.b16 %v1179
  %v1276 = vunpack.c.l.b16 %v1180
  %v1277 = vunpack.c.l.b16 %v1181
  %v1278 = vunpack.c.l.b16 %v1182
  %v1279 = vunpack.c.l.b16 %v1183
  %v1280 = vunpack.c.l.b16 %v1184
  %v1281 = vunpack.c.l.b16 %v1185
  %v1282 = vunpack.c.l.b16 %v1186
  %v1283 = vunpack.c.l.b16 %v1187
  %v1284 = vunpack.c.l.b16 %v1188
  %v1285 = vunpack.c.l.b16 %v1189
  %v1286 = vunpack.c.l.b16 %v1190
  %v1287 = vunpack.c.l.b16 %v1191
  %v1288 = vunpack.c.l.b16 %v1192
  %v1289 = vunpack.c.l.b16 %v1193
  %v1290 = vunpack.c.l.b16 %v1194
  %v1291 = vunpack.c.l.b16 %v1195
  %v1292 = vunpack.c.l.b16 %v1196
  %v1293 = vunpack.c.l.b16 %v1197
  %v1294 = vunpack.c.l.b16 %v1198
  %v1295 = vunpack.c.l.b16 %v1199
  %v1296 = vunpack.c.l.b16 %v1200
  %v1297 = vunpack.c.l.b16 %v1201
  %v1298 = vunpack.c.l.b16 %v1202
  %v1299 = vunpack.c.l.b16 %v1203
  %v1300 = vunpack.c.l.b16 %v1204
  %v1301 = vunpack.c.l.b16 %v1205
  %v1302 = vunpack.c.l.b16 %v1206
  %v1303 = vunpack.c.l.b16 %v1207
  %v1304 = vpack.c.b16 %v1257, %v1256
  %v1305 = vpack.c.b16 %v1259, %v1258
  %v1306 = vpack.c.b16 %v1261, %v1260
  %v1307 = vpack.c.b16 %v1263, %v1262
  %v1308 = vpack.c.b16 %v1265, %v1264
  %v1309 = vpack.c.b16 %v1267, %v1266
  %v1310 = vpack.c.b16 %v1269, %v1268
  %v1311 = vpack.c.b16 %v1271, %v1270
  %v1312 = vpack.c.b16 %v1273, %v1272
  %v1313 = vpack.c.b16 %v1275, %v1274
  %v1314 = vpack.c.b16 %v1277, %v1276
  %v1315 = vpack.c.b16 %v1279, %v1278
  %v1316 = vpack.c.b16 %v1281, %v1280
  %v1317 = vpack.c.b16 %v1283, %v1282
  %v1318 = vpack.c.b16 %v1285, %v1284
  %v1319 = vpack.c.b16 %v1287, %v1286
  %v1320 = vpack.c.b16 %v1289, %v1288
  %v1321 = vpack.c.b16 %v1291, %v1290
  %v1322 = vpack.c.b16 %v1293, %v1292
  %v1323 = vpack.c.b16 %v1295, %v1294
  %v1324 = vpack.c.b16 %v1297, %v1296
  %v1325 = vpack.c.b16 %v1299, %v1298
  %v1326 = vpack.c.b16 %v1301, %v1300
  %v1327 = vpack.c.b16 %v1303, %v1302
  %1352 = vmatprep.subr.bf16.mxu0 0
  %1353 = vmatpush1.bf16.msra.mxu0 %v1311
  %1354 = vmatprep.subr.bf16.mxu0 0
  %1355 = vmatpush1.bf16.msra.mxu0 %v1310
  %1356 = vmatprep.subr.bf16.mxu0 0
  %1357 = vmatpush1.bf16.msra.mxu0 %v1309
  %1358 = vmatprep.subr.bf16.mxu0 0
  %1359 = vmatpush1.bf16.msra.mxu0 %v1308
  %1360 = vmatprep.subr.bf16.mxu0 0
  %1361 = vmatpush1.bf16.msra.mxu0 %v1307
  %1362 = vmatprep.subr.bf16.mxu0 0
  %1363 = vmatpush1.bf16.msra.mxu0 %v1306
  %1364 = vmatprep.subr.bf16.mxu0 0
  %1365 = vmatpush1.bf16.msra.mxu0 %v1305
  %1366 = vmatprep.subr.bf16.mxu0 0
  %1367 = vmatpush1.bf16.msra.mxu0 %v1304
  %1368 = vmatprep.subr.bf16.mxu0 0
  %1369 = vmatpush2.bf16.msra.mxu0 %v1319
  %1370 = vmatprep.subr.bf16.mxu0 0
  %1371 = vmatpush2.bf16.msra.mxu0 %v1318
  %1372 = vmatprep.subr.bf16.mxu0 0
  %1373 = vmatpush2.bf16.msra.mxu0 %v1317
  %1374 = vmatprep.subr.bf16.mxu0 0
  %1375 = vmatpush2.bf16.msra.mxu0 %v1316
  %1376 = vmatprep.subr.bf16.mxu0 0
  %1377 = vmatpush2.bf16.msra.mxu0 %v1315
  %1378 = vmatprep.subr.bf16.mxu0 0
  %1379 = vmatpush2.bf16.msra.mxu0 %v1314
  %1380 = vmatprep.subr.bf16.mxu0 0
  %1381 = vmatpush2.bf16.msra.mxu0 %v1313
  %1382 = vmatprep.subr.bf16.mxu0 0
  %1383 = vmatpush2.bf16.msra.mxu0 %v1312
  %1384 = vmatprep.mubr.bf16.mxu0 %v943
  %1385 = vmatmul.mubr.bf16.gmra.mxu0 %v781
  %v1386 = vpop.f32.mrf.mxu0
  %v1387 = vadd.f32 0.0, %v1386
  %v1388 = vpop.f32.mrf.mxu0
  %v1389 = vpop.f32.mrf.mxu0
  %v1390 = vadd.f32 0.0, %v1389
  %v1391 = vpop.f32.mrf.mxu0
  %1392 = vmatprep.mubr.bf16.mxu0 %v944
  %1393 = vmatmul.mubr.bf16.gmra.mxu0 %v782
  %v1394 = vpop.f32.mrf.mxu0
  %v1395 = vadd.f32 0.0, %v1394
  %v1396 = vpop.f32.mrf.mxu0
  %v1397 = vpop.f32.mrf.mxu0
  %v1398 = vadd.f32 0.0, %v1397
  %v1399 = vpop.f32.mrf.mxu0
  %1400 = vmatprep.mubr.bf16.mxu0 %v945
  %1401 = vmatmul.mubr.bf16.gmra.mxu0 %v783
  %v1402 = vpop.f32.mrf.mxu0
  %v1403 = vadd.f32 0.0, %v1402
  %v1404 = vpop.f32.mrf.mxu0
  %v1405 = vpop.f32.mrf.mxu0
  %v1406 = vadd.f32 0.0, %v1405
  %v1407 = vpop.f32.mrf.mxu0
  %1408 = vmatprep.mubr.bf16.mxu0 %v946
  %1409 = vmatmul.mubr.bf16.gmra.mxu0 %v784
  %v1410 = vpop.f32.mrf.mxu0
  %v1411 = vadd.f32 0.0, %v1410
  %v1412 = vpop.f32.mrf.mxu0
  %v1413 = vpop.f32.mrf.mxu0
  %v1414 = vadd.f32 0.0, %v1413
  %v1415 = vpop.f32.mrf.mxu0
  %1416 = vmatprep.mubr.bf16.mxu0 %v947
  %1417 = vmatmul.mubr.bf16.gmra.mxu0 %v785
  %v1418 = vpop.f32.mrf.mxu0
  %v1419 = vadd.f32 0.0, %v1418
  %v1420 = vpop.f32.mrf.mxu0
  %v1421 = vpop.f32.mrf.mxu0
  %v1422 = vadd.f32 0.0, %v1421
  %v1423 = vpop.f32.mrf.mxu0
  %1424 = vmatprep.mubr.bf16.mxu0 %v948
  %1425 = vmatmul.mubr.bf16.gmra.mxu0 %v786
  %v1426 = vpop.f32.mrf.mxu0
  %v1427 = vadd.f32 0.0, %v1426
  %v1428 = vpop.f32.mrf.mxu0
  %v1429 = vpop.f32.mrf.mxu0
  %v1430 = vadd.f32 0.0, %v1429
  %v1431 = vpop.f32.mrf.mxu0
  %1432 = vmatprep.mubr.bf16.mxu0 %v949
  %1433 = vmatmul.mubr.bf16.gmra.mxu0 %v787
  %v1434 = vpop.f32.mrf.mxu0
  %v1435 = vadd.f32 0.0, %v1434
  %v1436 = vpop.f32.mrf.mxu0
  %v1437 = vpop.f32.mrf.mxu0
  %v1438 = vadd.f32 0.0, %v1437
  %v1439 = vpop.f32.mrf.mxu0
  %1440 = vmatprep.mubr.bf16.mxu0 %v950
  %1441 = vmatmul.mubr.bf16.gmra.mxu0 %v788
  %v1442 = vpop.f32.mrf.mxu0
  %v1443 = vadd.f32 0.0, %v1442
  %v1444 = vpop.f32.mrf.mxu0
  %v1445 = vpop.f32.mrf.mxu0
  %v1446 = vadd.f32 0.0, %v1445
  %v1447 = vpop.f32.mrf.mxu0
  %1448 = vmatprep.mubr.bf16.mxu0 %v951
  %1449 = vmatmul.mubr.bf16.gmra.mxu0 %v789
  %v1450 = vpop.f32.mrf.mxu0
  %v1451 = vadd.f32 0.0, %v1450
  %v1452 = vpop.f32.mrf.mxu0
  %v1453 = vpop.f32.mrf.mxu0
  %v1454 = vadd.f32 0.0, %v1453
  %v1455 = vpop.f32.mrf.mxu0
  %1456 = vmatprep.mubr.bf16.mxu0 %v952
  %1457 = vmatmul.mubr.bf16.gmra.mxu0 %v790
  %v1458 = vpop.f32.mrf.mxu0
  %v1459 = vadd.f32 0.0, %v1458
  %v1460 = vpop.f32.mrf.mxu0
  %v1461 = vpop.f32.mrf.mxu0
  %v1462 = vadd.f32 0.0, %v1461
  %v1463 = vpop.f32.mrf.mxu0
  %1464 = vmatprep.mubr.bf16.mxu0 %v953
  %1465 = vmatmul.mubr.bf16.gmra.mxu0 %v791
  %v1466 = vpop.f32.mrf.mxu0
  %v1467 = vadd.f32 0.0, %v1466
  %v1468 = vpop.f32.mrf.mxu0
  %v1469 = vpop.f32.mrf.mxu0
  %v1470 = vadd.f32 0.0, %v1469
  %v1471 = vpop.f32.mrf.mxu0
  %1472 = vmatprep.mubr.bf16.mxu0 %v954
  %1473 = vmatmul.mubr.bf16.gmra.mxu0 %v792
  %v1474 = vpop.f32.mrf.mxu0
  %v1475 = vadd.f32 0.0, %v1474
  %v1476 = vpop.f32.mrf.mxu0
  %v1477 = vpop.f32.mrf.mxu0
  %v1478 = vadd.f32 0.0, %v1477
  %v1479 = vpop.f32.mrf.mxu0
  %1480 = vmatprep.mubr.bf16.mxu0 %v955
  %1481 = vmatmul.mubr.bf16.gmra.mxu0 %v793
  %v1482 = vpop.f32.mrf.mxu0
  %v1483 = vadd.f32 0.0, %v1482
  %v1484 = vpop.f32.mrf.mxu0
  %v1485 = vpop.f32.mrf.mxu0
  %v1486 = vadd.f32 0.0, %v1485
  %v1487 = vpop.f32.mrf.mxu0
  %1488 = vmatprep.mubr.bf16.mxu0 %v956
  %1489 = vmatmul.mubr.bf16.gmra.mxu0 %v794
  %v1490 = vpop.f32.mrf.mxu0
  %v1491 = vadd.f32 0.0, %v1490
  %v1492 = vpop.f32.mrf.mxu0
  %v1493 = vpop.f32.mrf.mxu0
  %v1494 = vadd.f32 0.0, %v1493
  %v1495 = vpop.f32.mrf.mxu0
  %1496 = vmatprep.mubr.bf16.mxu0 %v957
  %1497 = vmatmul.mubr.bf16.gmra.mxu0 %v795
  %v1498 = vpop.f32.mrf.mxu0
  %v1499 = vadd.f32 0.0, %v1498
  %v1500 = vpop.f32.mrf.mxu0
  %v1501 = vpop.f32.mrf.mxu0
  %v1502 = vadd.f32 0.0, %v1501
  %v1503 = vpop.f32.mrf.mxu0
  %1504 = vmatprep.mubr.bf16.mxu0 %v958
  %1505 = vmatmul.mubr.bf16.gmra.mxu0 %v796
  %v1506 = vpop.f32.mrf.mxu0
  %v1507 = vadd.f32 0.0, %v1506
  %v1508 = vpop.f32.mrf.mxu0
  %v1509 = vpop.f32.mrf.mxu0
  %v1510 = vadd.f32 0.0, %v1509
  %v1511 = vpop.f32.mrf.mxu0
  %1512 = vmatprep.mubr.bf16.mxu0 %v959
  %1513 = vmatmul.mubr.bf16.gmra.mxu0 %v797
  %v1514 = vpop.f32.mrf.mxu0
  %v1515 = vadd.f32 0.0, %v1514
  %v1516 = vpop.f32.mrf.mxu0
  %v1517 = vpop.f32.mrf.mxu0
  %v1518 = vadd.f32 0.0, %v1517
  %v1519 = vpop.f32.mrf.mxu0
  %1520 = vmatprep.mubr.bf16.mxu0 %v960
  %1521 = vmatmul.mubr.bf16.gmra.mxu0 %v798
  %v1522 = vpop.f32.mrf.mxu0
  %v1523 = vadd.f32 0.0, %v1522
  %v1524 = vpop.f32.mrf.mxu0
  %v1525 = vpop.f32.mrf.mxu0
  %v1526 = vadd.f32 0.0, %v1525
  %v1527 = vpop.f32.mrf.mxu0
  %1528 = vmatprep.mubr.bf16.mxu0 %v961
  %1529 = vmatmul.mubr.bf16.gmra.mxu0 %v799
  %v1530 = vpop.f32.mrf.mxu0
  %v1531 = vadd.f32 0.0, %v1530
  %v1532 = vpop.f32.mrf.mxu0
  %v1533 = vpop.f32.mrf.mxu0
  %v1534 = vadd.f32 0.0, %v1533
  %v1535 = vpop.f32.mrf.mxu0
  %1536 = vmatprep.mubr.bf16.mxu0 %v962
  %1537 = vmatmul.mubr.bf16.gmra.mxu0 %v800
  %v1538 = vpop.f32.mrf.mxu0
  %v1539 = vadd.f32 0.0, %v1538
  %v1540 = vpop.f32.mrf.mxu0
  %v1541 = vpop.f32.mrf.mxu0
  %v1542 = vadd.f32 0.0, %v1541
  %v1543 = vpop.f32.mrf.mxu0
  %1544 = vmatprep.mubr.bf16.mxu0 %v963
  %1545 = vmatmul.mubr.bf16.gmra.mxu0 %v801
  %v1546 = vpop.f32.mrf.mxu0
  %v1547 = vadd.f32 0.0, %v1546
  %v1548 = vpop.f32.mrf.mxu0
  %v1549 = vpop.f32.mrf.mxu0
  %v1550 = vadd.f32 0.0, %v1549
  %v1551 = vpop.f32.mrf.mxu0
  %1552 = vmatprep.mubr.bf16.mxu0 %v964
  %1553 = vmatmul.mubr.bf16.gmra.mxu0 %v802
  %v1554 = vpop.f32.mrf.mxu0
  %v1555 = vadd.f32 0.0, %v1554
  %v1556 = vpop.f32.mrf.mxu0
  %v1557 = vpop.f32.mrf.mxu0
  %v1558 = vadd.f32 0.0, %v1557
  %v1559 = vpop.f32.mrf.mxu0
  %1560 = vmatprep.mubr.bf16.mxu0 %v965
  %1561 = vmatmul.mubr.bf16.gmra.mxu0 %v803
  %v1562 = vpop.f32.mrf.mxu0
  %v1563 = vadd.f32 0.0, %v1562
  %v1564 = vpop.f32.mrf.mxu0
  %v1565 = vpop.f32.mrf.mxu0
  %v1566 = vadd.f32 0.0, %v1565
  %v1567 = vpop.f32.mrf.mxu0
  %1568 = vmatprep.mubr.bf16.mxu0 %v966
  %1569 = vmatmul.mubr.bf16.gmra.mxu0 %v804
  %v1570 = vpop.f32.mrf.mxu0
  %v1571 = vadd.f32 0.0, %v1570
  %v1572 = vpop.f32.mrf.mxu0
  %v1573 = vpop.f32.mrf.mxu0
  %v1574 = vadd.f32 0.0, %v1573
  %v1575 = vpop.f32.mrf.mxu0
  %1576 = vmatprep.mubr.bf16.mxu0 %v967
  %1577 = vmatmul.mubr.bf16.gmra.mxu0 %v805
  %v1578 = vpop.f32.mrf.mxu0
  %v1579 = vadd.f32 0.0, %v1578
  %v1580 = vpop.f32.mrf.mxu0
  %v1581 = vpop.f32.mrf.mxu0
  %v1582 = vadd.f32 0.0, %v1581
  %v1583 = vpop.f32.mrf.mxu0
  %1584 = vmatprep.mubr.bf16.mxu0 %v968
  %1585 = vmatmul.mubr.bf16.gmra.mxu0 %v806
  %v1586 = vpop.f32.mrf.mxu0
  %v1587 = vadd.f32 0.0, %v1586
  %v1588 = vpop.f32.mrf.mxu0
  %v1589 = vpop.f32.mrf.mxu0
  %v1590 = vadd.f32 0.0, %v1589
  %v1591 = vpop.f32.mrf.mxu0
  %1592 = vmatprep.mubr.bf16.mxu0 %v969
  %1593 = vmatmul.mubr.bf16.gmra.mxu0 %v807
  %v1594 = vpop.f32.mrf.mxu0
  %v1595 = vadd.f32 0.0, %v1594
  %v1596 = vpop.f32.mrf.mxu0
  %v1597 = vpop.f32.mrf.mxu0
  %v1598 = vadd.f32 0.0, %v1597
  %v1599 = vpop.f32.mrf.mxu0
  %1600 = vmatprep.mubr.bf16.mxu0 %v970
  %1601 = vmatmul.mubr.bf16.gmra.mxu0 %v808
  %v1602 = vpop.f32.mrf.mxu0
  %v1603 = vadd.f32 0.0, %v1602
  %v1604 = vpop.f32.mrf.mxu0
  %v1605 = vpop.f32.mrf.mxu0
  %v1606 = vadd.f32 0.0, %v1605
  %v1607 = vpop.f32.mrf.mxu0
  %1608 = vmatprep.mubr.bf16.mxu0 %v971
  %1609 = vmatmul.mubr.bf16.gmra.mxu0 %v809
  %v1610 = vpop.f32.mrf.mxu0
  %v1611 = vadd.f32 0.0, %v1610
  %v1612 = vpop.f32.mrf.mxu0
  %v1613 = vpop.f32.mrf.mxu0
  %v1614 = vadd.f32 0.0, %v1613
  %v1615 = vpop.f32.mrf.mxu0
  %1616 = vmatprep.mubr.bf16.mxu0 %v972
  %1617 = vmatmul.mubr.bf16.gmra.mxu0 %v810
  %v1618 = vpop.f32.mrf.mxu0
  %v1619 = vadd.f32 0.0, %v1618
  %v1620 = vpop.f32.mrf.mxu0
  %v1621 = vpop.f32.mrf.mxu0
  %v1622 = vadd.f32 0.0, %v1621
  %v1623 = vpop.f32.mrf.mxu0
  %1624 = vmatprep.mubr.bf16.mxu0 %v973
  %1625 = vmatmul.mubr.bf16.gmra.mxu0 %v811
  %v1626 = vpop.f32.mrf.mxu0
  %v1627 = vadd.f32 0.0, %v1626
  %v1628 = vpop.f32.mrf.mxu0
  %v1629 = vpop.f32.mrf.mxu0
  %v1630 = vadd.f32 0.0, %v1629
  %v1631 = vpop.f32.mrf.mxu0
  %1632 = vmatprep.mubr.bf16.mxu0 %v974
  %1633 = vmatmul.mubr.bf16.gmra.mxu0 %v812
  %v1634 = vpop.f32.mrf.mxu0
  %v1635 = vadd.f32 0.0, %v1634
  %v1636 = vpop.f32.mrf.mxu0
  %v1637 = vpop.f32.mrf.mxu0
  %v1638 = vadd.f32 0.0, %v1637
  %v1639 = vpop.f32.mrf.mxu0
  %1640 = vmatprep.mubr.bf16.mxu0 %v975
  %1641 = vmatmul.mubr.bf16.gmra.mxu0 %v813
  %v1642 = vpop.f32.mrf.mxu0
  %v1643 = vadd.f32 0.0, %v1642
  %v1644 = vpop.f32.mrf.mxu0
  %v1645 = vpop.f32.mrf.mxu0
  %v1646 = vadd.f32 0.0, %v1645
  %v1647 = vpop.f32.mrf.mxu0
  %1648 = vmatprep.mubr.bf16.mxu0 %v976
  %1649 = vmatmul.mubr.bf16.gmra.mxu0 %v814
  %v1650 = vpop.f32.mrf.mxu0
  %v1651 = vadd.f32 0.0, %v1650
  %v1652 = vpop.f32.mrf.mxu0
  %v1653 = vpop.f32.mrf.mxu0
  %v1654 = vadd.f32 0.0, %v1653
  %v1655 = vpop.f32.mrf.mxu0
  %1656 = vmatprep.mubr.bf16.mxu0 %v977
  %1657 = vmatmul.mubr.bf16.gmra.mxu0 %v815
  %v1658 = vpop.f32.mrf.mxu0
  %v1659 = vadd.f32 0.0, %v1658
  %v1660 = vpop.f32.mrf.mxu0
  %v1661 = vpop.f32.mrf.mxu0
  %v1662 = vadd.f32 0.0, %v1661
  %v1663 = vpop.f32.mrf.mxu0
  %1664 = vmatprep.mubr.bf16.mxu0 %v978
  %1665 = vmatmul.mubr.bf16.gmra.mxu0 %v816
  %v1666 = vpop.f32.mrf.mxu0
  %v1667 = vadd.f32 0.0, %v1666
  %v1668 = vpop.f32.mrf.mxu0
  %v1669 = vpop.f32.mrf.mxu0
  %v1670 = vadd.f32 0.0, %v1669
  %v1671 = vpop.f32.mrf.mxu0
  %1672 = vmatprep.mubr.bf16.mxu0 %v979
  %1673 = vmatmul.mubr.bf16.gmra.mxu0 %v817
  %v1674 = vpop.f32.mrf.mxu0
  %v1675 = vadd.f32 0.0, %v1674
  %v1676 = vpop.f32.mrf.mxu0
  %v1677 = vpop.f32.mrf.mxu0
  %v1678 = vadd.f32 0.0, %v1677
  %v1679 = vpop.f32.mrf.mxu0
  %1680 = vmatprep.mubr.bf16.mxu0 %v980
  %1681 = vmatmul.mubr.bf16.gmra.mxu0 %v818
  %v1682 = vpop.f32.mrf.mxu0
  %v1683 = vadd.f32 0.0, %v1682
  %v1684 = vpop.f32.mrf.mxu0
  %v1685 = vpop.f32.mrf.mxu0
  %v1686 = vadd.f32 0.0, %v1685
  %v1687 = vpop.f32.mrf.mxu0
  %1688 = vmatprep.mubr.bf16.mxu0 %v981
  %1689 = vmatmul.mubr.bf16.gmra.mxu0 %v819
  %v1690 = vpop.f32.mrf.mxu0
  %v1691 = vadd.f32 0.0, %v1690
  %v1692 = vpop.f32.mrf.mxu0
  %v1693 = vpop.f32.mrf.mxu0
  %v1694 = vadd.f32 0.0, %v1693
  %v1695 = vpop.f32.mrf.mxu0
  %1696 = vmatprep.mubr.bf16.mxu0 %v982
  %1697 = vmatmul.mubr.bf16.gmra.mxu0 %v820
  %v1698 = vpop.f32.mrf.mxu0
  %v1699 = vadd.f32 0.0, %v1698
  %v1700 = vpop.f32.mrf.mxu0
  %v1701 = vpop.f32.mrf.mxu0
  %v1702 = vadd.f32 0.0, %v1701
  %v1703 = vpop.f32.mrf.mxu0
  %1704 = vmatprep.mubr.bf16.mxu0 %v983
  %1705 = vmatmul.mubr.bf16.gmra.mxu0 %v821
  %v1706 = vpop.f32.mrf.mxu0
  %v1707 = vadd.f32 0.0, %v1706
  %v1708 = vpop.f32.mrf.mxu0
  %v1709 = vpop.f32.mrf.mxu0
  %v1710 = vadd.f32 0.0, %v1709
  %v1711 = vpop.f32.mrf.mxu0
  %1712 = vmatprep.mubr.bf16.mxu0 %v984
  %1713 = vmatmul.mubr.bf16.gmra.mxu0 %v822
  %v1714 = vpop.f32.mrf.mxu0
  %v1715 = vadd.f32 0.0, %v1714
  %v1716 = vpop.f32.mrf.mxu0
  %v1717 = vpop.f32.mrf.mxu0
  %v1718 = vadd.f32 0.0, %v1717
  %v1719 = vpop.f32.mrf.mxu0
  %1720 = vmatprep.mubr.bf16.mxu0 %v985
  %1721 = vmatmul.mubr.bf16.gmra.mxu0 %v823
  %v1722 = vpop.f32.mrf.mxu0
  %v1723 = vadd.f32 0.0, %v1722
  %v1724 = vpop.f32.mrf.mxu0
  %v1725 = vpop.f32.mrf.mxu0
  %v1726 = vadd.f32 0.0, %v1725
  %v1727 = vpop.f32.mrf.mxu0
  %1728 = vmatprep.mubr.bf16.mxu0 %v986
  %1729 = vmatmul.mubr.bf16.gmra.mxu0 %v824
  %v1730 = vpop.f32.mrf.mxu0
  %v1731 = vadd.f32 0.0, %v1730
  %v1732 = vpop.f32.mrf.mxu0
  %v1733 = vpop.f32.mrf.mxu0
  %v1734 = vadd.f32 0.0, %v1733
  %v1735 = vpop.f32.mrf.mxu0
  %1736 = vmatprep.mubr.bf16.mxu0 %v987
  %1737 = vmatmul.mubr.bf16.gmra.mxu0 %v825
  %v1738 = vpop.f32.mrf.mxu0
  %v1739 = vadd.f32 0.0, %v1738
  %v1740 = vpop.f32.mrf.mxu0
  %v1741 = vpop.f32.mrf.mxu0
  %v1742 = vadd.f32 0.0, %v1741
  %v1743 = vpop.f32.mrf.mxu0
  %1744 = vmatprep.mubr.bf16.mxu0 %v988
  %1745 = vmatmul.mubr.bf16.gmra.mxu0 %v826
  %v1746 = vpop.f32.mrf.mxu0
  %v1747 = vadd.f32 0.0, %v1746
  %v1748 = vpop.f32.mrf.mxu0
  %v1749 = vpop.f32.mrf.mxu0
  %v1750 = vadd.f32 0.0, %v1749
  %v1751 = vpop.f32.mrf.mxu0
  %1752 = vmatprep.mubr.bf16.mxu0 %v989
  %1753 = vmatmul.mubr.bf16.gmra.mxu0 %v827
  %v1754 = vpop.f32.mrf.mxu0
  %v1755 = vadd.f32 0.0, %v1754
  %v1756 = vpop.f32.mrf.mxu0
  %v1757 = vpop.f32.mrf.mxu0
  %v1758 = vadd.f32 0.0, %v1757
  %v1759 = vpop.f32.mrf.mxu0
  %1760 = vmatprep.mubr.bf16.mxu0 %v990
  %1761 = vmatmul.mubr.bf16.gmra.mxu0 %v828
  %v1762 = vpop.f32.mrf.mxu0
  %v1763 = vadd.f32 0.0, %v1762
  %v1764 = vpop.f32.mrf.mxu0
  %v1765 = vpop.f32.mrf.mxu0
  %v1766 = vadd.f32 0.0, %v1765
  %v1767 = vpop.f32.mrf.mxu0
  %1768 = vmatprep.mubr.bf16.mxu0 %v991
  %1769 = vmatmul.mubr.bf16.gmra.mxu0 %v829
  %v1770 = vpop.f32.mrf.mxu0
  %v1771 = vadd.f32 0.0, %v1770
  %v1772 = vpop.f32.mrf.mxu0
  %v1773 = vpop.f32.mrf.mxu0
  %v1774 = vadd.f32 0.0, %v1773
  %v1775 = vpop.f32.mrf.mxu0
  %1776 = vmatprep.mubr.bf16.mxu0 %v992
  %1777 = vmatmul.mubr.bf16.gmra.mxu0 %v830
  %v1778 = vpop.f32.mrf.mxu0
  %v1779 = vadd.f32 0.0, %v1778
  %v1780 = vpop.f32.mrf.mxu0
  %v1781 = vpop.f32.mrf.mxu0
  %v1782 = vadd.f32 0.0, %v1781
  %v1783 = vpop.f32.mrf.mxu0
  %1784 = vmatprep.mubr.bf16.mxu0 %v993
  %1785 = vmatmul.mubr.bf16.gmra.mxu0 %v831
  %v1786 = vpop.f32.mrf.mxu0
  %v1787 = vadd.f32 0.0, %v1786
  %v1788 = vpop.f32.mrf.mxu0
  %v1789 = vpop.f32.mrf.mxu0
  %v1790 = vadd.f32 0.0, %v1789
  %v1791 = vpop.f32.mrf.mxu0
  %1792 = vmatprep.mubr.bf16.mxu0 %v994
  %1793 = vmatmul.mubr.bf16.gmra.mxu0 %v832
  %v1794 = vpop.f32.mrf.mxu0
  %v1795 = vadd.f32 0.0, %v1794
  %v1796 = vpop.f32.mrf.mxu0
  %v1797 = vpop.f32.mrf.mxu0
  %v1798 = vadd.f32 0.0, %v1797
  %v1799 = vpop.f32.mrf.mxu0
  %1800 = vmatprep.mubr.bf16.mxu0 %v995
  %1801 = vmatmul.mubr.bf16.gmra.mxu0 %v833
  %v1802 = vpop.f32.mrf.mxu0
  %v1803 = vadd.f32 0.0, %v1802
  %v1804 = vpop.f32.mrf.mxu0
  %v1805 = vpop.f32.mrf.mxu0
  %v1806 = vadd.f32 0.0, %v1805
  %v1807 = vpop.f32.mrf.mxu0
  %1808 = vmatprep.mubr.bf16.mxu0 %v996
  %1809 = vmatmul.mubr.bf16.gmra.mxu0 %v834
  %v1810 = vpop.f32.mrf.mxu0
  %v1811 = vadd.f32 0.0, %v1810
  %v1812 = vpop.f32.mrf.mxu0
  %v1813 = vpop.f32.mrf.mxu0
  %v1814 = vadd.f32 0.0, %v1813
  %v1815 = vpop.f32.mrf.mxu0
  %1816 = vdwg.mxu0
  %1817 = vmatprep.subr.bf16.mxu0 0
  %1818 = vmatpush1.bf16.msra.mxu0 %v1327
  %1819 = vmatprep.subr.bf16.mxu0 0
  %1820 = vmatpush1.bf16.msra.mxu0 %v1326
  %1821 = vmatprep.subr.bf16.mxu0 0
  %1822 = vmatpush1.bf16.msra.mxu0 %v1325
  %1823 = vmatprep.subr.bf16.mxu0 0
  %1824 = vmatpush1.bf16.msra.mxu0 %v1324
  %1825 = vmatprep.subr.bf16.mxu0 0
  %1826 = vmatpush1.bf16.msra.mxu0 %v1323
  %1827 = vmatprep.subr.bf16.mxu0 0
  %1828 = vmatpush1.bf16.msra.mxu0 %v1322
  %1829 = vmatprep.subr.bf16.mxu0 0
  %1830 = vmatpush1.bf16.msra.mxu0 %v1321
  %1831 = vmatprep.subr.bf16.mxu0 0
  %1832 = vmatpush1.bf16.msra.mxu0 %v1320
  %1833 = vmatprep.subr.bf16.mxu0 0
  %1834 = vmatpush2.bf16.msra.mxu0 0
  %1835 = vmatprep.subr.bf16.mxu0 0
  %1836 = vmatpush2.bf16.msra.mxu0 0
  %1837 = vmatprep.subr.bf16.mxu0 0
  %1838 = vmatpush2.bf16.msra.mxu0 0
  %1839 = vmatprep.subr.bf16.mxu0 0
  %1840 = vmatpush2.bf16.msra.mxu0 0
  %1841 = vmatprep.subr.bf16.mxu0 0
  %1842 = vmatpush2.bf16.msra.mxu0 0
  %1843 = vmatprep.subr.bf16.mxu0 0
  %1844 = vmatpush2.bf16.msra.mxu0 0
  %1845 = vmatprep.subr.bf16.mxu0 0
  %1846 = vmatpush2.bf16.msra.mxu0 0
  %1847 = vmatprep.subr.bf16.mxu0 0
  %1848 = vmatpush2.bf16.msra.mxu0 0
  %1849 = vmatprep.mubr.bf16.mxu0 0
  %1850 = vmatmul.mubr.bf16.gmra.mxu0 %v1105
  %v1851 = vpop.f32.mrf.mxu0
  %v1852 = vadd.f32 %v1387, %v1851
  %v1853 = vpop.f32.mrf.mxu0
  %v1854 = vpop.f32.mrf.mxu0
  %v1855 = vadd.f32 %v1390, %v1854
  %v1856 = vpop.f32.mrf.mxu0
  %1857 = vmatprep.mubr.bf16.mxu0 0
  %1858 = vmatmul.mubr.bf16.gmra.mxu0 %v1106
  %v1859 = vpop.f32.mrf.mxu0
  %v1860 = vadd.f32 %v1395, %v1859
  %v1861 = vpop.f32.mrf.mxu0
  %v1862 = vpop.f32.mrf.mxu0
  %v1863 = vadd.f32 %v1398, %v1862
  %v1864 = vpop.f32.mrf.mxu0
  %1865 = vmatprep.mubr.bf16.mxu0 0
  %1866 = vmatmul.mubr.bf16.gmra.mxu0 %v1107
  %v1867 = vpop.f32.mrf.mxu0
  %v1868 = vadd.f32 %v1403, %v1867
  %v1869 = vpop.f32.mrf.mxu0
  %v1870 = vpop.f32.mrf.mxu0
  %v1871 = vadd.f32 %v1406, %v1870
  %v1872 = vpop.f32.mrf.mxu0
  %1873 = vmatprep.mubr.bf16.mxu0 0
  %1874 = vmatmul.mubr.bf16.gmra.mxu0 %v1108
  %v1875 = vpop.f32.mrf.mxu0
  %v1876 = vadd.f32 %v1411, %v1875
  %v1877 = vpop.f32.mrf.mxu0
  %v1878 = vpop.f32.mrf.mxu0
  %v1879 = vadd.f32 %v1414, %v1878
  %v1880 = vpop.f32.mrf.mxu0
  %1881 = vmatprep.mubr.bf16.mxu0 0
  %1882 = vmatmul.mubr.bf16.gmra.mxu0 %v1109
  %v1883 = vpop.f32.mrf.mxu0
  %v1884 = vadd.f32 %v1419, %v1883
  %v1885 = vpop.f32.mrf.mxu0
  %v1886 = vpop.f32.mrf.mxu0
  %v1887 = vadd.f32 %v1422, %v1886
  %v1888 = vpop.f32.mrf.mxu0
  %1889 = vmatprep.mubr.bf16.mxu0 0
  %1890 = vmatmul.mubr.bf16.gmra.mxu0 %v1110
  %v1891 = vpop.f32.mrf.mxu0
  %v1892 = vadd.f32 %v1427, %v1891
  %v1893 = vpop.f32.mrf.mxu0
  %v1894 = vpop.f32.mrf.mxu0
  %v1895 = vadd.f32 %v1430, %v1894
  %v1896 = vpop.f32.mrf.mxu0
  %1897 = vmatprep.mubr.bf16.mxu0 0
  %1898 = vmatmul.mubr.bf16.gmra.mxu0 %v1111
  %v1899 = vpop.f32.mrf.mxu0
  %v1900 = vadd.f32 %v1435, %v1899
  %v1901 = vpop.f32.mrf.mxu0
  %v1902 = vpop.f32.mrf.mxu0
  %v1903 = vadd.f32 %v1438, %v1902
  %v1904 = vpop.f32.mrf.mxu0
  %1905 = vmatprep.mubr.bf16.mxu0 0
  %1906 = vmatmul.mubr.bf16.gmra.mxu0 %v1112
  %v1907 = vpop.f32.mrf.mxu0
  %v1908 = vadd.f32 %v1443, %v1907
  %v1909 = vpop.f32.mrf.mxu0
  %v1910 = vpop.f32.mrf.mxu0
  %v1911 = vadd.f32 %v1446, %v1910
  %v1912 = vpop.f32.mrf.mxu0
  %1913 = vmatprep.mubr.bf16.mxu0 0
  %1914 = vmatmul.mubr.bf16.gmra.mxu0 %v1113
  %v1915 = vpop.f32.mrf.mxu0
  %v1916 = vadd.f32 %v1451, %v1915
  %v1917 = vpop.f32.mrf.mxu0
  %v1918 = vpop.f32.mrf.mxu0
  %v1919 = vadd.f32 %v1454, %v1918
  %v1920 = vpop.f32.mrf.mxu0
  %1921 = vmatprep.mubr.bf16.mxu0 0
  %1922 = vmatmul.mubr.bf16.gmra.mxu0 %v1114
  %v1923 = vpop.f32.mrf.mxu0
  %v1924 = vadd.f32 %v1459, %v1923
  %v1925 = vpop.f32.mrf.mxu0
  %v1926 = vpop.f32.mrf.mxu0
  %v1927 = vadd.f32 %v1462, %v1926
  %v1928 = vpop.f32.mrf.mxu0
  %1929 = vmatprep.mubr.bf16.mxu0 0
  %1930 = vmatmul.mubr.bf16.gmra.mxu0 %v1115
  %v1931 = vpop.f32.mrf.mxu0
  %v1932 = vadd.f32 %v1467, %v1931
  %v1933 = vpop.f32.mrf.mxu0
  %v1934 = vpop.f32.mrf.mxu0
  %v1935 = vadd.f32 %v1470, %v1934
  %v1936 = vpop.f32.mrf.mxu0
  %1937 = vmatprep.mubr.bf16.mxu0 0
  %1938 = vmatmul.mubr.bf16.gmra.mxu0 %v1116
  %v1939 = vpop.f32.mrf.mxu0
  %v1940 = vadd.f32 %v1475, %v1939
  %v1941 = vpop.f32.mrf.mxu0
  %v1942 = vpop.f32.mrf.mxu0
  %v1943 = vadd.f32 %v1478, %v1942
  %v1944 = vpop.f32.mrf.mxu0
  %1945 = vmatprep.mubr.bf16.mxu0 0
  %1946 = vmatmul.mubr.bf16.gmra.mxu0 %v1117
  %v1947 = vpop.f32.mrf.mxu0
  %v1948 = vadd.f32 %v1483, %v1947
  %v1949 = vpop.f32.mrf.mxu0
  %v1950 = vpop.f32.mrf.mxu0
  %v1951 = vadd.f32 %v1486, %v1950
  %v1952 = vpop.f32.mrf.mxu0
  %1953 = vmatprep.mubr.bf16.mxu0 0
  %1954 = vmatmul.mubr.bf16.gmra.mxu0 %v1118
  %v1955 = vpop.f32.mrf.mxu0
  %v1956 = vadd.f32 %v1491, %v1955
  %v1957 = vpop.f32.mrf.mxu0
  %v1958 = vpop.f32.mrf.mxu0
  %v1959 = vadd.f32 %v1494, %v1958
  %v1960 = vpop.f32.mrf.mxu0
  %1961 = vmatprep.mubr.bf16.mxu0 0
  %1962 = vmatmul.mubr.bf16.gmra.mxu0 %v1119
  %v1963 = vpop.f32.mrf.mxu0
  %v1964 = vadd.f32 %v1499, %v1963
  %v1965 = vpop.f32.mrf.mxu0
  %v1966 = vpop.f32.mrf.mxu0
  %v1967 = vadd.f32 %v1502, %v1966
  %v1968 = vpop.f32.mrf.mxu0
  %1969 = vmatprep.mubr.bf16.mxu0 0
  %1970 = vmatmul.mubr.bf16.gmra.mxu0 %v1120
  %v1971 = vpop.f32.mrf.mxu0
  %v1972 = vadd.f32 %v1507, %v1971
  %v1973 = vpop.f32.mrf.mxu0
  %v1974 = vpop.f32.mrf.mxu0
  %v1975 = vadd.f32 %v1510, %v1974
  %v1976 = vpop.f32.mrf.mxu0
  %1977 = vmatprep.mubr.bf16.mxu0 0
  %1978 = vmatmul.mubr.bf16.gmra.mxu0 %v1121
  %v1979 = vpop.f32.mrf.mxu0
  %v1980 = vadd.f32 %v1515, %v1979
  %v1981 = vpop.f32.mrf.mxu0
  %v1982 = vpop.f32.mrf.mxu0
  %v1983 = vadd.f32 %v1518, %v1982
  %v1984 = vpop.f32.mrf.mxu0
  %1985 = vmatprep.mubr.bf16.mxu0 0
  %1986 = vmatmul.mubr.bf16.gmra.mxu0 %v1122
  %v1987 = vpop.f32.mrf.mxu0
  %v1988 = vadd.f32 %v1523, %v1987
  %v1989 = vpop.f32.mrf.mxu0
  %v1990 = vpop.f32.mrf.mxu0
  %v1991 = vadd.f32 %v1526, %v1990
  %v1992 = vpop.f32.mrf.mxu0
  %1993 = vmatprep.mubr.bf16.mxu0 0
  %1994 = vmatmul.mubr.bf16.gmra.mxu0 %v1123
  %v1995 = vpop.f32.mrf.mxu0
  %v1996 = vadd.f32 %v1531, %v1995
  %v1997 = vpop.f32.mrf.mxu0
  %v1998 = vpop.f32.mrf.mxu0
  %v1999 = vadd.f32 %v1534, %v1998
  %v2000 = vpop.f32.mrf.mxu0
  %2001 = vmatprep.mubr.bf16.mxu0 0
  %2002 = vmatmul.mubr.bf16.gmra.mxu0 %v1124
  %v2003 = vpop.f32.mrf.mxu0
  %v2004 = vadd.f32 %v1539, %v2003
  %v2005 = vpop.f32.mrf.mxu0
  %v2006 = vpop.f32.mrf.mxu0
  %v2007 = vadd.f32 %v1542, %v2006
  %v2008 = vpop.f32.mrf.mxu0
  %2009 = vmatprep.mubr.bf16.mxu0 0
  %2010 = vmatmul.mubr.bf16.gmra.mxu0 %v1125
  %v2011 = vpop.f32.mrf.mxu0
  %v2012 = vadd.f32 %v1547, %v2011
  %v2013 = vpop.f32.mrf.mxu0
  %v2014 = vpop.f32.mrf.mxu0
  %v2015 = vadd.f32 %v1550, %v2014
  %v2016 = vpop.f32.mrf.mxu0
  %2017 = vmatprep.mubr.bf16.mxu0 0
  %2018 = vmatmul.mubr.bf16.gmra.mxu0 %v1126
  %v2019 = vpop.f32.mrf.mxu0
  %v2020 = vadd.f32 %v1555, %v2019
  %v2021 = vpop.f32.mrf.mxu0
  %v2022 = vpop.f32.mrf.mxu0
  %v2023 = vadd.f32 %v1558, %v2022
  %v2024 = vpop.f32.mrf.mxu0
  %2025 = vmatprep.mubr.bf16.mxu0 0
  %2026 = vmatmul.mubr.bf16.gmra.mxu0 %v1127
  %v2027 = vpop.f32.mrf.mxu0
  %v2028 = vadd.f32 %v1563, %v2027
  %v2029 = vpop.f32.mrf.mxu0
  %v2030 = vpop.f32.mrf.mxu0
  %v2031 = vadd.f32 %v1566, %v2030
  %v2032 = vpop.f32.mrf.mxu0
  %2033 = vmatprep.mubr.bf16.mxu0 0
  %2034 = vmatmul.mubr.bf16.gmra.mxu0 %v1128
  %v2035 = vpop.f32.mrf.mxu0
  %v2036 = vadd.f32 %v1571, %v2035
  %v2037 = vpop.f32.mrf.mxu0
  %v2038 = vpop.f32.mrf.mxu0
  %v2039 = vadd.f32 %v1574, %v2038
  %v2040 = vpop.f32.mrf.mxu0
  %2041 = vmatprep.mubr.bf16.mxu0 0
  %2042 = vmatmul.mubr.bf16.gmra.mxu0 %v1129
  %v2043 = vpop.f32.mrf.mxu0
  %v2044 = vadd.f32 %v1579, %v2043
  %v2045 = vpop.f32.mrf.mxu0
  %v2046 = vpop.f32.mrf.mxu0
  %v2047 = vadd.f32 %v1582, %v2046
  %v2048 = vpop.f32.mrf.mxu0
  %2049 = vmatprep.mubr.bf16.mxu0 0
  %2050 = vmatmul.mubr.bf16.gmra.mxu0 %v1130
  %v2051 = vpop.f32.mrf.mxu0
  %v2052 = vadd.f32 %v1587, %v2051
  %v2053 = vpop.f32.mrf.mxu0
  %v2054 = vpop.f32.mrf.mxu0
  %v2055 = vadd.f32 %v1590, %v2054
  %v2056 = vpop.f32.mrf.mxu0
  %2057 = vmatprep.mubr.bf16.mxu0 0
  %2058 = vmatmul.mubr.bf16.gmra.mxu0 %v1131
  %v2059 = vpop.f32.mrf.mxu0
  %v2060 = vadd.f32 %v1595, %v2059
  %v2061 = vpop.f32.mrf.mxu0
  %v2062 = vpop.f32.mrf.mxu0
  %v2063 = vadd.f32 %v1598, %v2062
  %v2064 = vpop.f32.mrf.mxu0
  %2065 = vmatprep.mubr.bf16.mxu0 0
  %2066 = vmatmul.mubr.bf16.gmra.mxu0 %v1132
  %v2067 = vpop.f32.mrf.mxu0
  %v2068 = vadd.f32 %v1603, %v2067
  %v2069 = vpop.f32.mrf.mxu0
  %v2070 = vpop.f32.mrf.mxu0
  %v2071 = vadd.f32 %v1606, %v2070
  %v2072 = vpop.f32.mrf.mxu0
  %2073 = vmatprep.mubr.bf16.mxu0 0
  %2074 = vmatmul.mubr.bf16.gmra.mxu0 %v1133
  %v2075 = vpop.f32.mrf.mxu0
  %v2076 = vadd.f32 %v1611, %v2075
  %v2077 = vpop.f32.mrf.mxu0
  %v2078 = vpop.f32.mrf.mxu0
  %v2079 = vadd.f32 %v1614, %v2078
  %v2080 = vpop.f32.mrf.mxu0
  %2081 = vmatprep.mubr.bf16.mxu0 0
  %2082 = vmatmul.mubr.bf16.gmra.mxu0 %v1134
  %v2083 = vpop.f32.mrf.mxu0
  %v2084 = vadd.f32 %v1619, %v2083
  %v2085 = vpop.f32.mrf.mxu0
  %v2086 = vpop.f32.mrf.mxu0
  %v2087 = vadd.f32 %v1622, %v2086
  %v2088 = vpop.f32.mrf.mxu0
  %2089 = vmatprep.mubr.bf16.mxu0 0
  %2090 = vmatmul.mubr.bf16.gmra.mxu0 %v1135
  %v2091 = vpop.f32.mrf.mxu0
  %v2092 = vadd.f32 %v1627, %v2091
  %v2093 = vpop.f32.mrf.mxu0
  %v2094 = vpop.f32.mrf.mxu0
  %v2095 = vadd.f32 %v1630, %v2094
  %v2096 = vpop.f32.mrf.mxu0
  %2097 = vmatprep.mubr.bf16.mxu0 0
  %2098 = vmatmul.mubr.bf16.gmra.mxu0 %v1136
  %v2099 = vpop.f32.mrf.mxu0
  %v2100 = vadd.f32 %v1635, %v2099
  %v2101 = vpop.f32.mrf.mxu0
  %v2102 = vpop.f32.mrf.mxu0
  %v2103 = vadd.f32 %v1638, %v2102
  %v2104 = vpop.f32.mrf.mxu0
  %2105 = vmatprep.mubr.bf16.mxu0 0
  %2106 = vmatmul.mubr.bf16.gmra.mxu0 %v1137
  %v2107 = vpop.f32.mrf.mxu0
  %v2108 = vadd.f32 %v1643, %v2107
  %v2109 = vpop.f32.mrf.mxu0
  %v2110 = vpop.f32.mrf.mxu0
  %v2111 = vadd.f32 %v1646, %v2110
  %v2112 = vpop.f32.mrf.mxu0
  %2113 = vmatprep.mubr.bf16.mxu0 0
  %2114 = vmatmul.mubr.bf16.gmra.mxu0 %v1138
  %v2115 = vpop.f32.mrf.mxu0
  %v2116 = vadd.f32 %v1651, %v2115
  %v2117 = vpop.f32.mrf.mxu0
  %v2118 = vpop.f32.mrf.mxu0
  %v2119 = vadd.f32 %v1654, %v2118
  %v2120 = vpop.f32.mrf.mxu0
  %2121 = vmatprep.mubr.bf16.mxu0 0
  %2122 = vmatmul.mubr.bf16.gmra.mxu0 %v1139
  %v2123 = vpop.f32.mrf.mxu0
  %v2124 = vadd.f32 %v1659, %v2123
  %v2125 = vpop.f32.mrf.mxu0
  %v2126 = vpop.f32.mrf.mxu0
  %v2127 = vadd.f32 %v1662, %v2126
  %v2128 = vpop.f32.mrf.mxu0
  %2129 = vmatprep.mubr.bf16.mxu0 0
  %2130 = vmatmul.mubr.bf16.gmra.mxu0 %v1140
  %v2131 = vpop.f32.mrf.mxu0
  %v2132 = vadd.f32 %v1667, %v2131
  %v2133 = vpop.f32.mrf.mxu0
  %v2134 = vpop.f32.mrf.mxu0
  %v2135 = vadd.f32 %v1670, %v2134
  %v2136 = vpop.f32.mrf.mxu0
  %2137 = vmatprep.mubr.bf16.mxu0 0
  %2138 = vmatmul.mubr.bf16.gmra.mxu0 %v1141
  %v2139 = vpop.f32.mrf.mxu0
  %v2140 = vadd.f32 %v1675, %v2139
  %v2141 = vpop.f32.mrf.mxu0
  %v2142 = vpop.f32.mrf.mxu0
  %v2143 = vadd.f32 %v1678, %v2142
  %v2144 = vpop.f32.mrf.mxu0
  %2145 = vmatprep.mubr.bf16.mxu0 0
  %2146 = vmatmul.mubr.bf16.gmra.mxu0 %v1142
  %v2147 = vpop.f32.mrf.mxu0
  %v2148 = vadd.f32 %v1683, %v2147
  %v2149 = vpop.f32.mrf.mxu0
  %v2150 = vpop.f32.mrf.mxu0
  %v2151 = vadd.f32 %v1686, %v2150
  %v2152 = vpop.f32.mrf.mxu0
  %2153 = vmatprep.mubr.bf16.mxu0 0
  %2154 = vmatmul.mubr.bf16.gmra.mxu0 %v1143
  %v2155 = vpop.f32.mrf.mxu0
  %v2156 = vadd.f32 %v1691, %v2155
  %v2157 = vpop.f32.mrf.mxu0
  %v2158 = vpop.f32.mrf.mxu0
  %v2159 = vadd.f32 %v1694, %v2158
  %v2160 = vpop.f32.mrf.mxu0
  %2161 = vmatprep.mubr.bf16.mxu0 0
  %2162 = vmatmul.mubr.bf16.gmra.mxu0 %v1144
  %v2163 = vpop.f32.mrf.mxu0
  %v2164 = vadd.f32 %v1699, %v2163
  %v2165 = vpop.f32.mrf.mxu0
  %v2166 = vpop.f32.mrf.mxu0
  %v2167 = vadd.f32 %v1702, %v2166
  %v2168 = vpop.f32.mrf.mxu0
  %2169 = vmatprep.mubr.bf16.mxu0 0
  %2170 = vmatmul.mubr.bf16.gmra.mxu0 %v1145
  %v2171 = vpop.f32.mrf.mxu0
  %v2172 = vadd.f32 %v1707, %v2171
  %v2173 = vpop.f32.mrf.mxu0
  %v2174 = vpop.f32.mrf.mxu0
  %v2175 = vadd.f32 %v1710, %v2174
  %v2176 = vpop.f32.mrf.mxu0
  %2177 = vmatprep.mubr.bf16.mxu0 0
  %2178 = vmatmul.mubr.bf16.gmra.mxu0 %v1146
  %v2179 = vpop.f32.mrf.mxu0
  %v2180 = vadd.f32 %v1715, %v2179
  %v2181 = vpop.f32.mrf.mxu0
  %v2182 = vpop.f32.mrf.mxu0
  %v2183 = vadd.f32 %v1718, %v2182
  %v2184 = vpop.f32.mrf.mxu0
  %2185 = vmatprep.mubr.bf16.mxu0 0
  %2186 = vmatmul.mubr.bf16.gmra.mxu0 %v1147
  %v2187 = vpop.f32.mrf.mxu0
  %v2188 = vadd.f32 %v1723, %v2187
  %v2189 = vpop.f32.mrf.mxu0
  %v2190 = vpop.f32.mrf.mxu0
  %v2191 = vadd.f32 %v1726, %v2190
  %v2192 = vpop.f32.mrf.mxu0
  %2193 = vmatprep.mubr.bf16.mxu0 0
  %2194 = vmatmul.mubr.bf16.gmra.mxu0 %v1148
  %v2195 = vpop.f32.mrf.mxu0
  %v2196 = vadd.f32 %v1731, %v2195
  %v2197 = vpop.f32.mrf.mxu0
  %v2198 = vpop.f32.mrf.mxu0
  %v2199 = vadd.f32 %v1734, %v2198
  %v2200 = vpop.f32.mrf.mxu0
  %2201 = vmatprep.mubr.bf16.mxu0 0
  %2202 = vmatmul.mubr.bf16.gmra.mxu0 %v1149
  %v2203 = vpop.f32.mrf.mxu0
  %v2204 = vadd.f32 %v1739, %v2203
  %v2205 = vpop.f32.mrf.mxu0
  %v2206 = vpop.f32.mrf.mxu0
  %v2207 = vadd.f32 %v1742, %v2206
  %v2208 = vpop.f32.mrf.mxu0
  %2209 = vmatprep.mubr.bf16.mxu0 0
  %2210 = vmatmul.mubr.bf16.gmra.mxu0 %v1150
  %v2211 = vpop.f32.mrf.mxu0
  %v2212 = vadd.f32 %v1747, %v2211
  %v2213 = vpop.f32.mrf.mxu0
  %v2214 = vpop.f32.mrf.mxu0
  %v2215 = vadd.f32 %v1750, %v2214
  %v2216 = vpop.f32.mrf.mxu0
  %2217 = vmatprep.mubr.bf16.mxu0 0
  %2218 = vmatmul.mubr.bf16.gmra.mxu0 %v1151
  %v2219 = vpop.f32.mrf.mxu0
  %v2220 = vadd.f32 %v1755, %v2219
  %v2221 = vpop.f32.mrf.mxu0
  %v2222 = vpop.f32.mrf.mxu0
  %v2223 = vadd.f32 %v1758, %v2222
  %v2224 = vpop.f32.mrf.mxu0
  %2225 = vmatprep.mubr.bf16.mxu0 0
  %2226 = vmatmul.mubr.bf16.gmra.mxu0 %v1152
  %v2227 = vpop.f32.mrf.mxu0
  %v2228 = vadd.f32 %v1763, %v2227
  %v2229 = vpop.f32.mrf.mxu0
  %v2230 = vpop.f32.mrf.mxu0
  %v2231 = vadd.f32 %v1766, %v2230
  %v2232 = vpop.f32.mrf.mxu0
  %2233 = vmatprep.mubr.bf16.mxu0 0
  %2234 = vmatmul.mubr.bf16.gmra.mxu0 %v1153
  %v2235 = vpop.f32.mrf.mxu0
  %v2236 = vadd.f32 %v1771, %v2235
  %v2237 = vpop.f32.mrf.mxu0
  %v2238 = vpop.f32.mrf.mxu0
  %v2239 = vadd.f32 %v1774, %v2238
  %v2240 = vpop.f32.mrf.mxu0
  %2241 = vmatprep.mubr.bf16.mxu0 0
  %2242 = vmatmul.mubr.bf16.gmra.mxu0 %v1154
  %v2243 = vpop.f32.mrf.mxu0
  %v2244 = vadd.f32 %v1779, %v2243
  %v2245 = vpop.f32.mrf.mxu0
  %v2246 = vpop.f32.mrf.mxu0
  %v2247 = vadd.f32 %v1782, %v2246
  %v2248 = vpop.f32.mrf.mxu0
  %2249 = vmatprep.mubr.bf16.mxu0 0
  %2250 = vmatmul.mubr.bf16.gmra.mxu0 %v1155
  %v2251 = vpop.f32.mrf.mxu0
  %v2252 = vadd.f32 %v1787, %v2251
  %v2253 = vpop.f32.mrf.mxu0
  %v2254 = vpop.f32.mrf.mxu0
  %v2255 = vadd.f32 %v1790, %v2254
  %v2256 = vpop.f32.mrf.mxu0
  %2257 = vmatprep.mubr.bf16.mxu0 0
  %2258 = vmatmul.mubr.bf16.gmra.mxu0 %v1156
  %v2259 = vpop.f32.mrf.mxu0
  %v2260 = vadd.f32 %v1795, %v2259
  %v2261 = vpop.f32.mrf.mxu0
  %v2262 = vpop.f32.mrf.mxu0
  %v2263 = vadd.f32 %v1798, %v2262
  %v2264 = vpop.f32.mrf.mxu0
  %2265 = vmatprep.mubr.bf16.mxu0 0
  %2266 = vmatmul.mubr.bf16.gmra.mxu0 %v1157
  %v2267 = vpop.f32.mrf.mxu0
  %v2268 = vadd.f32 %v1803, %v2267
  %v2269 = vpop.f32.mrf.mxu0
  %v2270 = vpop.f32.mrf.mxu0
  %v2271 = vadd.f32 %v1806, %v2270
  %v2272 = vpop.f32.mrf.mxu0
  %2273 = vmatprep.mubr.bf16.mxu0 0
  %2274 = vmatmul.mubr.bf16.gmra.mxu0 %v1158
  %v2275 = vpop.f32.mrf.mxu0
  %v2276 = vadd.f32 %v1811, %v2275
  %v2277 = vpop.f32.mrf.mxu0
  %v2278 = vpop.f32.mrf.mxu0
  %v2279 = vadd.f32 %v1814, %v2278
  %v2280 = vpop.f32.mrf.mxu0
  %2281 = vdwg.mxu0
  %v2330 = vunpack.c.l.b16 %v624
  %v2331 = vunpack.c.l.b16 %v625
  %v2332 = vunpack.c.l.b16 %v626
  %v2333 = vunpack.c.l.b16 %v627
  %v2334 = vunpack.c.l.b16 %v628
  %v2335 = vunpack.c.l.b16 %v629
  %v2336 = vunpack.c.l.b16 %v630
  %v2337 = vunpack.c.l.b16 %v631
  %v2338 = vunpack.c.l.b16 %v632
  %v2339 = vunpack.c.l.b16 %v633
  %v2340 = vunpack.c.l.b16 %v634
  %v2341 = vunpack.c.l.b16 %v635
  %v2342 = vunpack.c.l.b16 %v636
  %v2343 = vunpack.c.l.b16 %v637
  %v2344 = vunpack.c.l.b16 %v638
  %v2345 = vunpack.c.l.b16 %v639
  %v2346 = vunpack.c.l.b16 %v640
  %v2347 = vunpack.c.l.b16 %v641
  %v2348 = vunpack.c.l.b16 %v642
  %v2349 = vunpack.c.l.b16 %v643
  %v2350 = vunpack.c.l.b16 %v644
  %v2351 = vunpack.c.l.b16 %v645
  %v2352 = vunpack.c.l.b16 %v646
  %v2353 = vunpack.c.l.b16 %v647
  %v2354 = vunpack.c.l.b16 %v648
  %v2355 = vunpack.c.l.b16 %v649
  %v2356 = vunpack.c.l.b16 %v650
  %v2357 = vunpack.c.l.b16 %v651
  %v2358 = vunpack.c.l.b16 %v652
  %v2359 = vunpack.c.l.b16 %v653
  %v2360 = vunpack.c.l.b16 %v654
  %v2361 = vunpack.c.l.b16 %v655
  %v2362 = vunpack.c.l.b16 %v656
  %v2363 = vunpack.c.l.b16 %v657
  %v2364 = vunpack.c.l.b16 %v658
  %v2365 = vunpack.c.l.b16 %v659
  %v2366 = vunpack.c.l.b16 %v660
  %v2367 = vunpack.c.l.b16 %v661
  %v2368 = vunpack.c.l.b16 %v662
  %v2369 = vunpack.c.l.b16 %v663
  %v2370 = vunpack.c.l.b16 %v664
  %v2371 = vunpack.c.l.b16 %v665
  %v2372 = vunpack.c.l.b16 %v666
  %v2373 = vunpack.c.l.b16 %v667
  %v2374 = vunpack.c.l.b16 %v668
  %v2375 = vunpack.c.l.b16 %v669
  %v2376 = vunpack.c.l.b16 %v670
  %v2377 = vunpack.c.l.b16 %v671
  %v2378 = vpack.c.b16 %v2331, %v2330
  %v2379 = vpack.c.b16 %v2333, %v2332
  %v2380 = vpack.c.b16 %v2335, %v2334
  %v2381 = vpack.c.b16 %v2337, %v2336
  %v2382 = vpack.c.b16 %v2339, %v2338
  %v2383 = vpack.c.b16 %v2341, %v2340
  %v2384 = vpack.c.b16 %v2343, %v2342
  %v2385 = vpack.c.b16 %v2345, %v2344
  %v2386 = vpack.c.b16 %v2347, %v2346
  %v2387 = vpack.c.b16 %v2349, %v2348
  %v2388 = vpack.c.b16 %v2351, %v2350
  %v2389 = vpack.c.b16 %v2353, %v2352
  %v2390 = vpack.c.b16 %v2355, %v2354
  %v2391 = vpack.c.b16 %v2357, %v2356
  %v2392 = vpack.c.b16 %v2359, %v2358
  %v2393 = vpack.c.b16 %v2361, %v2360
  %v2394 = vpack.c.b16 %v2363, %v2362
  %v2395 = vpack.c.b16 %v2365, %v2364
  %v2396 = vpack.c.b16 %v2367, %v2366
  %v2397 = vpack.c.b16 %v2369, %v2368
  %v2398 = vpack.c.b16 %v2371, %v2370
  %v2399 = vpack.c.b16 %v2373, %v2372
  %v2400 = vpack.c.b16 %v2375, %v2374
  %v2401 = vpack.c.b16 %v2377, %v2376
  %2426 = vmatprep.subr.bf16.mxu0 0
  %2427 = vmatpush1.bf16.msra.mxu0 %v2385
  %2428 = vmatprep.subr.bf16.mxu0 0
  %2429 = vmatpush1.bf16.msra.mxu0 %v2384
  %2430 = vmatprep.subr.bf16.mxu0 0
  %2431 = vmatpush1.bf16.msra.mxu0 %v2383
  %2432 = vmatprep.subr.bf16.mxu0 0
  %2433 = vmatpush1.bf16.msra.mxu0 %v2382
  %2434 = vmatprep.subr.bf16.mxu0 0
  %2435 = vmatpush1.bf16.msra.mxu0 %v2381
  %2436 = vmatprep.subr.bf16.mxu0 0
  %2437 = vmatpush1.bf16.msra.mxu0 %v2380
  %2438 = vmatprep.subr.bf16.mxu0 0
  %2439 = vmatpush1.bf16.msra.mxu0 %v2379
  %2440 = vmatprep.subr.bf16.mxu0 0
  %2441 = vmatpush1.bf16.msra.mxu0 %v2378
  %2442 = vmatprep.subr.bf16.mxu0 0
  %2443 = vmatpush2.bf16.msra.mxu0 %v2393
  %2444 = vmatprep.subr.bf16.mxu0 0
  %2445 = vmatpush2.bf16.msra.mxu0 %v2392
  %2446 = vmatprep.subr.bf16.mxu0 0
  %2447 = vmatpush2.bf16.msra.mxu0 %v2391
  %2448 = vmatprep.subr.bf16.mxu0 0
  %2449 = vmatpush2.bf16.msra.mxu0 %v2390
  %2450 = vmatprep.subr.bf16.mxu0 0
  %2451 = vmatpush2.bf16.msra.mxu0 %v2389
  %2452 = vmatprep.subr.bf16.mxu0 0
  %2453 = vmatpush2.bf16.msra.mxu0 %v2388
  %2454 = vmatprep.subr.bf16.mxu0 0
  %2455 = vmatpush2.bf16.msra.mxu0 %v2387
  %2456 = vmatprep.subr.bf16.mxu0 0
  %2457 = vmatpush2.bf16.msra.mxu0 %v2386
  %2458 = vmatprep.mubr.bf16.mxu0 %v408
  %2459 = vmatmul.mubr.bf16.gmra.mxu0 %v246
  %v2460 = vpop.f32.mrf.mxu0
  %v2461 = vadd.f32 %v1852, %v2460
  %v2462 = vpop.f32.mrf.mxu0
  %v2463 = vpop.f32.mrf.mxu0
  %v2464 = vadd.f32 %v1855, %v2463
  %v2465 = vpop.f32.mrf.mxu0
  %2466 = vmatprep.mubr.bf16.mxu0 %v409
  %2467 = vmatmul.mubr.bf16.gmra.mxu0 %v247
  %v2468 = vpop.f32.mrf.mxu0
  %v2469 = vadd.f32 %v1860, %v2468
  %v2470 = vpop.f32.mrf.mxu0
  %v2471 = vpop.f32.mrf.mxu0
  %v2472 = vadd.f32 %v1863, %v2471
  %v2473 = vpop.f32.mrf.mxu0
  %2474 = vmatprep.mubr.bf16.mxu0 %v410
  %2475 = vmatmul.mubr.bf16.gmra.mxu0 %v248
  %v2476 = vpop.f32.mrf.mxu0
  %v2477 = vadd.f32 %v1868, %v2476
  %v2478 = vpop.f32.mrf.mxu0
  %v2479 = vpop.f32.mrf.mxu0
  %v2480 = vadd.f32 %v1871, %v2479
  %v2481 = vpop.f32.mrf.mxu0
  %2482 = vmatprep.mubr.bf16.mxu0 %v411
  %2483 = vmatmul.mubr.bf16.gmra.mxu0 %v249
  %v2484 = vpop.f32.mrf.mxu0
  %v2485 = vadd.f32 %v1876, %v2484
  %v2486 = vpop.f32.mrf.mxu0
  %v2487 = vpop.f32.mrf.mxu0
  %v2488 = vadd.f32 %v1879, %v2487
  %v2489 = vpop.f32.mrf.mxu0
  %2490 = vmatprep.mubr.bf16.mxu0 %v412
  %2491 = vmatmul.mubr.bf16.gmra.mxu0 %v250
  %v2492 = vpop.f32.mrf.mxu0
  %v2493 = vadd.f32 %v1884, %v2492
  %v2494 = vpop.f32.mrf.mxu0
  %v2495 = vpop.f32.mrf.mxu0
  %v2496 = vadd.f32 %v1887, %v2495
  %v2497 = vpop.f32.mrf.mxu0
  %2498 = vmatprep.mubr.bf16.mxu0 %v413
  %2499 = vmatmul.mubr.bf16.gmra.mxu0 %v251
  %v2500 = vpop.f32.mrf.mxu0
  %v2501 = vadd.f32 %v1892, %v2500
  %v2502 = vpop.f32.mrf.mxu0
  %v2503 = vpop.f32.mrf.mxu0
  %v2504 = vadd.f32 %v1895, %v2503
  %v2505 = vpop.f32.mrf.mxu0
  %2506 = vmatprep.mubr.bf16.mxu0 %v414
  %2507 = vmatmul.mubr.bf16.gmra.mxu0 %v252
  %v2508 = vpop.f32.mrf.mxu0
  %v2509 = vadd.f32 %v1900, %v2508
  %v2510 = vpop.f32.mrf.mxu0
  %v2511 = vpop.f32.mrf.mxu0
  %v2512 = vadd.f32 %v1903, %v2511
  %v2513 = vpop.f32.mrf.mxu0
  %2514 = vmatprep.mubr.bf16.mxu0 %v415
  %2515 = vmatmul.mubr.bf16.gmra.mxu0 %v253
  %v2516 = vpop.f32.mrf.mxu0
  %v2517 = vadd.f32 %v1908, %v2516
  %v2518 = vpop.f32.mrf.mxu0
  %v2519 = vpop.f32.mrf.mxu0
  %v2520 = vadd.f32 %v1911, %v2519
  %v2521 = vpop.f32.mrf.mxu0
  %2522 = vmatprep.mubr.bf16.mxu0 %v416
  %2523 = vmatmul.mubr.bf16.gmra.mxu0 %v254
  %v2524 = vpop.f32.mrf.mxu0
  %v2525 = vadd.f32 %v1916, %v2524
  %v2526 = vpop.f32.mrf.mxu0
  %v2527 = vpop.f32.mrf.mxu0
  %v2528 = vadd.f32 %v1919, %v2527
  %v2529 = vpop.f32.mrf.mxu0
  %2530 = vmatprep.mubr.bf16.mxu0 %v417
  %2531 = vmatmul.mubr.bf16.gmra.mxu0 %v255
  %v2532 = vpop.f32.mrf.mxu0
  %v2533 = vadd.f32 %v1924, %v2532
  %v2534 = vpop.f32.mrf.mxu0
  %v2535 = vpop.f32.mrf.mxu0
  %v2536 = vadd.f32 %v1927, %v2535
  %v2537 = vpop.f32.mrf.mxu0
  %2538 = vmatprep.mubr.bf16.mxu0 %v418
  %2539 = vmatmul.mubr.bf16.gmra.mxu0 %v256
  %v2540 = vpop.f32.mrf.mxu0
  %v2541 = vadd.f32 %v1932, %v2540
  %v2542 = vpop.f32.mrf.mxu0
  %v2543 = vpop.f32.mrf.mxu0
  %v2544 = vadd.f32 %v1935, %v2543
  %v2545 = vpop.f32.mrf.mxu0
  %2546 = vmatprep.mubr.bf16.mxu0 %v419
  %2547 = vmatmul.mubr.bf16.gmra.mxu0 %v257
  %v2548 = vpop.f32.mrf.mxu0
  %v2549 = vadd.f32 %v1940, %v2548
  %v2550 = vpop.f32.mrf.mxu0
  %v2551 = vpop.f32.mrf.mxu0
  %v2552 = vadd.f32 %v1943, %v2551
  %v2553 = vpop.f32.mrf.mxu0
  %2554 = vmatprep.mubr.bf16.mxu0 %v420
  %2555 = vmatmul.mubr.bf16.gmra.mxu0 %v258
  %v2556 = vpop.f32.mrf.mxu0
  %v2557 = vadd.f32 %v1948, %v2556
  %v2558 = vpop.f32.mrf.mxu0
  %v2559 = vpop.f32.mrf.mxu0
  %v2560 = vadd.f32 %v1951, %v2559
  %v2561 = vpop.f32.mrf.mxu0
  %2562 = vmatprep.mubr.bf16.mxu0 %v421
  %2563 = vmatmul.mubr.bf16.gmra.mxu0 %v259
  %v2564 = vpop.f32.mrf.mxu0
  %v2565 = vadd.f32 %v1956, %v2564
  %v2566 = vpop.f32.mrf.mxu0
  %v2567 = vpop.f32.mrf.mxu0
  %v2568 = vadd.f32 %v1959, %v2567
  %v2569 = vpop.f32.mrf.mxu0
  %2570 = vmatprep.mubr.bf16.mxu0 %v422
  %2571 = vmatmul.mubr.bf16.gmra.mxu0 %v260
  %v2572 = vpop.f32.mrf.mxu0
  %v2573 = vadd.f32 %v1964, %v2572
  %v2574 = vpop.f32.mrf.mxu0
  %v2575 = vpop.f32.mrf.mxu0
  %v2576 = vadd.f32 %v1967, %v2575
  %v2577 = vpop.f32.mrf.mxu0
  %2578 = vmatprep.mubr.bf16.mxu0 %v423
  %2579 = vmatmul.mubr.bf16.gmra.mxu0 %v261
  %v2580 = vpop.f32.mrf.mxu0
  %v2581 = vadd.f32 %v1972, %v2580
  %v2582 = vpop.f32.mrf.mxu0
  %v2583 = vpop.f32.mrf.mxu0
  %v2584 = vadd.f32 %v1975, %v2583
  %v2585 = vpop.f32.mrf.mxu0
  %2586 = vmatprep.mubr.bf16.mxu0 %v424
  %2587 = vmatmul.mubr.bf16.gmra.mxu0 %v262
  %v2588 = vpop.f32.mrf.mxu0
  %v2589 = vadd.f32 %v1980, %v2588
  %v2590 = vpop.f32.mrf.mxu0
  %v2591 = vpop.f32.mrf.mxu0
  %v2592 = vadd.f32 %v1983, %v2591
  %v2593 = vpop.f32.mrf.mxu0
  %2594 = vmatprep.mubr.bf16.mxu0 %v425
  %2595 = vmatmul.mubr.bf16.gmra.mxu0 %v263
  %v2596 = vpop.f32.mrf.mxu0
  %v2597 = vadd.f32 %v1988, %v2596
  %v2598 = vpop.f32.mrf.mxu0
  %v2599 = vpop.f32.mrf.mxu0
  %v2600 = vadd.f32 %v1991, %v2599
  %v2601 = vpop.f32.mrf.mxu0
  %2602 = vmatprep.mubr.bf16.mxu0 %v426
  %2603 = vmatmul.mubr.bf16.gmra.mxu0 %v264
  %v2604 = vpop.f32.mrf.mxu0
  %v2605 = vadd.f32 %v1996, %v2604
  %v2606 = vpop.f32.mrf.mxu0
  %v2607 = vpop.f32.mrf.mxu0
  %v2608 = vadd.f32 %v1999, %v2607
  %v2609 = vpop.f32.mrf.mxu0
  %2610 = vmatprep.mubr.bf16.mxu0 %v427
  %2611 = vmatmul.mubr.bf16.gmra.mxu0 %v265
  %v2612 = vpop.f32.mrf.mxu0
  %v2613 = vadd.f32 %v2004, %v2612
  %v2614 = vpop.f32.mrf.mxu0
  %v2615 = vpop.f32.mrf.mxu0
  %v2616 = vadd.f32 %v2007, %v2615
  %v2617 = vpop.f32.mrf.mxu0
  %2618 = vmatprep.mubr.bf16.mxu0 %v428
  %2619 = vmatmul.mubr.bf16.gmra.mxu0 %v266
  %v2620 = vpop.f32.mrf.mxu0
  %v2621 = vadd.f32 %v2012, %v2620
  %v2622 = vpop.f32.mrf.mxu0
  %v2623 = vpop.f32.mrf.mxu0
  %v2624 = vadd.f32 %v2015, %v2623
  %v2625 = vpop.f32.mrf.mxu0
  %2626 = vmatprep.mubr.bf16.mxu0 %v429
  %2627 = vmatmul.mubr.bf16.gmra.mxu0 %v267
  %v2628 = vpop.f32.mrf.mxu0
  %v2629 = vadd.f32 %v2020, %v2628
  %v2630 = vpop.f32.mrf.mxu0
  %v2631 = vpop.f32.mrf.mxu0
  %v2632 = vadd.f32 %v2023, %v2631
  %v2633 = vpop.f32.mrf.mxu0
  %2634 = vmatprep.mubr.bf16.mxu0 %v430
  %2635 = vmatmul.mubr.bf16.gmra.mxu0 %v268
  %v2636 = vpop.f32.mrf.mxu0
  %v2637 = vadd.f32 %v2028, %v2636
  %v2638 = vpop.f32.mrf.mxu0
  %v2639 = vpop.f32.mrf.mxu0
  %v2640 = vadd.f32 %v2031, %v2639
  %v2641 = vpop.f32.mrf.mxu0
  %2642 = vmatprep.mubr.bf16.mxu0 %v431
  %2643 = vmatmul.mubr.bf16.gmra.mxu0 %v269
  %v2644 = vpop.f32.mrf.mxu0
  %v2645 = vadd.f32 %v2036, %v2644
  %v2646 = vpop.f32.mrf.mxu0
  %v2647 = vpop.f32.mrf.mxu0
  %v2648 = vadd.f32 %v2039, %v2647
  %v2649 = vpop.f32.mrf.mxu0
  %2650 = vmatprep.mubr.bf16.mxu0 %v432
  %2651 = vmatmul.mubr.bf16.gmra.mxu0 %v270
  %v2652 = vpop.f32.mrf.mxu0
  %v2653 = vadd.f32 %v2044, %v2652
  %v2654 = vpop.f32.mrf.mxu0
  %v2655 = vpop.f32.mrf.mxu0
  %v2656 = vadd.f32 %v2047, %v2655
  %v2657 = vpop.f32.mrf.mxu0
  %2658 = vmatprep.mubr.bf16.mxu0 %v433
  %2659 = vmatmul.mubr.bf16.gmra.mxu0 %v271
  %v2660 = vpop.f32.mrf.mxu0
  %v2661 = vadd.f32 %v2052, %v2660
  %v2662 = vpop.f32.mrf.mxu0
  %v2663 = vpop.f32.mrf.mxu0
  %v2664 = vadd.f32 %v2055, %v2663
  %v2665 = vpop.f32.mrf.mxu0
  %2666 = vmatprep.mubr.bf16.mxu0 %v434
  %2667 = vmatmul.mubr.bf16.gmra.mxu0 %v272
  %v2668 = vpop.f32.mrf.mxu0
  %v2669 = vadd.f32 %v2060, %v2668
  %v2670 = vpop.f32.mrf.mxu0
  %v2671 = vpop.f32.mrf.mxu0
  %v2672 = vadd.f32 %v2063, %v2671
  %v2673 = vpop.f32.mrf.mxu0
  %2674 = vmatprep.mubr.bf16.mxu0 %v435
  %2675 = vmatmul.mubr.bf16.gmra.mxu0 %v273
  %v2676 = vpop.f32.mrf.mxu0
  %v2677 = vadd.f32 %v2068, %v2676
  %v2678 = vpop.f32.mrf.mxu0
  %v2679 = vpop.f32.mrf.mxu0
  %v2680 = vadd.f32 %v2071, %v2679
  %v2681 = vpop.f32.mrf.mxu0
  %2682 = vmatprep.mubr.bf16.mxu0 %v436
  %2683 = vmatmul.mubr.bf16.gmra.mxu0 %v274
  %v2684 = vpop.f32.mrf.mxu0
  %v2685 = vadd.f32 %v2076, %v2684
  %v2686 = vpop.f32.mrf.mxu0
  %v2687 = vpop.f32.mrf.mxu0
  %v2688 = vadd.f32 %v2079, %v2687
  %v2689 = vpop.f32.mrf.mxu0
  %2690 = vmatprep.mubr.bf16.mxu0 %v437
  %2691 = vmatmul.mubr.bf16.gmra.mxu0 %v275
  %v2692 = vpop.f32.mrf.mxu0
  %v2693 = vadd.f32 %v2084, %v2692
  %v2694 = vpop.f32.mrf.mxu0
  %v2695 = vpop.f32.mrf.mxu0
  %v2696 = vadd.f32 %v2087, %v2695
  %v2697 = vpop.f32.mrf.mxu0
  %2698 = vmatprep.mubr.bf16.mxu0 %v438
  %2699 = vmatmul.mubr.bf16.gmra.mxu0 %v276
  %v2700 = vpop.f32.mrf.mxu0
  %v2701 = vadd.f32 %v2092, %v2700
  %v2702 = vpop.f32.mrf.mxu0
  %v2703 = vpop.f32.mrf.mxu0
  %v2704 = vadd.f32 %v2095, %v2703
  %v2705 = vpop.f32.mrf.mxu0
  %2706 = vmatprep.mubr.bf16.mxu0 %v439
  %2707 = vmatmul.mubr.bf16.gmra.mxu0 %v277
  %v2708 = vpop.f32.mrf.mxu0
  %v2709 = vadd.f32 %v2100, %v2708
  %v2710 = vpop.f32.mrf.mxu0
  %v2711 = vpop.f32.mrf.mxu0
  %v2712 = vadd.f32 %v2103, %v2711
  %v2713 = vpop.f32.mrf.mxu0
  %2714 = vmatprep.mubr.bf16.mxu0 %v440
  %2715 = vmatmul.mubr.bf16.gmra.mxu0 %v278
  %v2716 = vpop.f32.mrf.mxu0
  %v2717 = vadd.f32 %v2108, %v2716
  %v2718 = vpop.f32.mrf.mxu0
  %v2719 = vpop.f32.mrf.mxu0
  %v2720 = vadd.f32 %v2111, %v2719
  %v2721 = vpop.f32.mrf.mxu0
  %2722 = vmatprep.mubr.bf16.mxu0 %v441
  %2723 = vmatmul.mubr.bf16.gmra.mxu0 %v279
  %v2724 = vpop.f32.mrf.mxu0
  %v2725 = vadd.f32 %v2116, %v2724
  %v2726 = vpop.f32.mrf.mxu0
  %v2727 = vpop.f32.mrf.mxu0
  %v2728 = vadd.f32 %v2119, %v2727
  %v2729 = vpop.f32.mrf.mxu0
  %2730 = vmatprep.mubr.bf16.mxu0 %v442
  %2731 = vmatmul.mubr.bf16.gmra.mxu0 %v280
  %v2732 = vpop.f32.mrf.mxu0
  %v2733 = vadd.f32 %v2124, %v2732
  %v2734 = vpop.f32.mrf.mxu0
  %v2735 = vpop.f32.mrf.mxu0
  %v2736 = vadd.f32 %v2127, %v2735
  %v2737 = vpop.f32.mrf.mxu0
  %2738 = vmatprep.mubr.bf16.mxu0 %v443
  %2739 = vmatmul.mubr.bf16.gmra.mxu0 %v281
  %v2740 = vpop.f32.mrf.mxu0
  %v2741 = vadd.f32 %v2132, %v2740
  %v2742 = vpop.f32.mrf.mxu0
  %v2743 = vpop.f32.mrf.mxu0
  %v2744 = vadd.f32 %v2135, %v2743
  %v2745 = vpop.f32.mrf.mxu0
  %2746 = vmatprep.mubr.bf16.mxu0 %v444
  %2747 = vmatmul.mubr.bf16.gmra.mxu0 %v282
  %v2748 = vpop.f32.mrf.mxu0
  %v2749 = vadd.f32 %v2140, %v2748
  %v2750 = vpop.f32.mrf.mxu0
  %v2751 = vpop.f32.mrf.mxu0
  %v2752 = vadd.f32 %v2143, %v2751
  %v2753 = vpop.f32.mrf.mxu0
  %2754 = vmatprep.mubr.bf16.mxu0 %v445
  %2755 = vmatmul.mubr.bf16.gmra.mxu0 %v283
  %v2756 = vpop.f32.mrf.mxu0
  %v2757 = vadd.f32 %v2148, %v2756
  %v2758 = vpop.f32.mrf.mxu0
  %v2759 = vpop.f32.mrf.mxu0
  %v2760 = vadd.f32 %v2151, %v2759
  %v2761 = vpop.f32.mrf.mxu0
  %2762 = vmatprep.mubr.bf16.mxu0 %v446
  %2763 = vmatmul.mubr.bf16.gmra.mxu0 %v284
  %v2764 = vpop.f32.mrf.mxu0
  %v2765 = vadd.f32 %v2156, %v2764
  %v2766 = vpop.f32.mrf.mxu0
  %v2767 = vpop.f32.mrf.mxu0
  %v2768 = vadd.f32 %v2159, %v2767
  %v2769 = vpop.f32.mrf.mxu0
  %2770 = vmatprep.mubr.bf16.mxu0 %v447
  %2771 = vmatmul.mubr.bf16.gmra.mxu0 %v285
  %v2772 = vpop.f32.mrf.mxu0
  %v2773 = vadd.f32 %v2164, %v2772
  %v2774 = vpop.f32.mrf.mxu0
  %v2775 = vpop.f32.mrf.mxu0
  %v2776 = vadd.f32 %v2167, %v2775
  %v2777 = vpop.f32.mrf.mxu0
  %2778 = vmatprep.mubr.bf16.mxu0 %v448
  %2779 = vmatmul.mubr.bf16.gmra.mxu0 %v286
  %v2780 = vpop.f32.mrf.mxu0
  %v2781 = vadd.f32 %v2172, %v2780
  %v2782 = vpop.f32.mrf.mxu0
  %v2783 = vpop.f32.mrf.mxu0
  %v2784 = vadd.f32 %v2175, %v2783
  %v2785 = vpop.f32.mrf.mxu0
  %2786 = vmatprep.mubr.bf16.mxu0 %v449
  %2787 = vmatmul.mubr.bf16.gmra.mxu0 %v287
  %v2788 = vpop.f32.mrf.mxu0
  %v2789 = vadd.f32 %v2180, %v2788
  %v2790 = vpop.f32.mrf.mxu0
  %v2791 = vpop.f32.mrf.mxu0
  %v2792 = vadd.f32 %v2183, %v2791
  %v2793 = vpop.f32.mrf.mxu0
  %2794 = vmatprep.mubr.bf16.mxu0 %v450
  %2795 = vmatmul.mubr.bf16.gmra.mxu0 %v288
  %v2796 = vpop.f32.mrf.mxu0
  %v2797 = vadd.f32 %v2188, %v2796
  %v2798 = vpop.f32.mrf.mxu0
  %v2799 = vpop.f32.mrf.mxu0
  %v2800 = vadd.f32 %v2191, %v2799
  %v2801 = vpop.f32.mrf.mxu0
  %2802 = vmatprep.mubr.bf16.mxu0 %v451
  %2803 = vmatmul.mubr.bf16.gmra.mxu0 %v289
  %v2804 = vpop.f32.mrf.mxu0
  %v2805 = vadd.f32 %v2196, %v2804
  %v2806 = vpop.f32.mrf.mxu0
  %v2807 = vpop.f32.mrf.mxu0
  %v2808 = vadd.f32 %v2199, %v2807
  %v2809 = vpop.f32.mrf.mxu0
  %2810 = vmatprep.mubr.bf16.mxu0 %v452
  %2811 = vmatmul.mubr.bf16.gmra.mxu0 %v290
  %v2812 = vpop.f32.mrf.mxu0
  %v2813 = vadd.f32 %v2204, %v2812
  %v2814 = vpop.f32.mrf.mxu0
  %v2815 = vpop.f32.mrf.mxu0
  %v2816 = vadd.f32 %v2207, %v2815
  %v2817 = vpop.f32.mrf.mxu0
  %2818 = vmatprep.mubr.bf16.mxu0 %v453
  %2819 = vmatmul.mubr.bf16.gmra.mxu0 %v291
  %v2820 = vpop.f32.mrf.mxu0
  %v2821 = vadd.f32 %v2212, %v2820
  %v2822 = vpop.f32.mrf.mxu0
  %v2823 = vpop.f32.mrf.mxu0
  %v2824 = vadd.f32 %v2215, %v2823
  %v2825 = vpop.f32.mrf.mxu0
  %2826 = vmatprep.mubr.bf16.mxu0 %v454
  %2827 = vmatmul.mubr.bf16.gmra.mxu0 %v292
  %v2828 = vpop.f32.mrf.mxu0
  %v2829 = vadd.f32 %v2220, %v2828
  %v2830 = vpop.f32.mrf.mxu0
  %v2831 = vpop.f32.mrf.mxu0
  %v2832 = vadd.f32 %v2223, %v2831
  %v2833 = vpop.f32.mrf.mxu0
  %2834 = vmatprep.mubr.bf16.mxu0 %v455
  %2835 = vmatmul.mubr.bf16.gmra.mxu0 %v293
  %v2836 = vpop.f32.mrf.mxu0
  %v2837 = vadd.f32 %v2228, %v2836
  %v2838 = vpop.f32.mrf.mxu0
  %v2839 = vpop.f32.mrf.mxu0
  %v2840 = vadd.f32 %v2231, %v2839
  %v2841 = vpop.f32.mrf.mxu0
  %2842 = vmatprep.mubr.bf16.mxu0 %v456
  %2843 = vmatmul.mubr.bf16.gmra.mxu0 %v294
  %v2844 = vpop.f32.mrf.mxu0
  %v2845 = vadd.f32 %v2236, %v2844
  %v2846 = vpop.f32.mrf.mxu0
  %v2847 = vpop.f32.mrf.mxu0
  %v2848 = vadd.f32 %v2239, %v2847
  %v2849 = vpop.f32.mrf.mxu0
  %2850 = vmatprep.mubr.bf16.mxu0 %v457
  %2851 = vmatmul.mubr.bf16.gmra.mxu0 %v295
  %v2852 = vpop.f32.mrf.mxu0
  %v2853 = vadd.f32 %v2244, %v2852
  %v2854 = vpop.f32.mrf.mxu0
  %v2855 = vpop.f32.mrf.mxu0
  %v2856 = vadd.f32 %v2247, %v2855
  %v2857 = vpop.f32.mrf.mxu0
  %2858 = vmatprep.mubr.bf16.mxu0 %v458
  %2859 = vmatmul.mubr.bf16.gmra.mxu0 %v296
  %v2860 = vpop.f32.mrf.mxu0
  %v2861 = vadd.f32 %v2252, %v2860
  %v2862 = vpop.f32.mrf.mxu0
  %v2863 = vpop.f32.mrf.mxu0
  %v2864 = vadd.f32 %v2255, %v2863
  %v2865 = vpop.f32.mrf.mxu0
  %2866 = vmatprep.mubr.bf16.mxu0 %v459
  %2867 = vmatmul.mubr.bf16.gmra.mxu0 %v297
  %v2868 = vpop.f32.mrf.mxu0
  %v2869 = vadd.f32 %v2260, %v2868
  %v2870 = vpop.f32.mrf.mxu0
  %v2871 = vpop.f32.mrf.mxu0
  %v2872 = vadd.f32 %v2263, %v2871
  %v2873 = vpop.f32.mrf.mxu0
  %2874 = vmatprep.mubr.bf16.mxu0 %v460
  %2875 = vmatmul.mubr.bf16.gmra.mxu0 %v298
  %v2876 = vpop.f32.mrf.mxu0
  %v2877 = vadd.f32 %v2268, %v2876
  %v2878 = vpop.f32.mrf.mxu0
  %v2879 = vpop.f32.mrf.mxu0
  %v2880 = vadd.f32 %v2271, %v2879
  %v2881 = vpop.f32.mrf.mxu0
  %2882 = vmatprep.mubr.bf16.mxu0 %v461
  %2883 = vmatmul.mubr.bf16.gmra.mxu0 %v299
  %v2884 = vpop.f32.mrf.mxu0
  %v2885 = vadd.f32 %v2276, %v2884
  %v2886 = vpop.f32.mrf.mxu0
  %v2887 = vpop.f32.mrf.mxu0
  %v2888 = vadd.f32 %v2279, %v2887
  %v2889 = vpop.f32.mrf.mxu0
  %2890 = vdwg.mxu0
  %2891 = vmatprep.subr.bf16.mxu0 0
  %2892 = vmatpush1.bf16.msra.mxu0 %v2401
  %2893 = vmatprep.subr.bf16.mxu0 0
  %2894 = vmatpush1.bf16.msra.mxu0 %v2400
  %2895 = vmatprep.subr.bf16.mxu0 0
  %2896 = vmatpush1.bf16.msra.mxu0 %v2399
  %2897 = vmatprep.subr.bf16.mxu0 0
  %2898 = vmatpush1.bf16.msra.mxu0 %v2398
  %2899 = vmatprep.subr.bf16.mxu0 0
  %2900 = vmatpush1.bf16.msra.mxu0 %v2397
  %2901 = vmatprep.subr.bf16.mxu0 0
  %2902 = vmatpush1.bf16.msra.mxu0 %v2396
  %2903 = vmatprep.subr.bf16.mxu0 0
  %2904 = vmatpush1.bf16.msra.mxu0 %v2395
  %2905 = vmatprep.subr.bf16.mxu0 0
  %2906 = vmatpush1.bf16.msra.mxu0 %v2394
  %2907 = vmatprep.subr.bf16.mxu0 0
  %2908 = vmatpush2.bf16.msra.mxu0 0
  %2909 = vmatprep.subr.bf16.mxu0 0
  %2910 = vmatpush2.bf16.msra.mxu0 0
  %2911 = vmatprep.subr.bf16.mxu0 0
  %2912 = vmatpush2.bf16.msra.mxu0 0
  %2913 = vmatprep.subr.bf16.mxu0 0
  %2914 = vmatpush2.bf16.msra.mxu0 0
  %2915 = vmatprep.subr.bf16.mxu0 0
  %2916 = vmatpush2.bf16.msra.mxu0 0
  %2917 = vmatprep.subr.bf16.mxu0 0
  %2918 = vmatpush2.bf16.msra.mxu0 0
  %2919 = vmatprep.subr.bf16.mxu0 0
  %2920 = vmatpush2.bf16.msra.mxu0 0
  %2921 = vmatprep.subr.bf16.mxu0 0
  %2922 = vmatpush2.bf16.msra.mxu0 0
  %2923 = vmatprep.mubr.bf16.mxu0 0
  %2924 = vmatmul.mubr.bf16.gmra.mxu0 %v570
  %v2925 = vpop.f32.mrf.mxu0
  %v2926 = vadd.f32 %v2461, %v2925
  %v2927 = vpop.f32.mrf.mxu0
  %v2928 = vpop.f32.mrf.mxu0
  %v2929 = vadd.f32 %v2464, %v2928
  %v2930 = vpop.f32.mrf.mxu0
  %2931 = vmatprep.mubr.bf16.mxu0 0
  %2932 = vmatmul.mubr.bf16.gmra.mxu0 %v571
  %v2933 = vpop.f32.mrf.mxu0
  %v2934 = vadd.f32 %v2469, %v2933
  %v2935 = vpop.f32.mrf.mxu0
  %v2936 = vpop.f32.mrf.mxu0
  %v2937 = vadd.f32 %v2472, %v2936
  %v2938 = vpop.f32.mrf.mxu0
  %2939 = vmatprep.mubr.bf16.mxu0 0
  %2940 = vmatmul.mubr.bf16.gmra.mxu0 %v572
  %v2941 = vpop.f32.mrf.mxu0
  %v2942 = vadd.f32 %v2477, %v2941
  %v2943 = vpop.f32.mrf.mxu0
  %v2944 = vpop.f32.mrf.mxu0
  %v2945 = vadd.f32 %v2480, %v2944
  %v2946 = vpop.f32.mrf.mxu0
  %2947 = vmatprep.mubr.bf16.mxu0 0
  %2948 = vmatmul.mubr.bf16.gmra.mxu0 %v573
  %v2949 = vpop.f32.mrf.mxu0
  %v2950 = vadd.f32 %v2485, %v2949
  %v2951 = vpop.f32.mrf.mxu0
  %v2952 = vpop.f32.mrf.mxu0
  %v2953 = vadd.f32 %v2488, %v2952
  %v2954 = vpop.f32.mrf.mxu0
  %2955 = vmatprep.mubr.bf16.mxu0 0
  %2956 = vmatmul.mubr.bf16.gmra.mxu0 %v574
  %v2957 = vpop.f32.mrf.mxu0
  %v2958 = vadd.f32 %v2493, %v2957
  %v2959 = vpop.f32.mrf.mxu0
  %v2960 = vpop.f32.mrf.mxu0
  %v2961 = vadd.f32 %v2496, %v2960
  %v2962 = vpop.f32.mrf.mxu0
  %2963 = vmatprep.mubr.bf16.mxu0 0
  %2964 = vmatmul.mubr.bf16.gmra.mxu0 %v575
  %v2965 = vpop.f32.mrf.mxu0
  %v2966 = vadd.f32 %v2501, %v2965
  %v2967 = vpop.f32.mrf.mxu0
  %v2968 = vpop.f32.mrf.mxu0
  %v2969 = vadd.f32 %v2504, %v2968
  %v2970 = vpop.f32.mrf.mxu0
  %2971 = vmatprep.mubr.bf16.mxu0 0
  %2972 = vmatmul.mubr.bf16.gmra.mxu0 %v576
  %v2973 = vpop.f32.mrf.mxu0
  %v2974 = vadd.f32 %v2509, %v2973
  %v2975 = vpop.f32.mrf.mxu0
  %v2976 = vpop.f32.mrf.mxu0
  %v2977 = vadd.f32 %v2512, %v2976
  %v2978 = vpop.f32.mrf.mxu0
  %2979 = vmatprep.mubr.bf16.mxu0 0
  %2980 = vmatmul.mubr.bf16.gmra.mxu0 %v577
  %v2981 = vpop.f32.mrf.mxu0
  %v2982 = vadd.f32 %v2517, %v2981
  %v2983 = vpop.f32.mrf.mxu0
  %v2984 = vpop.f32.mrf.mxu0
  %v2985 = vadd.f32 %v2520, %v2984
  %v2986 = vpop.f32.mrf.mxu0
  %2987 = vmatprep.mubr.bf16.mxu0 0
  %2988 = vmatmul.mubr.bf16.gmra.mxu0 %v578
  %v2989 = vpop.f32.mrf.mxu0
  %v2990 = vadd.f32 %v2525, %v2989
  %v2991 = vpop.f32.mrf.mxu0
  %v2992 = vpop.f32.mrf.mxu0
  %v2993 = vadd.f32 %v2528, %v2992
  %v2994 = vpop.f32.mrf.mxu0
  %2995 = vmatprep.mubr.bf16.mxu0 0
  %2996 = vmatmul.mubr.bf16.gmra.mxu0 %v579
  %v2997 = vpop.f32.mrf.mxu0
  %v2998 = vadd.f32 %v2533, %v2997
  %v2999 = vpop.f32.mrf.mxu0
  %v3000 = vpop.f32.mrf.mxu0
  %v3001 = vadd.f32 %v2536, %v3000
  %v3002 = vpop.f32.mrf.mxu0
  %3003 = vmatprep.mubr.bf16.mxu0 0
  %3004 = vmatmul.mubr.bf16.gmra.mxu0 %v580
  %v3005 = vpop.f32.mrf.mxu0
  %v3006 = vadd.f32 %v2541, %v3005
  %v3007 = vpop.f32.mrf.mxu0
  %v3008 = vpop.f32.mrf.mxu0
  %v3009 = vadd.f32 %v2544, %v3008
  %v3010 = vpop.f32.mrf.mxu0
  %3011 = vmatprep.mubr.bf16.mxu0 0
  %3012 = vmatmul.mubr.bf16.gmra.mxu0 %v581
  %v3013 = vpop.f32.mrf.mxu0
  %v3014 = vadd.f32 %v2549, %v3013
  %v3015 = vpop.f32.mrf.mxu0
  %v3016 = vpop.f32.mrf.mxu0
  %v3017 = vadd.f32 %v2552, %v3016
  %v3018 = vpop.f32.mrf.mxu0
  %3019 = vmatprep.mubr.bf16.mxu0 0
  %3020 = vmatmul.mubr.bf16.gmra.mxu0 %v582
  %v3021 = vpop.f32.mrf.mxu0
  %v3022 = vadd.f32 %v2557, %v3021
  %v3023 = vpop.f32.mrf.mxu0
  %v3024 = vpop.f32.mrf.mxu0
  %v3025 = vadd.f32 %v2560, %v3024
  %v3026 = vpop.f32.mrf.mxu0
  %3027 = vmatprep.mubr.bf16.mxu0 0
  %3028 = vmatmul.mubr.bf16.gmra.mxu0 %v583
  %v3029 = vpop.f32.mrf.mxu0
  %v3030 = vadd.f32 %v2565, %v3029
  %v3031 = vpop.f32.mrf.mxu0
  %v3032 = vpop.f32.mrf.mxu0
  %v3033 = vadd.f32 %v2568, %v3032
  %v3034 = vpop.f32.mrf.mxu0
  %3035 = vmatprep.mubr.bf16.mxu0 0
  %3036 = vmatmul.mubr.bf16.gmra.mxu0 %v584
  %v3037 = vpop.f32.mrf.mxu0
  %v3038 = vadd.f32 %v2573, %v3037
  %v3039 = vpop.f32.mrf.mxu0
  %v3040 = vpop.f32.mrf.mxu0
  %v3041 = vadd.f32 %v2576, %v3040
  %v3042 = vpop.f32.mrf.mxu0
  %3043 = vmatprep.mubr.bf16.mxu0 0
  %3044 = vmatmul.mubr.bf16.gmra.mxu0 %v585
  %v3045 = vpop.f32.mrf.mxu0
  %v3046 = vadd.f32 %v2581, %v3045
  %v3047 = vpop.f32.mrf.mxu0
  %v3048 = vpop.f32.mrf.mxu0
  %v3049 = vadd.f32 %v2584, %v3048
  %v3050 = vpop.f32.mrf.mxu0
  %3051 = vmatprep.mubr.bf16.mxu0 0
  %3052 = vmatmul.mubr.bf16.gmra.mxu0 %v586
  %v3053 = vpop.f32.mrf.mxu0
  %v3054 = vadd.f32 %v2589, %v3053
  %v3055 = vpop.f32.mrf.mxu0
  %v3056 = vpop.f32.mrf.mxu0
  %v3057 = vadd.f32 %v2592, %v3056
  %v3058 = vpop.f32.mrf.mxu0
  %3059 = vmatprep.mubr.bf16.mxu0 0
  %3060 = vmatmul.mubr.bf16.gmra.mxu0 %v587
  %v3061 = vpop.f32.mrf.mxu0
  %v3062 = vadd.f32 %v2597, %v3061
  %v3063 = vpop.f32.mrf.mxu0
  %v3064 = vpop.f32.mrf.mxu0
  %v3065 = vadd.f32 %v2600, %v3064
  %v3066 = vpop.f32.mrf.mxu0
  %3067 = vmatprep.mubr.bf16.mxu0 0
  %3068 = vmatmul.mubr.bf16.gmra.mxu0 %v588
  %v3069 = vpop.f32.mrf.mxu0
  %v3070 = vadd.f32 %v2605, %v3069
  %v3071 = vpop.f32.mrf.mxu0
  %v3072 = vpop.f32.mrf.mxu0
  %v3073 = vadd.f32 %v2608, %v3072
  %v3074 = vpop.f32.mrf.mxu0
  %3075 = vmatprep.mubr.bf16.mxu0 0
  %3076 = vmatmul.mubr.bf16.gmra.mxu0 %v589
  %v3077 = vpop.f32.mrf.mxu0
  %v3078 = vadd.f32 %v2613, %v3077
  %v3079 = vpop.f32.mrf.mxu0
  %v3080 = vpop.f32.mrf.mxu0
  %v3081 = vadd.f32 %v2616, %v3080
  %v3082 = vpop.f32.mrf.mxu0
  %3083 = vmatprep.mubr.bf16.mxu0 0
  %3084 = vmatmul.mubr.bf16.gmra.mxu0 %v590
  %v3085 = vpop.f32.mrf.mxu0
  %v3086 = vadd.f32 %v2621, %v3085
  %v3087 = vpop.f32.mrf.mxu0
  %v3088 = vpop.f32.mrf.mxu0
  %v3089 = vadd.f32 %v2624, %v3088
  %v3090 = vpop.f32.mrf.mxu0
  %3091 = vmatprep.mubr.bf16.mxu0 0
  %3092 = vmatmul.mubr.bf16.gmra.mxu0 %v591
  %v3093 = vpop.f32.mrf.mxu0
  %v3094 = vadd.f32 %v2629, %v3093
  %v3095 = vpop.f32.mrf.mxu0
  %v3096 = vpop.f32.mrf.mxu0
  %v3097 = vadd.f32 %v2632, %v3096
  %v3098 = vpop.f32.mrf.mxu0
  %3099 = vmatprep.mubr.bf16.mxu0 0
  %3100 = vmatmul.mubr.bf16.gmra.mxu0 %v592
  %v3101 = vpop.f32.mrf.mxu0
  %v3102 = vadd.f32 %v2637, %v3101
  %v3103 = vpop.f32.mrf.mxu0
  %v3104 = vpop.f32.mrf.mxu0
  %v3105 = vadd.f32 %v2640, %v3104
  %v3106 = vpop.f32.mrf.mxu0
  %3107 = vmatprep.mubr.bf16.mxu0 0
  %3108 = vmatmul.mubr.bf16.gmra.mxu0 %v593
  %v3109 = vpop.f32.mrf.mxu0
  %v3110 = vadd.f32 %v2645, %v3109
  %v3111 = vpop.f32.mrf.mxu0
  %v3112 = vpop.f32.mrf.mxu0
  %v3113 = vadd.f32 %v2648, %v3112
  %v3114 = vpop.f32.mrf.mxu0
  %3115 = vmatprep.mubr.bf16.mxu0 0
  %3116 = vmatmul.mubr.bf16.gmra.mxu0 %v594
  %v3117 = vpop.f32.mrf.mxu0
  %v3118 = vadd.f32 %v2653, %v3117
  %v3119 = vpop.f32.mrf.mxu0
  %v3120 = vpop.f32.mrf.mxu0
  %v3121 = vadd.f32 %v2656, %v3120
  %v3122 = vpop.f32.mrf.mxu0
  %3123 = vmatprep.mubr.bf16.mxu0 0
  %3124 = vmatmul.mubr.bf16.gmra.mxu0 %v595
  %v3125 = vpop.f32.mrf.mxu0
  %v3126 = vadd.f32 %v2661, %v3125
  %v3127 = vpop.f32.mrf.mxu0
  %v3128 = vpop.f32.mrf.mxu0
  %v3129 = vadd.f32 %v2664, %v3128
  %v3130 = vpop.f32.mrf.mxu0
  %3131 = vmatprep.mubr.bf16.mxu0 0
  %3132 = vmatmul.mubr.bf16.gmra.mxu0 %v596
  %v3133 = vpop.f32.mrf.mxu0
  %v3134 = vadd.f32 %v2669, %v3133
  %v3135 = vpop.f32.mrf.mxu0
  %v3136 = vpop.f32.mrf.mxu0
  %v3137 = vadd.f32 %v2672, %v3136
  %v3138 = vpop.f32.mrf.mxu0
  %3139 = vmatprep.mubr.bf16.mxu0 0
  %3140 = vmatmul.mubr.bf16.gmra.mxu0 %v597
  %v3141 = vpop.f32.mrf.mxu0
  %v3142 = vadd.f32 %v2677, %v3141
  %v3143 = vpop.f32.mrf.mxu0
  %v3144 = vpop.f32.mrf.mxu0
  %v3145 = vadd.f32 %v2680, %v3144
  %v3146 = vpop.f32.mrf.mxu0
  %3147 = vmatprep.mubr.bf16.mxu0 0
  %3148 = vmatmul.mubr.bf16.gmra.mxu0 %v598
  %v3149 = vpop.f32.mrf.mxu0
  %v3150 = vadd.f32 %v2685, %v3149
  %v3151 = vpop.f32.mrf.mxu0
  %v3152 = vpop.f32.mrf.mxu0
  %v3153 = vadd.f32 %v2688, %v3152
  %v3154 = vpop.f32.mrf.mxu0
  %3155 = vmatprep.mubr.bf16.mxu0 0
  %3156 = vmatmul.mubr.bf16.gmra.mxu0 %v599
  %v3157 = vpop.f32.mrf.mxu0
  %v3158 = vadd.f32 %v2693, %v3157
  %v3159 = vpop.f32.mrf.mxu0
  %v3160 = vpop.f32.mrf.mxu0
  %v3161 = vadd.f32 %v2696, %v3160
  %v3162 = vpop.f32.mrf.mxu0
  %3163 = vmatprep.mubr.bf16.mxu0 0
  %3164 = vmatmul.mubr.bf16.gmra.mxu0 %v600
  %v3165 = vpop.f32.mrf.mxu0
  %v3166 = vadd.f32 %v2701, %v3165
  %v3167 = vpop.f32.mrf.mxu0
  %v3168 = vpop.f32.mrf.mxu0
  %v3169 = vadd.f32 %v2704, %v3168
  %v3170 = vpop.f32.mrf.mxu0
  %3171 = vmatprep.mubr.bf16.mxu0 0
  %3172 = vmatmul.mubr.bf16.gmra.mxu0 %v601
  %v3173 = vpop.f32.mrf.mxu0
  %v3174 = vadd.f32 %v2709, %v3173
  %v3175 = vpop.f32.mrf.mxu0
  %v3176 = vpop.f32.mrf.mxu0
  %v3177 = vadd.f32 %v2712, %v3176
  %v3178 = vpop.f32.mrf.mxu0
  %3179 = vmatprep.mubr.bf16.mxu0 0
  %3180 = vmatmul.mubr.bf16.gmra.mxu0 %v602
  %v3181 = vpop.f32.mrf.mxu0
  %v3182 = vadd.f32 %v2717, %v3181
  %v3183 = vpop.f32.mrf.mxu0
  %v3184 = vpop.f32.mrf.mxu0
  %v3185 = vadd.f32 %v2720, %v3184
  %v3186 = vpop.f32.mrf.mxu0
  %3187 = vmatprep.mubr.bf16.mxu0 0
  %3188 = vmatmul.mubr.bf16.gmra.mxu0 %v603
  %v3189 = vpop.f32.mrf.mxu0
  %v3190 = vadd.f32 %v2725, %v3189
  %v3191 = vpop.f32.mrf.mxu0
  %v3192 = vpop.f32.mrf.mxu0
  %v3193 = vadd.f32 %v2728, %v3192
  %v3194 = vpop.f32.mrf.mxu0
  %3195 = vmatprep.mubr.bf16.mxu0 0
  %3196 = vmatmul.mubr.bf16.gmra.mxu0 %v604
  %v3197 = vpop.f32.mrf.mxu0
  %v3198 = vadd.f32 %v2733, %v3197
  %v3199 = vpop.f32.mrf.mxu0
  %v3200 = vpop.f32.mrf.mxu0
  %v3201 = vadd.f32 %v2736, %v3200
  %v3202 = vpop.f32.mrf.mxu0
  %3203 = vmatprep.mubr.bf16.mxu0 0
  %3204 = vmatmul.mubr.bf16.gmra.mxu0 %v605
  %v3205 = vpop.f32.mrf.mxu0
  %v3206 = vadd.f32 %v2741, %v3205
  %v3207 = vpop.f32.mrf.mxu0
  %v3208 = vpop.f32.mrf.mxu0
  %v3209 = vadd.f32 %v2744, %v3208
  %v3210 = vpop.f32.mrf.mxu0
  %3211 = vmatprep.mubr.bf16.mxu0 0
  %3212 = vmatmul.mubr.bf16.gmra.mxu0 %v606
  %v3213 = vpop.f32.mrf.mxu0
  %v3214 = vadd.f32 %v2749, %v3213
  %v3215 = vpop.f32.mrf.mxu0
  %v3216 = vpop.f32.mrf.mxu0
  %v3217 = vadd.f32 %v2752, %v3216
  %v3218 = vpop.f32.mrf.mxu0
  %3219 = vmatprep.mubr.bf16.mxu0 0
  %3220 = vmatmul.mubr.bf16.gmra.mxu0 %v607
  %v3221 = vpop.f32.mrf.mxu0
  %v3222 = vadd.f32 %v2757, %v3221
  %v3223 = vpop.f32.mrf.mxu0
  %v3224 = vpop.f32.mrf.mxu0
  %v3225 = vadd.f32 %v2760, %v3224
  %v3226 = vpop.f32.mrf.mxu0
  %3227 = vmatprep.mubr.bf16.mxu0 0
  %3228 = vmatmul.mubr.bf16.gmra.mxu0 %v608
  %v3229 = vpop.f32.mrf.mxu0
  %v3230 = vadd.f32 %v2765, %v3229
  %v3231 = vpop.f32.mrf.mxu0
  %v3232 = vpop.f32.mrf.mxu0
  %v3233 = vadd.f32 %v2768, %v3232
  %v3234 = vpop.f32.mrf.mxu0
  %3235 = vmatprep.mubr.bf16.mxu0 0
  %3236 = vmatmul.mubr.bf16.gmra.mxu0 %v609
  %v3237 = vpop.f32.mrf.mxu0
  %v3238 = vadd.f32 %v2773, %v3237
  %v3239 = vpop.f32.mrf.mxu0
  %v3240 = vpop.f32.mrf.mxu0
  %v3241 = vadd.f32 %v2776, %v3240
  %v3242 = vpop.f32.mrf.mxu0
  %3243 = vmatprep.mubr.bf16.mxu0 0
  %3244 = vmatmul.mubr.bf16.gmra.mxu0 %v610
  %v3245 = vpop.f32.mrf.mxu0
  %v3246 = vadd.f32 %v2781, %v3245
  %v3247 = vpop.f32.mrf.mxu0
  %v3248 = vpop.f32.mrf.mxu0
  %v3249 = vadd.f32 %v2784, %v3248
  %v3250 = vpop.f32.mrf.mxu0
  %3251 = vmatprep.mubr.bf16.mxu0 0
  %3252 = vmatmul.mubr.bf16.gmra.mxu0 %v611
  %v3253 = vpop.f32.mrf.mxu0
  %v3254 = vadd.f32 %v2789, %v3253
  %v3255 = vpop.f32.mrf.mxu0
  %v3256 = vpop.f32.mrf.mxu0
  %v3257 = vadd.f32 %v2792, %v3256
  %v3258 = vpop.f32.mrf.mxu0
  %3259 = vmatprep.mubr.bf16.mxu0 0
  %3260 = vmatmul.mubr.bf16.gmra.mxu0 %v612
  %v3261 = vpop.f32.mrf.mxu0
  %v3262 = vadd.f32 %v2797, %v3261
  %v3263 = vpop.f32.mrf.mxu0
  %v3264 = vpop.f32.mrf.mxu0
  %v3265 = vadd.f32 %v2800, %v3264
  %v3266 = vpop.f32.mrf.mxu0
  %3267 = vmatprep.mubr.bf16.mxu0 0
  %3268 = vmatmul.mubr.bf16.gmra.mxu0 %v613
  %v3269 = vpop.f32.mrf.mxu0
  %v3270 = vadd.f32 %v2805, %v3269
  %v3271 = vpop.f32.mrf.mxu0
  %v3272 = vpop.f32.mrf.mxu0
  %v3273 = vadd.f32 %v2808, %v3272
  %v3274 = vpop.f32.mrf.mxu0
  %3275 = vmatprep.mubr.bf16.mxu0 0
  %3276 = vmatmul.mubr.bf16.gmra.mxu0 %v614
  %v3277 = vpop.f32.mrf.mxu0
  %v3278 = vadd.f32 %v2813, %v3277
  %v3279 = vpop.f32.mrf.mxu0
  %v3280 = vpop.f32.mrf.mxu0
  %v3281 = vadd.f32 %v2816, %v3280
  %v3282 = vpop.f32.mrf.mxu0
  %3283 = vmatprep.mubr.bf16.mxu0 0
  %3284 = vmatmul.mubr.bf16.gmra.mxu0 %v615
  %v3285 = vpop.f32.mrf.mxu0
  %v3286 = vadd.f32 %v2821, %v3285
  %v3287 = vpop.f32.mrf.mxu0
  %v3288 = vpop.f32.mrf.mxu0
  %v3289 = vadd.f32 %v2824, %v3288
  %v3290 = vpop.f32.mrf.mxu0
  %3291 = vmatprep.mubr.bf16.mxu0 0
  %3292 = vmatmul.mubr.bf16.gmra.mxu0 %v616
  %v3293 = vpop.f32.mrf.mxu0
  %v3294 = vadd.f32 %v2829, %v3293
  %v3295 = vpop.f32.mrf.mxu0
  %v3296 = vpop.f32.mrf.mxu0
  %v3297 = vadd.f32 %v2832, %v3296
  %v3298 = vpop.f32.mrf.mxu0
  %3299 = vmatprep.mubr.bf16.mxu0 0
  %3300 = vmatmul.mubr.bf16.gmra.mxu0 %v617
  %v3301 = vpop.f32.mrf.mxu0
  %v3302 = vadd.f32 %v2837, %v3301
  %v3303 = vpop.f32.mrf.mxu0
  %v3304 = vpop.f32.mrf.mxu0
  %v3305 = vadd.f32 %v2840, %v3304
  %v3306 = vpop.f32.mrf.mxu0
  %3307 = vmatprep.mubr.bf16.mxu0 0
  %3308 = vmatmul.mubr.bf16.gmra.mxu0 %v618
  %v3309 = vpop.f32.mrf.mxu0
  %v3310 = vadd.f32 %v2845, %v3309
  %v3311 = vpop.f32.mrf.mxu0
  %v3312 = vpop.f32.mrf.mxu0
  %v3313 = vadd.f32 %v2848, %v3312
  %v3314 = vpop.f32.mrf.mxu0
  %3315 = vmatprep.mubr.bf16.mxu0 0
  %3316 = vmatmul.mubr.bf16.gmra.mxu0 %v619
  %v3317 = vpop.f32.mrf.mxu0
  %v3318 = vadd.f32 %v2853, %v3317
  %v3319 = vpop.f32.mrf.mxu0
  %v3320 = vpop.f32.mrf.mxu0
  %v3321 = vadd.f32 %v2856, %v3320
  %v3322 = vpop.f32.mrf.mxu0
  %3323 = vmatprep.mubr.bf16.mxu0 0
  %3324 = vmatmul.mubr.bf16.gmra.mxu0 %v620
  %v3325 = vpop.f32.mrf.mxu0
  %v3326 = vadd.f32 %v2861, %v3325
  %v3327 = vpop.f32.mrf.mxu0
  %v3328 = vpop.f32.mrf.mxu0
  %v3329 = vadd.f32 %v2864, %v3328
  %v3330 = vpop.f32.mrf.mxu0
  %3331 = vmatprep.mubr.bf16.mxu0 0
  %3332 = vmatmul.mubr.bf16.gmra.mxu0 %v621
  %v3333 = vpop.f32.mrf.mxu0
  %v3334 = vadd.f32 %v2869, %v3333
  %v3335 = vpop.f32.mrf.mxu0
  %v3336 = vpop.f32.mrf.mxu0
  %v3337 = vadd.f32 %v2872, %v3336
  %v3338 = vpop.f32.mrf.mxu0
  %3339 = vmatprep.mubr.bf16.mxu0 0
  %3340 = vmatmul.mubr.bf16.gmra.mxu0 %v622
  %v3341 = vpop.f32.mrf.mxu0
  %v3342 = vadd.f32 %v2877, %v3341
  %v3343 = vpop.f32.mrf.mxu0
  %v3344 = vpop.f32.mrf.mxu0
  %v3345 = vadd.f32 %v2880, %v3344
  %v3346 = vpop.f32.mrf.mxu0
  %3347 = vmatprep.mubr.bf16.mxu0 0
  %3348 = vmatmul.mubr.bf16.gmra.mxu0 %v623
  %v3349 = vpop.f32.mrf.mxu0
  %v3350 = vadd.f32 %v2885, %v3349
  %v3351 = vpop.f32.mrf.mxu0
  %v3352 = vpop.f32.mrf.mxu0
  %v3353 = vadd.f32 %v2888, %v3352
  %v3354 = vpop.f32.mrf.mxu0
  %3355 = vdwg.mxu0
  %s3356 = scalar_lea.vmem %s0, 64
  %v3357 = vld [vmem:[%s3356] sm:$0xff]
  %v3358 = vld [vmem:[%s3356 + $0x8] sm:$0xff]
  %v3359 = vld [vmem:[%s3356 + $0x10] sm:$0xff]
  %v3360 = vld [vmem:[%s3356 + $0x20] sm:$0xff]
  %v3361 = vld [vmem:[%s3356 + $0x28] sm:$0xff]
  %v3362 = vld [vmem:[%s3356 + $0x30] sm:$0xff]
  %v3363 = vld [vmem:[%s3356 + $0x40] sm:$0xff]
  %v3364 = vld [vmem:[%s3356 + $0x48] sm:$0xff]
  %v3365 = vld [vmem:[%s3356 + $0x50] sm:$0xff]
  %v3366 = vld [vmem:[%s3356 + $0x60] sm:$0xff]
  %v3367 = vld [vmem:[%s3356 + $0x68] sm:$0xff]
  %v3368 = vld [vmem:[%s3356 + $0x70] sm:$0xff]
  %v3369 = vld [vmem:[%s3356 + $0x80] sm:$0xff]
  %v3370 = vld [vmem:[%s3356 + $0x88] sm:$0xff]
  %v3371 = vld [vmem:[%s3356 + $0x90] sm:$0xff]
  %v3372 = vld [vmem:[%s3356 + $0xa0] sm:$0xff]
  %v3373 = vld [vmem:[%s3356 + $0xa8] sm:$0xff]
  %v3374 = vld [vmem:[%s3356 + $0xb0] sm:$0xff]
  %v3375 = vld [vmem:[%s3356 + $0xc0] sm:$0xff]
  %v3376 = vld [vmem:[%s3356 + $0xc8] sm:$0xff]
  %v3377 = vld [vmem:[%s3356 + $0xd0] sm:$0xff]
  %v3378 = vld [vmem:[%s3356 + $0xe0] sm:$0xff]
  %v3379 = vld [vmem:[%s3356 + $0xe8] sm:$0xff]
  %v3380 = vld [vmem:[%s3356 + $0xf0] sm:$0xff]
  %v3381 = vld [vmem:[%s3356 + $0x100] sm:$0xff]
  %v3382 = vld [vmem:[%s3356 + $0x108] sm:$0xff]
  %v3383 = vld [vmem:[%s3356 + $0x110] sm:$0xff]
  %v3384 = vld [vmem:[%s3356 + $0x120] sm:$0xff]
  %v3385 = vld [vmem:[%s3356 + $0x128] sm:$0xff]
  %v3386 = vld [vmem:[%s3356 + $0x130] sm:$0xff]
  %v3387 = vld [vmem:[%s3356 + $0x140] sm:$0xff]
  %v3388 = vld [vmem:[%s3356 + $0x148] sm:$0xff]
  %v3389 = vld [vmem:[%s3356 + $0x150] sm:$0xff]
  %v3390 = vld [vmem:[%s3356 + $0x160] sm:$0xff]
  %v3391 = vld [vmem:[%s3356 + $0x168] sm:$0xff]
  %v3392 = vld [vmem:[%s3356 + $0x170] sm:$0xff]
  %v3393 = vld [vmem:[%s3356 + $0x180] sm:$0xff]
  %v3394 = vld [vmem:[%s3356 + $0x188] sm:$0xff]
  %v3395 = vld [vmem:[%s3356 + $0x190] sm:$0xff]
  %v3396 = vld [vmem:[%s3356 + $0x1a0] sm:$0xff]
  %v3397 = vld [vmem:[%s3356 + $0x1a8] sm:$0xff]
  %v3398 = vld [vmem:[%s3356 + $0x1b0] sm:$0xff]
  %v3399 = vld [vmem:[%s3356 + $0x1c0] sm:$0xff]
  %v3400 = vld [vmem:[%s3356 + $0x1c8] sm:$0xff]
  %v3401 = vld [vmem:[%s3356 + $0x1d0] sm:$0xff]
  %v3402 = vld [vmem:[%s3356 + $0x1e0] sm:$0xff]
  %v3403 = vld [vmem:[%s3356 + $0x1e8] sm:$0xff]
  %v3404 = vld [vmem:[%s3356 + $0x1f0] sm:$0xff]
  %v3405 = vld [vmem:[%s3356 + $0x200] sm:$0xff]
  %v3406 = vld [vmem:[%s3356 + $0x208] sm:$0xff]
  %v3407 = vld [vmem:[%s3356 + $0x210] sm:$0xff]
  %v3408 = vld [vmem:[%s3356 + $0x220] sm:$0xff]
  %v3409 = vld [vmem:[%s3356 + $0x228] sm:$0xff]
  %v3410 = vld [vmem:[%s3356 + $0x230] sm:$0xff]
  %v3411 = vld [vmem:[%s3356 + $0x280] sm:$0xff]
  %v3412 = vld [vmem:[%s3356 + $0x288] sm:$0xff]
  %v3413 = vld [vmem:[%s3356 + $0x290] sm:$0xff]
  %v3414 = vld [vmem:[%s3356 + $0x2a0] sm:$0xff]
  %v3415 = vld [vmem:[%s3356 + $0x2a8] sm:$0xff]
  %v3416 = vld [vmem:[%s3356 + $0x2b0] sm:$0xff]
  %v3417 = vld [vmem:[%s3356 + $0x2c0] sm:$0xff]
  %v3418 = vld [vmem:[%s3356 + $0x2c8] sm:$0xff]
  %v3419 = vld [vmem:[%s3356 + $0x2d0] sm:$0xff]
  %v3420 = vld [vmem:[%s3356 + $0x2e0] sm:$0xff]
  %v3421 = vld [vmem:[%s3356 + $0x2e8] sm:$0xff]
  %v3422 = vld [vmem:[%s3356 + $0x2f0] sm:$0xff]
  %v3423 = vld [vmem:[%s3356 + $0x300] sm:$0xff]
  %v3424 = vld [vmem:[%s3356 + $0x308] sm:$0xff]
  %v3425 = vld [vmem:[%s3356 + $0x310] sm:$0xff]
  %v3426 = vld [vmem:[%s3356 + $0x320] sm:$0xff]
  %v3427 = vld [vmem:[%s3356 + $0x328] sm:$0xff]
  %v3428 = vld [vmem:[%s3356 + $0x330] sm:$0xff]
  %v3429 = vld [vmem:[%s3356 + $0x340] sm:$0xff]
  %v3430 = vld [vmem:[%s3356 + $0x348] sm:$0xff]
  %v3431 = vld [vmem:[%s3356 + $0x350] sm:$0xff]
  %v3432 = vld [vmem:[%s3356 + $0x360] sm:$0xff]
  %v3433 = vld [vmem:[%s3356 + $0x368] sm:$0xff]
  %v3434 = vld [vmem:[%s3356 + $0x370] sm:$0xff]
  %v3435 = vld [vmem:[%s3356 + $0x380] sm:$0xff]
  %v3436 = vld [vmem:[%s3356 + $0x388] sm:$0xff]
  %v3437 = vld [vmem:[%s3356 + $0x390] sm:$0xff]
  %v3438 = vld [vmem:[%s3356 + $0x3a0] sm:$0xff]
  %v3439 = vld [vmem:[%s3356 + $0x3a8] sm:$0xff]
  %v3440 = vld [vmem:[%s3356 + $0x3b0] sm:$0xff]
  %v3441 = vld [vmem:[%s3356 + $0x3c0] sm:$0xff]
  %v3442 = vld [vmem:[%s3356 + $0x3c8] sm:$0xff]
  %v3443 = vld [vmem:[%s3356 + $0x3d0] sm:$0xff]
  %v3444 = vld [vmem:[%s3356 + $0x3e0] sm:$0xff]
  %v3445 = vld [vmem:[%s3356 + $0x3e8] sm:$0xff]
  %v3446 = vld [vmem:[%s3356 + $0x3f0] sm:$0xff]
  %v3447 = vld [vmem:[%s3356 + $0x400] sm:$0xff]
  %v3448 = vld [vmem:[%s3356 + $0x408] sm:$0xff]
  %v3449 = vld [vmem:[%s3356 + $0x410] sm:$0xff]
  %v3450 = vld [vmem:[%s3356 + $0x420] sm:$0xff]
  %v3451 = vld [vmem:[%s3356 + $0x428] sm:$0xff]
  %v3452 = vld [vmem:[%s3356 + $0x430] sm:$0xff]
  %v3453 = vld [vmem:[%s3356 + $0x440] sm:$0xff]
  %v3454 = vld [vmem:[%s3356 + $0x448] sm:$0xff]
  %v3455 = vld [vmem:[%s3356 + $0x450] sm:$0xff]
  %v3456 = vld [vmem:[%s3356 + $0x460] sm:$0xff]
  %v3457 = vld [vmem:[%s3356 + $0x468] sm:$0xff]
  %v3458 = vld [vmem:[%s3356 + $0x470] sm:$0xff]
  %v3459 = vld [vmem:[%s3356 + $0x480] sm:$0xff]
  %v3460 = vld [vmem:[%s3356 + $0x488] sm:$0xff]
  %v3461 = vld [vmem:[%s3356 + $0x490] sm:$0xff]
  %v3462 = vld [vmem:[%s3356 + $0x4a0] sm:$0xff]
  %v3463 = vld [vmem:[%s3356 + $0x4a8] sm:$0xff]
  %v3464 = vld [vmem:[%s3356 + $0x4b0] sm:$0xff]
  %v3465 = vpack.c.bf16 %v3358, %v3357
  %v3466 = vpack.c.bf16 %v3360, %v3359
  %v3467 = vpack.c.bf16 %v3362, %v3361
  %v3468 = vpack.c.bf16 %v3364, %v3363
  %v3469 = vpack.c.bf16 %v3366, %v3365
  %v3470 = vpack.c.bf16 %v3368, %v3367
  %v3471 = vpack.c.bf16 %v3370, %v3369
  %v3472 = vpack.c.bf16 %v3372, %v3371
  %v3473 = vpack.c.bf16 %v3374, %v3373
  %v3474 = vpack.c.bf16 %v3376, %v3375
  %v3475 = vpack.c.bf16 %v3378, %v3377
  %v3476 = vpack.c.bf16 %v3380, %v3379
  %v3477 = vpack.c.bf16 %v3382, %v3381
  %v3478 = vpack.c.bf16 %v3384, %v3383
  %v3479 = vpack.c.bf16 %v3386, %v3385
  %v3480 = vpack.c.bf16 %v3388, %v3387
  %v3481 = vpack.c.bf16 %v3390, %v3389
  %v3482 = vpack.c.bf16 %v3392, %v3391
  %v3483 = vpack.c.bf16 %v3394, %v3393
  %v3484 = vpack.c.bf16 %v3396, %v3395
  %v3485 = vpack.c.bf16 %v3398, %v3397
  %v3486 = vpack.c.bf16 %v3400, %v3399
  %v3487 = vpack.c.bf16 %v3402, %v3401
  %v3488 = vpack.c.bf16 %v3404, %v3403
  %v3489 = vpack.c.bf16 %v3406, %v3405
  %v3490 = vpack.c.bf16 %v3408, %v3407
  %v3491 = vpack.c.bf16 %v3410, %v3409
  %v3492 = vpack.c.bf16 %v3412, %v3411
  %v3493 = vpack.c.bf16 %v3414, %v3413
  %v3494 = vpack.c.bf16 %v3416, %v3415
  %v3495 = vpack.c.bf16 %v3418, %v3417
  %v3496 = vpack.c.bf16 %v3420, %v3419
  %v3497 = vpack.c.bf16 %v3422, %v3421
  %v3498 = vpack.c.bf16 %v3424, %v3423
  %v3499 = vpack.c.bf16 %v3426, %v3425
  %v3500 = vpack.c.bf16 %v3428, %v3427
  %v3501 = vpack.c.bf16 %v3430, %v3429
  %v3502 = vpack.c.bf16 %v3432, %v3431
  %v3503 = vpack.c.bf16 %v3434, %v3433
  %v3504 = vpack.c.bf16 %v3436, %v3435
  %v3505 = vpack.c.bf16 %v3438, %v3437
  %v3506 = vpack.c.bf16 %v3440, %v3439
  %v3507 = vpack.c.bf16 %v3442, %v3441
  %v3508 = vpack.c.bf16 %v3444, %v3443
  %v3509 = vpack.c.bf16 %v3446, %v3445
  %v3510 = vpack.c.bf16 %v3448, %v3447
  %v3511 = vpack.c.bf16 %v3450, %v3449
  %v3512 = vpack.c.bf16 %v3452, %v3451
  %v3513 = vpack.c.bf16 %v3454, %v3453
  %v3514 = vpack.c.bf16 %v3456, %v3455
  %v3515 = vpack.c.bf16 %v3458, %v3457
  %v3516 = vpack.c.bf16 %v3460, %v3459
  %v3517 = vpack.c.bf16 %v3462, %v3461
  %v3518 = vpack.c.bf16 %v3464, %v3463
  %v3519 = vld [vmem:[%s3356 + $0x1] sm:$0xff]
  %v3520 = vld [vmem:[%s3356 + $0x9] sm:$0xff]
  %v3521 = vld [vmem:[%s3356 + $0x11] sm:$0xff]
  %v3522 = vld [vmem:[%s3356 + $0x21] sm:$0xff]
  %v3523 = vld [vmem:[%s3356 + $0x29] sm:$0xff]
  %v3524 = vld [vmem:[%s3356 + $0x31] sm:$0xff]
  %v3525 = vld [vmem:[%s3356 + $0x41] sm:$0xff]
  %v3526 = vld [vmem:[%s3356 + $0x49] sm:$0xff]
  %v3527 = vld [vmem:[%s3356 + $0x51] sm:$0xff]
  %v3528 = vld [vmem:[%s3356 + $0x61] sm:$0xff]
  %v3529 = vld [vmem:[%s3356 + $0x69] sm:$0xff]
  %v3530 = vld [vmem:[%s3356 + $0x71] sm:$0xff]
  %v3531 = vld [vmem:[%s3356 + $0x81] sm:$0xff]
  %v3532 = vld [vmem:[%s3356 + $0x89] sm:$0xff]
  %v3533 = vld [vmem:[%s3356 + $0x91] sm:$0xff]
  %v3534 = vld [vmem:[%s3356 + $0xa1] sm:$0xff]
  %v3535 = vld [vmem:[%s3356 + $0xa9] sm:$0xff]
  %v3536 = vld [vmem:[%s3356 + $0xb1] sm:$0xff]
  %v3537 = vld [vmem:[%s3356 + $0xc1] sm:$0xff]
  %v3538 = vld [vmem:[%s3356 + $0xc9] sm:$0xff]
  %v3539 = vld [vmem:[%s3356 + $0xd1] sm:$0xff]
  %v3540 = vld [vmem:[%s3356 + $0xe1] sm:$0xff]
  %v3541 = vld [vmem:[%s3356 + $0xe9] sm:$0xff]
  %v3542 = vld [vmem:[%s3356 + $0xf1] sm:$0xff]
  %v3543 = vld [vmem:[%s3356 + $0x101] sm:$0xff]
  %v3544 = vld [vmem:[%s3356 + $0x109] sm:$0xff]
  %v3545 = vld [vmem:[%s3356 + $0x111] sm:$0xff]
  %v3546 = vld [vmem:[%s3356 + $0x121] sm:$0xff]
  %v3547 = vld [vmem:[%s3356 + $0x129] sm:$0xff]
  %v3548 = vld [vmem:[%s3356 + $0x131] sm:$0xff]
  %v3549 = vld [vmem:[%s3356 + $0x141] sm:$0xff]
  %v3550 = vld [vmem:[%s3356 + $0x149] sm:$0xff]
  %v3551 = vld [vmem:[%s3356 + $0x151] sm:$0xff]
  %v3552 = vld [vmem:[%s3356 + $0x161] sm:$0xff]
  %v3553 = vld [vmem:[%s3356 + $0x169] sm:$0xff]
  %v3554 = vld [vmem:[%s3356 + $0x171] sm:$0xff]
  %v3555 = vld [vmem:[%s3356 + $0x181] sm:$0xff]
  %v3556 = vld [vmem:[%s3356 + $0x189] sm:$0xff]
  %v3557 = vld [vmem:[%s3356 + $0x191] sm:$0xff]
  %v3558 = vld [vmem:[%s3356 + $0x1a1] sm:$0xff]
  %v3559 = vld [vmem:[%s3356 + $0x1a9] sm:$0xff]
  %v3560 = vld [vmem:[%s3356 + $0x1b1] sm:$0xff]
  %v3561 = vld [vmem:[%s3356 + $0x1c1] sm:$0xff]
  %v3562 = vld [vmem:[%s3356 + $0x1c9] sm:$0xff]
  %v3563 = vld [vmem:[%s3356 + $0x1d1] sm:$0xff]
  %v3564 = vld [vmem:[%s3356 + $0x1e1] sm:$0xff]
  %v3565 = vld [vmem:[%s3356 + $0x1e9] sm:$0xff]
  %v3566 = vld [vmem:[%s3356 + $0x1f1] sm:$0xff]
  %v3567 = vld [vmem:[%s3356 + $0x201] sm:$0xff]
  %v3568 = vld [vmem:[%s3356 + $0x209] sm:$0xff]
  %v3569 = vld [vmem:[%s3356 + $0x211] sm:$0xff]
  %v3570 = vld [vmem:[%s3356 + $0x221] sm:$0xff]
  %v3571 = vld [vmem:[%s3356 + $0x229] sm:$0xff]
  %v3572 = vld [vmem:[%s3356 + $0x231] sm:$0xff]
  %v3573 = vld [vmem:[%s3356 + $0x281] sm:$0xff]
  %v3574 = vld [vmem:[%s3356 + $0x289] sm:$0xff]
  %v3575 = vld [vmem:[%s3356 + $0x291] sm:$0xff]
  %v3576 = vld [vmem:[%s3356 + $0x2a1] sm:$0xff]
  %v3577 = vld [vmem:[%s3356 + $0x2a9] sm:$0xff]
  %v3578 = vld [vmem:[%s3356 + $0x2b1] sm:$0xff]
  %v3579 = vld [vmem:[%s3356 + $0x2c1] sm:$0xff]
  %v3580 = vld [vmem:[%s3356 + $0x2c9] sm:$0xff]
  %v3581 = vld [vmem:[%s3356 + $0x2d1] sm:$0xff]
  %v3582 = vld [vmem:[%s3356 + $0x2e1] sm:$0xff]
  %v3583 = vld [vmem:[%s3356 + $0x2e9] sm:$0xff]
  %v3584 = vld [vmem:[%s3356 + $0x2f1] sm:$0xff]
  %v3585 = vld [vmem:[%s3356 + $0x301] sm:$0xff]
  %v3586 = vld [vmem:[%s3356 + $0x309] sm:$0xff]
  %v3587 = vld [vmem:[%s3356 + $0x311] sm:$0xff]
  %v3588 = vld [vmem:[%s3356 + $0x321] sm:$0xff]
  %v3589 = vld [vmem:[%s3356 + $0x329] sm:$0xff]
  %v3590 = vld [vmem:[%s3356 + $0x331] sm:$0xff]
  %v3591 = vld [vmem:[%s3356 + $0x341] sm:$0xff]
  %v3592 = vld [vmem:[%s3356 + $0x349] sm:$0xff]
  %v3593 = vld [vmem:[%s3356 + $0x351] sm:$0xff]
  %v3594 = vld [vmem:[%s3356 + $0x361] sm:$0xff]
  %v3595 = vld [vmem:[%s3356 + $0x369] sm:$0xff]
  %v3596 = vld [vmem:[%s3356 + $0x371] sm:$0xff]
  %v3597 = vld [vmem:[%s3356 + $0x381] sm:$0xff]
  %v3598 = vld [vmem:[%s3356 + $0x389] sm:$0xff]
  %v3599 = vld [vmem:[%s3356 + $0x391] sm:$0xff]
  %v3600 = vld [vmem:[%s3356 + $0x3a1] sm:$0xff]
  %v3601 = vld [vmem:[%s3356 + $0x3a9] sm:$0xff]
  %v3602 = vld [vmem:[%s3356 + $0x3b1] sm:$0xff]
  %v3603 = vld [vmem:[%s3356 + $0x3c1] sm:$0xff]
  %v3604 = vld [vmem:[%s3356 + $0x3c9] sm:$0xff]
  %v3605 = vld [vmem:[%s3356 + $0x3d1] sm:$0xff]
  %v3606 = vld [vmem:[%s3356 + $0x3e1] sm:$0xff]
  %v3607 = vld [vmem:[%s3356 + $0x3e9] sm:$0xff]
  %v3608 = vld [vmem:[%s3356 + $0x3f1] sm:$0xff]
  %v3609 = vld [vmem:[%s3356 + $0x401] sm:$0xff]
  %v3610 = vld [vmem:[%s3356 + $0x409] sm:$0xff]
  %v3611 = vld [vmem:[%s3356 + $0x411] sm:$0xff]
  %v3612 = vld [vmem:[%s3356 + $0x421] sm:$0xff]
  %v3613 = vld [vmem:[%s3356 + $0x429] sm:$0xff]
  %v3614 = vld [vmem:[%s3356 + $0x431] sm:$0xff]
  %v3615 = vld [vmem:[%s3356 + $0x441] sm:$0xff]
  %v3616 = vld [vmem:[%s3356 + $0x449] sm:$0xff]
  %v3617 = vld [vmem:[%s3356 + $0x451] sm:$0xff]
  %v3618 = vld [vmem:[%s3356 + $0x461] sm:$0xff]
  %v3619 = vld [vmem:[%s3356 + $0x469] sm:$0xff]
  %v3620 = vld [vmem:[%s3356 + $0x471] sm:$0xff]
  %v3621 = vld [vmem:[%s3356 + $0x481] sm:$0xff]
  %v3622 = vld [vmem:[%s3356 + $0x489] sm:$0xff]
  %v3623 = vld [vmem:[%s3356 + $0x491] sm:$0xff]
  %v3624 = vld [vmem:[%s3356 + $0x4a1] sm:$0xff]
  %v3625 = vld [vmem:[%s3356 + $0x4a9] sm:$0xff]
  %v3626 = vld [vmem:[%s3356 + $0x4b1] sm:$0xff]
  %v3627 = vpack.c.bf16 %v3520, %v3519
  %v3628 = vpack.c.bf16 %v3522, %v3521
  %v3629 = vpack.c.bf16 %v3524, %v3523
  %v3630 = vpack.c.bf16 %v3526, %v3525
  %v3631 = vpack.c.bf16 %v3528, %v3527
  %v3632 = vpack.c.bf16 %v3530, %v3529
  %v3633 = vpack.c.bf16 %v3532, %v3531
  %v3634 = vpack.c.bf16 %v3534, %v3533
  %v3635 = vpack.c.bf16 %v3536, %v3535
  %v3636 = vpack.c.bf16 %v3538, %v3537
  %v3637 = vpack.c.bf16 %v3540, %v3539
  %v3638 = vpack.c.bf16 %v3542, %v3541
  %v3639 = vpack.c.bf16 %v3544, %v3543
  %v3640 = vpack.c.bf16 %v3546, %v3545
  %v3641 = vpack.c.bf16 %v3548, %v3547
  %v3642 = vpack.c.bf16 %v3550, %v3549
  %v3643 = vpack.c.bf16 %v3552, %v3551
  %v3644 = vpack.c.bf16 %v3554, %v3553
  %v3645 = vpack.c.bf16 %v3556, %v3555
  %v3646 = vpack.c.bf16 %v3558, %v3557
  %v3647 = vpack.c.bf16 %v3560, %v3559
  %v3648 = vpack.c.bf16 %v3562, %v3561
  %v3649 = vpack.c.bf16 %v3564, %v3563
  %v3650 = vpack.c.bf16 %v3566, %v3565
  %v3651 = vpack.c.bf16 %v3568, %v3567
  %v3652 = vpack.c.bf16 %v3570, %v3569
  %v3653 = vpack.c.bf16 %v3572, %v3571
  %v3654 = vpack.c.bf16 %v3574, %v3573
  %v3655 = vpack.c.bf16 %v3576, %v3575
  %v3656 = vpack.c.bf16 %v3578, %v3577
  %v3657 = vpack.c.bf16 %v3580, %v3579
  %v3658 = vpack.c.bf16 %v3582, %v3581
  %v3659 = vpack.c.bf16 %v3584, %v3583
  %v3660 = vpack.c.bf16 %v3586, %v3585
  %v3661 = vpack.c.bf16 %v3588, %v3587
  %v3662 = vpack.c.bf16 %v3590, %v3589
  %v3663 = vpack.c.bf16 %v3592, %v3591
  %v3664 = vpack.c.bf16 %v3594, %v3593
  %v3665 = vpack.c.bf16 %v3596, %v3595
  %v3666 = vpack.c.bf16 %v3598, %v3597
  %v3667 = vpack.c.bf16 %v3600, %v3599
  %v3668 = vpack.c.bf16 %v3602, %v3601
  %v3669 = vpack.c.bf16 %v3604, %v3603
  %v3670 = vpack.c.bf16 %v3606, %v3605
  %v3671 = vpack.c.bf16 %v3608, %v3607
  %v3672 = vpack.c.bf16 %v3610, %v3609
  %v3673 = vpack.c.bf16 %v3612, %v3611
  %v3674 = vpack.c.bf16 %v3614, %v3613
  %v3675 = vpack.c.bf16 %v3616, %v3615
  %v3676 = vpack.c.bf16 %v3618, %v3617
  %v3677 = vpack.c.bf16 %v3620, %v3619
  %v3678 = vpack.c.bf16 %v3622, %v3621
  %v3679 = vpack.c.bf16 %v3624, %v3623
  %v3680 = vpack.c.bf16 %v3626, %v3625
  %v3681 = vld [vmem:[%s3356 + $0x2] sm:$0xff]
  %v3682 = vld [vmem:[%s3356 + $0xa] sm:$0xff]
  %v3683 = vld [vmem:[%s3356 + $0x12] sm:$0xff]
  %v3684 = vld [vmem:[%s3356 + $0x22] sm:$0xff]
  %v3685 = vld [vmem:[%s3356 + $0x2a] sm:$0xff]
  %v3686 = vld [vmem:[%s3356 + $0x32] sm:$0xff]
  %v3687 = vld [vmem:[%s3356 + $0x42] sm:$0xff]
  %v3688 = vld [vmem:[%s3356 + $0x4a] sm:$0xff]
  %v3689 = vld [vmem:[%s3356 + $0x52] sm:$0xff]
  %v3690 = vld [vmem:[%s3356 + $0x62] sm:$0xff]
  %v3691 = vld [vmem:[%s3356 + $0x6a] sm:$0xff]
  %v3692 = vld [vmem:[%s3356 + $0x72] sm:$0xff]
  %v3693 = vld [vmem:[%s3356 + $0x82] sm:$0xff]
  %v3694 = vld [vmem:[%s3356 + $0x8a] sm:$0xff]
  %v3695 = vld [vmem:[%s3356 + $0x92] sm:$0xff]
  %v3696 = vld [vmem:[%s3356 + $0xa2] sm:$0xff]
  %v3697 = vld [vmem:[%s3356 + $0xaa] sm:$0xff]
  %v3698 = vld [vmem:[%s3356 + $0xb2] sm:$0xff]
  %v3699 = vld [vmem:[%s3356 + $0xc2] sm:$0xff]
  %v3700 = vld [vmem:[%s3356 + $0xca] sm:$0xff]
  %v3701 = vld [vmem:[%s3356 + $0xd2] sm:$0xff]
  %v3702 = vld [vmem:[%s3356 + $0xe2] sm:$0xff]
  %v3703 = vld [vmem:[%s3356 + $0xea] sm:$0xff]
  %v3704 = vld [vmem:[%s3356 + $0xf2] sm:$0xff]
  %v3705 = vld [vmem:[%s3356 + $0x102] sm:$0xff]
  %v3706 = vld [vmem:[%s3356 + $0x10a] sm:$0xff]
  %v3707 = vld [vmem:[%s3356 + $0x112] sm:$0xff]
  %v3708 = vld [vmem:[%s3356 + $0x122] sm:$0xff]
  %v3709 = vld [vmem:[%s3356 + $0x12a] sm:$0xff]
  %v3710 = vld [vmem:[%s3356 + $0x132] sm:$0xff]
  %v3711 = vld [vmem:[%s3356 + $0x142] sm:$0xff]
  %v3712 = vld [vmem:[%s3356 + $0x14a] sm:$0xff]
  %v3713 = vld [vmem:[%s3356 + $0x152] sm:$0xff]
  %v3714 = vld [vmem:[%s3356 + $0x162] sm:$0xff]
  %v3715 = vld [vmem:[%s3356 + $0x16a] sm:$0xff]
  %v3716 = vld [vmem:[%s3356 + $0x172] sm:$0xff]
  %v3717 = vld [vmem:[%s3356 + $0x182] sm:$0xff]
  %v3718 = vld [vmem:[%s3356 + $0x18a] sm:$0xff]
  %v3719 = vld [vmem:[%s3356 + $0x192] sm:$0xff]
  %v3720 = vld [vmem:[%s3356 + $0x1a2] sm:$0xff]
  %v3721 = vld [vmem:[%s3356 + $0x1aa] sm:$0xff]
  %v3722 = vld [vmem:[%s3356 + $0x1b2] sm:$0xff]
  %v3723 = vld [vmem:[%s3356 + $0x1c2] sm:$0xff]
  %v3724 = vld [vmem:[%s3356 + $0x1ca] sm:$0xff]
  %v3725 = vld [vmem:[%s3356 + $0x1d2] sm:$0xff]
  %v3726 = vld [vmem:[%s3356 + $0x1e2] sm:$0xff]
  %v3727 = vld [vmem:[%s3356 + $0x1ea] sm:$0xff]
  %v3728 = vld [vmem:[%s3356 + $0x1f2] sm:$0xff]
  %v3729 = vld [vmem:[%s3356 + $0x202] sm:$0xff]
  %v3730 = vld [vmem:[%s3356 + $0x20a] sm:$0xff]
  %v3731 = vld [vmem:[%s3356 + $0x212] sm:$0xff]
  %v3732 = vld [vmem:[%s3356 + $0x222] sm:$0xff]
  %v3733 = vld [vmem:[%s3356 + $0x22a] sm:$0xff]
  %v3734 = vld [vmem:[%s3356 + $0x232] sm:$0xff]
  %v3735 = vld [vmem:[%s3356 + $0x282] sm:$0xff]
  %v3736 = vld [vmem:[%s3356 + $0x28a] sm:$0xff]
  %v3737 = vld [vmem:[%s3356 + $0x292] sm:$0xff]
  %v3738 = vld [vmem:[%s3356 + $0x2a2] sm:$0xff]
  %v3739 = vld [vmem:[%s3356 + $0x2aa] sm:$0xff]
  %v3740 = vld [vmem:[%s3356 + $0x2b2] sm:$0xff]
  %v3741 = vld [vmem:[%s3356 + $0x2c2] sm:$0xff]
  %v3742 = vld [vmem:[%s3356 + $0x2ca] sm:$0xff]
  %v3743 = vld [vmem:[%s3356 + $0x2d2] sm:$0xff]
  %v3744 = vld [vmem:[%s3356 + $0x2e2] sm:$0xff]
  %v3745 = vld [vmem:[%s3356 + $0x2ea] sm:$0xff]
  %v3746 = vld [vmem:[%s3356 + $0x2f2] sm:$0xff]
  %v3747 = vld [vmem:[%s3356 + $0x302] sm:$0xff]
  %v3748 = vld [vmem:[%s3356 + $0x30a] sm:$0xff]
  %v3749 = vld [vmem:[%s3356 + $0x312] sm:$0xff]
  %v3750 = vld [vmem:[%s3356 + $0x322] sm:$0xff]
  %v3751 = vld [vmem:[%s3356 + $0x32a] sm:$0xff]
  %v3752 = vld [vmem:[%s3356 + $0x332] sm:$0xff]
  %v3753 = vld [vmem:[%s3356 + $0x342] sm:$0xff]
  %v3754 = vld [vmem:[%s3356 + $0x34a] sm:$0xff]
  %v3755 = vld [vmem:[%s3356 + $0x352] sm:$0xff]
  %v3756 = vld [vmem:[%s3356 + $0x362] sm:$0xff]
  %v3757 = vld [vmem:[%s3356 + $0x36a] sm:$0xff]
  %v3758 = vld [vmem:[%s3356 + $0x372] sm:$0xff]
  %v3759 = vld [vmem:[%s3356 + $0x382] sm:$0xff]
  %v3760 = vld [vmem:[%s3356 + $0x38a] sm:$0xff]
  %v3761 = vld [vmem:[%s3356 + $0x392] sm:$0xff]
  %v3762 = vld [vmem:[%s3356 + $0x3a2] sm:$0xff]
  %v3763 = vld [vmem:[%s3356 + $0x3aa] sm:$0xff]
  %v3764 = vld [vmem:[%s3356 + $0x3b2] sm:$0xff]
  %v3765 = vld [vmem:[%s3356 + $0x3c2] sm:$0xff]
  %v3766 = vld [vmem:[%s3356 + $0x3ca] sm:$0xff]
  %v3767 = vld [vmem:[%s3356 + $0x3d2] sm:$0xff]
  %v3768 = vld [vmem:[%s3356 + $0x3e2] sm:$0xff]
  %v3769 = vld [vmem:[%s3356 + $0x3ea] sm:$0xff]
  %v3770 = vld [vmem:[%s3356 + $0x3f2] sm:$0xff]
  %v3771 = vld [vmem:[%s3356 + $0x402] sm:$0xff]
  %v3772 = vld [vmem:[%s3356 + $0x40a] sm:$0xff]
  %v3773 = vld [vmem:[%s3356 + $0x412] sm:$0xff]
  %v3774 = vld [vmem:[%s3356 + $0x422] sm:$0xff]
  %v3775 = vld [vmem:[%s3356 + $0x42a] sm:$0xff]
  %v3776 = vld [vmem:[%s3356 + $0x432] sm:$0xff]
  %v3777 = vld [vmem:[%s3356 + $0x442] sm:$0xff]
  %v3778 = vld [vmem:[%s3356 + $0x44a] sm:$0xff]
  %v3779 = vld [vmem:[%s3356 + $0x452] sm:$0xff]
  %v3780 = vld [vmem:[%s3356 + $0x462] sm:$0xff]
  %v3781 = vld [vmem:[%s3356 + $0x46a] sm:$0xff]
  %v3782 = vld [vmem:[%s3356 + $0x472] sm:$0xff]
  %v3783 = vld [vmem:[%s3356 + $0x482] sm:$0xff]
  %v3784 = vld [vmem:[%s3356 + $0x48a] sm:$0xff]
  %v3785 = vld [vmem:[%s3356 + $0x492] sm:$0xff]
  %v3786 = vld [vmem:[%s3356 + $0x4a2] sm:$0xff]
  %v3787 = vld [vmem:[%s3356 + $0x4aa] sm:$0xff]
  %v3788 = vld [vmem:[%s3356 + $0x4b2] sm:$0xff]
  %v3789 = vpack.c.bf16 %v3682, %v3681
  %v3790 = vpack.c.bf16 %v3684, %v3683
  %v3791 = vpack.c.bf16 %v3686, %v3685
  %v3792 = vpack.c.bf16 %v3688, %v3687
  %v3793 = vpack.c.bf16 %v3690, %v3689
  %v3794 = vpack.c.bf16 %v3692, %v3691
  %v3795 = vpack.c.bf16 %v3694, %v3693
  %v3796 = vpack.c.bf16 %v3696, %v3695
  %v3797 = vpack.c.bf16 %v3698, %v3697
  %v3798 = vpack.c.bf16 %v3700, %v3699
  %v3799 = vpack.c.bf16 %v3702, %v3701
  %v3800 = vpack.c.bf16 %v3704, %v3703
  %v3801 = vpack.c.bf16 %v3706, %v3705
  %v3802 = vpack.c.bf16 %v3708, %v3707
  %v3803 = vpack.c.bf16 %v3710, %v3709
  %v3804 = vpack.c.bf16 %v3712, %v3711
  %v3805 = vpack.c.bf16 %v3714, %v3713
  %v3806 = vpack.c.bf16 %v3716, %v3715
  %v3807 = vpack.c.bf16 %v3718, %v3717
  %v3808 = vpack.c.bf16 %v3720, %v3719
  %v3809 = vpack.c.bf16 %v3722, %v3721
  %v3810 = vpack.c.bf16 %v3724, %v3723
  %v3811 = vpack.c.bf16 %v3726, %v3725
  %v3812 = vpack.c.bf16 %v3728, %v3727
  %v3813 = vpack.c.bf16 %v3730, %v3729
  %v3814 = vpack.c.bf16 %v3732, %v3731
  %v3815 = vpack.c.bf16 %v3734, %v3733
  %v3816 = vpack.c.bf16 %v3736, %v3735
  %v3817 = vpack.c.bf16 %v3738, %v3737
  %v3818 = vpack.c.bf16 %v3740, %v3739
  %v3819 = vpack.c.bf16 %v3742, %v3741
  %v3820 = vpack.c.bf16 %v3744, %v3743
  %v3821 = vpack.c.bf16 %v3746, %v3745
  %v3822 = vpack.c.bf16 %v3748, %v3747
  %v3823 = vpack.c.bf16 %v3750, %v3749
  %v3824 = vpack.c.bf16 %v3752, %v3751
  %v3825 = vpack.c.bf16 %v3754, %v3753
  %v3826 = vpack.c.bf16 %v3756, %v3755
  %v3827 = vpack.c.bf16 %v3758, %v3757
  %v3828 = vpack.c.bf16 %v3760, %v3759
  %v3829 = vpack.c.bf16 %v3762, %v3761
  %v3830 = vpack.c.bf16 %v3764, %v3763
  %v3831 = vpack.c.bf16 %v3766, %v3765
  %v3832 = vpack.c.bf16 %v3768, %v3767
  %v3833 = vpack.c.bf16 %v3770, %v3769
  %v3834 = vpack.c.bf16 %v3772, %v3771
  %v3835 = vpack.c.bf16 %v3774, %v3773
  %v3836 = vpack.c.bf16 %v3776, %v3775
  %v3837 = vpack.c.bf16 %v3778, %v3777
  %v3838 = vpack.c.bf16 %v3780, %v3779
  %v3839 = vpack.c.bf16 %v3782, %v3781
  %v3840 = vpack.c.bf16 %v3784, %v3783
  %v3841 = vpack.c.bf16 %v3786, %v3785
  %v3842 = vpack.c.bf16 %v3788, %v3787
  %s3843 = scalar_lea.vmem %s2, 384
  %v3844 = vld [vmem:[%s3843] sm:$0xf]
  %v3845 = vld [vmem:[%s3843 + $0x4] sm:$0xf]
  %v3846 = vld [vmem:[%s3843 + $0x8] sm:$0xf]
  %v3847 = vld [vmem:[%s3843 + $0xc] sm:$0xf]
  %v3848 = vld [vmem:[%s3843 + $0x10] sm:$0xf]
  %v3849 = vld [vmem:[%s3843 + $0x14] sm:$0xf]
  %v3850 = vld [vmem:[%s3843 + $0x18] sm:$0xf]
  %v3851 = vld [vmem:[%s3843 + $0x1c] sm:$0xf]
  %v3852 = vld [vmem:[%s3843 + $0x20] sm:$0xf]
  %v3853 = vld [vmem:[%s3843 + $0x24] sm:$0xf]
  %v3854 = vld [vmem:[%s3843 + $0x28] sm:$0xf]
  %v3855 = vld [vmem:[%s3843 + $0x2c] sm:$0xf]
  %v3856 = vld [vmem:[%s3843 + $0x30] sm:$0xf]
  %v3857 = vld [vmem:[%s3843 + $0x34] sm:$0xf]
  %v3858 = vld [vmem:[%s3843 + $0x38] sm:$0xf]
  %v3859 = vld [vmem:[%s3843 + $0x3c] sm:$0xf]
  %v3860 = vld [vmem:[%s3843 + $0x40] sm:$0xf]
  %v3861 = vld [vmem:[%s3843 + $0x44] sm:$0xf]
  %v3862 = vld [vmem:[%s3843 + $0x48] sm:$0xf]
  %v3863 = vld [vmem:[%s3843 + $0x4c] sm:$0xf]
  %v3864 = vld [vmem:[%s3843 + $0x50] sm:$0xf]
  %v3865 = vld [vmem:[%s3843 + $0x54] sm:$0xf]
  %v3866 = vld [vmem:[%s3843 + $0x58] sm:$0xf]
  %v3867 = vld [vmem:[%s3843 + $0x5c] sm:$0xf]
  %v3868 = vld [vmem:[%s3843 + $0x60] sm:$0xf]
  %v3869 = vld [vmem:[%s3843 + $0x64] sm:$0xf]
  %v3870 = vld [vmem:[%s3843 + $0x68] sm:$0xf]
  %v3871 = vld [vmem:[%s3843 + $0x6c] sm:$0xf]
  %v3872 = vld [vmem:[%s3843 + $0x70] sm:$0xf]
  %v3873 = vld [vmem:[%s3843 + $0x74] sm:$0xf]
  %v3874 = vld [vmem:[%s3843 + $0x78] sm:$0xf]
  %v3875 = vld [vmem:[%s3843 + $0x7c] sm:$0xf]
  %v3876 = vld [vmem:[%s3843 + $0x80] sm:$0xf]
  %v3877 = vld [vmem:[%s3843 + $0x84] sm:$0xf]
  %v3878 = vld [vmem:[%s3843 + $0x88] sm:$0xf]
  %v3879 = vld [vmem:[%s3843 + $0x8c] sm:$0xf]
  %v3880 = vld [vmem:[%s3843 + $0x90] sm:$0xf]
  %v3881 = vld [vmem:[%s3843 + $0x94] sm:$0xf]
  %v3882 = vld [vmem:[%s3843 + $0x98] sm:$0xf]
  %v3883 = vld [vmem:[%s3843 + $0x9c] sm:$0xf]
  %v3884 = vld [vmem:[%s3843 + $0xa0] sm:$0xf]
  %v3885 = vld [vmem:[%s3843 + $0xa4] sm:$0xf]
  %v3886 = vld [vmem:[%s3843 + $0xa8] sm:$0xf]
  %v3887 = vld [vmem:[%s3843 + $0xac] sm:$0xf]
  %v3888 = vld [vmem:[%s3843 + $0xb0] sm:$0xf]
  %v3889 = vld [vmem:[%s3843 + $0xb4] sm:$0xf]
  %v3890 = vld [vmem:[%s3843 + $0xb8] sm:$0xf]
  %v3891 = vld [vmem:[%s3843 + $0xbc] sm:$0xf]
  %v3940 = vunpack.c.l.b16 %v3844
  %v3941 = vunpack.c.l.b16 %v3845
  %v3942 = vunpack.c.l.b16 %v3846
  %v3943 = vunpack.c.l.b16 %v3847
  %v3944 = vunpack.c.l.b16 %v3848
  %v3945 = vunpack.c.l.b16 %v3849
  %v3946 = vunpack.c.l.b16 %v3850
  %v3947 = vunpack.c.l.b16 %v3851
  %v3948 = vunpack.c.l.b16 %v3852
  %v3949 = vunpack.c.l.b16 %v3853
  %v3950 = vunpack.c.l.b16 %v3854
  %v3951 = vunpack.c.l.b16 %v3855
  %v3952 = vunpack.c.l.b16 %v3856
  %v3953 = vunpack.c.l.b16 %v3857
  %v3954 = vunpack.c.l.b16 %v3858
  %v3955 = vunpack.c.l.b16 %v3859
  %v3956 = vunpack.c.l.b16 %v3860
  %v3957 = vunpack.c.l.b16 %v3861
  %v3958 = vunpack.c.l.b16 %v3862
  %v3959 = vunpack.c.l.b16 %v3863
  %v3960 = vunpack.c.l.b16 %v3864
  %v3961 = vunpack.c.l.b16 %v3865
  %v3962 = vunpack.c.l.b16 %v3866
  %v3963 = vunpack.c.l.b16 %v3867
  %v3964 = vunpack.c.l.b16 %v3868
  %v3965 = vunpack.c.l.b16 %v3869
  %v3966 = vunpack.c.l.b16 %v3870
  %v3967 = vunpack.c.l.b16 %v3871
  %v3968 = vunpack.c.l.b16 %v3872
  %v3969 = vunpack.c.l.b16 %v3873
  %v3970 = vunpack.c.l.b16 %v3874
  %v3971 = vunpack.c.l.b16 %v3875
  %v3972 = vunpack.c.l.b16 %v3876
  %v3973 = vunpack.c.l.b16 %v3877
  %v3974 = vunpack.c.l.b16 %v3878
  %v3975 = vunpack.c.l.b16 %v3879
  %v3976 = vunpack.c.l.b16 %v3880
  %v3977 = vunpack.c.l.b16 %v3881
  %v3978 = vunpack.c.l.b16 %v3882
  %v3979 = vunpack.c.l.b16 %v3883
  %v3980 = vunpack.c.l.b16 %v3884
  %v3981 = vunpack.c.l.b16 %v3885
  %v3982 = vunpack.c.l.b16 %v3886
  %v3983 = vunpack.c.l.b16 %v3887
  %v3984 = vunpack.c.l.b16 %v3888
  %v3985 = vunpack.c.l.b16 %v3889
  %v3986 = vunpack.c.l.b16 %v3890
  %v3987 = vunpack.c.l.b16 %v3891
  %v3988 = vpack.c.b16 %v3941, %v3940
  %v3989 = vpack.c.b16 %v3943, %v3942
  %v3990 = vpack.c.b16 %v3945, %v3944
  %v3991 = vpack.c.b16 %v3947, %v3946
  %v3992 = vpack.c.b16 %v3949, %v3948
  %v3993 = vpack.c.b16 %v3951, %v3950
  %v3994 = vpack.c.b16 %v3953, %v3952
  %v3995 = vpack.c.b16 %v3955, %v3954
  %v3996 = vpack.c.b16 %v3957, %v3956
  %v3997 = vpack.c.b16 %v3959, %v3958
  %v3998 = vpack.c.b16 %v3961, %v3960
  %v3999 = vpack.c.b16 %v3963, %v3962
  %v4000 = vpack.c.b16 %v3965, %v3964
  %v4001 = vpack.c.b16 %v3967, %v3966
  %v4002 = vpack.c.b16 %v3969, %v3968
  %v4003 = vpack.c.b16 %v3971, %v3970
  %v4004 = vpack.c.b16 %v3973, %v3972
  %v4005 = vpack.c.b16 %v3975, %v3974
  %v4006 = vpack.c.b16 %v3977, %v3976
  %v4007 = vpack.c.b16 %v3979, %v3978
  %v4008 = vpack.c.b16 %v3981, %v3980
  %v4009 = vpack.c.b16 %v3983, %v3982
  %v4010 = vpack.c.b16 %v3985, %v3984
  %v4011 = vpack.c.b16 %v3987, %v3986
  %4036 = vmatprep.subr.bf16.mxu0 0
  %4037 = vmatpush1.bf16.msra.mxu0 %v3995
  %4038 = vmatprep.subr.bf16.mxu0 0
  %4039 = vmatpush1.bf16.msra.mxu0 %v3994
  %4040 = vmatprep.subr.bf16.mxu0 0
  %4041 = vmatpush1.bf16.msra.mxu0 %v3993
  %4042 = vmatprep.subr.bf16.mxu0 0
  %4043 = vmatpush1.bf16.msra.mxu0 %v3992
  %4044 = vmatprep.subr.bf16.mxu0 0
  %4045 = vmatpush1.bf16.msra.mxu0 %v3991
  %4046 = vmatprep.subr.bf16.mxu0 0
  %4047 = vmatpush1.bf16.msra.mxu0 %v3990
  %4048 = vmatprep.subr.bf16.mxu0 0
  %4049 = vmatpush1.bf16.msra.mxu0 %v3989
  %4050 = vmatprep.subr.bf16.mxu0 0
  %4051 = vmatpush1.bf16.msra.mxu0 %v3988
  %4052 = vmatprep.subr.bf16.mxu0 0
  %4053 = vmatpush2.bf16.msra.mxu0 %v4003
  %4054 = vmatprep.subr.bf16.mxu0 0
  %4055 = vmatpush2.bf16.msra.mxu0 %v4002
  %4056 = vmatprep.subr.bf16.mxu0 0
  %4057 = vmatpush2.bf16.msra.mxu0 %v4001
  %4058 = vmatprep.subr.bf16.mxu0 0
  %4059 = vmatpush2.bf16.msra.mxu0 %v4000
  %4060 = vmatprep.subr.bf16.mxu0 0
  %4061 = vmatpush2.bf16.msra.mxu0 %v3999
  %4062 = vmatprep.subr.bf16.mxu0 0
  %4063 = vmatpush2.bf16.msra.mxu0 %v3998
  %4064 = vmatprep.subr.bf16.mxu0 0
  %4065 = vmatpush2.bf16.msra.mxu0 %v3997
  %4066 = vmatprep.subr.bf16.mxu0 0
  %4067 = vmatpush2.bf16.msra.mxu0 %v3996
  %4068 = vmatprep.mubr.bf16.mxu0 %v3627
  %4069 = vmatmul.mubr.bf16.gmra.mxu0 %v3465
  %v4070 = vpop.f32.mrf.mxu0
  %v4071 = vadd.f32 0.0, %v4070
  %v4072 = vpop.f32.mrf.mxu0
  %v4073 = vpop.f32.mrf.mxu0
  %v4074 = vadd.f32 0.0, %v4073
  %v4075 = vpop.f32.mrf.mxu0
  %4076 = vmatprep.mubr.bf16.mxu0 %v3628
  %4077 = vmatmul.mubr.bf16.gmra.mxu0 %v3466
  %v4078 = vpop.f32.mrf.mxu0
  %v4079 = vadd.f32 0.0, %v4078
  %v4080 = vpop.f32.mrf.mxu0
  %v4081 = vpop.f32.mrf.mxu0
  %v4082 = vadd.f32 0.0, %v4081
  %v4083 = vpop.f32.mrf.mxu0
  %4084 = vmatprep.mubr.bf16.mxu0 %v3629
  %4085 = vmatmul.mubr.bf16.gmra.mxu0 %v3467
  %v4086 = vpop.f32.mrf.mxu0
  %v4087 = vadd.f32 0.0, %v4086
  %v4088 = vpop.f32.mrf.mxu0
  %v4089 = vpop.f32.mrf.mxu0
  %v4090 = vadd.f32 0.0, %v4089
  %v4091 = vpop.f32.mrf.mxu0
  %4092 = vmatprep.mubr.bf16.mxu0 %v3630
  %4093 = vmatmul.mubr.bf16.gmra.mxu0 %v3468
  %v4094 = vpop.f32.mrf.mxu0
  %v4095 = vadd.f32 0.0, %v4094
  %v4096 = vpop.f32.mrf.mxu0
  %v4097 = vpop.f32.mrf.mxu0
  %v4098 = vadd.f32 0.0, %v4097
  %v4099 = vpop.f32.mrf.mxu0
  %4100 = vmatprep.mubr.bf16.mxu0 %v3631
  %4101 = vmatmul.mubr.bf16.gmra.mxu0 %v3469
  %v4102 = vpop.f32.mrf.mxu0
  %v4103 = vadd.f32 0.0, %v4102
  %v4104 = vpop.f32.mrf.mxu0
  %v4105 = vpop.f32.mrf.mxu0
  %v4106 = vadd.f32 0.0, %v4105
  %v4107 = vpop.f32.mrf.mxu0
  %4108 = vmatprep.mubr.bf16.mxu0 %v3632
  %4109 = vmatmul.mubr.bf16.gmra.mxu0 %v3470
  %v4110 = vpop.f32.mrf.mxu0
  %v4111 = vadd.f32 0.0, %v4110
  %v4112 = vpop.f32.mrf.mxu0
  %v4113 = vpop.f32.mrf.mxu0
  %v4114 = vadd.f32 0.0, %v4113
  %v4115 = vpop.f32.mrf.mxu0
  %4116 = vmatprep.mubr.bf16.mxu0 %v3633
  %4117 = vmatmul.mubr.bf16.gmra.mxu0 %v3471
  %v4118 = vpop.f32.mrf.mxu0
  %v4119 = vadd.f32 0.0, %v4118
  %v4120 = vpop.f32.mrf.mxu0
  %v4121 = vpop.f32.mrf.mxu0
  %v4122 = vadd.f32 0.0, %v4121
  %v4123 = vpop.f32.mrf.mxu0
  %4124 = vmatprep.mubr.bf16.mxu0 %v3634
  %4125 = vmatmul.mubr.bf16.gmra.mxu0 %v3472
  %v4126 = vpop.f32.mrf.mxu0
  %v4127 = vadd.f32 0.0, %v4126
  %v4128 = vpop.f32.mrf.mxu0
  %v4129 = vpop.f32.mrf.mxu0
  %v4130 = vadd.f32 0.0, %v4129
  %v4131 = vpop.f32.mrf.mxu0
  %4132 = vmatprep.mubr.bf16.mxu0 %v3635
  %4133 = vmatmul.mubr.bf16.gmra.mxu0 %v3473
  %v4134 = vpop.f32.mrf.mxu0
  %v4135 = vadd.f32 0.0, %v4134
  %v4136 = vpop.f32.mrf.mxu0
  %v4137 = vpop.f32.mrf.mxu0
  %v4138 = vadd.f32 0.0, %v4137
  %v4139 = vpop.f32.mrf.mxu0
  %4140 = vmatprep.mubr.bf16.mxu0 %v3636
  %4141 = vmatmul.mubr.bf16.gmra.mxu0 %v3474
  %v4142 = vpop.f32.mrf.mxu0
  %v4143 = vadd.f32 0.0, %v4142
  %v4144 = vpop.f32.mrf.mxu0
  %v4145 = vpop.f32.mrf.mxu0
  %v4146 = vadd.f32 0.0, %v4145
  %v4147 = vpop.f32.mrf.mxu0
  %4148 = vmatprep.mubr.bf16.mxu0 %v3637
  %4149 = vmatmul.mubr.bf16.gmra.mxu0 %v3475
  %v4150 = vpop.f32.mrf.mxu0
  %v4151 = vadd.f32 0.0, %v4150
  %v4152 = vpop.f32.mrf.mxu0
  %v4153 = vpop.f32.mrf.mxu0
  %v4154 = vadd.f32 0.0, %v4153
  %v4155 = vpop.f32.mrf.mxu0
  %4156 = vmatprep.mubr.bf16.mxu0 %v3638
  %4157 = vmatmul.mubr.bf16.gmra.mxu0 %v3476
  %v4158 = vpop.f32.mrf.mxu0
  %v4159 = vadd.f32 0.0, %v4158
  %v4160 = vpop.f32.mrf.mxu0
  %v4161 = vpop.f32.mrf.mxu0
  %v4162 = vadd.f32 0.0, %v4161
  %v4163 = vpop.f32.mrf.mxu0
  %4164 = vmatprep.mubr.bf16.mxu0 %v3639
  %4165 = vmatmul.mubr.bf16.gmra.mxu0 %v3477
  %v4166 = vpop.f32.mrf.mxu0
  %v4167 = vadd.f32 0.0, %v4166
  %v4168 = vpop.f32.mrf.mxu0
  %v4169 = vpop.f32.mrf.mxu0
  %v4170 = vadd.f32 0.0, %v4169
  %v4171 = vpop.f32.mrf.mxu0
  %4172 = vmatprep.mubr.bf16.mxu0 %v3640
  %4173 = vmatmul.mubr.bf16.gmra.mxu0 %v3478
  %v4174 = vpop.f32.mrf.mxu0
  %v4175 = vadd.f32 0.0, %v4174
  %v4176 = vpop.f32.mrf.mxu0
  %v4177 = vpop.f32.mrf.mxu0
  %v4178 = vadd.f32 0.0, %v4177
  %v4179 = vpop.f32.mrf.mxu0
  %4180 = vmatprep.mubr.bf16.mxu0 %v3641
  %4181 = vmatmul.mubr.bf16.gmra.mxu0 %v3479
  %v4182 = vpop.f32.mrf.mxu0
  %v4183 = vadd.f32 0.0, %v4182
  %v4184 = vpop.f32.mrf.mxu0
  %v4185 = vpop.f32.mrf.mxu0
  %v4186 = vadd.f32 0.0, %v4185
  %v4187 = vpop.f32.mrf.mxu0
  %4188 = vmatprep.mubr.bf16.mxu0 %v3642
  %4189 = vmatmul.mubr.bf16.gmra.mxu0 %v3480
  %v4190 = vpop.f32.mrf.mxu0
  %v4191 = vadd.f32 0.0, %v4190
  %v4192 = vpop.f32.mrf.mxu0
  %v4193 = vpop.f32.mrf.mxu0
  %v4194 = vadd.f32 0.0, %v4193
  %v4195 = vpop.f32.mrf.mxu0
  %4196 = vmatprep.mubr.bf16.mxu0 %v3643
  %4197 = vmatmul.mubr.bf16.gmra.mxu0 %v3481
  %v4198 = vpop.f32.mrf.mxu0
  %v4199 = vadd.f32 0.0, %v4198
  %v4200 = vpop.f32.mrf.mxu0
  %v4201 = vpop.f32.mrf.mxu0
  %v4202 = vadd.f32 0.0, %v4201
  %v4203 = vpop.f32.mrf.mxu0
  %4204 = vmatprep.mubr.bf16.mxu0 %v3644
  %4205 = vmatmul.mubr.bf16.gmra.mxu0 %v3482
  %v4206 = vpop.f32.mrf.mxu0
  %v4207 = vadd.f32 0.0, %v4206
  %v4208 = vpop.f32.mrf.mxu0
  %v4209 = vpop.f32.mrf.mxu0
  %v4210 = vadd.f32 0.0, %v4209
  %v4211 = vpop.f32.mrf.mxu0
  %4212 = vmatprep.mubr.bf16.mxu0 %v3645
  %4213 = vmatmul.mubr.bf16.gmra.mxu0 %v3483
  %v4214 = vpop.f32.mrf.mxu0
  %v4215 = vadd.f32 0.0, %v4214
  %v4216 = vpop.f32.mrf.mxu0
  %v4217 = vpop.f32.mrf.mxu0
  %v4218 = vadd.f32 0.0, %v4217
  %v4219 = vpop.f32.mrf.mxu0
  %4220 = vmatprep.mubr.bf16.mxu0 %v3646
  %4221 = vmatmul.mubr.bf16.gmra.mxu0 %v3484
  %v4222 = vpop.f32.mrf.mxu0
  %v4223 = vadd.f32 0.0, %v4222
  %v4224 = vpop.f32.mrf.mxu0
  %v4225 = vpop.f32.mrf.mxu0
  %v4226 = vadd.f32 0.0, %v4225
  %v4227 = vpop.f32.mrf.mxu0
  %4228 = vmatprep.mubr.bf16.mxu0 %v3647
  %4229 = vmatmul.mubr.bf16.gmra.mxu0 %v3485
  %v4230 = vpop.f32.mrf.mxu0
  %v4231 = vadd.f32 0.0, %v4230
  %v4232 = vpop.f32.mrf.mxu0
  %v4233 = vpop.f32.mrf.mxu0
  %v4234 = vadd.f32 0.0, %v4233
  %v4235 = vpop.f32.mrf.mxu0
  %4236 = vmatprep.mubr.bf16.mxu0 %v3648
  %4237 = vmatmul.mubr.bf16.gmra.mxu0 %v3486
  %v4238 = vpop.f32.mrf.mxu0
  %v4239 = vadd.f32 0.0, %v4238
  %v4240 = vpop.f32.mrf.mxu0
  %v4241 = vpop.f32.mrf.mxu0
  %v4242 = vadd.f32 0.0, %v4241
  %v4243 = vpop.f32.mrf.mxu0
  %4244 = vmatprep.mubr.bf16.mxu0 %v3649
  %4245 = vmatmul.mubr.bf16.gmra.mxu0 %v3487
  %v4246 = vpop.f32.mrf.mxu0
  %v4247 = vadd.f32 0.0, %v4246
  %v4248 = vpop.f32.mrf.mxu0
  %v4249 = vpop.f32.mrf.mxu0
  %v4250 = vadd.f32 0.0, %v4249
  %v4251 = vpop.f32.mrf.mxu0
  %4252 = vmatprep.mubr.bf16.mxu0 %v3650
  %4253 = vmatmul.mubr.bf16.gmra.mxu0 %v3488
  %v4254 = vpop.f32.mrf.mxu0
  %v4255 = vadd.f32 0.0, %v4254
  %v4256 = vpop.f32.mrf.mxu0
  %v4257 = vpop.f32.mrf.mxu0
  %v4258 = vadd.f32 0.0, %v4257
  %v4259 = vpop.f32.mrf.mxu0
  %4260 = vmatprep.mubr.bf16.mxu0 %v3651
  %4261 = vmatmul.mubr.bf16.gmra.mxu0 %v3489
  %v4262 = vpop.f32.mrf.mxu0
  %v4263 = vadd.f32 0.0, %v4262
  %v4264 = vpop.f32.mrf.mxu0
  %v4265 = vpop.f32.mrf.mxu0
  %v4266 = vadd.f32 0.0, %v4265
  %v4267 = vpop.f32.mrf.mxu0
  %4268 = vmatprep.mubr.bf16.mxu0 %v3652
  %4269 = vmatmul.mubr.bf16.gmra.mxu0 %v3490
  %v4270 = vpop.f32.mrf.mxu0
  %v4271 = vadd.f32 0.0, %v4270
  %v4272 = vpop.f32.mrf.mxu0
  %v4273 = vpop.f32.mrf.mxu0
  %v4274 = vadd.f32 0.0, %v4273
  %v4275 = vpop.f32.mrf.mxu0
  %4276 = vmatprep.mubr.bf16.mxu0 %v3653
  %4277 = vmatmul.mubr.bf16.gmra.mxu0 %v3491
  %v4278 = vpop.f32.mrf.mxu0
  %v4279 = vadd.f32 0.0, %v4278
  %v4280 = vpop.f32.mrf.mxu0
  %v4281 = vpop.f32.mrf.mxu0
  %v4282 = vadd.f32 0.0, %v4281
  %v4283 = vpop.f32.mrf.mxu0
  %4284 = vmatprep.mubr.bf16.mxu0 %v3654
  %4285 = vmatmul.mubr.bf16.gmra.mxu0 %v3492
  %v4286 = vpop.f32.mrf.mxu0
  %v4287 = vadd.f32 0.0, %v4286
  %v4288 = vpop.f32.mrf.mxu0
  %v4289 = vpop.f32.mrf.mxu0
  %v4290 = vadd.f32 0.0, %v4289
  %v4291 = vpop.f32.mrf.mxu0
  %4292 = vmatprep.mubr.bf16.mxu0 %v3655
  %4293 = vmatmul.mubr.bf16.gmra.mxu0 %v3493
  %v4294 = vpop.f32.mrf.mxu0
  %v4295 = vadd.f32 0.0, %v4294
  %v4296 = vpop.f32.mrf.mxu0
  %v4297 = vpop.f32.mrf.mxu0
  %v4298 = vadd.f32 0.0, %v4297
  %v4299 = vpop.f32.mrf.mxu0
  %4300 = vmatprep.mubr.bf16.mxu0 %v3656
  %4301 = vmatmul.mubr.bf16.gmra.mxu0 %v3494
  %v4302 = vpop.f32.mrf.mxu0
  %v4303 = vadd.f32 0.0, %v4302
  %v4304 = vpop.f32.mrf.mxu0
  %v4305 = vpop.f32.mrf.mxu0
  %v4306 = vadd.f32 0.0, %v4305
  %v4307 = vpop.f32.mrf.mxu0
  %4308 = vmatprep.mubr.bf16.mxu0 %v3657
  %4309 = vmatmul.mubr.bf16.gmra.mxu0 %v3495
  %v4310 = vpop.f32.mrf.mxu0
  %v4311 = vadd.f32 0.0, %v4310
  %v4312 = vpop.f32.mrf.mxu0
  %v4313 = vpop.f32.mrf.mxu0
  %v4314 = vadd.f32 0.0, %v4313
  %v4315 = vpop.f32.mrf.mxu0
  %4316 = vmatprep.mubr.bf16.mxu0 %v3658
  %4317 = vmatmul.mubr.bf16.gmra.mxu0 %v3496
  %v4318 = vpop.f32.mrf.mxu0
  %v4319 = vadd.f32 0.0, %v4318
  %v4320 = vpop.f32.mrf.mxu0
  %v4321 = vpop.f32.mrf.mxu0
  %v4322 = vadd.f32 0.0, %v4321
  %v4323 = vpop.f32.mrf.mxu0
  %4324 = vmatprep.mubr.bf16.mxu0 %v3659
  %4325 = vmatmul.mubr.bf16.gmra.mxu0 %v3497
  %v4326 = vpop.f32.mrf.mxu0
  %v4327 = vadd.f32 0.0, %v4326
  %v4328 = vpop.f32.mrf.mxu0
  %v4329 = vpop.f32.mrf.mxu0
  %v4330 = vadd.f32 0.0, %v4329
  %v4331 = vpop.f32.mrf.mxu0
  %4332 = vmatprep.mubr.bf16.mxu0 %v3660
  %4333 = vmatmul.mubr.bf16.gmra.mxu0 %v3498
  %v4334 = vpop.f32.mrf.mxu0
  %v4335 = vadd.f32 0.0, %v4334
  %v4336 = vpop.f32.mrf.mxu0
  %v4337 = vpop.f32.mrf.mxu0
  %v4338 = vadd.f32 0.0, %v4337
  %v4339 = vpop.f32.mrf.mxu0
  %4340 = vmatprep.mubr.bf16.mxu0 %v3661
  %4341 = vmatmul.mubr.bf16.gmra.mxu0 %v3499
  %v4342 = vpop.f32.mrf.mxu0
  %v4343 = vadd.f32 0.0, %v4342
  %v4344 = vpop.f32.mrf.mxu0
  %v4345 = vpop.f32.mrf.mxu0
  %v4346 = vadd.f32 0.0, %v4345
  %v4347 = vpop.f32.mrf.mxu0
  %4348 = vmatprep.mubr.bf16.mxu0 %v3662
  %4349 = vmatmul.mubr.bf16.gmra.mxu0 %v3500
  %v4350 = vpop.f32.mrf.mxu0
  %v4351 = vadd.f32 0.0, %v4350
  %v4352 = vpop.f32.mrf.mxu0
  %v4353 = vpop.f32.mrf.mxu0
  %v4354 = vadd.f32 0.0, %v4353
  %v4355 = vpop.f32.mrf.mxu0
  %4356 = vmatprep.mubr.bf16.mxu0 %v3663
  %4357 = vmatmul.mubr.bf16.gmra.mxu0 %v3501
  %v4358 = vpop.f32.mrf.mxu0
  %v4359 = vadd.f32 0.0, %v4358
  %v4360 = vpop.f32.mrf.mxu0
  %v4361 = vpop.f32.mrf.mxu0
  %v4362 = vadd.f32 0.0, %v4361
  %v4363 = vpop.f32.mrf.mxu0
  %4364 = vmatprep.mubr.bf16.mxu0 %v3664
  %4365 = vmatmul.mubr.bf16.gmra.mxu0 %v3502
  %v4366 = vpop.f32.mrf.mxu0
  %v4367 = vadd.f32 0.0, %v4366
  %v4368 = vpop.f32.mrf.mxu0
  %v4369 = vpop.f32.mrf.mxu0
  %v4370 = vadd.f32 0.0, %v4369
  %v4371 = vpop.f32.mrf.mxu0
  %4372 = vmatprep.mubr.bf16.mxu0 %v3665
  %4373 = vmatmul.mubr.bf16.gmra.mxu0 %v3503
  %v4374 = vpop.f32.mrf.mxu0
  %v4375 = vadd.f32 0.0, %v4374
  %v4376 = vpop.f32.mrf.mxu0
  %v4377 = vpop.f32.mrf.mxu0
  %v4378 = vadd.f32 0.0, %v4377
  %v4379 = vpop.f32.mrf.mxu0
  %4380 = vmatprep.mubr.bf16.mxu0 %v3666
  %4381 = vmatmul.mubr.bf16.gmra.mxu0 %v3504
  %v4382 = vpop.f32.mrf.mxu0
  %v4383 = vadd.f32 0.0, %v4382
  %v4384 = vpop.f32.mrf.mxu0
  %v4385 = vpop.f32.mrf.mxu0
  %v4386 = vadd.f32 0.0, %v4385
  %v4387 = vpop.f32.mrf.mxu0
  %4388 = vmatprep.mubr.bf16.mxu0 %v3667
  %4389 = vmatmul.mubr.bf16.gmra.mxu0 %v3505
  %v4390 = vpop.f32.mrf.mxu0
  %v4391 = vadd.f32 0.0, %v4390
  %v4392 = vpop.f32.mrf.mxu0
  %v4393 = vpop.f32.mrf.mxu0
  %v4394 = vadd.f32 0.0, %v4393
  %v4395 = vpop.f32.mrf.mxu0
  %4396 = vmatprep.mubr.bf16.mxu0 %v3668
  %4397 = vmatmul.mubr.bf16.gmra.mxu0 %v3506
  %v4398 = vpop.f32.mrf.mxu0
  %v4399 = vadd.f32 0.0, %v4398
  %v4400 = vpop.f32.mrf.mxu0
  %v4401 = vpop.f32.mrf.mxu0
  %v4402 = vadd.f32 0.0, %v4401
  %v4403 = vpop.f32.mrf.mxu0
  %4404 = vmatprep.mubr.bf16.mxu0 %v3669
  %4405 = vmatmul.mubr.bf16.gmra.mxu0 %v3507
  %v4406 = vpop.f32.mrf.mxu0
  %v4407 = vadd.f32 0.0, %v4406
  %v4408 = vpop.f32.mrf.mxu0
  %v4409 = vpop.f32.mrf.mxu0
  %v4410 = vadd.f32 0.0, %v4409
  %v4411 = vpop.f32.mrf.mxu0
  %4412 = vmatprep.mubr.bf16.mxu0 %v3670
  %4413 = vmatmul.mubr.bf16.gmra.mxu0 %v3508
  %v4414 = vpop.f32.mrf.mxu0
  %v4415 = vadd.f32 0.0, %v4414
  %v4416 = vpop.f32.mrf.mxu0
  %v4417 = vpop.f32.mrf.mxu0
  %v4418 = vadd.f32 0.0, %v4417
  %v4419 = vpop.f32.mrf.mxu0
  %4420 = vmatprep.mubr.bf16.mxu0 %v3671
  %4421 = vmatmul.mubr.bf16.gmra.mxu0 %v3509
  %v4422 = vpop.f32.mrf.mxu0
  %v4423 = vadd.f32 0.0, %v4422
  %v4424 = vpop.f32.mrf.mxu0
  %v4425 = vpop.f32.mrf.mxu0
  %v4426 = vadd.f32 0.0, %v4425
  %v4427 = vpop.f32.mrf.mxu0
  %4428 = vmatprep.mubr.bf16.mxu0 %v3672
  %4429 = vmatmul.mubr.bf16.gmra.mxu0 %v3510
  %v4430 = vpop.f32.mrf.mxu0
  %v4431 = vadd.f32 0.0, %v4430
  %v4432 = vpop.f32.mrf.mxu0
  %v4433 = vpop.f32.mrf.mxu0
  %v4434 = vadd.f32 0.0, %v4433
  %v4435 = vpop.f32.mrf.mxu0
  %4436 = vmatprep.mubr.bf16.mxu0 %v3673
  %4437 = vmatmul.mubr.bf16.gmra.mxu0 %v3511
  %v4438 = vpop.f32.mrf.mxu0
  %v4439 = vadd.f32 0.0, %v4438
  %v4440 = vpop.f32.mrf.mxu0
  %v4441 = vpop.f32.mrf.mxu0
  %v4442 = vadd.f32 0.0, %v4441
  %v4443 = vpop.f32.mrf.mxu0
  %4444 = vmatprep.mubr.bf16.mxu0 %v3674
  %4445 = vmatmul.mubr.bf16.gmra.mxu0 %v3512
  %v4446 = vpop.f32.mrf.mxu0
  %v4447 = vadd.f32 0.0, %v4446
  %v4448 = vpop.f32.mrf.mxu0
  %v4449 = vpop.f32.mrf.mxu0
  %v4450 = vadd.f32 0.0, %v4449
  %v4451 = vpop.f32.mrf.mxu0
  %4452 = vmatprep.mubr.bf16.mxu0 %v3675
  %4453 = vmatmul.mubr.bf16.gmra.mxu0 %v3513
  %v4454 = vpop.f32.mrf.mxu0
  %v4455 = vadd.f32 0.0, %v4454
  %v4456 = vpop.f32.mrf.mxu0
  %v4457 = vpop.f32.mrf.mxu0
  %v4458 = vadd.f32 0.0, %v4457
  %v4459 = vpop.f32.mrf.mxu0
  %4460 = vmatprep.mubr.bf16.mxu0 %v3676
  %4461 = vmatmul.mubr.bf16.gmra.mxu0 %v3514
  %v4462 = vpop.f32.mrf.mxu0
  %v4463 = vadd.f32 0.0, %v4462
  %v4464 = vpop.f32.mrf.mxu0
  %v4465 = vpop.f32.mrf.mxu0
  %v4466 = vadd.f32 0.0, %v4465
  %v4467 = vpop.f32.mrf.mxu0
  %4468 = vmatprep.mubr.bf16.mxu0 %v3677
  %4469 = vmatmul.mubr.bf16.gmra.mxu0 %v3515
  %v4470 = vpop.f32.mrf.mxu0
  %v4471 = vadd.f32 0.0, %v4470
  %v4472 = vpop.f32.mrf.mxu0
  %v4473 = vpop.f32.mrf.mxu0
  %v4474 = vadd.f32 0.0, %v4473
  %v4475 = vpop.f32.mrf.mxu0
  %4476 = vmatprep.mubr.bf16.mxu0 %v3678
  %4477 = vmatmul.mubr.bf16.gmra.mxu0 %v3516
  %v4478 = vpop.f32.mrf.mxu0
  %v4479 = vadd.f32 0.0, %v4478
  %v4480 = vpop.f32.mrf.mxu0
  %v4481 = vpop.f32.mrf.mxu0
  %v4482 = vadd.f32 0.0, %v4481
  %v4483 = vpop.f32.mrf.mxu0
  %4484 = vmatprep.mubr.bf16.mxu0 %v3679
  %4485 = vmatmul.mubr.bf16.gmra.mxu0 %v3517
  %v4486 = vpop.f32.mrf.mxu0
  %v4487 = vadd.f32 0.0, %v4486
  %v4488 = vpop.f32.mrf.mxu0
  %v4489 = vpop.f32.mrf.mxu0
  %v4490 = vadd.f32 0.0, %v4489
  %v4491 = vpop.f32.mrf.mxu0
  %4492 = vmatprep.mubr.bf16.mxu0 %v3680
  %4493 = vmatmul.mubr.bf16.gmra.mxu0 %v3518
  %v4494 = vpop.f32.mrf.mxu0
  %v4495 = vadd.f32 0.0, %v4494
  %v4496 = vpop.f32.mrf.mxu0
  %v4497 = vpop.f32.mrf.mxu0
  %v4498 = vadd.f32 0.0, %v4497
  %v4499 = vpop.f32.mrf.mxu0
  %4500 = vdwg.mxu0
  %4501 = vmatprep.subr.bf16.mxu0 0
  %4502 = vmatpush1.bf16.msra.mxu0 %v4011
  %4503 = vmatprep.subr.bf16.mxu0 0
  %4504 = vmatpush1.bf16.msra.mxu0 %v4010
  %4505 = vmatprep.subr.bf16.mxu0 0
  %4506 = vmatpush1.bf16.msra.mxu0 %v4009
  %4507 = vmatprep.subr.bf16.mxu0 0
  %4508 = vmatpush1.bf16.msra.mxu0 %v4008
  %4509 = vmatprep.subr.bf16.mxu0 0
  %4510 = vmatpush1.bf16.msra.mxu0 %v4007
  %4511 = vmatprep.subr.bf16.mxu0 0
  %4512 = vmatpush1.bf16.msra.mxu0 %v4006
  %4513 = vmatprep.subr.bf16.mxu0 0
  %4514 = vmatpush1.bf16.msra.mxu0 %v4005
  %4515 = vmatprep.subr.bf16.mxu0 0
  %4516 = vmatpush1.bf16.msra.mxu0 %v4004
  %4517 = vmatprep.subr.bf16.mxu0 0
  %4518 = vmatpush2.bf16.msra.mxu0 0
  %4519 = vmatprep.subr.bf16.mxu0 0
  %4520 = vmatpush2.bf16.msra.mxu0 0
  %4521 = vmatprep.subr.bf16.mxu0 0
  %4522 = vmatpush2.bf16.msra.mxu0 0
  %4523 = vmatprep.subr.bf16.mxu0 0
  %4524 = vmatpush2.bf16.msra.mxu0 0
  %4525 = vmatprep.subr.bf16.mxu0 0
  %4526 = vmatpush2.bf16.msra.mxu0 0
  %4527 = vmatprep.subr.bf16.mxu0 0
  %4528 = vmatpush2.bf16.msra.mxu0 0
  %4529 = vmatprep.subr.bf16.mxu0 0
  %4530 = vmatpush2.bf16.msra.mxu0 0
  %4531 = vmatprep.subr.bf16.mxu0 0
  %4532 = vmatpush2.bf16.msra.mxu0 0
  %4533 = vmatprep.mubr.bf16.mxu0 0
  %4534 = vmatmul.mubr.bf16.gmra.mxu0 %v3789
  %v4535 = vpop.f32.mrf.mxu0
  %v4536 = vadd.f32 %v4071, %v4535
  %v4537 = vpop.f32.mrf.mxu0
  %v4538 = vpop.f32.mrf.mxu0
  %v4539 = vadd.f32 %v4074, %v4538
  %v4540 = vpop.f32.mrf.mxu0
  %4541 = vmatprep.mubr.bf16.mxu0 0
  %4542 = vmatmul.mubr.bf16.gmra.mxu0 %v3790
  %v4543 = vpop.f32.mrf.mxu0
  %v4544 = vadd.f32 %v4079, %v4543
  %v4545 = vpop.f32.mrf.mxu0
  %v4546 = vpop.f32.mrf.mxu0
  %v4547 = vadd.f32 %v4082, %v4546
  %v4548 = vpop.f32.mrf.mxu0
  %4549 = vmatprep.mubr.bf16.mxu0 0
  %4550 = vmatmul.mubr.bf16.gmra.mxu0 %v3791
  %v4551 = vpop.f32.mrf.mxu0
  %v4552 = vadd.f32 %v4087, %v4551
  %v4553 = vpop.f32.mrf.mxu0
  %v4554 = vpop.f32.mrf.mxu0
  %v4555 = vadd.f32 %v4090, %v4554
  %v4556 = vpop.f32.mrf.mxu0
  %4557 = vmatprep.mubr.bf16.mxu0 0
  %4558 = vmatmul.mubr.bf16.gmra.mxu0 %v3792
  %v4559 = vpop.f32.mrf.mxu0
  %v4560 = vadd.f32 %v4095, %v4559
  %v4561 = vpop.f32.mrf.mxu0
  %v4562 = vpop.f32.mrf.mxu0
  %v4563 = vadd.f32 %v4098, %v4562
  %v4564 = vpop.f32.mrf.mxu0
  %4565 = vmatprep.mubr.bf16.mxu0 0
  %4566 = vmatmul.mubr.bf16.gmra.mxu0 %v3793
  %v4567 = vpop.f32.mrf.mxu0
  %v4568 = vadd.f32 %v4103, %v4567
  %v4569 = vpop.f32.mrf.mxu0
  %v4570 = vpop.f32.mrf.mxu0
  %v4571 = vadd.f32 %v4106, %v4570
  %v4572 = vpop.f32.mrf.mxu0
  %4573 = vmatprep.mubr.bf16.mxu0 0
  %4574 = vmatmul.mubr.bf16.gmra.mxu0 %v3794
  %v4575 = vpop.f32.mrf.mxu0
  %v4576 = vadd.f32 %v4111, %v4575
  %v4577 = vpop.f32.mrf.mxu0
  %v4578 = vpop.f32.mrf.mxu0
  %v4579 = vadd.f32 %v4114, %v4578
  %v4580 = vpop.f32.mrf.mxu0
  %4581 = vmatprep.mubr.bf16.mxu0 0
  %4582 = vmatmul.mubr.bf16.gmra.mxu0 %v3795
  %v4583 = vpop.f32.mrf.mxu0
  %v4584 = vadd.f32 %v4119, %v4583
  %v4585 = vpop.f32.mrf.mxu0
  %v4586 = vpop.f32.mrf.mxu0
  %v4587 = vadd.f32 %v4122, %v4586
  %v4588 = vpop.f32.mrf.mxu0
  %4589 = vmatprep.mubr.bf16.mxu0 0
  %4590 = vmatmul.mubr.bf16.gmra.mxu0 %v3796
  %v4591 = vpop.f32.mrf.mxu0
  %v4592 = vadd.f32 %v4127, %v4591
  %v4593 = vpop.f32.mrf.mxu0
  %v4594 = vpop.f32.mrf.mxu0
  %v4595 = vadd.f32 %v4130, %v4594
  %v4596 = vpop.f32.mrf.mxu0
  %4597 = vmatprep.mubr.bf16.mxu0 0
  %4598 = vmatmul.mubr.bf16.gmra.mxu0 %v3797
  %v4599 = vpop.f32.mrf.mxu0
  %v4600 = vadd.f32 %v4135, %v4599
  %v4601 = vpop.f32.mrf.mxu0
  %v4602 = vpop.f32.mrf.mxu0
  %v4603 = vadd.f32 %v4138, %v4602
  %v4604 = vpop.f32.mrf.mxu0
  %4605 = vmatprep.mubr.bf16.mxu0 0
  %4606 = vmatmul.mubr.bf16.gmra.mxu0 %v3798
  %v4607 = vpop.f32.mrf.mxu0
  %v4608 = vadd.f32 %v4143, %v4607
  %v4609 = vpop.f32.mrf.mxu0
  %v4610 = vpop.f32.mrf.mxu0
  %v4611 = vadd.f32 %v4146, %v4610
  %v4612 = vpop.f32.mrf.mxu0
  %4613 = vmatprep.mubr.bf16.mxu0 0
  %4614 = vmatmul.mubr.bf16.gmra.mxu0 %v3799
  %v4615 = vpop.f32.mrf.mxu0
  %v4616 = vadd.f32 %v4151, %v4615
  %v4617 = vpop.f32.mrf.mxu0
  %v4618 = vpop.f32.mrf.mxu0
  %v4619 = vadd.f32 %v4154, %v4618
  %v4620 = vpop.f32.mrf.mxu0
  %4621 = vmatprep.mubr.bf16.mxu0 0
  %4622 = vmatmul.mubr.bf16.gmra.mxu0 %v3800
  %v4623 = vpop.f32.mrf.mxu0
  %v4624 = vadd.f32 %v4159, %v4623
  %v4625 = vpop.f32.mrf.mxu0
  %v4626 = vpop.f32.mrf.mxu0
  %v4627 = vadd.f32 %v4162, %v4626
  %v4628 = vpop.f32.mrf.mxu0
  %4629 = vmatprep.mubr.bf16.mxu0 0
  %4630 = vmatmul.mubr.bf16.gmra.mxu0 %v3801
  %v4631 = vpop.f32.mrf.mxu0
  %v4632 = vadd.f32 %v4167, %v4631
  %v4633 = vpop.f32.mrf.mxu0
  %v4634 = vpop.f32.mrf.mxu0
  %v4635 = vadd.f32 %v4170, %v4634
  %v4636 = vpop.f32.mrf.mxu0
  %4637 = vmatprep.mubr.bf16.mxu0 0
  %4638 = vmatmul.mubr.bf16.gmra.mxu0 %v3802
  %v4639 = vpop.f32.mrf.mxu0
  %v4640 = vadd.f32 %v4175, %v4639
  %v4641 = vpop.f32.mrf.mxu0
  %v4642 = vpop.f32.mrf.mxu0
  %v4643 = vadd.f32 %v4178, %v4642
  %v4644 = vpop.f32.mrf.mxu0
  %4645 = vmatprep.mubr.bf16.mxu0 0
  %4646 = vmatmul.mubr.bf16.gmra.mxu0 %v3803
  %v4647 = vpop.f32.mrf.mxu0
  %v4648 = vadd.f32 %v4183, %v4647
  %v4649 = vpop.f32.mrf.mxu0
  %v4650 = vpop.f32.mrf.mxu0
  %v4651 = vadd.f32 %v4186, %v4650
  %v4652 = vpop.f32.mrf.mxu0
  %4653 = vmatprep.mubr.bf16.mxu0 0
  %4654 = vmatmul.mubr.bf16.gmra.mxu0 %v3804
  %v4655 = vpop.f32.mrf.mxu0
  %v4656 = vadd.f32 %v4191, %v4655
  %v4657 = vpop.f32.mrf.mxu0
  %v4658 = vpop.f32.mrf.mxu0
  %v4659 = vadd.f32 %v4194, %v4658
  %v4660 = vpop.f32.mrf.mxu0
  %4661 = vmatprep.mubr.bf16.mxu0 0
  %4662 = vmatmul.mubr.bf16.gmra.mxu0 %v3805
  %v4663 = vpop.f32.mrf.mxu0
  %v4664 = vadd.f32 %v4199, %v4663
  %v4665 = vpop.f32.mrf.mxu0
  %v4666 = vpop.f32.mrf.mxu0
  %v4667 = vadd.f32 %v4202, %v4666
  %v4668 = vpop.f32.mrf.mxu0
  %4669 = vmatprep.mubr.bf16.mxu0 0
  %4670 = vmatmul.mubr.bf16.gmra.mxu0 %v3806
  %v4671 = vpop.f32.mrf.mxu0
  %v4672 = vadd.f32 %v4207, %v4671
  %v4673 = vpop.f32.mrf.mxu0
  %v4674 = vpop.f32.mrf.mxu0
  %v4675 = vadd.f32 %v4210, %v4674
  %v4676 = vpop.f32.mrf.mxu0
  %4677 = vmatprep.mubr.bf16.mxu0 0
  %4678 = vmatmul.mubr.bf16.gmra.mxu0 %v3807
  %v4679 = vpop.f32.mrf.mxu0
  %v4680 = vadd.f32 %v4215, %v4679
  %v4681 = vpop.f32.mrf.mxu0
  %v4682 = vpop.f32.mrf.mxu0
  %v4683 = vadd.f32 %v4218, %v4682
  %v4684 = vpop.f32.mrf.mxu0
  %4685 = vmatprep.mubr.bf16.mxu0 0
  %4686 = vmatmul.mubr.bf16.gmra.mxu0 %v3808
  %v4687 = vpop.f32.mrf.mxu0
  %v4688 = vadd.f32 %v4223, %v4687
  %v4689 = vpop.f32.mrf.mxu0
  %v4690 = vpop.f32.mrf.mxu0
  %v4691 = vadd.f32 %v4226, %v4690
  %v4692 = vpop.f32.mrf.mxu0
  %4693 = vmatprep.mubr.bf16.mxu0 0
  %4694 = vmatmul.mubr.bf16.gmra.mxu0 %v3809
  %v4695 = vpop.f32.mrf.mxu0
  %v4696 = vadd.f32 %v4231, %v4695
  %v4697 = vpop.f32.mrf.mxu0
  %v4698 = vpop.f32.mrf.mxu0
  %v4699 = vadd.f32 %v4234, %v4698
  %v4700 = vpop.f32.mrf.mxu0
  %4701 = vmatprep.mubr.bf16.mxu0 0
  %4702 = vmatmul.mubr.bf16.gmra.mxu0 %v3810
  %v4703 = vpop.f32.mrf.mxu0
  %v4704 = vadd.f32 %v4239, %v4703
  %v4705 = vpop.f32.mrf.mxu0
  %v4706 = vpop.f32.mrf.mxu0
  %v4707 = vadd.f32 %v4242, %v4706
  %v4708 = vpop.f32.mrf.mxu0
  %4709 = vmatprep.mubr.bf16.mxu0 0
  %4710 = vmatmul.mubr.bf16.gmra.mxu0 %v3811
  %v4711 = vpop.f32.mrf.mxu0
  %v4712 = vadd.f32 %v4247, %v4711
  %v4713 = vpop.f32.mrf.mxu0
  %v4714 = vpop.f32.mrf.mxu0
  %v4715 = vadd.f32 %v4250, %v4714
  %v4716 = vpop.f32.mrf.mxu0
  %4717 = vmatprep.mubr.bf16.mxu0 0
  %4718 = vmatmul.mubr.bf16.gmra.mxu0 %v3812
  %v4719 = vpop.f32.mrf.mxu0
  %v4720 = vadd.f32 %v4255, %v4719
  %v4721 = vpop.f32.mrf.mxu0
  %v4722 = vpop.f32.mrf.mxu0
  %v4723 = vadd.f32 %v4258, %v4722
  %v4724 = vpop.f32.mrf.mxu0
  %4725 = vmatprep.mubr.bf16.mxu0 0
  %4726 = vmatmul.mubr.bf16.gmra.mxu0 %v3813
  %v4727 = vpop.f32.mrf.mxu0
  %v4728 = vadd.f32 %v4263, %v4727
  %v4729 = vpop.f32.mrf.mxu0
  %v4730 = vpop.f32.mrf.mxu0
  %v4731 = vadd.f32 %v4266, %v4730
  %v4732 = vpop.f32.mrf.mxu0
  %4733 = vmatprep.mubr.bf16.mxu0 0
  %4734 = vmatmul.mubr.bf16.gmra.mxu0 %v3814
  %v4735 = vpop.f32.mrf.mxu0
  %v4736 = vadd.f32 %v4271, %v4735
  %v4737 = vpop.f32.mrf.mxu0
  %v4738 = vpop.f32.mrf.mxu0
  %v4739 = vadd.f32 %v4274, %v4738
  %v4740 = vpop.f32.mrf.mxu0
  %4741 = vmatprep.mubr.bf16.mxu0 0
  %4742 = vmatmul.mubr.bf16.gmra.mxu0 %v3815
  %v4743 = vpop.f32.mrf.mxu0
  %v4744 = vadd.f32 %v4279, %v4743
  %v4745 = vpop.f32.mrf.mxu0
  %v4746 = vpop.f32.mrf.mxu0
  %v4747 = vadd.f32 %v4282, %v4746
  %v4748 = vpop.f32.mrf.mxu0
  %4749 = vmatprep.mubr.bf16.mxu0 0
  %4750 = vmatmul.mubr.bf16.gmra.mxu0 %v3816
  %v4751 = vpop.f32.mrf.mxu0
  %v4752 = vadd.f32 %v4287, %v4751
  %v4753 = vpop.f32.mrf.mxu0
  %v4754 = vpop.f32.mrf.mxu0
  %v4755 = vadd.f32 %v4290, %v4754
  %v4756 = vpop.f32.mrf.mxu0
  %4757 = vmatprep.mubr.bf16.mxu0 0
  %4758 = vmatmul.mubr.bf16.gmra.mxu0 %v3817
  %v4759 = vpop.f32.mrf.mxu0
  %v4760 = vadd.f32 %v4295, %v4759
  %v4761 = vpop.f32.mrf.mxu0
  %v4762 = vpop.f32.mrf.mxu0
  %v4763 = vadd.f32 %v4298, %v4762
  %v4764 = vpop.f32.mrf.mxu0
  %4765 = vmatprep.mubr.bf16.mxu0 0
  %4766 = vmatmul.mubr.bf16.gmra.mxu0 %v3818
  %v4767 = vpop.f32.mrf.mxu0
  %v4768 = vadd.f32 %v4303, %v4767
  %v4769 = vpop.f32.mrf.mxu0
  %v4770 = vpop.f32.mrf.mxu0
  %v4771 = vadd.f32 %v4306, %v4770
  %v4772 = vpop.f32.mrf.mxu0
  %4773 = vmatprep.mubr.bf16.mxu0 0
  %4774 = vmatmul.mubr.bf16.gmra.mxu0 %v3819
  %v4775 = vpop.f32.mrf.mxu0
  %v4776 = vadd.f32 %v4311, %v4775
  %v4777 = vpop.f32.mrf.mxu0
  %v4778 = vpop.f32.mrf.mxu0
  %v4779 = vadd.f32 %v4314, %v4778
  %v4780 = vpop.f32.mrf.mxu0
  %4781 = vmatprep.mubr.bf16.mxu0 0
  %4782 = vmatmul.mubr.bf16.gmra.mxu0 %v3820
  %v4783 = vpop.f32.mrf.mxu0
  %v4784 = vadd.f32 %v4319, %v4783
  %v4785 = vpop.f32.mrf.mxu0
  %v4786 = vpop.f32.mrf.mxu0
  %v4787 = vadd.f32 %v4322, %v4786
  %v4788 = vpop.f32.mrf.mxu0
  %4789 = vmatprep.mubr.bf16.mxu0 0
  %4790 = vmatmul.mubr.bf16.gmra.mxu0 %v3821
  %v4791 = vpop.f32.mrf.mxu0
  %v4792 = vadd.f32 %v4327, %v4791
  %v4793 = vpop.f32.mrf.mxu0
  %v4794 = vpop.f32.mrf.mxu0
  %v4795 = vadd.f32 %v4330, %v4794
  %v4796 = vpop.f32.mrf.mxu0
  %4797 = vmatprep.mubr.bf16.mxu0 0
  %4798 = vmatmul.mubr.bf16.gmra.mxu0 %v3822
  %v4799 = vpop.f32.mrf.mxu0
  %v4800 = vadd.f32 %v4335, %v4799
  %v4801 = vpop.f32.mrf.mxu0
  %v4802 = vpop.f32.mrf.mxu0
  %v4803 = vadd.f32 %v4338, %v4802
  %v4804 = vpop.f32.mrf.mxu0
  %4805 = vmatprep.mubr.bf16.mxu0 0
  %4806 = vmatmul.mubr.bf16.gmra.mxu0 %v3823
  %v4807 = vpop.f32.mrf.mxu0
  %v4808 = vadd.f32 %v4343, %v4807
  %v4809 = vpop.f32.mrf.mxu0
  %v4810 = vpop.f32.mrf.mxu0
  %v4811 = vadd.f32 %v4346, %v4810
  %v4812 = vpop.f32.mrf.mxu0
  %4813 = vmatprep.mubr.bf16.mxu0 0
  %4814 = vmatmul.mubr.bf16.gmra.mxu0 %v3824
  %v4815 = vpop.f32.mrf.mxu0
  %v4816 = vadd.f32 %v4351, %v4815
  %v4817 = vpop.f32.mrf.mxu0
  %v4818 = vpop.f32.mrf.mxu0
  %v4819 = vadd.f32 %v4354, %v4818
  %v4820 = vpop.f32.mrf.mxu0
  %4821 = vmatprep.mubr.bf16.mxu0 0
  %4822 = vmatmul.mubr.bf16.gmra.mxu0 %v3825
  %v4823 = vpop.f32.mrf.mxu0
  %v4824 = vadd.f32 %v4359, %v4823
  %v4825 = vpop.f32.mrf.mxu0
  %v4826 = vpop.f32.mrf.mxu0
  %v4827 = vadd.f32 %v4362, %v4826
  %v4828 = vpop.f32.mrf.mxu0
  %4829 = vmatprep.mubr.bf16.mxu0 0
  %4830 = vmatmul.mubr.bf16.gmra.mxu0 %v3826
  %v4831 = vpop.f32.mrf.mxu0
  %v4832 = vadd.f32 %v4367, %v4831
  %v4833 = vpop.f32.mrf.mxu0
  %v4834 = vpop.f32.mrf.mxu0
  %v4835 = vadd.f32 %v4370, %v4834
  %v4836 = vpop.f32.mrf.mxu0
  %4837 = vmatprep.mubr.bf16.mxu0 0
  %4838 = vmatmul.mubr.bf16.gmra.mxu0 %v3827
  %v4839 = vpop.f32.mrf.mxu0
  %v4840 = vadd.f32 %v4375, %v4839
  %v4841 = vpop.f32.mrf.mxu0
  %v4842 = vpop.f32.mrf.mxu0
  %v4843 = vadd.f32 %v4378, %v4842
  %v4844 = vpop.f32.mrf.mxu0
  %4845 = vmatprep.mubr.bf16.mxu0 0
  %4846 = vmatmul.mubr.bf16.gmra.mxu0 %v3828
  %v4847 = vpop.f32.mrf.mxu0
  %v4848 = vadd.f32 %v4383, %v4847
  %v4849 = vpop.f32.mrf.mxu0
  %v4850 = vpop.f32.mrf.mxu0
  %v4851 = vadd.f32 %v4386, %v4850
  %v4852 = vpop.f32.mrf.mxu0
  %4853 = vmatprep.mubr.bf16.mxu0 0
  %4854 = vmatmul.mubr.bf16.gmra.mxu0 %v3829
  %v4855 = vpop.f32.mrf.mxu0
  %v4856 = vadd.f32 %v4391, %v4855
  %v4857 = vpop.f32.mrf.mxu0
  %v4858 = vpop.f32.mrf.mxu0
  %v4859 = vadd.f32 %v4394, %v4858
  %v4860 = vpop.f32.mrf.mxu0
  %4861 = vmatprep.mubr.bf16.mxu0 0
  %4862 = vmatmul.mubr.bf16.gmra.mxu0 %v3830
  %v4863 = vpop.f32.mrf.mxu0
  %v4864 = vadd.f32 %v4399, %v4863
  %v4865 = vpop.f32.mrf.mxu0
  %v4866 = vpop.f32.mrf.mxu0
  %v4867 = vadd.f32 %v4402, %v4866
  %v4868 = vpop.f32.mrf.mxu0
  %4869 = vmatprep.mubr.bf16.mxu0 0
  %4870 = vmatmul.mubr.bf16.gmra.mxu0 %v3831
  %v4871 = vpop.f32.mrf.mxu0
  %v4872 = vadd.f32 %v4407, %v4871
  %v4873 = vpop.f32.mrf.mxu0
  %v4874 = vpop.f32.mrf.mxu0
  %v4875 = vadd.f32 %v4410, %v4874
  %v4876 = vpop.f32.mrf.mxu0
  %4877 = vmatprep.mubr.bf16.mxu0 0
  %4878 = vmatmul.mubr.bf16.gmra.mxu0 %v3832
  %v4879 = vpop.f32.mrf.mxu0
  %v4880 = vadd.f32 %v4415, %v4879
  %v4881 = vpop.f32.mrf.mxu0
  %v4882 = vpop.f32.mrf.mxu0
  %v4883 = vadd.f32 %v4418, %v4882
  %v4884 = vpop.f32.mrf.mxu0
  %4885 = vmatprep.mubr.bf16.mxu0 0
  %4886 = vmatmul.mubr.bf16.gmra.mxu0 %v3833
  %v4887 = vpop.f32.mrf.mxu0
  %v4888 = vadd.f32 %v4423, %v4887
  %v4889 = vpop.f32.mrf.mxu0
  %v4890 = vpop.f32.mrf.mxu0
  %v4891 = vadd.f32 %v4426, %v4890
  %v4892 = vpop.f32.mrf.mxu0
  %4893 = vmatprep.mubr.bf16.mxu0 0
  %4894 = vmatmul.mubr.bf16.gmra.mxu0 %v3834
  %v4895 = vpop.f32.mrf.mxu0
  %v4896 = vadd.f32 %v4431, %v4895
  %v4897 = vpop.f32.mrf.mxu0
  %v4898 = vpop.f32.mrf.mxu0
  %v4899 = vadd.f32 %v4434, %v4898
  %v4900 = vpop.f32.mrf.mxu0
  %4901 = vmatprep.mubr.bf16.mxu0 0
  %4902 = vmatmul.mubr.bf16.gmra.mxu0 %v3835
  %v4903 = vpop.f32.mrf.mxu0
  %v4904 = vadd.f32 %v4439, %v4903
  %v4905 = vpop.f32.mrf.mxu0
  %v4906 = vpop.f32.mrf.mxu0
  %v4907 = vadd.f32 %v4442, %v4906
  %v4908 = vpop.f32.mrf.mxu0
  %4909 = vmatprep.mubr.bf16.mxu0 0
  %4910 = vmatmul.mubr.bf16.gmra.mxu0 %v3836
  %v4911 = vpop.f32.mrf.mxu0
  %v4912 = vadd.f32 %v4447, %v4911
  %v4913 = vpop.f32.mrf.mxu0
  %v4914 = vpop.f32.mrf.mxu0
  %v4915 = vadd.f32 %v4450, %v4914
  %v4916 = vpop.f32.mrf.mxu0
  %4917 = vmatprep.mubr.bf16.mxu0 0
  %4918 = vmatmul.mubr.bf16.gmra.mxu0 %v3837
  %v4919 = vpop.f32.mrf.mxu0
  %v4920 = vadd.f32 %v4455, %v4919
  %v4921 = vpop.f32.mrf.mxu0
  %v4922 = vpop.f32.mrf.mxu0
  %v4923 = vadd.f32 %v4458, %v4922
  %v4924 = vpop.f32.mrf.mxu0
  %4925 = vmatprep.mubr.bf16.mxu0 0
  %4926 = vmatmul.mubr.bf16.gmra.mxu0 %v3838
  %v4927 = vpop.f32.mrf.mxu0
  %v4928 = vadd.f32 %v4463, %v4927
  %v4929 = vpop.f32.mrf.mxu0
  %v4930 = vpop.f32.mrf.mxu0
  %v4931 = vadd.f32 %v4466, %v4930
  %v4932 = vpop.f32.mrf.mxu0
  %4933 = vmatprep.mubr.bf16.mxu0 0
  %4934 = vmatmul.mubr.bf16.gmra.mxu0 %v3839
  %v4935 = vpop.f32.mrf.mxu0
  %v4936 = vadd.f32 %v4471, %v4935
  %v4937 = vpop.f32.mrf.mxu0
  %v4938 = vpop.f32.mrf.mxu0
  %v4939 = vadd.f32 %v4474, %v4938
  %v4940 = vpop.f32.mrf.mxu0
  %4941 = vmatprep.mubr.bf16.mxu0 0
  %4942 = vmatmul.mubr.bf16.gmra.mxu0 %v3840
  %v4943 = vpop.f32.mrf.mxu0
  %v4944 = vadd.f32 %v4479, %v4943
  %v4945 = vpop.f32.mrf.mxu0
  %v4946 = vpop.f32.mrf.mxu0
  %v4947 = vadd.f32 %v4482, %v4946
  %v4948 = vpop.f32.mrf.mxu0
  %4949 = vmatprep.mubr.bf16.mxu0 0
  %4950 = vmatmul.mubr.bf16.gmra.mxu0 %v3841
  %v4951 = vpop.f32.mrf.mxu0
  %v4952 = vadd.f32 %v4487, %v4951
  %v4953 = vpop.f32.mrf.mxu0
  %v4954 = vpop.f32.mrf.mxu0
  %v4955 = vadd.f32 %v4490, %v4954
  %v4956 = vpop.f32.mrf.mxu0
  %4957 = vmatprep.mubr.bf16.mxu0 0
  %4958 = vmatmul.mubr.bf16.gmra.mxu0 %v3842
  %v4959 = vpop.f32.mrf.mxu0
  %v4960 = vadd.f32 %v4495, %v4959
  %v4961 = vpop.f32.mrf.mxu0
  %v4962 = vpop.f32.mrf.mxu0
  %v4963 = vadd.f32 %v4498, %v4962
  %v4964 = vpop.f32.mrf.mxu0
  %4965 = vdwg.mxu0
  %v4966 = vadd.f32 %v2926, %v4536
  %v4967 = vadd.f32 %v2929, %v4539
  %v4968 = vadd.f32 %v2934, %v4544
  %v4969 = vadd.f32 %v2937, %v4547
  %v4970 = vadd.f32 %v2942, %v4552
  %v4971 = vadd.f32 %v2945, %v4555
  %v4972 = vadd.f32 %v2950, %v4560
  %v4973 = vadd.f32 %v2953, %v4563
  %v4974 = vadd.f32 %v2958, %v4568
  %v4975 = vadd.f32 %v2961, %v4571
  %v4976 = vadd.f32 %v2966, %v4576
  %v4977 = vadd.f32 %v2969, %v4579
  %v4978 = vadd.f32 %v2974, %v4584
  %v4979 = vadd.f32 %v2977, %v4587
  %v4980 = vadd.f32 %v2982, %v4592
  %v4981 = vadd.f32 %v2985, %v4595
  %v4982 = vadd.f32 %v2990, %v4600
  %v4983 = vadd.f32 %v2993, %v4603
  %v4984 = vadd.f32 %v2998, %v4608
  %v4985 = vadd.f32 %v3001, %v4611
  %v4986 = vadd.f32 %v3006, %v4616
  %v4987 = vadd.f32 %v3009, %v4619
  %v4988 = vadd.f32 %v3014, %v4624
  %v4989 = vadd.f32 %v3017, %v4627
  %v4990 = vadd.f32 %v3022, %v4632
  %v4991 = vadd.f32 %v3025, %v4635
  %v4992 = vadd.f32 %v3030, %v4640
  %v4993 = vadd.f32 %v3033, %v4643
  %v4994 = vadd.f32 %v3038, %v4648
  %v4995 = vadd.f32 %v3041, %v4651
  %v4996 = vadd.f32 %v3046, %v4656
  %v4997 = vadd.f32 %v3049, %v4659
  %v4998 = vadd.f32 %v3054, %v4664
  %v4999 = vadd.f32 %v3057, %v4667
  %v5000 = vadd.f32 %v3062, %v4672
  %v5001 = vadd.f32 %v3065, %v4675
  %v5002 = vadd.f32 %v3070, %v4680
  %v5003 = vadd.f32 %v3073, %v4683
  %v5004 = vadd.f32 %v3078, %v4688
  %v5005 = vadd.f32 %v3081, %v4691
  %v5006 = vadd.f32 %v3086, %v4696
  %v5007 = vadd.f32 %v3089, %v4699
  %v5008 = vadd.f32 %v3094, %v4704
  %v5009 = vadd.f32 %v3097, %v4707
  %v5010 = vadd.f32 %v3102, %v4712
  %v5011 = vadd.f32 %v3105, %v4715
  %v5012 = vadd.f32 %v3110, %v4720
  %v5013 = vadd.f32 %v3113, %v4723
  %v5014 = vadd.f32 %v3118, %v4728
  %v5015 = vadd.f32 %v3121, %v4731
  %v5016 = vadd.f32 %v3126, %v4736
  %v5017 = vadd.f32 %v3129, %v4739
  %v5018 = vadd.f32 %v3134, %v4744
  %v5019 = vadd.f32 %v3137, %v4747
  %v5020 = vadd.f32 %v3142, %v4752
  %v5021 = vadd.f32 %v3145, %v4755
  %v5022 = vadd.f32 %v3150, %v4760
  %v5023 = vadd.f32 %v3153, %v4763
  %v5024 = vadd.f32 %v3158, %v4768
  %v5025 = vadd.f32 %v3161, %v4771
  %v5026 = vadd.f32 %v3166, %v4776
  %v5027 = vadd.f32 %v3169, %v4779
  %v5028 = vadd.f32 %v3174, %v4784
  %v5029 = vadd.f32 %v3177, %v4787
  %v5030 = vadd.f32 %v3182, %v4792
  %v5031 = vadd.f32 %v3185, %v4795
  %v5032 = vadd.f32 %v3190, %v4800
  %v5033 = vadd.f32 %v3193, %v4803
  %v5034 = vadd.f32 %v3198, %v4808
  %v5035 = vadd.f32 %v3201, %v4811
  %v5036 = vadd.f32 %v3206, %v4816
  %v5037 = vadd.f32 %v3209, %v4819
  %v5038 = vadd.f32 %v3214, %v4824
  %v5039 = vadd.f32 %v3217, %v4827
  %v5040 = vadd.f32 %v3222, %v4832
  %v5041 = vadd.f32 %v3225, %v4835
  %v5042 = vadd.f32 %v3230, %v4840
  %v5043 = vadd.f32 %v3233, %v4843
  %v5044 = vadd.f32 %v3238, %v4848
  %v5045 = vadd.f32 %v3241, %v4851
  %v5046 = vadd.f32 %v3246, %v4856
  %v5047 = vadd.f32 %v3249, %v4859
  %v5048 = vadd.f32 %v3254, %v4864
  %v5049 = vadd.f32 %v3257, %v4867
  %v5050 = vadd.f32 %v3262, %v4872
  %v5051 = vadd.f32 %v3265, %v4875
  %v5052 = vadd.f32 %v3270, %v4880
  %v5053 = vadd.f32 %v3273, %v4883
  %v5054 = vadd.f32 %v3278, %v4888
  %v5055 = vadd.f32 %v3281, %v4891
  %v5056 = vadd.f32 %v3286, %v4896
  %v5057 = vadd.f32 %v3289, %v4899
  %v5058 = vadd.f32 %v3294, %v4904
  %v5059 = vadd.f32 %v3297, %v4907
  %v5060 = vadd.f32 %v3302, %v4912
  %v5061 = vadd.f32 %v3305, %v4915
  %v5062 = vadd.f32 %v3310, %v4920
  %v5063 = vadd.f32 %v3313, %v4923
  %v5064 = vadd.f32 %v3318, %v4928
  %v5065 = vadd.f32 %v3321, %v4931
  %v5066 = vadd.f32 %v3326, %v4936
  %v5067 = vadd.f32 %v3329, %v4939
  %v5068 = vadd.f32 %v3334, %v4944
  %v5069 = vadd.f32 %v3337, %v4947
  %v5070 = vadd.f32 %v3342, %v4952
  %v5071 = vadd.f32 %v3345, %v4955
  %v5072 = vadd.f32 %v3350, %v4960
  %v5073 = vadd.f32 %v3353, %v4963
  %5075 = vset.pattern.permute.xlu0 0
  %5076 = vperm.xlu0 %5075, %v30
  %v5077 = vpop.permute.xlu0 %5076
  %5080 = vset.pattern.permute.xlu0 0
  %5081 = vperm.xlu0 %5080, %v31
  %v5082 = vpop.permute.xlu0 %5081
  %5085 = vset.pattern.permute.xlu0 0
  %5086 = vperm.xlu0 %5085, %v32
  %v5087 = vpop.permute.xlu0 %5086
  %5090 = vset.pattern.permute.xlu0 0
  %5091 = vperm.xlu0 %5090, %v33
  %v5092 = vpop.permute.xlu0 %5091
  %5095 = vset.pattern.permute.xlu0 0
  %5096 = vperm.xlu0 %5095, %v34
  %v5097 = vpop.permute.xlu0 %5096
  %5100 = vset.pattern.permute.xlu0 0
  %5101 = vperm.xlu0 %5100, %v35
  %v5102 = vpop.permute.xlu0 %5101
  %5105 = vset.pattern.permute.xlu0 0
  %5106 = vperm.xlu0 %5105, %v36
  %v5107 = vpop.permute.xlu0 %5106
  %5110 = vset.pattern.permute.xlu0 0
  %5111 = vperm.xlu0 %5110, %v37
  %v5112 = vpop.permute.xlu0 %5111
  %5115 = vset.pattern.permute.xlu0 0
  %5116 = vperm.xlu0 %5115, %v38
  %v5117 = vpop.permute.xlu0 %5116
  %5120 = vset.pattern.permute.xlu0 0
  %5121 = vperm.xlu0 %5120, %v39
  %v5122 = vpop.permute.xlu0 %5121
  %5125 = vset.pattern.permute.xlu0 0
  %5126 = vperm.xlu0 %5125, %v40
  %v5127 = vpop.permute.xlu0 %5126
  %5130 = vset.pattern.permute.xlu0 0
  %5131 = vperm.xlu0 %5130, %v41
  %v5132 = vpop.permute.xlu0 %5131
  %5135 = vset.pattern.permute.xlu0 0
  %5136 = vperm.xlu0 %5135, %v42
  %v5137 = vpop.permute.xlu0 %5136
  %5140 = vset.pattern.permute.xlu0 0
  %5141 = vperm.xlu0 %5140, %v43
  %v5142 = vpop.permute.xlu0 %5141
  %5145 = vset.pattern.permute.xlu0 0
  %5146 = vperm.xlu0 %5145, %v44
  %v5147 = vpop.permute.xlu0 %5146
  %5150 = vset.pattern.permute.xlu0 0
  %5151 = vperm.xlu0 %5150, %v45
  %v5152 = vpop.permute.xlu0 %5151
  %5155 = vset.pattern.permute.xlu0 0
  %5156 = vperm.xlu0 %5155, %v46
  %v5157 = vpop.permute.xlu0 %5156
  %5160 = vset.pattern.permute.xlu0 0
  %5161 = vperm.xlu0 %5160, %v47
  %v5162 = vpop.permute.xlu0 %5161
  %5165 = vset.pattern.permute.xlu0 0
  %5166 = vperm.xlu0 %5165, %v48
  %v5167 = vpop.permute.xlu0 %5166
  %5170 = vset.pattern.permute.xlu0 0
  %5171 = vperm.xlu0 %5170, %v49
  %v5172 = vpop.permute.xlu0 %5171
  %5175 = vset.pattern.permute.xlu0 0
  %5176 = vperm.xlu0 %5175, %v50
  %v5177 = vpop.permute.xlu0 %5176
  %5180 = vset.pattern.permute.xlu0 0
  %5181 = vperm.xlu0 %5180, %v51
  %v5182 = vpop.permute.xlu0 %5181
  %5185 = vset.pattern.permute.xlu0 0
  %5186 = vperm.xlu0 %5185, %v52
  %v5187 = vpop.permute.xlu0 %5186
  %5190 = vset.pattern.permute.xlu0 0
  %5191 = vperm.xlu0 %5190, %v53
  %v5192 = vpop.permute.xlu0 %5191
  %5195 = vset.pattern.permute.xlu0 0
  %5196 = vperm.xlu0 %5195, %v54
  %v5197 = vpop.permute.xlu0 %5196
  %5200 = vset.pattern.permute.xlu0 0
  %5201 = vperm.xlu0 %5200, %v55
  %v5202 = vpop.permute.xlu0 %5201
  %5205 = vset.pattern.permute.xlu0 0
  %5206 = vperm.xlu0 %5205, %v56
  %v5207 = vpop.permute.xlu0 %5206
  %5210 = vset.pattern.permute.xlu0 0
  %5211 = vperm.xlu0 %5210, %v57
  %v5212 = vpop.permute.xlu0 %5211
  %5215 = vset.pattern.permute.xlu0 0
  %5216 = vperm.xlu0 %5215, %v58
  %v5217 = vpop.permute.xlu0 %5216
  %5220 = vset.pattern.permute.xlu0 0
  %5221 = vperm.xlu0 %5220, %v59
  %v5222 = vpop.permute.xlu0 %5221
  %5225 = vset.pattern.permute.xlu0 0
  %5226 = vperm.xlu0 %5225, %v60
  %v5227 = vpop.permute.xlu0 %5226
  %5230 = vset.pattern.permute.xlu0 0
  %5231 = vperm.xlu0 %5230, %v61
  %v5232 = vpop.permute.xlu0 %5231
  %5235 = vset.pattern.permute.xlu0 0
  %5236 = vperm.xlu0 %5235, %v62
  %v5237 = vpop.permute.xlu0 %5236
  %5240 = vset.pattern.permute.xlu0 0
  %5241 = vperm.xlu0 %5240, %v63
  %v5242 = vpop.permute.xlu0 %5241
  %5245 = vset.pattern.permute.xlu0 0
  %5246 = vperm.xlu0 %5245, %v64
  %v5247 = vpop.permute.xlu0 %5246
  %5250 = vset.pattern.permute.xlu0 0
  %5251 = vperm.xlu0 %5250, %v65
  %v5252 = vpop.permute.xlu0 %5251
  %5255 = vset.pattern.permute.xlu0 0
  %5256 = vperm.xlu0 %5255, %v66
  %v5257 = vpop.permute.xlu0 %5256
  %5260 = vset.pattern.permute.xlu0 0
  %5261 = vperm.xlu0 %5260, %v67
  %v5262 = vpop.permute.xlu0 %5261
  %5265 = vset.pattern.permute.xlu0 0
  %5266 = vperm.xlu0 %5265, %v68
  %v5267 = vpop.permute.xlu0 %5266
  %5270 = vset.pattern.permute.xlu0 0
  %5271 = vperm.xlu0 %5270, %v69
  %v5272 = vpop.permute.xlu0 %5271
  %5275 = vset.pattern.permute.xlu0 0
  %5276 = vperm.xlu0 %5275, %v70
  %v5277 = vpop.permute.xlu0 %5276
  %5280 = vset.pattern.permute.xlu0 0
  %5281 = vperm.xlu0 %5280, %v71
  %v5282 = vpop.permute.xlu0 %5281
  %5285 = vset.pattern.permute.xlu0 0
  %5286 = vperm.xlu0 %5285, %v72
  %v5287 = vpop.permute.xlu0 %5286
  %5290 = vset.pattern.permute.xlu0 0
  %5291 = vperm.xlu0 %5290, %v73
  %v5292 = vpop.permute.xlu0 %5291
  %5295 = vset.pattern.permute.xlu0 0
  %5296 = vperm.xlu0 %5295, %v74
  %v5297 = vpop.permute.xlu0 %5296
  %5300 = vset.pattern.permute.xlu0 0
  %5301 = vperm.xlu0 %5300, %v75
  %v5302 = vpop.permute.xlu0 %5301
  %5305 = vset.pattern.permute.xlu0 0
  %5306 = vperm.xlu0 %5305, %v76
  %v5307 = vpop.permute.xlu0 %5306
  %5310 = vset.pattern.permute.xlu0 0
  %5311 = vperm.xlu0 %5310, %v77
  %v5312 = vpop.permute.xlu0 %5311
  %5315 = vset.pattern.permute.xlu0 0
  %5316 = vperm.xlu0 %5315, %v78
  %v5317 = vpop.permute.xlu0 %5316
  %5320 = vset.pattern.permute.xlu0 0
  %5321 = vperm.xlu0 %5320, %v79
  %v5322 = vpop.permute.xlu0 %5321
  %5325 = vset.pattern.permute.xlu0 0
  %5326 = vperm.xlu0 %5325, %v80
  %v5327 = vpop.permute.xlu0 %5326
  %5330 = vset.pattern.permute.xlu0 0
  %5331 = vperm.xlu0 %5330, %v81
  %v5332 = vpop.permute.xlu0 %5331
  %5335 = vset.pattern.permute.xlu0 0
  %5336 = vperm.xlu0 %5335, %v82
  %v5337 = vpop.permute.xlu0 %5336
  %5340 = vset.pattern.permute.xlu0 0
  %5341 = vperm.xlu0 %5340, %v83
  %v5342 = vpop.permute.xlu0 %5341
  %5345 = vset.pattern.permute.xlu0 0
  %5346 = vperm.xlu0 %5345, %v84
  %v5347 = vpop.permute.xlu0 %5346
  %5350 = vset.pattern.permute.xlu0 0
  %5351 = vperm.xlu0 %5350, %v85
  %v5352 = vpop.permute.xlu0 %5351
  %5355 = vset.pattern.permute.xlu0 0
  %5356 = vperm.xlu0 %5355, %v86
  %v5357 = vpop.permute.xlu0 %5356
  %5360 = vset.pattern.permute.xlu0 0
  %5361 = vperm.xlu0 %5360, %v87
  %v5362 = vpop.permute.xlu0 %5361
  %5365 = vset.pattern.permute.xlu0 0
  %5366 = vperm.xlu0 %5365, %v88
  %v5367 = vpop.permute.xlu0 %5366
  %5370 = vset.pattern.permute.xlu0 0
  %5371 = vperm.xlu0 %5370, %v89
  %v5372 = vpop.permute.xlu0 %5371
  %5375 = vset.pattern.permute.xlu0 0
  %5376 = vperm.xlu0 %5375, %v90
  %v5377 = vpop.permute.xlu0 %5376
  %5380 = vset.pattern.permute.xlu0 0
  %5381 = vperm.xlu0 %5380, %v91
  %v5382 = vpop.permute.xlu0 %5381
  %5385 = vset.pattern.permute.xlu0 0
  %5386 = vperm.xlu0 %5385, %v92
  %v5387 = vpop.permute.xlu0 %5386
  %5390 = vset.pattern.permute.xlu0 0
  %5391 = vperm.xlu0 %5390, %v93
  %v5392 = vpop.permute.xlu0 %5391
  %5395 = vset.pattern.permute.xlu0 0
  %5396 = vperm.xlu0 %5395, %v94
  %v5397 = vpop.permute.xlu0 %5396
  %5400 = vset.pattern.permute.xlu0 0
  %5401 = vperm.xlu0 %5400, %v95
  %v5402 = vpop.permute.xlu0 %5401
  %5405 = vset.pattern.permute.xlu0 0
  %5406 = vperm.xlu0 %5405, %v96
  %v5407 = vpop.permute.xlu0 %5406
  %5410 = vset.pattern.permute.xlu0 0
  %5411 = vperm.xlu0 %5410, %v97
  %v5412 = vpop.permute.xlu0 %5411
  %5415 = vset.pattern.permute.xlu0 0
  %5416 = vperm.xlu0 %5415, %v98
  %v5417 = vpop.permute.xlu0 %5416
  %5420 = vset.pattern.permute.xlu0 0
  %5421 = vperm.xlu0 %5420, %v99
  %v5422 = vpop.permute.xlu0 %5421
  %5425 = vset.pattern.permute.xlu0 0
  %5426 = vperm.xlu0 %5425, %v100
  %v5427 = vpop.permute.xlu0 %5426
  %5430 = vset.pattern.permute.xlu0 0
  %5431 = vperm.xlu0 %5430, %v101
  %v5432 = vpop.permute.xlu0 %5431
  %5435 = vset.pattern.permute.xlu0 0
  %5436 = vperm.xlu0 %5435, %v102
  %v5437 = vpop.permute.xlu0 %5436
  %5440 = vset.pattern.permute.xlu0 0
  %5441 = vperm.xlu0 %5440, %v103
  %v5442 = vpop.permute.xlu0 %5441
  %5445 = vset.pattern.permute.xlu0 0
  %5446 = vperm.xlu0 %5445, %v104
  %v5447 = vpop.permute.xlu0 %5446
  %5450 = vset.pattern.permute.xlu0 0
  %5451 = vperm.xlu0 %5450, %v105
  %v5452 = vpop.permute.xlu0 %5451
  %5455 = vset.pattern.permute.xlu0 0
  %5456 = vperm.xlu0 %5455, %v106
  %v5457 = vpop.permute.xlu0 %5456
  %5460 = vset.pattern.permute.xlu0 0
  %5461 = vperm.xlu0 %5460, %v107
  %v5462 = vpop.permute.xlu0 %5461
  %5465 = vset.pattern.permute.xlu0 0
  %5466 = vperm.xlu0 %5465, %v108
  %v5467 = vpop.permute.xlu0 %5466
  %5470 = vset.pattern.permute.xlu0 0
  %5471 = vperm.xlu0 %5470, %v109
  %v5472 = vpop.permute.xlu0 %5471
  %5475 = vset.pattern.permute.xlu0 0
  %5476 = vperm.xlu0 %5475, %v110
  %v5477 = vpop.permute.xlu0 %5476
  %5480 = vset.pattern.permute.xlu0 0
  %5481 = vperm.xlu0 %5480, %v111
  %v5482 = vpop.permute.xlu0 %5481
  %5485 = vset.pattern.permute.xlu0 0
  %5486 = vperm.xlu0 %5485, %v112
  %v5487 = vpop.permute.xlu0 %5486
  %5490 = vset.pattern.permute.xlu0 0
  %5491 = vperm.xlu0 %5490, %v113
  %v5492 = vpop.permute.xlu0 %5491
  %5495 = vset.pattern.permute.xlu0 0
  %5496 = vperm.xlu0 %5495, %v114
  %v5497 = vpop.permute.xlu0 %5496
  %5500 = vset.pattern.permute.xlu0 0
  %5501 = vperm.xlu0 %5500, %v115
  %v5502 = vpop.permute.xlu0 %5501
  %5505 = vset.pattern.permute.xlu0 0
  %5506 = vperm.xlu0 %5505, %v116
  %v5507 = vpop.permute.xlu0 %5506
  %5510 = vset.pattern.permute.xlu0 0
  %5511 = vperm.xlu0 %5510, %v117
  %v5512 = vpop.permute.xlu0 %5511
  %5515 = vset.pattern.permute.xlu0 0
  %5516 = vperm.xlu0 %5515, %v118
  %v5517 = vpop.permute.xlu0 %5516
  %5520 = vset.pattern.permute.xlu0 0
  %5521 = vperm.xlu0 %5520, %v119
  %v5522 = vpop.permute.xlu0 %5521
  %5525 = vset.pattern.permute.xlu0 0
  %5526 = vperm.xlu0 %5525, %v120
  %v5527 = vpop.permute.xlu0 %5526
  %5530 = vset.pattern.permute.xlu0 0
  %5531 = vperm.xlu0 %5530, %v121
  %v5532 = vpop.permute.xlu0 %5531
  %5535 = vset.pattern.permute.xlu0 0
  %5536 = vperm.xlu0 %5535, %v122
  %v5537 = vpop.permute.xlu0 %5536
  %5540 = vset.pattern.permute.xlu0 0
  %5541 = vperm.xlu0 %5540, %v123
  %v5542 = vpop.permute.xlu0 %5541
  %5545 = vset.pattern.permute.xlu0 0
  %5546 = vperm.xlu0 %5545, %v124
  %v5547 = vpop.permute.xlu0 %5546
  %5550 = vset.pattern.permute.xlu0 0
  %5551 = vperm.xlu0 %5550, %v125
  %v5552 = vpop.permute.xlu0 %5551
  %5555 = vset.pattern.permute.xlu0 0
  %5556 = vperm.xlu0 %5555, %v126
  %v5557 = vpop.permute.xlu0 %5556
  %5560 = vset.pattern.permute.xlu0 0
  %5561 = vperm.xlu0 %5560, %v127
  %v5562 = vpop.permute.xlu0 %5561
  %5565 = vset.pattern.permute.xlu0 0
  %5566 = vperm.xlu0 %5565, %v128
  %v5567 = vpop.permute.xlu0 %5566
  %5570 = vset.pattern.permute.xlu0 0
  %5571 = vperm.xlu0 %5570, %v129
  %v5572 = vpop.permute.xlu0 %5571
  %5575 = vset.pattern.permute.xlu0 0
  %5576 = vperm.xlu0 %5575, %v130
  %v5577 = vpop.permute.xlu0 %5576
  %5580 = vset.pattern.permute.xlu0 0
  %5581 = vperm.xlu0 %5580, %v131
  %v5582 = vpop.permute.xlu0 %5581
  %5585 = vset.pattern.permute.xlu0 0
  %5586 = vperm.xlu0 %5585, %v132
  %v5587 = vpop.permute.xlu0 %5586
  %5590 = vset.pattern.permute.xlu0 0
  %5591 = vperm.xlu0 %5590, %v133
  %v5592 = vpop.permute.xlu0 %5591
  %5595 = vset.pattern.permute.xlu0 0
  %5596 = vperm.xlu0 %5595, %v134
  %v5597 = vpop.permute.xlu0 %5596
  %5600 = vset.pattern.permute.xlu0 0
  %5601 = vperm.xlu0 %5600, %v135
  %v5602 = vpop.permute.xlu0 %5601
  %5605 = vset.pattern.permute.xlu0 0
  %5606 = vperm.xlu0 %5605, %v136
  %v5607 = vpop.permute.xlu0 %5606
  %5610 = vset.pattern.permute.xlu0 0
  %5611 = vperm.xlu0 %5610, %v137
  %v5612 = vpop.permute.xlu0 %5611
  %v5614 = vmul.f32 %v4966, %v5077
  %v5615 = vmul.f32 %v4967, %v5082
  %v5616 = vmul.f32 %v4968, %v5087
  %v5617 = vmul.f32 %v4969, %v5092
  %v5618 = vmul.f32 %v4970, %v5097
  %v5619 = vmul.f32 %v4971, %v5102
  %v5620 = vmul.f32 %v4972, %v5107
  %v5621 = vmul.f32 %v4973, %v5112
  %v5622 = vmul.f32 %v4974, %v5117
  %v5623 = vmul.f32 %v4975, %v5122
  %v5624 = vmul.f32 %v4976, %v5127
  %v5625 = vmul.f32 %v4977, %v5132
  %v5626 = vmul.f32 %v4978, %v5137
  %v5627 = vmul.f32 %v4979, %v5142
  %v5628 = vmul.f32 %v4980, %v5147
  %v5629 = vmul.f32 %v4981, %v5152
  %v5630 = vmul.f32 %v4982, %v5157
  %v5631 = vmul.f32 %v4983, %v5162
  %v5632 = vmul.f32 %v4984, %v5167
  %v5633 = vmul.f32 %v4985, %v5172
  %v5634 = vmul.f32 %v4986, %v5177
  %v5635 = vmul.f32 %v4987, %v5182
  %v5636 = vmul.f32 %v4988, %v5187
  %v5637 = vmul.f32 %v4989, %v5192
  %v5638 = vmul.f32 %v4990, %v5197
  %v5639 = vmul.f32 %v4991, %v5202
  %v5640 = vmul.f32 %v4992, %v5207
  %v5641 = vmul.f32 %v4993, %v5212
  %v5642 = vmul.f32 %v4994, %v5217
  %v5643 = vmul.f32 %v4995, %v5222
  %v5644 = vmul.f32 %v4996, %v5227
  %v5645 = vmul.f32 %v4997, %v5232
  %v5646 = vmul.f32 %v4998, %v5237
  %v5647 = vmul.f32 %v4999, %v5242
  %v5648 = vmul.f32 %v5000, %v5247
  %v5649 = vmul.f32 %v5001, %v5252
  %v5650 = vmul.f32 %v5002, %v5257
  %v5651 = vmul.f32 %v5003, %v5262
  %v5652 = vmul.f32 %v5004, %v5267
  %v5653 = vmul.f32 %v5005, %v5272
  %v5654 = vmul.f32 %v5006, %v5277
  %v5655 = vmul.f32 %v5007, %v5282
  %v5656 = vmul.f32 %v5008, %v5287
  %v5657 = vmul.f32 %v5009, %v5292
  %v5658 = vmul.f32 %v5010, %v5297
  %v5659 = vmul.f32 %v5011, %v5302
  %v5660 = vmul.f32 %v5012, %v5307
  %v5661 = vmul.f32 %v5013, %v5312
  %v5662 = vmul.f32 %v5014, %v5317
  %v5663 = vmul.f32 %v5015, %v5322
  %v5664 = vmul.f32 %v5016, %v5327
  %v5665 = vmul.f32 %v5017, %v5332
  %v5666 = vmul.f32 %v5018, %v5337
  %v5667 = vmul.f32 %v5019, %v5342
  %v5668 = vmul.f32 %v5020, %v5347
  %v5669 = vmul.f32 %v5021, %v5352
  %v5670 = vmul.f32 %v5022, %v5357
  %v5671 = vmul.f32 %v5023, %v5362
  %v5672 = vmul.f32 %v5024, %v5367
  %v5673 = vmul.f32 %v5025, %v5372
  %v5674 = vmul.f32 %v5026, %v5377
  %v5675 = vmul.f32 %v5027, %v5382
  %v5676 = vmul.f32 %v5028, %v5387
  %v5677 = vmul.f32 %v5029, %v5392
  %v5678 = vmul.f32 %v5030, %v5397
  %v5679 = vmul.f32 %v5031, %v5402
  %v5680 = vmul.f32 %v5032, %v5407
  %v5681 = vmul.f32 %v5033, %v5412
  %v5682 = vmul.f32 %v5034, %v5417
  %v5683 = vmul.f32 %v5035, %v5422
  %v5684 = vmul.f32 %v5036, %v5427
  %v5685 = vmul.f32 %v5037, %v5432
  %v5686 = vmul.f32 %v5038, %v5437
  %v5687 = vmul.f32 %v5039, %v5442
  %v5688 = vmul.f32 %v5040, %v5447
  %v5689 = vmul.f32 %v5041, %v5452
  %v5690 = vmul.f32 %v5042, %v5457
  %v5691 = vmul.f32 %v5043, %v5462
  %v5692 = vmul.f32 %v5044, %v5467
  %v5693 = vmul.f32 %v5045, %v5472
  %v5694 = vmul.f32 %v5046, %v5477
  %v5695 = vmul.f32 %v5047, %v5482
  %v5696 = vmul.f32 %v5048, %v5487
  %v5697 = vmul.f32 %v5049, %v5492
  %v5698 = vmul.f32 %v5050, %v5497
  %v5699 = vmul.f32 %v5051, %v5502
  %v5700 = vmul.f32 %v5052, %v5507
  %v5701 = vmul.f32 %v5053, %v5512
  %v5702 = vmul.f32 %v5054, %v5517
  %v5703 = vmul.f32 %v5055, %v5522
  %v5704 = vmul.f32 %v5056, %v5527
  %v5705 = vmul.f32 %v5057, %v5532
  %v5706 = vmul.f32 %v5058, %v5537
  %v5707 = vmul.f32 %v5059, %v5542
  %v5708 = vmul.f32 %v5060, %v5547
  %v5709 = vmul.f32 %v5061, %v5552
  %v5710 = vmul.f32 %v5062, %v5557
  %v5711 = vmul.f32 %v5063, %v5562
  %v5712 = vmul.f32 %v5064, %v5567
  %v5713 = vmul.f32 %v5065, %v5572
  %v5714 = vmul.f32 %v5066, %v5577
  %v5715 = vmul.f32 %v5067, %v5582
  %v5716 = vmul.f32 %v5068, %v5587
  %v5717 = vmul.f32 %v5069, %v5592
  %v5718 = vmul.f32 %v5070, %v5597
  %v5719 = vmul.f32 %v5071, %v5602
  %v5720 = vmul.f32 %v5072, %v5607
  %v5721 = vmul.f32 %v5073, %v5612
  %v5722 = vadd.f32 %v5614, %v5615
  %v5723 = vadd.f32 %v5722, %v5616
  %v5724 = vadd.f32 %v5723, %v5617
  %v5725 = vadd.f32 %v5724, %v5618
  %v5726 = vadd.f32 %v5725, %v5619
  %v5727 = vadd.f32 %v5726, %v5620
  %v5728 = vadd.f32 %v5727, %v5621
  %v5729 = vadd.f32 %v5728, %v5622
  %v5730 = vadd.f32 %v5729, %v5623
  %v5731 = vadd.f32 %v5730, %v5624
  %v5732 = vadd.f32 %v5731, %v5625
  %v5733 = vadd.f32 %v5732, %v5626
  %v5734 = vadd.f32 %v5733, %v5627
  %v5735 = vadd.f32 %v5734, %v5628
  %v5736 = vadd.f32 %v5735, %v5629
  %v5737 = vadd.f32 %v5736, %v5630
  %v5738 = vadd.f32 %v5737, %v5631
  %v5739 = vadd.f32 %v5738, %v5632
  %v5740 = vadd.f32 %v5739, %v5633
  %v5741 = vadd.f32 %v5740, %v5634
  %v5742 = vadd.f32 %v5741, %v5635
  %v5743 = vadd.f32 %v5742, %v5636
  %v5744 = vadd.f32 %v5743, %v5637
  %v5745 = vadd.f32 %v5744, %v5638
  %v5746 = vadd.f32 %v5745, %v5639
  %v5747 = vadd.f32 %v5746, %v5640
  %v5748 = vadd.f32 %v5747, %v5641
  %v5749 = vadd.f32 %v5748, %v5642
  %v5750 = vadd.f32 %v5749, %v5643
  %v5751 = vadd.f32 %v5750, %v5644
  %v5752 = vadd.f32 %v5751, %v5645
  %v5753 = vadd.f32 %v5752, %v5646
  %v5754 = vadd.f32 %v5753, %v5647
  %v5755 = vadd.f32 %v5754, %v5648
  %v5756 = vadd.f32 %v5755, %v5649
  %v5757 = vadd.f32 %v5756, %v5650
  %v5758 = vadd.f32 %v5757, %v5651
  %v5759 = vadd.f32 %v5758, %v5652
  %v5760 = vadd.f32 %v5759, %v5653
  %v5761 = vadd.f32 %v5760, %v5654
  %v5762 = vadd.f32 %v5761, %v5655
  %v5763 = vadd.f32 %v5762, %v5656
  %v5764 = vadd.f32 %v5763, %v5657
  %v5765 = vadd.f32 %v5764, %v5658
  %v5766 = vadd.f32 %v5765, %v5659
  %v5767 = vadd.f32 %v5766, %v5660
  %v5768 = vadd.f32 %v5767, %v5661
  %v5769 = vadd.f32 %v5768, %v5662
  %v5770 = vadd.f32 %v5769, %v5663
  %v5771 = vadd.f32 %v5770, %v5664
  %v5772 = vadd.f32 %v5771, %v5665
  %v5773 = vadd.f32 %v5772, %v5666
  %v5774 = vadd.f32 %v5773, %v5667
  %v5775 = vadd.f32 %v5774, %v5668
  %v5776 = vadd.f32 %v5775, %v5669
  %v5777 = vadd.f32 %v5776, %v5670
  %v5778 = vadd.f32 %v5777, %v5671
  %v5779 = vadd.f32 %v5778, %v5672
  %v5780 = vadd.f32 %v5779, %v5673
  %v5781 = vadd.f32 %v5780, %v5674
  %v5782 = vadd.f32 %v5781, %v5675
  %v5783 = vadd.f32 %v5782, %v5676
  %v5784 = vadd.f32 %v5783, %v5677
  %v5785 = vadd.f32 %v5784, %v5678
  %v5786 = vadd.f32 %v5785, %v5679
  %v5787 = vadd.f32 %v5786, %v5680
  %v5788 = vadd.f32 %v5787, %v5681
  %v5789 = vadd.f32 %v5788, %v5682
  %v5790 = vadd.f32 %v5789, %v5683
  %v5791 = vadd.f32 %v5790, %v5684
  %v5792 = vadd.f32 %v5791, %v5685
  %v5793 = vadd.f32 %v5792, %v5686
  %v5794 = vadd.f32 %v5793, %v5687
  %v5795 = vadd.f32 %v5794, %v5688
  %v5796 = vadd.f32 %v5795, %v5689
  %v5797 = vadd.f32 %v5796, %v5690
  %v5798 = vadd.f32 %v5797, %v5691
  %v5799 = vadd.f32 %v5798, %v5692
  %v5800 = vadd.f32 %v5799, %v5693
  %v5801 = vadd.f32 %v5800, %v5694
  %v5802 = vadd.f32 %v5801, %v5695
  %v5803 = vadd.f32 %v5802, %v5696
  %v5804 = vadd.f32 %v5803, %v5697
  %v5805 = vadd.f32 %v5804, %v5698
  %v5806 = vadd.f32 %v5805, %v5699
  %v5807 = vadd.f32 %v5806, %v5700
  %v5808 = vadd.f32 %v5807, %v5701
  %v5809 = vadd.f32 %v5808, %v5702
  %v5810 = vadd.f32 %v5809, %v5703
  %v5811 = vadd.f32 %v5810, %v5704
  %v5812 = vadd.f32 %v5811, %v5705
  %v5813 = vadd.f32 %v5812, %v5706
  %v5814 = vadd.f32 %v5813, %v5707
  %v5815 = vadd.f32 %v5814, %v5708
  %v5816 = vadd.f32 %v5815, %v5709
  %v5817 = vadd.f32 %v5816, %v5710
  %v5818 = vadd.f32 %v5817, %v5711
  %v5819 = vadd.f32 %v5818, %v5712
  %v5820 = vadd.f32 %v5819, %v5713
  %v5821 = vadd.f32 %v5820, %v5714
  %v5822 = vadd.f32 %v5821, %v5715
  %v5823 = vadd.f32 %v5822, %v5716
  %v5824 = vadd.f32 %v5823, %v5717
  %v5825 = vadd.f32 %v5824, %v5718
  %v5826 = vadd.f32 %v5825, %v5719
  %v5827 = vadd.f32 %v5826, %v5720
  %v5828 = vadd.f32 %v5827, %v5721
  %v5829 = vrot.slane %v5828, 4
  %v5830 = vadd.f32 %v5828, %v5829
  %v5831 = vrot.slane %v5830, 2
  %v5832 = vadd.f32 %v5830, %v5831
  %v5833 = vrot.slane %v5832, 1
  %v5834 = vadd.f32 %v5832, %v5833
  %v5835 = vmul.f32 %v5614, %v5614
  %v5836 = vmul.f32 %v5615, %v5615
  %v5837 = vmul.f32 %v5616, %v5616
  %v5838 = vmul.f32 %v5617, %v5617
  %v5839 = vmul.f32 %v5618, %v5618
  %v5840 = vmul.f32 %v5619, %v5619
  %v5841 = vmul.f32 %v5620, %v5620
  %v5842 = vmul.f32 %v5621, %v5621
  %v5843 = vmul.f32 %v5622, %v5622
  %v5844 = vmul.f32 %v5623, %v5623
  %v5845 = vmul.f32 %v5624, %v5624
  %v5846 = vmul.f32 %v5625, %v5625
  %v5847 = vmul.f32 %v5626, %v5626
  %v5848 = vmul.f32 %v5627, %v5627
  %v5849 = vmul.f32 %v5628, %v5628
  %v5850 = vmul.f32 %v5629, %v5629
  %v5851 = vmul.f32 %v5630, %v5630
  %v5852 = vmul.f32 %v5631, %v5631
  %v5853 = vmul.f32 %v5632, %v5632
  %v5854 = vmul.f32 %v5633, %v5633
  %v5855 = vmul.f32 %v5634, %v5634
  %v5856 = vmul.f32 %v5635, %v5635
  %v5857 = vmul.f32 %v5636, %v5636
  %v5858 = vmul.f32 %v5637, %v5637
  %v5859 = vmul.f32 %v5638, %v5638
  %v5860 = vmul.f32 %v5639, %v5639
  %v5861 = vmul.f32 %v5640, %v5640
  %v5862 = vmul.f32 %v5641, %v5641
  %v5863 = vmul.f32 %v5642, %v5642
  %v5864 = vmul.f32 %v5643, %v5643
  %v5865 = vmul.f32 %v5644, %v5644
  %v5866 = vmul.f32 %v5645, %v5645
  %v5867 = vmul.f32 %v5646, %v5646
  %v5868 = vmul.f32 %v5647, %v5647
  %v5869 = vmul.f32 %v5648, %v5648
  %v5870 = vmul.f32 %v5649, %v5649
  %v5871 = vmul.f32 %v5650, %v5650
  %v5872 = vmul.f32 %v5651, %v5651
  %v5873 = vmul.f32 %v5652, %v5652
  %v5874 = vmul.f32 %v5653, %v5653
  %v5875 = vmul.f32 %v5654, %v5654
  %v5876 = vmul.f32 %v5655, %v5655
  %v5877 = vmul.f32 %v5656, %v5656
  %v5878 = vmul.f32 %v5657, %v5657
  %v5879 = vmul.f32 %v5658, %v5658
  %v5880 = vmul.f32 %v5659, %v5659
  %v5881 = vmul.f32 %v5660, %v5660
  %v5882 = vmul.f32 %v5661, %v5661
  %v5883 = vmul.f32 %v5662, %v5662
  %v5884 = vmul.f32 %v5663, %v5663
  %v5885 = vmul.f32 %v5664, %v5664
  %v5886 = vmul.f32 %v5665, %v5665
  %v5887 = vmul.f32 %v5666, %v5666
  %v5888 = vmul.f32 %v5667, %v5667
  %v5889 = vmul.f32 %v5668, %v5668
  %v5890 = vmul.f32 %v5669, %v5669
  %v5891 = vmul.f32 %v5670, %v5670
  %v5892 = vmul.f32 %v5671, %v5671
  %v5893 = vmul.f32 %v5672, %v5672
  %v5894 = vmul.f32 %v5673, %v5673
  %v5895 = vmul.f32 %v5674, %v5674
  %v5896 = vmul.f32 %v5675, %v5675
  %v5897 = vmul.f32 %v5676, %v5676
  %v5898 = vmul.f32 %v5677, %v5677
  %v5899 = vmul.f32 %v5678, %v5678
  %v5900 = vmul.f32 %v5679, %v5679
  %v5901 = vmul.f32 %v5680, %v5680
  %v5902 = vmul.f32 %v5681, %v5681
  %v5903 = vmul.f32 %v5682, %v5682
  %v5904 = vmul.f32 %v5683, %v5683
  %v5905 = vmul.f32 %v5684, %v5684
  %v5906 = vmul.f32 %v5685, %v5685
  %v5907 = vmul.f32 %v5686, %v5686
  %v5908 = vmul.f32 %v5687, %v5687
  %v5909 = vmul.f32 %v5688, %v5688
  %v5910 = vmul.f32 %v5689, %v5689
  %v5911 = vmul.f32 %v5690, %v5690
  %v5912 = vmul.f32 %v5691, %v5691
  %v5913 = vmul.f32 %v5692, %v5692
  %v5914 = vmul.f32 %v5693, %v5693
  %v5915 = vmul.f32 %v5694, %v5694
  %v5916 = vmul.f32 %v5695, %v5695
  %v5917 = vmul.f32 %v5696, %v5696
  %v5918 = vmul.f32 %v5697, %v5697
  %v5919 = vmul.f32 %v5698, %v5698
  %v5920 = vmul.f32 %v5699, %v5699
  %v5921 = vmul.f32 %v5700, %v5700
  %v5922 = vmul.f32 %v5701, %v5701
  %v5923 = vmul.f32 %v5702, %v5702
  %v5924 = vmul.f32 %v5703, %v5703
  %v5925 = vmul.f32 %v5704, %v5704
  %v5926 = vmul.f32 %v5705, %v5705
  %v5927 = vmul.f32 %v5706, %v5706
  %v5928 = vmul.f32 %v5707, %v5707
  %v5929 = vmul.f32 %v5708, %v5708
  %v5930 = vmul.f32 %v5709, %v5709
  %v5931 = vmul.f32 %v5710, %v5710
  %v5932 = vmul.f32 %v5711, %v5711
  %v5933 = vmul.f32 %v5712, %v5712
  %v5934 = vmul.f32 %v5713, %v5713
  %v5935 = vmul.f32 %v5714, %v5714
  %v5936 = vmul.f32 %v5715, %v5715
  %v5937 = vmul.f32 %v5716, %v5716
  %v5938 = vmul.f32 %v5717, %v5717
  %v5939 = vmul.f32 %v5718, %v5718
  %v5940 = vmul.f32 %v5719, %v5719
  %v5941 = vmul.f32 %v5720, %v5720
  %v5942 = vmul.f32 %v5721, %v5721
  %v5943 = vadd.f32 %v5835, %v5836
  %v5944 = vadd.f32 %v5943, %v5837
  %v5945 = vadd.f32 %v5944, %v5838
  %v5946 = vadd.f32 %v5945, %v5839
  %v5947 = vadd.f32 %v5946, %v5840
  %v5948 = vadd.f32 %v5947, %v5841
  %v5949 = vadd.f32 %v5948, %v5842
  %v5950 = vadd.f32 %v5949, %v5843
  %v5951 = vadd.f32 %v5950, %v5844
  %v5952 = vadd.f32 %v5951, %v5845
  %v5953 = vadd.f32 %v5952, %v5846
  %v5954 = vadd.f32 %v5953, %v5847
  %v5955 = vadd.f32 %v5954, %v5848
  %v5956 = vadd.f32 %v5955, %v5849
  %v5957 = vadd.f32 %v5956, %v5850
  %v5958 = vadd.f32 %v5957, %v5851
  %v5959 = vadd.f32 %v5958, %v5852
  %v5960 = vadd.f32 %v5959, %v5853
  %v5961 = vadd.f32 %v5960, %v5854
  %v5962 = vadd.f32 %v5961, %v5855
  %v5963 = vadd.f32 %v5962, %v5856
  %v5964 = vadd.f32 %v5963, %v5857
  %v5965 = vadd.f32 %v5964, %v5858
  %v5966 = vadd.f32 %v5965, %v5859
  %v5967 = vadd.f32 %v5966, %v5860
  %v5968 = vadd.f32 %v5967, %v5861
  %v5969 = vadd.f32 %v5968, %v5862
  %v5970 = vadd.f32 %v5969, %v5863
  %v5971 = vadd.f32 %v5970, %v5864
  %v5972 = vadd.f32 %v5971, %v5865
  %v5973 = vadd.f32 %v5972, %v5866
  %v5974 = vadd.f32 %v5973, %v5867
  %v5975 = vadd.f32 %v5974, %v5868
  %v5976 = vadd.f32 %v5975, %v5869
  %v5977 = vadd.f32 %v5976, %v5870
  %v5978 = vadd.f32 %v5977, %v5871
  %v5979 = vadd.f32 %v5978, %v5872
  %v5980 = vadd.f32 %v5979, %v5873
  %v5981 = vadd.f32 %v5980, %v5874
  %v5982 = vadd.f32 %v5981, %v5875
  %v5983 = vadd.f32 %v5982, %v5876
  %v5984 = vadd.f32 %v5983, %v5877
  %v5985 = vadd.f32 %v5984, %v5878
  %v5986 = vadd.f32 %v5985, %v5879
  %v5987 = vadd.f32 %v5986, %v5880
  %v5988 = vadd.f32 %v5987, %v5881
  %v5989 = vadd.f32 %v5988, %v5882
  %v5990 = vadd.f32 %v5989, %v5883
  %v5991 = vadd.f32 %v5990, %v5884
  %v5992 = vadd.f32 %v5991, %v5885
  %v5993 = vadd.f32 %v5992, %v5886
  %v5994 = vadd.f32 %v5993, %v5887
  %v5995 = vadd.f32 %v5994, %v5888
  %v5996 = vadd.f32 %v5995, %v5889
  %v5997 = vadd.f32 %v5996, %v5890
  %v5998 = vadd.f32 %v5997, %v5891
  %v5999 = vadd.f32 %v5998, %v5892
  %v6000 = vadd.f32 %v5999, %v5893
  %v6001 = vadd.f32 %v6000, %v5894
  %v6002 = vadd.f32 %v6001, %v5895
  %v6003 = vadd.f32 %v6002, %v5896
  %v6004 = vadd.f32 %v6003, %v5897
  %v6005 = vadd.f32 %v6004, %v5898
  %v6006 = vadd.f32 %v6005, %v5899
  %v6007 = vadd.f32 %v6006, %v5900
  %v6008 = vadd.f32 %v6007, %v5901
  %v6009 = vadd.f32 %v6008, %v5902
  %v6010 = vadd.f32 %v6009, %v5903
  %v6011 = vadd.f32 %v6010, %v5904
  %v6012 = vadd.f32 %v6011, %v5905
  %v6013 = vadd.f32 %v6012, %v5906
  %v6014 = vadd.f32 %v6013, %v5907
  %v6015 = vadd.f32 %v6014, %v5908
  %v6016 = vadd.f32 %v6015, %v5909
  %v6017 = vadd.f32 %v6016, %v5910
  %v6018 = vadd.f32 %v6017, %v5911
  %v6019 = vadd.f32 %v6018, %v5912
  %v6020 = vadd.f32 %v6019, %v5913
  %v6021 = vadd.f32 %v6020, %v5914
  %v6022 = vadd.f32 %v6021, %v5915
  %v6023 = vadd.f32 %v6022, %v5916
  %v6024 = vadd.f32 %v6023, %v5917
  %v6025 = vadd.f32 %v6024, %v5918
  %v6026 = vadd.f32 %v6025, %v5919
  %v6027 = vadd.f32 %v6026, %v5920
  %v6028 = vadd.f32 %v6027, %v5921
  %v6029 = vadd.f32 %v6028, %v5922
  %v6030 = vadd.f32 %v6029, %v5923
  %v6031 = vadd.f32 %v6030, %v5924
  %v6032 = vadd.f32 %v6031, %v5925
  %v6033 = vadd.f32 %v6032, %v5926
  %v6034 = vadd.f32 %v6033, %v5927
  %v6035 = vadd.f32 %v6034, %v5928
  %v6036 = vadd.f32 %v6035, %v5929
  %v6037 = vadd.f32 %v6036, %v5930
  %v6038 = vadd.f32 %v6037, %v5931
  %v6039 = vadd.f32 %v6038, %v5932
  %v6040 = vadd.f32 %v6039, %v5933
  %v6041 = vadd.f32 %v6040, %v5934
  %v6042 = vadd.f32 %v6041, %v5935
  %v6043 = vadd.f32 %v6042, %v5936
  %v6044 = vadd.f32 %v6043, %v5937
  %v6045 = vadd.f32 %v6044, %v5938
  %v6046 = vadd.f32 %v6045, %v5939
  %v6047 = vadd.f32 %v6046, %v5940
  %v6048 = vadd.f32 %v6047, %v5941
  %v6049 = vadd.f32 %v6048, %v5942
  %v6050 = vrot.slane %v6049, 4
  %v6051 = vadd.f32 %v6049, %v6050
  %v6052 = vrot.slane %v6051, 2
  %v6053 = vadd.f32 %v6051, %v6052
  %v6054 = vrot.slane %v6053, 1
  %v6055 = vadd.f32 %v6053, %v6054
  %v6056 = vmul.f32 %v5834, 0.001953125
  %v6057 = vmul.f32 %v6055, 0.001953125
  %v6058 = vmul.f32 %v6056, %v6056
  %v6059 = vsub.f32 %v6057, %v6058
  %v6060 = vmax.f32 %v6059, 0.0
  %v6061 = vld [vmem:[%s3] sm:$0x1]
  %v6062 = vadd.f32 %v6060, 1e-05
  %v6063 = vrsqrt.pop %v6062
  %v6064 = vmul.f32 %v6061, %v6063
  %v6065 = vld [vmem:[%s4] sm:$0x1]
  %v6066 = vmul.f32 %v6056, %v6064
  %v6067 = vsub.f32 %v6065, %v6066
  %v6069 = vlaneseq
  %v6070 = vshrl.u32 %v6069, 7
  %v6071 = vsub.s32 0, %v6070
  %v6072 = vrot.slane %v6064, %v6071
  %v6074 = vmul.f32 %v5614, %v6072
  %v6075 = vmul.f32 %v5615, %v6072
  %v6076 = vmul.f32 %v5616, %v6072
  %v6077 = vmul.f32 %v5617, %v6072
  %v6078 = vmul.f32 %v5618, %v6072
  %v6079 = vmul.f32 %v5619, %v6072
  %v6080 = vmul.f32 %v5620, %v6072
  %v6081 = vmul.f32 %v5621, %v6072
  %v6082 = vmul.f32 %v5622, %v6072
  %v6083 = vmul.f32 %v5623, %v6072
  %v6084 = vmul.f32 %v5624, %v6072
  %v6085 = vmul.f32 %v5625, %v6072
  %v6086 = vmul.f32 %v5626, %v6072
  %v6087 = vmul.f32 %v5627, %v6072
  %v6088 = vmul.f32 %v5628, %v6072
  %v6089 = vmul.f32 %v5629, %v6072
  %v6090 = vmul.f32 %v5630, %v6072
  %v6091 = vmul.f32 %v5631, %v6072
  %v6092 = vmul.f32 %v5632, %v6072
  %v6093 = vmul.f32 %v5633, %v6072
  %v6094 = vmul.f32 %v5634, %v6072
  %v6095 = vmul.f32 %v5635, %v6072
  %v6096 = vmul.f32 %v5636, %v6072
  %v6097 = vmul.f32 %v5637, %v6072
  %v6098 = vmul.f32 %v5638, %v6072
  %v6099 = vmul.f32 %v5639, %v6072
  %v6100 = vmul.f32 %v5640, %v6072
  %v6101 = vmul.f32 %v5641, %v6072
  %v6102 = vmul.f32 %v5642, %v6072
  %v6103 = vmul.f32 %v5643, %v6072
  %v6104 = vmul.f32 %v5644, %v6072
  %v6105 = vmul.f32 %v5645, %v6072
  %v6106 = vmul.f32 %v5646, %v6072
  %v6107 = vmul.f32 %v5647, %v6072
  %v6108 = vmul.f32 %v5648, %v6072
  %v6109 = vmul.f32 %v5649, %v6072
  %v6110 = vmul.f32 %v5650, %v6072
  %v6111 = vmul.f32 %v5651, %v6072
  %v6112 = vmul.f32 %v5652, %v6072
  %v6113 = vmul.f32 %v5653, %v6072
  %v6114 = vmul.f32 %v5654, %v6072
  %v6115 = vmul.f32 %v5655, %v6072
  %v6116 = vmul.f32 %v5656, %v6072
  %v6117 = vmul.f32 %v5657, %v6072
  %v6118 = vmul.f32 %v5658, %v6072
  %v6119 = vmul.f32 %v5659, %v6072
  %v6120 = vmul.f32 %v5660, %v6072
  %v6121 = vmul.f32 %v5661, %v6072
  %v6122 = vmul.f32 %v5662, %v6072
  %v6123 = vmul.f32 %v5663, %v6072
  %v6124 = vmul.f32 %v5664, %v6072
  %v6125 = vmul.f32 %v5665, %v6072
  %v6126 = vmul.f32 %v5666, %v6072
  %v6127 = vmul.f32 %v5667, %v6072
  %v6128 = vmul.f32 %v5668, %v6072
  %v6129 = vmul.f32 %v5669, %v6072
  %v6130 = vmul.f32 %v5670, %v6072
  %v6131 = vmul.f32 %v5671, %v6072
  %v6132 = vmul.f32 %v5672, %v6072
  %v6133 = vmul.f32 %v5673, %v6072
  %v6134 = vmul.f32 %v5674, %v6072
  %v6135 = vmul.f32 %v5675, %v6072
  %v6136 = vmul.f32 %v5676, %v6072
  %v6137 = vmul.f32 %v5677, %v6072
  %v6138 = vmul.f32 %v5678, %v6072
  %v6139 = vmul.f32 %v5679, %v6072
  %v6140 = vmul.f32 %v5680, %v6072
  %v6141 = vmul.f32 %v5681, %v6072
  %v6142 = vmul.f32 %v5682, %v6072
  %v6143 = vmul.f32 %v5683, %v6072
  %v6144 = vmul.f32 %v5684, %v6072
  %v6145 = vmul.f32 %v5685, %v6072
  %v6146 = vmul.f32 %v5686, %v6072
  %v6147 = vmul.f32 %v5687, %v6072
  %v6148 = vmul.f32 %v5688, %v6072
  %v6149 = vmul.f32 %v5689, %v6072
  %v6150 = vmul.f32 %v5690, %v6072
  %v6151 = vmul.f32 %v5691, %v6072
  %v6152 = vmul.f32 %v5692, %v6072
  %v6153 = vmul.f32 %v5693, %v6072
  %v6154 = vmul.f32 %v5694, %v6072
  %v6155 = vmul.f32 %v5695, %v6072
  %v6156 = vmul.f32 %v5696, %v6072
  %v6157 = vmul.f32 %v5697, %v6072
  %v6158 = vmul.f32 %v5698, %v6072
  %v6159 = vmul.f32 %v5699, %v6072
  %v6160 = vmul.f32 %v5700, %v6072
  %v6161 = vmul.f32 %v5701, %v6072
  %v6162 = vmul.f32 %v5702, %v6072
  %v6163 = vmul.f32 %v5703, %v6072
  %v6164 = vmul.f32 %v5704, %v6072
  %v6165 = vmul.f32 %v5705, %v6072
  %v6166 = vmul.f32 %v5706, %v6072
  %v6167 = vmul.f32 %v5707, %v6072
  %v6168 = vmul.f32 %v5708, %v6072
  %v6169 = vmul.f32 %v5709, %v6072
  %v6170 = vmul.f32 %v5710, %v6072
  %v6171 = vmul.f32 %v5711, %v6072
  %v6172 = vmul.f32 %v5712, %v6072
  %v6173 = vmul.f32 %v5713, %v6072
  %v6174 = vmul.f32 %v5714, %v6072
  %v6175 = vmul.f32 %v5715, %v6072
  %v6176 = vmul.f32 %v5716, %v6072
  %v6177 = vmul.f32 %v5717, %v6072
  %v6178 = vmul.f32 %v5718, %v6072
  %v6179 = vmul.f32 %v5719, %v6072
  %v6180 = vmul.f32 %v5720, %v6072
  %v6181 = vmul.f32 %v5721, %v6072
  %v6183 = vlaneseq
  %v6184 = vshrl.u32 %v6183, 7
  %v6185 = vsub.s32 0, %v6184
  %v6186 = vrot.slane %v6067, %v6185
  %v6188 = vadd.f32 %v6074, %v6186
  %v6189 = vadd.f32 %v6075, %v6186
  %v6190 = vadd.f32 %v6076, %v6186
  %v6191 = vadd.f32 %v6077, %v6186
  %v6192 = vadd.f32 %v6078, %v6186
  %v6193 = vadd.f32 %v6079, %v6186
  %v6194 = vadd.f32 %v6080, %v6186
  %v6195 = vadd.f32 %v6081, %v6186
  %v6196 = vadd.f32 %v6082, %v6186
  %v6197 = vadd.f32 %v6083, %v6186
  %v6198 = vadd.f32 %v6084, %v6186
  %v6199 = vadd.f32 %v6085, %v6186
  %v6200 = vadd.f32 %v6086, %v6186
  %v6201 = vadd.f32 %v6087, %v6186
  %v6202 = vadd.f32 %v6088, %v6186
  %v6203 = vadd.f32 %v6089, %v6186
  %v6204 = vadd.f32 %v6090, %v6186
  %v6205 = vadd.f32 %v6091, %v6186
  %v6206 = vadd.f32 %v6092, %v6186
  %v6207 = vadd.f32 %v6093, %v6186
  %v6208 = vadd.f32 %v6094, %v6186
  %v6209 = vadd.f32 %v6095, %v6186
  %v6210 = vadd.f32 %v6096, %v6186
  %v6211 = vadd.f32 %v6097, %v6186
  %v6212 = vadd.f32 %v6098, %v6186
  %v6213 = vadd.f32 %v6099, %v6186
  %v6214 = vadd.f32 %v6100, %v6186
  %v6215 = vadd.f32 %v6101, %v6186
  %v6216 = vadd.f32 %v6102, %v6186
  %v6217 = vadd.f32 %v6103, %v6186
  %v6218 = vadd.f32 %v6104, %v6186
  %v6219 = vadd.f32 %v6105, %v6186
  %v6220 = vadd.f32 %v6106, %v6186
  %v6221 = vadd.f32 %v6107, %v6186
  %v6222 = vadd.f32 %v6108, %v6186
  %v6223 = vadd.f32 %v6109, %v6186
  %v6224 = vadd.f32 %v6110, %v6186
  %v6225 = vadd.f32 %v6111, %v6186
  %v6226 = vadd.f32 %v6112, %v6186
  %v6227 = vadd.f32 %v6113, %v6186
  %v6228 = vadd.f32 %v6114, %v6186
  %v6229 = vadd.f32 %v6115, %v6186
  %v6230 = vadd.f32 %v6116, %v6186
  %v6231 = vadd.f32 %v6117, %v6186
  %v6232 = vadd.f32 %v6118, %v6186
  %v6233 = vadd.f32 %v6119, %v6186
  %v6234 = vadd.f32 %v6120, %v6186
  %v6235 = vadd.f32 %v6121, %v6186
  %v6236 = vadd.f32 %v6122, %v6186
  %v6237 = vadd.f32 %v6123, %v6186
  %v6238 = vadd.f32 %v6124, %v6186
  %v6239 = vadd.f32 %v6125, %v6186
  %v6240 = vadd.f32 %v6126, %v6186
  %v6241 = vadd.f32 %v6127, %v6186
  %v6242 = vadd.f32 %v6128, %v6186
  %v6243 = vadd.f32 %v6129, %v6186
  %v6244 = vadd.f32 %v6130, %v6186
  %v6245 = vadd.f32 %v6131, %v6186
  %v6246 = vadd.f32 %v6132, %v6186
  %v6247 = vadd.f32 %v6133, %v6186
  %v6248 = vadd.f32 %v6134, %v6186
  %v6249 = vadd.f32 %v6135, %v6186
  %v6250 = vadd.f32 %v6136, %v6186
  %v6251 = vadd.f32 %v6137, %v6186
  %v6252 = vadd.f32 %v6138, %v6186
  %v6253 = vadd.f32 %v6139, %v6186
  %v6254 = vadd.f32 %v6140, %v6186
  %v6255 = vadd.f32 %v6141, %v6186
  %v6256 = vadd.f32 %v6142, %v6186
  %v6257 = vadd.f32 %v6143, %v6186
  %v6258 = vadd.f32 %v6144, %v6186
  %v6259 = vadd.f32 %v6145, %v6186
  %v6260 = vadd.f32 %v6146, %v6186
  %v6261 = vadd.f32 %v6147, %v6186
  %v6262 = vadd.f32 %v6148, %v6186
  %v6263 = vadd.f32 %v6149, %v6186
  %v6264 = vadd.f32 %v6150, %v6186
  %v6265 = vadd.f32 %v6151, %v6186
  %v6266 = vadd.f32 %v6152, %v6186
  %v6267 = vadd.f32 %v6153, %v6186
  %v6268 = vadd.f32 %v6154, %v6186
  %v6269 = vadd.f32 %v6155, %v6186
  %v6270 = vadd.f32 %v6156, %v6186
  %v6271 = vadd.f32 %v6157, %v6186
  %v6272 = vadd.f32 %v6158, %v6186
  %v6273 = vadd.f32 %v6159, %v6186
  %v6274 = vadd.f32 %v6160, %v6186
  %v6275 = vadd.f32 %v6161, %v6186
  %v6276 = vadd.f32 %v6162, %v6186
  %v6277 = vadd.f32 %v6163, %v6186
  %v6278 = vadd.f32 %v6164, %v6186
  %v6279 = vadd.f32 %v6165, %v6186
  %v6280 = vadd.f32 %v6166, %v6186
  %v6281 = vadd.f32 %v6167, %v6186
  %v6282 = vadd.f32 %v6168, %v6186
  %v6283 = vadd.f32 %v6169, %v6186
  %v6284 = vadd.f32 %v6170, %v6186
  %v6285 = vadd.f32 %v6171, %v6186
  %v6286 = vadd.f32 %v6172, %v6186
  %v6287 = vadd.f32 %v6173, %v6186
  %v6288 = vadd.f32 %v6174, %v6186
  %v6289 = vadd.f32 %v6175, %v6186
  %v6290 = vadd.f32 %v6176, %v6186
  %v6291 = vadd.f32 %v6177, %v6186
  %v6292 = vadd.f32 %v6178, %v6186
  %v6293 = vadd.f32 %v6179, %v6186
  %v6294 = vadd.f32 %v6180, %v6186
  %v6295 = vadd.f32 %v6181, %v6186
  %v6296 = vmax.f32 %v6188, 0.0
  %v6297 = vmax.f32 %v6189, 0.0
  %v6298 = vmax.f32 %v6190, 0.0
  %v6299 = vmax.f32 %v6191, 0.0
  %v6300 = vmax.f32 %v6192, 0.0
  %v6301 = vmax.f32 %v6193, 0.0
  %v6302 = vmax.f32 %v6194, 0.0
  %v6303 = vmax.f32 %v6195, 0.0
  %v6304 = vmax.f32 %v6196, 0.0
  %v6305 = vmax.f32 %v6197, 0.0
  %v6306 = vmax.f32 %v6198, 0.0
  %v6307 = vmax.f32 %v6199, 0.0
  %v6308 = vmax.f32 %v6200, 0.0
  %v6309 = vmax.f32 %v6201, 0.0
  %v6310 = vmax.f32 %v6202, 0.0
  %v6311 = vmax.f32 %v6203, 0.0
  %v6312 = vmax.f32 %v6204, 0.0
  %v6313 = vmax.f32 %v6205, 0.0
  %v6314 = vmax.f32 %v6206, 0.0
  %v6315 = vmax.f32 %v6207, 0.0
  %v6316 = vmax.f32 %v6208, 0.0
  %v6317 = vmax.f32 %v6209, 0.0
  %v6318 = vmax.f32 %v6210, 0.0
  %v6319 = vmax.f32 %v6211, 0.0
  %v6320 = vmax.f32 %v6212, 0.0
  %v6321 = vmax.f32 %v6213, 0.0
  %v6322 = vmax.f32 %v6214, 0.0
  %v6323 = vmax.f32 %v6215, 0.0
  %v6324 = vmax.f32 %v6216, 0.0
  %v6325 = vmax.f32 %v6217, 0.0
  %v6326 = vmax.f32 %v6218, 0.0
  %v6327 = vmax.f32 %v6219, 0.0
  %v6328 = vmax.f32 %v6220, 0.0
  %v6329 = vmax.f32 %v6221, 0.0
  %v6330 = vmax.f32 %v6222, 0.0
  %v6331 = vmax.f32 %v6223, 0.0
  %v6332 = vmax.f32 %v6224, 0.0
  %v6333 = vmax.f32 %v6225, 0.0
  %v6334 = vmax.f32 %v6226, 0.0
  %v6335 = vmax.f32 %v6227, 0.0
  %v6336 = vmax.f32 %v6228, 0.0
  %v6337 = vmax.f32 %v6229, 0.0
  %v6338 = vmax.f32 %v6230, 0.0
  %v6339 = vmax.f32 %v6231, 0.0
  %v6340 = vmax.f32 %v6232, 0.0
  %v6341 = vmax.f32 %v6233, 0.0
  %v6342 = vmax.f32 %v6234, 0.0
  %v6343 = vmax.f32 %v6235, 0.0
  %v6344 = vmax.f32 %v6236, 0.0
  %v6345 = vmax.f32 %v6237, 0.0
  %v6346 = vmax.f32 %v6238, 0.0
  %v6347 = vmax.f32 %v6239, 0.0
  %v6348 = vmax.f32 %v6240, 0.0
  %v6349 = vmax.f32 %v6241, 0.0
  %v6350 = vmax.f32 %v6242, 0.0
  %v6351 = vmax.f32 %v6243, 0.0
  %v6352 = vmax.f32 %v6244, 0.0
  %v6353 = vmax.f32 %v6245, 0.0
  %v6354 = vmax.f32 %v6246, 0.0
  %v6355 = vmax.f32 %v6247, 0.0
  %v6356 = vmax.f32 %v6248, 0.0
  %v6357 = vmax.f32 %v6249, 0.0
  %v6358 = vmax.f32 %v6250, 0.0
  %v6359 = vmax.f32 %v6251, 0.0
  %v6360 = vmax.f32 %v6252, 0.0
  %v6361 = vmax.f32 %v6253, 0.0
  %v6362 = vmax.f32 %v6254, 0.0
  %v6363 = vmax.f32 %v6255, 0.0
  %v6364 = vmax.f32 %v6256, 0.0
  %v6365 = vmax.f32 %v6257, 0.0
  %v6366 = vmax.f32 %v6258, 0.0
  %v6367 = vmax.f32 %v6259, 0.0
  %v6368 = vmax.f32 %v6260, 0.0
  %v6369 = vmax.f32 %v6261, 0.0
  %v6370 = vmax.f32 %v6262, 0.0
  %v6371 = vmax.f32 %v6263, 0.0
  %v6372 = vmax.f32 %v6264, 0.0
  %v6373 = vmax.f32 %v6265, 0.0
  %v6374 = vmax.f32 %v6266, 0.0
  %v6375 = vmax.f32 %v6267, 0.0
  %v6376 = vmax.f32 %v6268, 0.0
  %v6377 = vmax.f32 %v6269, 0.0
  %v6378 = vmax.f32 %v6270, 0.0
  %v6379 = vmax.f32 %v6271, 0.0
  %v6380 = vmax.f32 %v6272, 0.0
  %v6381 = vmax.f32 %v6273, 0.0
  %v6382 = vmax.f32 %v6274, 0.0
  %v6383 = vmax.f32 %v6275, 0.0
  %v6384 = vmax.f32 %v6276, 0.0
  %v6385 = vmax.f32 %v6277, 0.0
  %v6386 = vmax.f32 %v6278, 0.0
  %v6387 = vmax.f32 %v6279, 0.0
  %v6388 = vmax.f32 %v6280, 0.0
  %v6389 = vmax.f32 %v6281, 0.0
  %v6390 = vmax.f32 %v6282, 0.0
  %v6391 = vmax.f32 %v6283, 0.0
  %v6392 = vmax.f32 %v6284, 0.0
  %v6393 = vmax.f32 %v6285, 0.0
  %v6394 = vmax.f32 %v6286, 0.0
  %v6395 = vmax.f32 %v6287, 0.0
  %v6396 = vmax.f32 %v6288, 0.0
  %v6397 = vmax.f32 %v6289, 0.0
  %v6398 = vmax.f32 %v6290, 0.0
  %v6399 = vmax.f32 %v6291, 0.0
  %v6400 = vmax.f32 %v6292, 0.0
  %v6401 = vmax.f32 %v6293, 0.0
  %v6402 = vmax.f32 %v6294, 0.0
  %v6403 = vmax.f32 %v6295, 0.0
  %v6404 = vmul.f32 %v6296, %v5077
  %v6405 = vmul.f32 %v6297, %v5082
  %v6406 = vmul.f32 %v6298, %v5087
  %v6407 = vmul.f32 %v6299, %v5092
  %v6408 = vmul.f32 %v6300, %v5097
  %v6409 = vmul.f32 %v6301, %v5102
  %v6410 = vmul.f32 %v6302, %v5107
  %v6411 = vmul.f32 %v6303, %v5112
  %v6412 = vmul.f32 %v6304, %v5117
  %v6413 = vmul.f32 %v6305, %v5122
  %v6414 = vmul.f32 %v6306, %v5127
  %v6415 = vmul.f32 %v6307, %v5132
  %v6416 = vmul.f32 %v6308, %v5137
  %v6417 = vmul.f32 %v6309, %v5142
  %v6418 = vmul.f32 %v6310, %v5147
  %v6419 = vmul.f32 %v6311, %v5152
  %v6420 = vmul.f32 %v6312, %v5157
  %v6421 = vmul.f32 %v6313, %v5162
  %v6422 = vmul.f32 %v6314, %v5167
  %v6423 = vmul.f32 %v6315, %v5172
  %v6424 = vmul.f32 %v6316, %v5177
  %v6425 = vmul.f32 %v6317, %v5182
  %v6426 = vmul.f32 %v6318, %v5187
  %v6427 = vmul.f32 %v6319, %v5192
  %v6428 = vmul.f32 %v6320, %v5197
  %v6429 = vmul.f32 %v6321, %v5202
  %v6430 = vmul.f32 %v6322, %v5207
  %v6431 = vmul.f32 %v6323, %v5212
  %v6432 = vmul.f32 %v6324, %v5217
  %v6433 = vmul.f32 %v6325, %v5222
  %v6434 = vmul.f32 %v6326, %v5227
  %v6435 = vmul.f32 %v6327, %v5232
  %v6436 = vmul.f32 %v6328, %v5237
  %v6437 = vmul.f32 %v6329, %v5242
  %v6438 = vmul.f32 %v6330, %v5247
  %v6439 = vmul.f32 %v6331, %v5252
  %v6440 = vmul.f32 %v6332, %v5257
  %v6441 = vmul.f32 %v6333, %v5262
  %v6442 = vmul.f32 %v6334, %v5267
  %v6443 = vmul.f32 %v6335, %v5272
  %v6444 = vmul.f32 %v6336, %v5277
  %v6445 = vmul.f32 %v6337, %v5282
  %v6446 = vmul.f32 %v6338, %v5287
  %v6447 = vmul.f32 %v6339, %v5292
  %v6448 = vmul.f32 %v6340, %v5297
  %v6449 = vmul.f32 %v6341, %v5302
  %v6450 = vmul.f32 %v6342, %v5307
  %v6451 = vmul.f32 %v6343, %v5312
  %v6452 = vmul.f32 %v6344, %v5317
  %v6453 = vmul.f32 %v6345, %v5322
  %v6454 = vmul.f32 %v6346, %v5327
  %v6455 = vmul.f32 %v6347, %v5332
  %v6456 = vmul.f32 %v6348, %v5337
  %v6457 = vmul.f32 %v6349, %v5342
  %v6458 = vmul.f32 %v6350, %v5347
  %v6459 = vmul.f32 %v6351, %v5352
  %v6460 = vmul.f32 %v6352, %v5357
  %v6461 = vmul.f32 %v6353, %v5362
  %v6462 = vmul.f32 %v6354, %v5367
  %v6463 = vmul.f32 %v6355, %v5372
  %v6464 = vmul.f32 %v6356, %v5377
  %v6465 = vmul.f32 %v6357, %v5382
  %v6466 = vmul.f32 %v6358, %v5387
  %v6467 = vmul.f32 %v6359, %v5392
  %v6468 = vmul.f32 %v6360, %v5397
  %v6469 = vmul.f32 %v6361, %v5402
  %v6470 = vmul.f32 %v6362, %v5407
  %v6471 = vmul.f32 %v6363, %v5412
  %v6472 = vmul.f32 %v6364, %v5417
  %v6473 = vmul.f32 %v6365, %v5422
  %v6474 = vmul.f32 %v6366, %v5427
  %v6475 = vmul.f32 %v6367, %v5432
  %v6476 = vmul.f32 %v6368, %v5437
  %v6477 = vmul.f32 %v6369, %v5442
  %v6478 = vmul.f32 %v6370, %v5447
  %v6479 = vmul.f32 %v6371, %v5452
  %v6480 = vmul.f32 %v6372, %v5457
  %v6481 = vmul.f32 %v6373, %v5462
  %v6482 = vmul.f32 %v6374, %v5467
  %v6483 = vmul.f32 %v6375, %v5472
  %v6484 = vmul.f32 %v6376, %v5477
  %v6485 = vmul.f32 %v6377, %v5482
  %v6486 = vmul.f32 %v6378, %v5487
  %v6487 = vmul.f32 %v6379, %v5492
  %v6488 = vmul.f32 %v6380, %v5497
  %v6489 = vmul.f32 %v6381, %v5502
  %v6490 = vmul.f32 %v6382, %v5507
  %v6491 = vmul.f32 %v6383, %v5512
  %v6492 = vmul.f32 %v6384, %v5517
  %v6493 = vmul.f32 %v6385, %v5522
  %v6494 = vmul.f32 %v6386, %v5527
  %v6495 = vmul.f32 %v6387, %v5532
  %v6496 = vmul.f32 %v6388, %v5537
  %v6497 = vmul.f32 %v6389, %v5542
  %v6498 = vmul.f32 %v6390, %v5547
  %v6499 = vmul.f32 %v6391, %v5552
  %v6500 = vmul.f32 %v6392, %v5557
  %v6501 = vmul.f32 %v6393, %v5562
  %v6502 = vmul.f32 %v6394, %v5567
  %v6503 = vmul.f32 %v6395, %v5572
  %v6504 = vmul.f32 %v6396, %v5577
  %v6505 = vmul.f32 %v6397, %v5582
  %v6506 = vmul.f32 %v6398, %v5587
  %v6507 = vmul.f32 %v6399, %v5592
  %v6508 = vmul.f32 %v6400, %v5597
  %v6509 = vmul.f32 %v6401, %v5602
  %v6510 = vmul.f32 %v6402, %v5607
  %v6511 = vmul.f32 %v6403, %v5612
  %6512 = vst [vmem:[#allocation2] sm:$0xff] %v6404
  %6513 = vst [vmem:[#allocation2 + $0x8] sm:$0xff] %v6405
  %6514 = vst [vmem:[#allocation2 + $0x10] sm:$0xff] %v6406
  %6515 = vst [vmem:[#allocation2 + $0x18] sm:$0xff] %v6407
  %6516 = vst [vmem:[#allocation2 + $0x20] sm:$0xff] %v6408
  %6517 = vst [vmem:[#allocation2 + $0x28] sm:$0xff] %v6409
  %6518 = vst [vmem:[#allocation2 + $0x30] sm:$0xff] %v6410
  %6519 = vst [vmem:[#allocation2 + $0x38] sm:$0xff] %v6411
  %6520 = vst [vmem:[#allocation2 + $0x40] sm:$0xff] %v6412
  %6521 = vst [vmem:[#allocation2 + $0x48] sm:$0xff] %v6413
  %6522 = vst [vmem:[#allocation2 + $0x50] sm:$0xff] %v6414
  %6523 = vst [vmem:[#allocation2 + $0x58] sm:$0xff] %v6415
  %6524 = vst [vmem:[#allocation2 + $0x60] sm:$0xff] %v6416
  %6525 = vst [vmem:[#allocation2 + $0x68] sm:$0xff] %v6417
  %6526 = vst [vmem:[#allocation2 + $0x70] sm:$0xff] %v6418
  %6527 = vst [vmem:[#allocation2 + $0x78] sm:$0xff] %v6419
  %6528 = vst [vmem:[#allocation2 + $0x80] sm:$0xff] %v6420
  %6529 = vst [vmem:[#allocation2 + $0x88] sm:$0xff] %v6421
  %6530 = vst [vmem:[#allocation2 + $0x90] sm:$0xff] %v6422
  %6531 = vst [vmem:[#allocation2 + $0x98] sm:$0xff] %v6423
  %6532 = vst [vmem:[#allocation2 + $0xa0] sm:$0xff] %v6424
  %6533 = vst [vmem:[#allocation2 + $0xa8] sm:$0xff] %v6425
  %6534 = vst [vmem:[#allocation2 + $0xb0] sm:$0xff] %v6426
  %6535 = vst [vmem:[#allocation2 + $0xb8] sm:$0xff] %v6427
  %6536 = vst [vmem:[#allocation2 + $0xc0] sm:$0xff] %v6428
  %6537 = vst [vmem:[#allocation2 + $0xc8] sm:$0xff] %v6429
  %6538 = vst [vmem:[#allocation2 + $0xd0] sm:$0xff] %v6430
  %6539 = vst [vmem:[#allocation2 + $0xd8] sm:$0xff] %v6431
  %6540 = vst [vmem:[#allocation2 + $0xe0] sm:$0xff] %v6432
  %6541 = vst [vmem:[#allocation2 + $0xe8] sm:$0xff] %v6433
  %6542 = vst [vmem:[#allocation2 + $0xf0] sm:$0xff] %v6434
  %6543 = vst [vmem:[#allocation2 + $0xf8] sm:$0xff] %v6435
  %6544 = vst [vmem:[#allocation2 + $0x100] sm:$0xff] %v6436
  %6545 = vst [vmem:[#allocation2 + $0x108] sm:$0xff] %v6437
  %6546 = vst [vmem:[#allocation2 + $0x110] sm:$0xff] %v6438
  %6547 = vst [vmem:[#allocation2 + $0x118] sm:$0xff] %v6439
  %6548 = vst [vmem:[#allocation2 + $0x120] sm:$0xff] %v6440
  %6549 = vst [vmem:[#allocation2 + $0x128] sm:$0xff] %v6441
  %6550 = vst [vmem:[#allocation2 + $0x130] sm:$0xff] %v6442
  %6551 = vst [vmem:[#allocation2 + $0x138] sm:$0xff] %v6443
  %6552 = vst [vmem:[#allocation2 + $0x140] sm:$0xff] %v6444
  %6553 = vst [vmem:[#allocation2 + $0x148] sm:$0xff] %v6445
  %6554 = vst [vmem:[#allocation2 + $0x150] sm:$0xff] %v6446
  %6555 = vst [vmem:[#allocation2 + $0x158] sm:$0xff] %v6447
  %6556 = vst [vmem:[#allocation2 + $0x160] sm:$0xff] %v6448
  %6557 = vst [vmem:[#allocation2 + $0x168] sm:$0xff] %v6449
  %6558 = vst [vmem:[#allocation2 + $0x170] sm:$0xff] %v6450
  %6559 = vst [vmem:[#allocation2 + $0x178] sm:$0xff] %v6451
  %6560 = vst [vmem:[#allocation2 + $0x180] sm:$0xff] %v6452
  %6561 = vst [vmem:[#allocation2 + $0x188] sm:$0xff] %v6453
  %6562 = vst [vmem:[#allocation2 + $0x190] sm:$0xff] %v6454
  %6563 = vst [vmem:[#allocation2 + $0x198] sm:$0xff] %v6455
  %6564 = vst [vmem:[#allocation2 + $0x1a0] sm:$0xff] %v6456
  %6565 = vst [vmem:[#allocation2 + $0x1a8] sm:$0xff] %v6457
  %6566 = vst [vmem:[#allocation2 + $0x1b0] sm:$0xff] %v6458
  %6567 = vst [vmem:[#allocation2 + $0x1b8] sm:$0xff] %v6459
  %6568 = vst [vmem:[#allocation2 + $0x1c0] sm:$0xff] %v6460
  %6569 = vst [vmem:[#allocation2 + $0x1c8] sm:$0xff] %v6461
  %6570 = vst [vmem:[#allocation2 + $0x1d0] sm:$0xff] %v6462
  %6571 = vst [vmem:[#allocation2 + $0x1d8] sm:$0xff] %v6463
  %6572 = vst [vmem:[#allocation2 + $0x1e0] sm:$0xff] %v6464
  %6573 = vst [vmem:[#allocation2 + $0x1e8] sm:$0xff] %v6465
  %6574 = vst [vmem:[#allocation2 + $0x1f0] sm:$0xff] %v6466
  %6575 = vst [vmem:[#allocation2 + $0x1f8] sm:$0xff] %v6467
  %6576 = vst [vmem:[#allocation2 + $0x200] sm:$0xff] %v6468
  %6577 = vst [vmem:[#allocation2 + $0x208] sm:$0xff] %v6469
  %6578 = vst [vmem:[#allocation2 + $0x210] sm:$0xff] %v6470
  %6579 = vst [vmem:[#allocation2 + $0x218] sm:$0xff] %v6471
  %6580 = vst [vmem:[#allocation2 + $0x220] sm:$0xff] %v6472
  %6581 = vst [vmem:[#allocation2 + $0x228] sm:$0xff] %v6473
  %6582 = vst [vmem:[#allocation2 + $0x230] sm:$0xff] %v6474
  %6583 = vst [vmem:[#allocation2 + $0x238] sm:$0xff] %v6475
  %6584 = vst [vmem:[#allocation2 + $0x240] sm:$0xff] %v6476
  %6585 = vst [vmem:[#allocation2 + $0x248] sm:$0xff] %v6477
  %6586 = vst [vmem:[#allocation2 + $0x250] sm:$0xff] %v6478
  %6587 = vst [vmem:[#allocation2 + $0x258] sm:$0xff] %v6479
  %6588 = vst [vmem:[#allocation2 + $0x260] sm:$0xff] %v6480
  %6589 = vst [vmem:[#allocation2 + $0x268] sm:$0xff] %v6481
  %6590 = vst [vmem:[#allocation2 + $0x270] sm:$0xff] %v6482
  %6591 = vst [vmem:[#allocation2 + $0x278] sm:$0xff] %v6483
  %6592 = vst [vmem:[#allocation2 + $0x280] sm:$0xff] %v6484
  %6593 = vst [vmem:[#allocation2 + $0x288] sm:$0xff] %v6485
  %6594 = vst [vmem:[#allocation2 + $0x290] sm:$0xff] %v6486
  %6595 = vst [vmem:[#allocation2 + $0x298] sm:$0xff] %v6487
  %6596 = vst [vmem:[#allocation2 + $0x2a0] sm:$0xff] %v6488
  %6597 = vst [vmem:[#allocation2 + $0x2a8] sm:$0xff] %v6489
  %6598 = vst [vmem:[#allocation2 + $0x2b0] sm:$0xff] %v6490
  %6599 = vst [vmem:[#allocation2 + $0x2b8] sm:$0xff] %v6491
  %6600 = vst [vmem:[#allocation2 + $0x2c0] sm:$0xff] %v6492
  %6601 = vst [vmem:[#allocation2 + $0x2c8] sm:$0xff] %v6493
  %6602 = vst [vmem:[#allocation2 + $0x2d0] sm:$0xff] %v6494
  %6603 = vst [vmem:[#allocation2 + $0x2d8] sm:$0xff] %v6495
  %6604 = vst [vmem:[#allocation2 + $0x2e0] sm:$0xff] %v6496
  %6605 = vst [vmem:[#allocation2 + $0x2e8] sm:$0xff] %v6497
  %6606 = vst [vmem:[#allocation2 + $0x2f0] sm:$0xff] %v6498
  %6607 = vst [vmem:[#allocation2 + $0x2f8] sm:$0xff] %v6499
  %6608 = vst [vmem:[#allocation2 + $0x300] sm:$0xff] %v6500
  %6609 = vst [vmem:[#allocation2 + $0x308] sm:$0xff] %v6501
  %6610 = vst [vmem:[#allocation2 + $0x310] sm:$0xff] %v6502
  %6611 = vst [vmem:[#allocation2 + $0x318] sm:$0xff] %v6503
  %6612 = vst [vmem:[#allocation2 + $0x320] sm:$0xff] %v6504
  %6613 = vst [vmem:[#allocation2 + $0x328] sm:$0xff] %v6505
  %6614 = vst [vmem:[#allocation2 + $0x330] sm:$0xff] %v6506
  %6615 = vst [vmem:[#allocation2 + $0x338] sm:$0xff] %v6507
  %6616 = vst [vmem:[#allocation2 + $0x340] sm:$0xff] %v6508
  %6617 = vst [vmem:[#allocation2 + $0x348] sm:$0xff] %v6509
  %6618 = vst [vmem:[#allocation2 + $0x350] sm:$0xff] %v6510
  %6619 = vst [vmem:[#allocation2 + $0x358] sm:$0xff] %v6511
  %v6620 = vld [vmem:[#allocation2] sm:$0xff]
  %v6621 = vld [vmem:[#allocation2 + $0x8] sm:$0xff]
  %v6622 = vld [vmem:[#allocation2 + $0x18] sm:$0xff]
  %v6623 = vld [vmem:[#allocation2 + $0x20] sm:$0xff]
  %v6624 = vld [vmem:[#allocation2 + $0x30] sm:$0xff]
  %v6625 = vld [vmem:[#allocation2 + $0x38] sm:$0xff]
  %v6626 = vld [vmem:[#allocation2 + $0x48] sm:$0xff]
  %v6627 = vld [vmem:[#allocation2 + $0x50] sm:$0xff]
  %v6628 = vld [vmem:[#allocation2 + $0x60] sm:$0xff]
  %v6629 = vld [vmem:[#allocation2 + $0x68] sm:$0xff]
  %v6630 = vld [vmem:[#allocation2 + $0x78] sm:$0xff]
  %v6631 = vld [vmem:[#allocation2 + $0x80] sm:$0xff]
  %v6632 = vld [vmem:[#allocation2 + $0x90] sm:$0xff]
  %v6633 = vld [vmem:[#allocation2 + $0x98] sm:$0xff]
  %v6634 = vld [vmem:[#allocation2 + $0xa8] sm:$0xff]
  %v6635 = vld [vmem:[#allocation2 + $0xb0] sm:$0xff]
  %v6636 = vld [vmem:[#allocation2 + $0xc0] sm:$0xff]
  %v6637 = vld [vmem:[#allocation2 + $0xc8] sm:$0xff]
  %v6638 = vld [vmem:[#allocation2 + $0xd8] sm:$0xff]
  %v6639 = vld [vmem:[#allocation2 + $0xe0] sm:$0xff]
  %v6640 = vld [vmem:[#allocation2 + $0xf0] sm:$0xff]
  %v6641 = vld [vmem:[#allocation2 + $0xf8] sm:$0xff]
  %v6642 = vld [vmem:[#allocation2 + $0x108] sm:$0xff]
  %v6643 = vld [vmem:[#allocation2 + $0x110] sm:$0xff]
  %v6644 = vld [vmem:[#allocation2 + $0x120] sm:$0xff]
  %v6645 = vld [vmem:[#allocation2 + $0x128] sm:$0xff]
  %v6646 = vld [vmem:[#allocation2 + $0x138] sm:$0xff]
  %v6647 = vld [vmem:[#allocation2 + $0x140] sm:$0xff]
  %v6648 = vld [vmem:[#allocation2 + $0x150] sm:$0xff]
  %v6649 = vld [vmem:[#allocation2 + $0x158] sm:$0xff]
  %v6650 = vld [vmem:[#allocation2 + $0x168] sm:$0xff]
  %v6651 = vld [vmem:[#allocation2 + $0x170] sm:$0xff]
  %v6652 = vld [vmem:[#allocation2 + $0x1b0] sm:$0xff]
  %v6653 = vld [vmem:[#allocation2 + $0x1b8] sm:$0xff]
  %v6654 = vld [vmem:[#allocation2 + $0x1c8] sm:$0xff]
  %v6655 = vld [vmem:[#allocation2 + $0x1d0] sm:$0xff]
  %v6656 = vld [vmem:[#allocation2 + $0x1e0] sm:$0xff]
  %v6657 = vld [vmem:[#allocation2 + $0x1e8] sm:$0xff]
  %v6658 = vld [vmem:[#allocation2 + $0x1f8] sm:$0xff]
  %v6659 = vld [vmem:[#allocation2 + $0x200] sm:$0xff]
  %v6660 = vld [vmem:[#allocation2 + $0x210] sm:$0xff]
  %v6661 = vld [vmem:[#allocation2 + $0x218] sm:$0xff]
  %v6662 = vld [vmem:[#allocation2 + $0x228] sm:$0xff]
  %v6663 = vld [vmem:[#allocation2 + $0x230] sm:$0xff]
  %v6664 = vld [vmem:[#allocation2 + $0x240] sm:$0xff]
  %v6665 = vld [vmem:[#allocation2 + $0x248] sm:$0xff]
  %v6666 = vld [vmem:[#allocation2 + $0x258] sm:$0xff]
  %v6667 = vld [vmem:[#allocation2 + $0x260] sm:$0xff]
  %v6668 = vld [vmem:[#allocation2 + $0x270] sm:$0xff]
  %v6669 = vld [vmem:[#allocation2 + $0x278] sm:$0xff]
  %v6670 = vld [vmem:[#allocation2 + $0x288] sm:$0xff]
  %v6671 = vld [vmem:[#allocation2 + $0x290] sm:$0xff]
  %v6672 = vld [vmem:[#allocation2 + $0x2a0] sm:$0xff]
  %v6673 = vld [vmem:[#allocation2 + $0x2a8] sm:$0xff]
  %v6674 = vld [vmem:[#allocation2 + $0x2b8] sm:$0xff]
  %v6675 = vld [vmem:[#allocation2 + $0x2c0] sm:$0xff]
  %v6676 = vld [vmem:[#allocation2 + $0x2d0] sm:$0xff]
  %v6677 = vld [vmem:[#allocation2 + $0x2d8] sm:$0xff]
  %v6678 = vld [vmem:[#allocation2 + $0x2e8] sm:$0xff]
  %v6679 = vld [vmem:[#allocation2 + $0x2f0] sm:$0xff]
  %v6680 = vld [vmem:[#allocation2 + $0x300] sm:$0xff]
  %v6681 = vld [vmem:[#allocation2 + $0x308] sm:$0xff]
  %v6682 = vld [vmem:[#allocation2 + $0x318] sm:$0xff]
  %v6683 = vld [vmem:[#allocation2 + $0x320] sm:$0xff]
  %v6684 = vpack.c.bf16 %v6621, %v6620
  %v6685 = vpack.c.bf16 %v6623, %v6622
  %v6686 = vpack.c.bf16 %v6625, %v6624
  %v6687 = vpack.c.bf16 %v6627, %v6626
  %v6688 = vpack.c.bf16 %v6629, %v6628
  %v6689 = vpack.c.bf16 %v6631, %v6630
  %v6690 = vpack.c.bf16 %v6633, %v6632
  %v6691 = vpack.c.bf16 %v6635, %v6634
  %v6692 = vpack.c.bf16 %v6637, %v6636
  %v6693 = vpack.c.bf16 %v6639, %v6638
  %v6694 = vpack.c.bf16 %v6641, %v6640
  %v6695 = vpack.c.bf16 %v6643, %v6642
  %v6696 = vpack.c.bf16 %v6645, %v6644
  %v6697 = vpack.c.bf16 %v6647, %v6646
  %v6698 = vpack.c.bf16 %v6649, %v6648
  %v6699 = vpack.c.bf16 %v6651, %v6650
  %v6700 = vpack.c.bf16 %v6653, %v6652
  %v6701 = vpack.c.bf16 %v6655, %v6654
  %v6702 = vpack.c.bf16 %v6657, %v6656
  %v6703 = vpack.c.bf16 %v6659, %v6658
  %v6704 = vpack.c.bf16 %v6661, %v6660
  %v6705 = vpack.c.bf16 %v6663, %v6662
  %v6706 = vpack.c.bf16 %v6665, %v6664
  %v6707 = vpack.c.bf16 %v6667, %v6666
  %v6708 = vpack.c.bf16 %v6669, %v6668
  %v6709 = vpack.c.bf16 %v6671, %v6670
  %v6710 = vpack.c.bf16 %v6673, %v6672
  %v6711 = vpack.c.bf16 %v6675, %v6674
  %v6712 = vpack.c.bf16 %v6677, %v6676
  %v6713 = vpack.c.bf16 %v6679, %v6678
  %v6714 = vpack.c.bf16 %v6681, %v6680
  %v6715 = vpack.c.bf16 %v6683, %v6682
  %v6716 = vld [vmem:[#allocation2 + $0x1] sm:$0xff]
  %v6717 = vld [vmem:[#allocation2 + $0x9] sm:$0xff]
  %v6718 = vld [vmem:[#allocation2 + $0x19] sm:$0xff]
  %v6719 = vld [vmem:[#allocation2 + $0x21] sm:$0xff]
  %v6720 = vld [vmem:[#allocation2 + $0x31] sm:$0xff]
  %v6721 = vld [vmem:[#allocation2 + $0x39] sm:$0xff]
  %v6722 = vld [vmem:[#allocation2 + $0x49] sm:$0xff]
  %v6723 = vld [vmem:[#allocation2 + $0x51] sm:$0xff]
  %v6724 = vld [vmem:[#allocation2 + $0x61] sm:$0xff]
  %v6725 = vld [vmem:[#allocation2 + $0x69] sm:$0xff]
  %v6726 = vld [vmem:[#allocation2 + $0x79] sm:$0xff]
  %v6727 = vld [vmem:[#allocation2 + $0x81] sm:$0xff]
  %v6728 = vld [vmem:[#allocation2 + $0x91] sm:$0xff]
  %v6729 = vld [vmem:[#allocation2 + $0x99] sm:$0xff]
  %v6730 = vld [vmem:[#allocation2 + $0xa9] sm:$0xff]
  %v6731 = vld [vmem:[#allocation2 + $0xb1] sm:$0xff]
  %v6732 = vld [vmem:[#allocation2 + $0xc1] sm:$0xff]
  %v6733 = vld [vmem:[#allocation2 + $0xc9] sm:$0xff]
  %v6734 = vld [vmem:[#allocation2 + $0xd9] sm:$0xff]
  %v6735 = vld [vmem:[#allocation2 + $0xe1] sm:$0xff]
  %v6736 = vld [vmem:[#allocation2 + $0xf1] sm:$0xff]
  %v6737 = vld [vmem:[#allocation2 + $0xf9] sm:$0xff]
  %v6738 = vld [vmem:[#allocation2 + $0x109] sm:$0xff]
  %v6739 = vld [vmem:[#allocation2 + $0x111] sm:$0xff]
  %v6740 = vld [vmem:[#allocation2 + $0x121] sm:$0xff]
  %v6741 = vld [vmem:[#allocation2 + $0x129] sm:$0xff]
  %v6742 = vld [vmem:[#allocation2 + $0x139] sm:$0xff]
  %v6743 = vld [vmem:[#allocation2 + $0x141] sm:$0xff]
  %v6744 = vld [vmem:[#allocation2 + $0x151] sm:$0xff]
  %v6745 = vld [vmem:[#allocation2 + $0x159] sm:$0xff]
  %v6746 = vld [vmem:[#allocation2 + $0x169] sm:$0xff]
  %v6747 = vld [vmem:[#allocation2 + $0x171] sm:$0xff]
  %v6748 = vld [vmem:[#allocation2 + $0x1b1] sm:$0xff]
  %v6749 = vld [vmem:[#allocation2 + $0x1b9] sm:$0xff]
  %v6750 = vld [vmem:[#allocation2 + $0x1c9] sm:$0xff]
  %v6751 = vld [vmem:[#allocation2 + $0x1d1] sm:$0xff]
  %v6752 = vld [vmem:[#allocation2 + $0x1e1] sm:$0xff]
  %v6753 = vld [vmem:[#allocation2 + $0x1e9] sm:$0xff]
  %v6754 = vld [vmem:[#allocation2 + $0x1f9] sm:$0xff]
  %v6755 = vld [vmem:[#allocation2 + $0x201] sm:$0xff]
  %v6756 = vld [vmem:[#allocation2 + $0x211] sm:$0xff]
  %v6757 = vld [vmem:[#allocation2 + $0x219] sm:$0xff]
  %v6758 = vld [vmem:[#allocation2 + $0x229] sm:$0xff]
  %v6759 = vld [vmem:[#allocation2 + $0x231] sm:$0xff]
  %v6760 = vld [vmem:[#allocation2 + $0x241] sm:$0xff]
  %v6761 = vld [vmem:[#allocation2 + $0x249] sm:$0xff]
  %v6762 = vld [vmem:[#allocation2 + $0x259] sm:$0xff]
  %v6763 = vld [vmem:[#allocation2 + $0x261] sm:$0xff]
  %v6764 = vld [vmem:[#allocation2 + $0x271] sm:$0xff]
  %v6765 = vld [vmem:[#allocation2 + $0x279] sm:$0xff]
  %v6766 = vld [vmem:[#allocation2 + $0x289] sm:$0xff]
  %v6767 = vld [vmem:[#allocation2 + $0x291] sm:$0xff]
  %v6768 = vld [vmem:[#allocation2 + $0x2a1] sm:$0xff]
  %v6769 = vld [vmem:[#allocation2 + $0x2a9] sm:$0xff]
  %v6770 = vld [vmem:[#allocation2 + $0x2b9] sm:$0xff]
  %v6771 = vld [vmem:[#allocation2 + $0x2c1] sm:$0xff]
  %v6772 = vld [vmem:[#allocation2 + $0x2d1] sm:$0xff]
  %v6773 = vld [vmem:[#allocation2 + $0x2d9] sm:$0xff]
  %v6774 = vld [vmem:[#allocation2 + $0x2e9] sm:$0xff]
  %v6775 = vld [vmem:[#allocation2 + $0x2f1] sm:$0xff]
  %v6776 = vld [vmem:[#allocation2 + $0x301] sm:$0xff]
  %v6777 = vld [vmem:[#allocation2 + $0x309] sm:$0xff]
  %v6778 = vld [vmem:[#allocation2 + $0x319] sm:$0xff]
  %v6779 = vld [vmem:[#allocation2 + $0x321] sm:$0xff]
  %v6780 = vpack.c.bf16 %v6717, %v6716
  %v6781 = vpack.c.bf16 %v6719, %v6718
  %v6782 = vpack.c.bf16 %v6721, %v6720
  %v6783 = vpack.c.bf16 %v6723, %v6722
  %v6784 = vpack.c.bf16 %v6725, %v6724
  %v6785 = vpack.c.bf16 %v6727, %v6726
  %v6786 = vpack.c.bf16 %v6729, %v6728
  %v6787 = vpack.c.bf16 %v6731, %v6730
  %v6788 = vpack.c.bf16 %v6733, %v6732
  %v6789 = vpack.c.bf16 %v6735, %v6734
  %v6790 = vpack.c.bf16 %v6737, %v6736
  %v6791 = vpack.c.bf16 %v6739, %v6738
  %v6792 = vpack.c.bf16 %v6741, %v6740
  %v6793 = vpack.c.bf16 %v6743, %v6742
  %v6794 = vpack.c.bf16 %v6745, %v6744
  %v6795 = vpack.c.bf16 %v6747, %v6746
  %v6796 = vpack.c.bf16 %v6749, %v6748
  %v6797 = vpack.c.bf16 %v6751, %v6750
  %v6798 = vpack.c.bf16 %v6753, %v6752
  %v6799 = vpack.c.bf16 %v6755, %v6754
  %v6800 = vpack.c.bf16 %v6757, %v6756
  %v6801 = vpack.c.bf16 %v6759, %v6758
  %v6802 = vpack.c.bf16 %v6761, %v6760
  %v6803 = vpack.c.bf16 %v6763, %v6762
  %v6804 = vpack.c.bf16 %v6765, %v6764
  %v6805 = vpack.c.bf16 %v6767, %v6766
  %v6806 = vpack.c.bf16 %v6769, %v6768
  %v6807 = vpack.c.bf16 %v6771, %v6770
  %v6808 = vpack.c.bf16 %v6773, %v6772
  %v6809 = vpack.c.bf16 %v6775, %v6774
  %v6810 = vpack.c.bf16 %v6777, %v6776
  %v6811 = vpack.c.bf16 %v6779, %v6778
  %v6812 = vld [vmem:[#allocation2 + $0x2] sm:$0xff]
  %v6813 = vld [vmem:[#allocation2 + $0xa] sm:$0xff]
  %v6814 = vld [vmem:[#allocation2 + $0x1a] sm:$0xff]
  %v6815 = vld [vmem:[#allocation2 + $0x22] sm:$0xff]
  %v6816 = vld [vmem:[#allocation2 + $0x32] sm:$0xff]
  %v6817 = vld [vmem:[#allocation2 + $0x3a] sm:$0xff]
  %v6818 = vld [vmem:[#allocation2 + $0x4a] sm:$0xff]
  %v6819 = vld [vmem:[#allocation2 + $0x52] sm:$0xff]
  %v6820 = vld [vmem:[#allocation2 + $0x62] sm:$0xff]
  %v6821 = vld [vmem:[#allocation2 + $0x6a] sm:$0xff]
  %v6822 = vld [vmem:[#allocation2 + $0x7a] sm:$0xff]
  %v6823 = vld [vmem:[#allocation2 + $0x82] sm:$0xff]
  %v6824 = vld [vmem:[#allocation2 + $0x92] sm:$0xff]
  %v6825 = vld [vmem:[#allocation2 + $0x9a] sm:$0xff]
  %v6826 = vld [vmem:[#allocation2 + $0xaa] sm:$0xff]
  %v6827 = vld [vmem:[#allocation2 + $0xb2] sm:$0xff]
  %v6828 = vld [vmem:[#allocation2 + $0xc2] sm:$0xff]
  %v6829 = vld [vmem:[#allocation2 + $0xca] sm:$0xff]
  %v6830 = vld [vmem:[#allocation2 + $0xda] sm:$0xff]
  %v6831 = vld [vmem:[#allocation2 + $0xe2] sm:$0xff]
  %v6832 = vld [vmem:[#allocation2 + $0xf2] sm:$0xff]
  %v6833 = vld [vmem:[#allocation2 + $0xfa] sm:$0xff]
  %v6834 = vld [vmem:[#allocation2 + $0x10a] sm:$0xff]
  %v6835 = vld [vmem:[#allocation2 + $0x112] sm:$0xff]
  %v6836 = vld [vmem:[#allocation2 + $0x122] sm:$0xff]
  %v6837 = vld [vmem:[#allocation2 + $0x12a] sm:$0xff]
  %v6838 = vld [vmem:[#allocation2 + $0x13a] sm:$0xff]
  %v6839 = vld [vmem:[#allocation2 + $0x142] sm:$0xff]
  %v6840 = vld [vmem:[#allocation2 + $0x152] sm:$0xff]
  %v6841 = vld [vmem:[#allocation2 + $0x15a] sm:$0xff]
  %v6842 = vld [vmem:[#allocation2 + $0x16a] sm:$0xff]
  %v6843 = vld [vmem:[#allocation2 + $0x172] sm:$0xff]
  %v6844 = vld [vmem:[#allocation2 + $0x1b2] sm:$0xff]
  %v6845 = vld [vmem:[#allocation2 + $0x1ba] sm:$0xff]
  %v6846 = vld [vmem:[#allocation2 + $0x1ca] sm:$0xff]
  %v6847 = vld [vmem:[#allocation2 + $0x1d2] sm:$0xff]
  %v6848 = vld [vmem:[#allocation2 + $0x1e2] sm:$0xff]
  %v6849 = vld [vmem:[#allocation2 + $0x1ea] sm:$0xff]
  %v6850 = vld [vmem:[#allocation2 + $0x1fa] sm:$0xff]
  %v6851 = vld [vmem:[#allocation2 + $0x202] sm:$0xff]
  %v6852 = vld [vmem:[#allocation2 + $0x212] sm:$0xff]
  %v6853 = vld [vmem:[#allocation2 + $0x21a] sm:$0xff]
  %v6854 = vld [vmem:[#allocation2 + $0x22a] sm:$0xff]
  %v6855 = vld [vmem:[#allocation2 + $0x232] sm:$0xff]
  %v6856 = vld [vmem:[#allocation2 + $0x242] sm:$0xff]
  %v6857 = vld [vmem:[#allocation2 + $0x24a] sm:$0xff]
  %v6858 = vld [vmem:[#allocation2 + $0x25a] sm:$0xff]
  %v6859 = vld [vmem:[#allocation2 + $0x262] sm:$0xff]
  %v6860 = vld [vmem:[#allocation2 + $0x272] sm:$0xff]
  %v6861 = vld [vmem:[#allocation2 + $0x27a] sm:$0xff]
  %v6862 = vld [vmem:[#allocation2 + $0x28a] sm:$0xff]
  %v6863 = vld [vmem:[#allocation2 + $0x292] sm:$0xff]
  %v6864 = vld [vmem:[#allocation2 + $0x2a2] sm:$0xff]
  %v6865 = vld [vmem:[#allocation2 + $0x2aa] sm:$0xff]
  %v6866 = vld [vmem:[#allocation2 + $0x2ba] sm:$0xff]
  %v6867 = vld [vmem:[#allocation2 + $0x2c2] sm:$0xff]
  %v6868 = vld [vmem:[#allocation2 + $0x2d2] sm:$0xff]
  %v6869 = vld [vmem:[#allocation2 + $0x2da] sm:$0xff]
  %v6870 = vld [vmem:[#allocation2 + $0x2ea] sm:$0xff]
  %v6871 = vld [vmem:[#allocation2 + $0x2f2] sm:$0xff]
  %v6872 = vld [vmem:[#allocation2 + $0x302] sm:$0xff]
  %v6873 = vld [vmem:[#allocation2 + $0x30a] sm:$0xff]
  %v6874 = vld [vmem:[#allocation2 + $0x31a] sm:$0xff]
  %v6875 = vld [vmem:[#allocation2 + $0x322] sm:$0xff]
  %v6876 = vpack.c.bf16 %v6813, %v6812
  %v6877 = vpack.c.bf16 %v6815, %v6814
  %v6878 = vpack.c.bf16 %v6817, %v6816
  %v6879 = vpack.c.bf16 %v6819, %v6818
  %v6880 = vpack.c.bf16 %v6821, %v6820
  %v6881 = vpack.c.bf16 %v6823, %v6822
  %v6882 = vpack.c.bf16 %v6825, %v6824
  %v6883 = vpack.c.bf16 %v6827, %v6826
  %v6884 = vpack.c.bf16 %v6829, %v6828
  %v6885 = vpack.c.bf16 %v6831, %v6830
  %v6886 = vpack.c.bf16 %v6833, %v6832
  %v6887 = vpack.c.bf16 %v6835, %v6834
  %v6888 = vpack.c.bf16 %v6837, %v6836
  %v6889 = vpack.c.bf16 %v6839, %v6838
  %v6890 = vpack.c.bf16 %v6841, %v6840
  %v6891 = vpack.c.bf16 %v6843, %v6842
  %v6892 = vpack.c.bf16 %v6845, %v6844
  %v6893 = vpack.c.bf16 %v6847, %v6846
  %v6894 = vpack.c.bf16 %v6849, %v6848
  %v6895 = vpack.c.bf16 %v6851, %v6850
  %v6896 = vpack.c.bf16 %v6853, %v6852
  %v6897 = vpack.c.bf16 %v6855, %v6854
  %v6898 = vpack.c.bf16 %v6857, %v6856
  %v6899 = vpack.c.bf16 %v6859, %v6858
  %v6900 = vpack.c.bf16 %v6861, %v6860
  %v6901 = vpack.c.bf16 %v6863, %v6862
  %v6902 = vpack.c.bf16 %v6865, %v6864
  %v6903 = vpack.c.bf16 %v6867, %v6866
  %v6904 = vpack.c.bf16 %v6869, %v6868
  %v6905 = vpack.c.bf16 %v6871, %v6870
  %v6906 = vpack.c.bf16 %v6873, %v6872
  %v6907 = vpack.c.bf16 %v6875, %v6874
  %v6908 = vld [vmem:[%s5] sm:$0xf]
  %v6909 = vld [vmem:[%s5 + $0x4] sm:$0xf]
  %v6910 = vld [vmem:[%s5 + $0x8] sm:$0xf]
  %v6911 = vld [vmem:[%s5 + $0xc] sm:$0xf]
  %v6912 = vld [vmem:[%s5 + $0x10] sm:$0xf]
  %v6913 = vld [vmem:[%s5 + $0x14] sm:$0xf]
  %v6914 = vld [vmem:[%s5 + $0x18] sm:$0xf]
  %v6915 = vld [vmem:[%s5 + $0x1c] sm:$0xf]
  %v6916 = vld [vmem:[%s5 + $0x20] sm:$0xf]
  %v6917 = vld [vmem:[%s5 + $0x24] sm:$0xf]
  %v6918 = vld [vmem:[%s5 + $0x28] sm:$0xf]
  %v6919 = vld [vmem:[%s5 + $0x2c] sm:$0xf]
  %v6920 = vld [vmem:[%s5 + $0x30] sm:$0xf]
  %v6921 = vld [vmem:[%s5 + $0x34] sm:$0xf]
  %v6922 = vld [vmem:[%s5 + $0x38] sm:$0xf]
  %v6923 = vld [vmem:[%s5 + $0x3c] sm:$0xf]
  %v6924 = vld [vmem:[%s5 + $0x40] sm:$0xf]
  %v6925 = vld [vmem:[%s5 + $0x44] sm:$0xf]
  %v6926 = vld [vmem:[%s5 + $0x48] sm:$0xf]
  %v6927 = vld [vmem:[%s5 + $0x4c] sm:$0xf]
  %v6928 = vld [vmem:[%s5 + $0x50] sm:$0xf]
  %v6929 = vld [vmem:[%s5 + $0x54] sm:$0xf]
  %v6930 = vld [vmem:[%s5 + $0x58] sm:$0xf]
  %v6931 = vld [vmem:[%s5 + $0x5c] sm:$0xf]
  %v6932 = vld [vmem:[%s5 + $0x60] sm:$0xf]
  %v6933 = vld [vmem:[%s5 + $0x64] sm:$0xf]
  %v6934 = vld [vmem:[%s5 + $0x68] sm:$0xf]
  %v6935 = vld [vmem:[%s5 + $0x6c] sm:$0xf]
  %v6936 = vld [vmem:[%s5 + $0x70] sm:$0xf]
  %v6937 = vld [vmem:[%s5 + $0x74] sm:$0xf]
  %v6938 = vld [vmem:[%s5 + $0x78] sm:$0xf]
  %v6939 = vld [vmem:[%s5 + $0x7c] sm:$0xf]
  %v6940 = vld [vmem:[%s5 + $0x80] sm:$0xf]
  %v6941 = vld [vmem:[%s5 + $0x84] sm:$0xf]
  %v6942 = vld [vmem:[%s5 + $0x88] sm:$0xf]
  %v6943 = vld [vmem:[%s5 + $0x8c] sm:$0xf]
  %v6944 = vld [vmem:[%s5 + $0x90] sm:$0xf]
  %v6945 = vld [vmem:[%s5 + $0x94] sm:$0xf]
  %v6946 = vld [vmem:[%s5 + $0x98] sm:$0xf]
  %v6947 = vld [vmem:[%s5 + $0x9c] sm:$0xf]
  %v6948 = vld [vmem:[%s5 + $0xa0] sm:$0xf]
  %v6949 = vld [vmem:[%s5 + $0xa4] sm:$0xf]
  %v6950 = vld [vmem:[%s5 + $0xa8] sm:$0xf]
  %v6951 = vld [vmem:[%s5 + $0xac] sm:$0xf]
  %v6952 = vld [vmem:[%s5 + $0xb0] sm:$0xf]
  %v6953 = vld [vmem:[%s5 + $0xb4] sm:$0xf]
  %v6954 = vld [vmem:[%s5 + $0xb8] sm:$0xf]
  %v6955 = vld [vmem:[%s5 + $0xbc] sm:$0xf]
  %s6956 = scalar_lea.vmem [#allocation2], 24
  %v6957 = vld [vmem:[%s6956] sm:$0xff]
  %v6958 = vld [vmem:[%s6956 + $0x8] sm:$0xff]
  %v6959 = vld [vmem:[%s6956 + $0x18] sm:$0xff]
  %v6960 = vld [vmem:[%s6956 + $0x20] sm:$0xff]
  %v6961 = vld [vmem:[%s6956 + $0x30] sm:$0xff]
  %v6962 = vld [vmem:[%s6956 + $0x38] sm:$0xff]
  %v6963 = vld [vmem:[%s6956 + $0x48] sm:$0xff]
  %v6964 = vld [vmem:[%s6956 + $0x50] sm:$0xff]
  %v6965 = vld [vmem:[%s6956 + $0x60] sm:$0xff]
  %v6966 = vld [vmem:[%s6956 + $0x68] sm:$0xff]
  %v6967 = vld [vmem:[%s6956 + $0x78] sm:$0xff]
  %v6968 = vld [vmem:[%s6956 + $0x80] sm:$0xff]
  %v6969 = vld [vmem:[%s6956 + $0x90] sm:$0xff]
  %v6970 = vld [vmem:[%s6956 + $0x98] sm:$0xff]
  %v6971 = vld [vmem:[%s6956 + $0xa8] sm:$0xff]
  %v6972 = vld [vmem:[%s6956 + $0xb0] sm:$0xff]
  %v6973 = vld [vmem:[%s6956 + $0xc0] sm:$0xff]
  %v6974 = vld [vmem:[%s6956 + $0xc8] sm:$0xff]
  %v6975 = vld [vmem:[%s6956 + $0xd8] sm:$0xff]
  %v6976 = vld [vmem:[%s6956 + $0xe0] sm:$0xff]
  %v6977 = vld [vmem:[%s6956 + $0xf0] sm:$0xff]
  %v6978 = vld [vmem:[%s6956 + $0xf8] sm:$0xff]
  %v6979 = vld [vmem:[%s6956 + $0x108] sm:$0xff]
  %v6980 = vld [vmem:[%s6956 + $0x110] sm:$0xff]
  %v6981 = vld [vmem:[%s6956 + $0x120] sm:$0xff]
  %v6982 = vld [vmem:[%s6956 + $0x128] sm:$0xff]
  %v6983 = vld [vmem:[%s6956 + $0x138] sm:$0xff]
  %v6984 = vld [vmem:[%s6956 + $0x140] sm:$0xff]
  %v6985 = vld [vmem:[%s6956 + $0x150] sm:$0xff]
  %v6986 = vld [vmem:[%s6956 + $0x158] sm:$0xff]
  %v6987 = vld [vmem:[%s6956 + $0x168] sm:$0xff]
  %v6988 = vld [vmem:[%s6956 + $0x170] sm:$0xff]
  %v6989 = vld [vmem:[%s6956 + $0x1b0] sm:$0xff]
  %v6990 = vld [vmem:[%s6956 + $0x1b8] sm:$0xff]
  %v6991 = vld [vmem:[%s6956 + $0x1c8] sm:$0xff]
  %v6992 = vld [vmem:[%s6956 + $0x1d0] sm:$0xff]
  %v6993 = vld [vmem:[%s6956 + $0x1e0] sm:$0xff]
  %v6994 = vld [vmem:[%s6956 + $0x1e8] sm:$0xff]
  %v6995 = vld [vmem:[%s6956 + $0x1f8] sm:$0xff]
  %v6996 = vld [vmem:[%s6956 + $0x200] sm:$0xff]
  %v6997 = vld [vmem:[%s6956 + $0x210] sm:$0xff]
  %v6998 = vld [vmem:[%s6956 + $0x218] sm:$0xff]
  %v6999 = vld [vmem:[%s6956 + $0x228] sm:$0xff]
  %v7000 = vld [vmem:[%s6956 + $0x230] sm:$0xff]
  %v7001 = vld [vmem:[%s6956 + $0x240] sm:$0xff]
  %v7002 = vld [vmem:[%s6956 + $0x248] sm:$0xff]
  %v7003 = vld [vmem:[%s6956 + $0x258] sm:$0xff]
  %v7004 = vld [vmem:[%s6956 + $0x260] sm:$0xff]
  %v7005 = vld [vmem:[%s6956 + $0x270] sm:$0xff]
  %v7006 = vld [vmem:[%s6956 + $0x278] sm:$0xff]
  %v7007 = vld [vmem:[%s6956 + $0x288] sm:$0xff]
  %v7008 = vld [vmem:[%s6956 + $0x290] sm:$0xff]
  %v7009 = vld [vmem:[%s6956 + $0x2a0] sm:$0xff]
  %v7010 = vld [vmem:[%s6956 + $0x2a8] sm:$0xff]
  %v7011 = vld [vmem:[%s6956 + $0x2b8] sm:$0xff]
  %v7012 = vld [vmem:[%s6956 + $0x2c0] sm:$0xff]
  %v7013 = vld [vmem:[%s6956 + $0x2d0] sm:$0xff]
  %v7014 = vld [vmem:[%s6956 + $0x2d8] sm:$0xff]
  %v7015 = vld [vmem:[%s6956 + $0x2e8] sm:$0xff]
  %v7016 = vld [vmem:[%s6956 + $0x2f0] sm:$0xff]
  %v7017 = vld [vmem:[%s6956 + $0x300] sm:$0xff]
  %v7018 = vld [vmem:[%s6956 + $0x308] sm:$0xff]
  %v7019 = vld [vmem:[%s6956 + $0x318] sm:$0xff]
  %v7020 = vld [vmem:[%s6956 + $0x320] sm:$0xff]
  %v7021 = vpack.c.bf16 %v6958, %v6957
  %v7022 = vpack.c.bf16 %v6960, %v6959
  %v7023 = vpack.c.bf16 %v6962, %v6961
  %v7024 = vpack.c.bf16 %v6964, %v6963
  %v7025 = vpack.c.bf16 %v6966, %v6965
  %v7026 = vpack.c.bf16 %v6968, %v6967
  %v7027 = vpack.c.bf16 %v6970, %v6969
  %v7028 = vpack.c.bf16 %v6972, %v6971
  %v7029 = vpack.c.bf16 %v6974, %v6973
  %v7030 = vpack.c.bf16 %v6976, %v6975
  %v7031 = vpack.c.bf16 %v6978, %v6977
  %v7032 = vpack.c.bf16 %v6980, %v6979
  %v7033 = vpack.c.bf16 %v6982, %v6981
  %v7034 = vpack.c.bf16 %v6984, %v6983
  %v7035 = vpack.c.bf16 %v6986, %v6985
  %v7036 = vpack.c.bf16 %v6988, %v6987
  %v7037 = vpack.c.bf16 %v6990, %v6989
  %v7038 = vpack.c.bf16 %v6992, %v6991
  %v7039 = vpack.c.bf16 %v6994, %v6993
  %v7040 = vpack.c.bf16 %v6996, %v6995
  %v7041 = vpack.c.bf16 %v6998, %v6997
  %v7042 = vpack.c.bf16 %v7000, %v6999
  %v7043 = vpack.c.bf16 %v7002, %v7001
  %v7044 = vpack.c.bf16 %v7004, %v7003
  %v7045 = vpack.c.bf16 %v7006, %v7005
  %v7046 = vpack.c.bf16 %v7008, %v7007
  %v7047 = vpack.c.bf16 %v7010, %v7009
  %v7048 = vpack.c.bf16 %v7012, %v7011
  %v7049 = vpack.c.bf16 %v7014, %v7013
  %v7050 = vpack.c.bf16 %v7016, %v7015
  %v7051 = vpack.c.bf16 %v7018, %v7017
  %v7052 = vpack.c.bf16 %v7020, %v7019
  %v7053 = vld [vmem:[%s6956 + $0x1] sm:$0xff]
  %v7054 = vld [vmem:[%s6956 + $0x9] sm:$0xff]
  %v7055 = vld [vmem:[%s6956 + $0x19] sm:$0xff]
  %v7056 = vld [vmem:[%s6956 + $0x21] sm:$0xff]
  %v7057 = vld [vmem:[%s6956 + $0x31] sm:$0xff]
  %v7058 = vld [vmem:[%s6956 + $0x39] sm:$0xff]
  %v7059 = vld [vmem:[%s6956 + $0x49] sm:$0xff]
  %v7060 = vld [vmem:[%s6956 + $0x51] sm:$0xff]
  %v7061 = vld [vmem:[%s6956 + $0x61] sm:$0xff]
  %v7062 = vld [vmem:[%s6956 + $0x69] sm:$0xff]
  %v7063 = vld [vmem:[%s6956 + $0x79] sm:$0xff]
  %v7064 = vld [vmem:[%s6956 + $0x81] sm:$0xff]
  %v7065 = vld [vmem:[%s6956 + $0x91] sm:$0xff]
  %v7066 = vld [vmem:[%s6956 + $0x99] sm:$0xff]
  %v7067 = vld [vmem:[%s6956 + $0xa9] sm:$0xff]
  %v7068 = vld [vmem:[%s6956 + $0xb1] sm:$0xff]
  %v7069 = vld [vmem:[%s6956 + $0xc1] sm:$0xff]
  %v7070 = vld [vmem:[%s6956 + $0xc9] sm:$0xff]
  %v7071 = vld [vmem:[%s6956 + $0xd9] sm:$0xff]
  %v7072 = vld [vmem:[%s6956 + $0xe1] sm:$0xff]
  %v7073 = vld [vmem:[%s6956 + $0xf1] sm:$0xff]
  %v7074 = vld [vmem:[%s6956 + $0xf9] sm:$0xff]
  %v7075 = vld [vmem:[%s6956 + $0x109] sm:$0xff]
  %v7076 = vld [vmem:[%s6956 + $0x111] sm:$0xff]
  %v7077 = vld [vmem:[%s6956 + $0x121] sm:$0xff]
  %v7078 = vld [vmem:[%s6956 + $0x129] sm:$0xff]
  %v7079 = vld [vmem:[%s6956 + $0x139] sm:$0xff]
  %v7080 = vld [vmem:[%s6956 + $0x141] sm:$0xff]
  %v7081 = vld [vmem:[%s6956 + $0x151] sm:$0xff]
  %v7082 = vld [vmem:[%s6956 + $0x159] sm:$0xff]
  %v7083 = vld [vmem:[%s6956 + $0x169] sm:$0xff]
  %v7084 = vld [vmem:[%s6956 + $0x171] sm:$0xff]
  %v7085 = vld [vmem:[%s6956 + $0x1b1] sm:$0xff]
  %v7086 = vld [vmem:[%s6956 + $0x1b9] sm:$0xff]
  %v7087 = vld [vmem:[%s6956 + $0x1c9] sm:$0xff]
  %v7088 = vld [vmem:[%s6956 + $0x1d1] sm:$0xff]
  %v7089 = vld [vmem:[%s6956 + $0x1e1] sm:$0xff]
  %v7090 = vld [vmem:[%s6956 + $0x1e9] sm:$0xff]
  %v7091 = vld [vmem:[%s6956 + $0x1f9] sm:$0xff]
  %v7092 = vld [vmem:[%s6956 + $0x201] sm:$0xff]
  %v7093 = vld [vmem:[%s6956 + $0x211] sm:$0xff]
  %v7094 = vld [vmem:[%s6956 + $0x219] sm:$0xff]
  %v7095 = vld [vmem:[%s6956 + $0x229] sm:$0xff]
  %v7096 = vld [vmem:[%s6956 + $0x231] sm:$0xff]
  %v7097 = vld [vmem:[%s6956 + $0x241] sm:$0xff]
  %v7098 = vld [vmem:[%s6956 + $0x249] sm:$0xff]
  %v7099 = vld [vmem:[%s6956 + $0x259] sm:$0xff]
  %v7100 = vld [vmem:[%s6956 + $0x261] sm:$0xff]
  %v7101 = vld [vmem:[%s6956 + $0x271] sm:$0xff]
  %v7102 = vld [vmem:[%s6956 + $0x279] sm:$0xff]
  %v7103 = vld [vmem:[%s6956 + $0x289] sm:$0xff]
  %v7104 = vld [vmem:[%s6956 + $0x291] sm:$0xff]
  %v7105 = vld [vmem:[%s6956 + $0x2a1] sm:$0xff]
  %v7106 = vld [vmem:[%s6956 + $0x2a9] sm:$0xff]
  %v7107 = vld [vmem:[%s6956 + $0x2b9] sm:$0xff]
  %v7108 = vld [vmem:[%s6956 + $0x2c1] sm:$0xff]
  %v7109 = vld [vmem:[%s6956 + $0x2d1] sm:$0xff]
  %v7110 = vld [vmem:[%s6956 + $0x2d9] sm:$0xff]
  %v7111 = vld [vmem:[%s6956 + $0x2e9] sm:$0xff]
  %v7112 = vld [vmem:[%s6956 + $0x2f1] sm:$0xff]
  %v7113 = vld [vmem:[%s6956 + $0x301] sm:$0xff]
  %v7114 = vld [vmem:[%s6956 + $0x309] sm:$0xff]
  %v7115 = vld [vmem:[%s6956 + $0x319] sm:$0xff]
  %v7116 = vld [vmem:[%s6956 + $0x321] sm:$0xff]
  %v7117 = vpack.c.bf16 %v7054, %v7053
  %v7118 = vpack.c.bf16 %v7056, %v7055
  %v7119 = vpack.c.bf16 %v7058, %v7057
  %v7120 = vpack.c.bf16 %v7060, %v7059
  %v7121 = vpack.c.bf16 %v7062, %v7061
  %v7122 = vpack.c.bf16 %v7064, %v7063
  %v7123 = vpack.c.bf16 %v7066, %v7065
  %v7124 = vpack.c.bf16 %v7068, %v7067
  %v7125 = vpack.c.bf16 %v7070, %v7069
  %v7126 = vpack.c.bf16 %v7072, %v7071
  %v7127 = vpack.c.bf16 %v7074, %v7073
  %v7128 = vpack.c.bf16 %v7076, %v7075
  %v7129 = vpack.c.bf16 %v7078, %v7077
  %v7130 = vpack.c.bf16 %v7080, %v7079
  %v7131 = vpack.c.bf16 %v7082, %v7081
  %v7132 = vpack.c.bf16 %v7084, %v7083
  %v7133 = vpack.c.bf16 %v7086, %v7085
  %v7134 = vpack.c.bf16 %v7088, %v7087
  %v7135 = vpack.c.bf16 %v7090, %v7089
  %v7136 = vpack.c.bf16 %v7092, %v7091
  %v7137 = vpack.c.bf16 %v7094, %v7093
  %v7138 = vpack.c.bf16 %v7096, %v7095
  %v7139 = vpack.c.bf16 %v7098, %v7097
  %v7140 = vpack.c.bf16 %v7100, %v7099
  %v7141 = vpack.c.bf16 %v7102, %v7101
  %v7142 = vpack.c.bf16 %v7104, %v7103
  %v7143 = vpack.c.bf16 %v7106, %v7105
  %v7144 = vpack.c.bf16 %v7108, %v7107
  %v7145 = vpack.c.bf16 %v7110, %v7109
  %v7146 = vpack.c.bf16 %v7112, %v7111
  %v7147 = vpack.c.bf16 %v7114, %v7113
  %v7148 = vpack.c.bf16 %v7116, %v7115
  %v7149 = vld [vmem:[%s6956 + $0x2] sm:$0xff]
  %v7150 = vld [vmem:[%s6956 + $0xa] sm:$0xff]
  %v7151 = vld [vmem:[%s6956 + $0x1a] sm:$0xff]
  %v7152 = vld [vmem:[%s6956 + $0x22] sm:$0xff]
  %v7153 = vld [vmem:[%s6956 + $0x32] sm:$0xff]
  %v7154 = vld [vmem:[%s6956 + $0x3a] sm:$0xff]
  %v7155 = vld [vmem:[%s6956 + $0x4a] sm:$0xff]
  %v7156 = vld [vmem:[%s6956 + $0x52] sm:$0xff]
  %v7157 = vld [vmem:[%s6956 + $0x62] sm:$0xff]
  %v7158 = vld [vmem:[%s6956 + $0x6a] sm:$0xff]
  %v7159 = vld [vmem:[%s6956 + $0x7a] sm:$0xff]
  %v7160 = vld [vmem:[%s6956 + $0x82] sm:$0xff]
  %v7161 = vld [vmem:[%s6956 + $0x92] sm:$0xff]
  %v7162 = vld [vmem:[%s6956 + $0x9a] sm:$0xff]
  %v7163 = vld [vmem:[%s6956 + $0xaa] sm:$0xff]
  %v7164 = vld [vmem:[%s6956 + $0xb2] sm:$0xff]
  %v7165 = vld [vmem:[%s6956 + $0xc2] sm:$0xff]
  %v7166 = vld [vmem:[%s6956 + $0xca] sm:$0xff]
  %v7167 = vld [vmem:[%s6956 + $0xda] sm:$0xff]
  %v7168 = vld [vmem:[%s6956 + $0xe2] sm:$0xff]
  %v7169 = vld [vmem:[%s6956 + $0xf2] sm:$0xff]
  %v7170 = vld [vmem:[%s6956 + $0xfa] sm:$0xff]
  %v7171 = vld [vmem:[%s6956 + $0x10a] sm:$0xff]
  %v7172 = vld [vmem:[%s6956 + $0x112] sm:$0xff]
  %v7173 = vld [vmem:[%s6956 + $0x122] sm:$0xff]
  %v7174 = vld [vmem:[%s6956 + $0x12a] sm:$0xff]
  %v7175 = vld [vmem:[%s6956 + $0x13a] sm:$0xff]
  %v7176 = vld [vmem:[%s6956 + $0x142] sm:$0xff]
  %v7177 = vld [vmem:[%s6956 + $0x152] sm:$0xff]
  %v7178 = vld [vmem:[%s6956 + $0x15a] sm:$0xff]
  %v7179 = vld [vmem:[%s6956 + $0x16a] sm:$0xff]
  %v7180 = vld [vmem:[%s6956 + $0x172] sm:$0xff]
  %v7181 = vld [vmem:[%s6956 + $0x1b2] sm:$0xff]
  %v7182 = vld [vmem:[%s6956 + $0x1ba] sm:$0xff]
  %v7183 = vld [vmem:[%s6956 + $0x1ca] sm:$0xff]
  %v7184 = vld [vmem:[%s6956 + $0x1d2] sm:$0xff]
  %v7185 = vld [vmem:[%s6956 + $0x1e2] sm:$0xff]
  %v7186 = vld [vmem:[%s6956 + $0x1ea] sm:$0xff]
  %v7187 = vld [vmem:[%s6956 + $0x1fa] sm:$0xff]
  %v7188 = vld [vmem:[%s6956 + $0x202] sm:$0xff]
  %v7189 = vld [vmem:[%s6956 + $0x212] sm:$0xff]
  %v7190 = vld [vmem:[%s6956 + $0x21a] sm:$0xff]
  %v7191 = vld [vmem:[%s6956 + $0x22a] sm:$0xff]
  %v7192 = vld [vmem:[%s6956 + $0x232] sm:$0xff]
  %v7193 = vld [vmem:[%s6956 + $0x242] sm:$0xff]
  %v7194 = vld [vmem:[%s6956 + $0x24a] sm:$0xff]
  %v7195 = vld [vmem:[%s6956 + $0x25a] sm:$0xff]
  %v7196 = vld [vmem:[%s6956 + $0x262] sm:$0xff]
  %v7197 = vld [vmem:[%s6956 + $0x272] sm:$0xff]
  %v7198 = vld [vmem:[%s6956 + $0x27a] sm:$0xff]
  %v7199 = vld [vmem:[%s6956 + $0x28a] sm:$0xff]
  %v7200 = vld [vmem:[%s6956 + $0x292] sm:$0xff]
  %v7201 = vld [vmem:[%s6956 + $0x2a2] sm:$0xff]
  %v7202 = vld [vmem:[%s6956 + $0x2aa] sm:$0xff]
  %v7203 = vld [vmem:[%s6956 + $0x2ba] sm:$0xff]
  %v7204 = vld [vmem:[%s6956 + $0x2c2] sm:$0xff]
  %v7205 = vld [vmem:[%s6956 + $0x2d2] sm:$0xff]
  %v7206 = vld [vmem:[%s6956 + $0x2da] sm:$0xff]
  %v7207 = vld [vmem:[%s6956 + $0x2ea] sm:$0xff]
  %v7208 = vld [vmem:[%s6956 + $0x2f2] sm:$0xff]
  %v7209 = vld [vmem:[%s6956 + $0x302] sm:$0xff]
  %v7210 = vld [vmem:[%s6956 + $0x30a] sm:$0xff]
  %v7211 = vld [vmem:[%s6956 + $0x31a] sm:$0xff]
  %v7212 = vld [vmem:[%s6956 + $0x322] sm:$0xff]
  %v7213 = vpack.c.bf16 %v7150, %v7149
  %v7214 = vpack.c.bf16 %v7152, %v7151
  %v7215 = vpack.c.bf16 %v7154, %v7153
  %v7216 = vpack.c.bf16 %v7156, %v7155
  %v7217 = vpack.c.bf16 %v7158, %v7157
  %v7218 = vpack.c.bf16 %v7160, %v7159
  %v7219 = vpack.c.bf16 %v7162, %v7161
  %v7220 = vpack.c.bf16 %v7164, %v7163
  %v7221 = vpack.c.bf16 %v7166, %v7165
  %v7222 = vpack.c.bf16 %v7168, %v7167
  %v7223 = vpack.c.bf16 %v7170, %v7169
  %v7224 = vpack.c.bf16 %v7172, %v7171
  %v7225 = vpack.c.bf16 %v7174, %v7173
  %v7226 = vpack.c.bf16 %v7176, %v7175
  %v7227 = vpack.c.bf16 %v7178, %v7177
  %v7228 = vpack.c.bf16 %v7180, %v7179
  %v7229 = vpack.c.bf16 %v7182, %v7181
  %v7230 = vpack.c.bf16 %v7184, %v7183
  %v7231 = vpack.c.bf16 %v7186, %v7185
  %v7232 = vpack.c.bf16 %v7188, %v7187
  %v7233 = vpack.c.bf16 %v7190, %v7189
  %v7234 = vpack.c.bf16 %v7192, %v7191
  %v7235 = vpack.c.bf16 %v7194, %v7193
  %v7236 = vpack.c.bf16 %v7196, %v7195
  %v7237 = vpack.c.bf16 %v7198, %v7197
  %v7238 = vpack.c.bf16 %v7200, %v7199
  %v7239 = vpack.c.bf16 %v7202, %v7201
  %v7240 = vpack.c.bf16 %v7204, %v7203
  %v7241 = vpack.c.bf16 %v7206, %v7205
  %v7242 = vpack.c.bf16 %v7208, %v7207
  %v7243 = vpack.c.bf16 %v7210, %v7209
  %v7244 = vpack.c.bf16 %v7212, %v7211
  %s7245 = scalar_lea.vmem %s5, 192
  %v7246 = vld [vmem:[%s7245] sm:$0xf]
  %v7247 = vld [vmem:[%s7245 + $0x4] sm:$0xf]
  %v7248 = vld [vmem:[%s7245 + $0x8] sm:$0xf]
  %v7249 = vld [vmem:[%s7245 + $0xc] sm:$0xf]
  %v7250 = vld [vmem:[%s7245 + $0x10] sm:$0xf]
  %v7251 = vld [vmem:[%s7245 + $0x14] sm:$0xf]
  %v7252 = vld [vmem:[%s7245 + $0x18] sm:$0xf]
  %v7253 = vld [vmem:[%s7245 + $0x1c] sm:$0xf]
  %v7254 = vld [vmem:[%s7245 + $0x20] sm:$0xf]
  %v7255 = vld [vmem:[%s7245 + $0x24] sm:$0xf]
  %v7256 = vld [vmem:[%s7245 + $0x28] sm:$0xf]
  %v7257 = vld [vmem:[%s7245 + $0x2c] sm:$0xf]
  %v7258 = vld [vmem:[%s7245 + $0x30] sm:$0xf]
  %v7259 = vld [vmem:[%s7245 + $0x34] sm:$0xf]
  %v7260 = vld [vmem:[%s7245 + $0x38] sm:$0xf]
  %v7261 = vld [vmem:[%s7245 + $0x3c] sm:$0xf]
  %v7262 = vld [vmem:[%s7245 + $0x40] sm:$0xf]
  %v7263 = vld [vmem:[%s7245 + $0x44] sm:$0xf]
  %v7264 = vld [vmem:[%s7245 + $0x48] sm:$0xf]
  %v7265 = vld [vmem:[%s7245 + $0x4c] sm:$0xf]
  %v7266 = vld [vmem:[%s7245 + $0x50] sm:$0xf]
  %v7267 = vld [vmem:[%s7245 + $0x54] sm:$0xf]
  %v7268 = vld [vmem:[%s7245 + $0x58] sm:$0xf]
  %v7269 = vld [vmem:[%s7245 + $0x5c] sm:$0xf]
  %v7270 = vld [vmem:[%s7245 + $0x60] sm:$0xf]
  %v7271 = vld [vmem:[%s7245 + $0x64] sm:$0xf]
  %v7272 = vld [vmem:[%s7245 + $0x68] sm:$0xf]
  %v7273 = vld [vmem:[%s7245 + $0x6c] sm:$0xf]
  %v7274 = vld [vmem:[%s7245 + $0x70] sm:$0xf]
  %v7275 = vld [vmem:[%s7245 + $0x74] sm:$0xf]
  %v7276 = vld [vmem:[%s7245 + $0x78] sm:$0xf]
  %v7277 = vld [vmem:[%s7245 + $0x7c] sm:$0xf]
  %v7278 = vld [vmem:[%s7245 + $0x80] sm:$0xf]
  %v7279 = vld [vmem:[%s7245 + $0x84] sm:$0xf]
  %v7280 = vld [vmem:[%s7245 + $0x88] sm:$0xf]
  %v7281 = vld [vmem:[%s7245 + $0x8c] sm:$0xf]
  %v7282 = vld [vmem:[%s7245 + $0x90] sm:$0xf]
  %v7283 = vld [vmem:[%s7245 + $0x94] sm:$0xf]
  %v7284 = vld [vmem:[%s7245 + $0x98] sm:$0xf]
  %v7285 = vld [vmem:[%s7245 + $0x9c] sm:$0xf]
  %v7286 = vld [vmem:[%s7245 + $0xa0] sm:$0xf]
  %v7287 = vld [vmem:[%s7245 + $0xa4] sm:$0xf]
  %v7288 = vld [vmem:[%s7245 + $0xa8] sm:$0xf]
  %v7289 = vld [vmem:[%s7245 + $0xac] sm:$0xf]
  %v7290 = vld [vmem:[%s7245 + $0xb0] sm:$0xf]
  %v7291 = vld [vmem:[%s7245 + $0xb4] sm:$0xf]
  %v7292 = vld [vmem:[%s7245 + $0xb8] sm:$0xf]
  %v7293 = vld [vmem:[%s7245 + $0xbc] sm:$0xf]
  %v7342 = vunpack.c.l.b16 %v7246
  %v7343 = vunpack.c.l.b16 %v7247
  %v7344 = vunpack.c.l.b16 %v7248
  %v7345 = vunpack.c.l.b16 %v7249
  %v7346 = vunpack.c.l.b16 %v7250
  %v7347 = vunpack.c.l.b16 %v7251
  %v7348 = vunpack.c.l.b16 %v7252
  %v7349 = vunpack.c.l.b16 %v7253
  %v7350 = vunpack.c.l.b16 %v7254
  %v7351 = vunpack.c.l.b16 %v7255
  %v7352 = vunpack.c.l.b16 %v7256
  %v7353 = vunpack.c.l.b16 %v7257
  %v7354 = vunpack.c.l.b16 %v7258
  %v7355 = vunpack.c.l.b16 %v7259
  %v7356 = vunpack.c.l.b16 %v7260
  %v7357 = vunpack.c.l.b16 %v7261
  %v7358 = vunpack.c.l.b16 %v7262
  %v7359 = vunpack.c.l.b16 %v7263
  %v7360 = vunpack.c.l.b16 %v7264
  %v7361 = vunpack.c.l.b16 %v7265
  %v7362 = vunpack.c.l.b16 %v7266
  %v7363 = vunpack.c.l.b16 %v7267
  %v7364 = vunpack.c.l.b16 %v7268
  %v7365 = vunpack.c.l.b16 %v7269
  %v7366 = vunpack.c.l.b16 %v7270
  %v7367 = vunpack.c.l.b16 %v7271
  %v7368 = vunpack.c.l.b16 %v7272
  %v7369 = vunpack.c.l.b16 %v7273
  %v7370 = vunpack.c.l.b16 %v7274
  %v7371 = vunpack.c.l.b16 %v7275
  %v7372 = vunpack.c.l.b16 %v7276
  %v7373 = vunpack.c.l.b16 %v7277
  %v7374 = vunpack.c.l.b16 %v7278
  %v7375 = vunpack.c.l.b16 %v7279
  %v7376 = vunpack.c.l.b16 %v7280
  %v7377 = vunpack.c.l.b16 %v7281
  %v7378 = vunpack.c.l.b16 %v7282
  %v7379 = vunpack.c.l.b16 %v7283
  %v7380 = vunpack.c.l.b16 %v7284
  %v7381 = vunpack.c.l.b16 %v7285
  %v7382 = vunpack.c.l.b16 %v7286
  %v7383 = vunpack.c.l.b16 %v7287
  %v7384 = vunpack.c.l.b16 %v7288
  %v7385 = vunpack.c.l.b16 %v7289
  %v7386 = vunpack.c.l.b16 %v7290
  %v7387 = vunpack.c.l.b16 %v7291
  %v7388 = vunpack.c.l.b16 %v7292
  %v7389 = vunpack.c.l.b16 %v7293
  %v7390 = vpack.c.b16 %v7343, %v7342
  %v7391 = vpack.c.b16 %v7345, %v7344
  %v7392 = vpack.c.b16 %v7347, %v7346
  %v7393 = vpack.c.b16 %v7349, %v7348
  %v7394 = vpack.c.b16 %v7351, %v7350
  %v7395 = vpack.c.b16 %v7353, %v7352
  %v7396 = vpack.c.b16 %v7355, %v7354
  %v7397 = vpack.c.b16 %v7357, %v7356
  %v7398 = vpack.c.b16 %v7359, %v7358
  %v7399 = vpack.c.b16 %v7361, %v7360
  %v7400 = vpack.c.b16 %v7363, %v7362
  %v7401 = vpack.c.b16 %v7365, %v7364
  %v7402 = vpack.c.b16 %v7367, %v7366
  %v7403 = vpack.c.b16 %v7369, %v7368
  %v7404 = vpack.c.b16 %v7371, %v7370
  %v7405 = vpack.c.b16 %v7373, %v7372
  %v7406 = vpack.c.b16 %v7375, %v7374
  %v7407 = vpack.c.b16 %v7377, %v7376
  %v7408 = vpack.c.b16 %v7379, %v7378
  %v7409 = vpack.c.b16 %v7381, %v7380
  %v7410 = vpack.c.b16 %v7383, %v7382
  %v7411 = vpack.c.b16 %v7385, %v7384
  %v7412 = vpack.c.b16 %v7387, %v7386
  %v7413 = vpack.c.b16 %v7389, %v7388
  %7438 = vmatprep.subr.bf16.mxu0 0
  %7439 = vmatpush1.bf16.msra.mxu0 %v7397
  %7440 = vmatprep.subr.bf16.mxu0 0
  %7441 = vmatpush1.bf16.msra.mxu0 %v7396
  %7442 = vmatprep.subr.bf16.mxu0 0
  %7443 = vmatpush1.bf16.msra.mxu0 %v7395
  %7444 = vmatprep.subr.bf16.mxu0 0
  %7445 = vmatpush1.bf16.msra.mxu0 %v7394
  %7446 = vmatprep.subr.bf16.mxu0 0
  %7447 = vmatpush1.bf16.msra.mxu0 %v7393
  %7448 = vmatprep.subr.bf16.mxu0 0
  %7449 = vmatpush1.bf16.msra.mxu0 %v7392
  %7450 = vmatprep.subr.bf16.mxu0 0
  %7451 = vmatpush1.bf16.msra.mxu0 %v7391
  %7452 = vmatprep.subr.bf16.mxu0 0
  %7453 = vmatpush1.bf16.msra.mxu0 %v7390
  %7454 = vmatprep.subr.bf16.mxu0 0
  %7455 = vmatpush2.bf16.msra.mxu0 %v7405
  %7456 = vmatprep.subr.bf16.mxu0 0
  %7457 = vmatpush2.bf16.msra.mxu0 %v7404
  %7458 = vmatprep.subr.bf16.mxu0 0
  %7459 = vmatpush2.bf16.msra.mxu0 %v7403
  %7460 = vmatprep.subr.bf16.mxu0 0
  %7461 = vmatpush2.bf16.msra.mxu0 %v7402
  %7462 = vmatprep.subr.bf16.mxu0 0
  %7463 = vmatpush2.bf16.msra.mxu0 %v7401
  %7464 = vmatprep.subr.bf16.mxu0 0
  %7465 = vmatpush2.bf16.msra.mxu0 %v7400
  %7466 = vmatprep.subr.bf16.mxu0 0
  %7467 = vmatpush2.bf16.msra.mxu0 %v7399
  %7468 = vmatprep.subr.bf16.mxu0 0
  %7469 = vmatpush2.bf16.msra.mxu0 %v7398
  %7470 = vmatprep.mubr.bf16.mxu0 %v7117
  %7471 = vmatmul.mubr.bf16.gmra.mxu0 %v7021
  %v7472 = vpop.f32.mrf.mxu0
  %v7473 = vadd.f32 0.0, %v7472
  %v7474 = vpop.f32.mrf.mxu0
  %v7475 = vpop.f32.mrf.mxu0
  %v7476 = vadd.f32 0.0, %v7475
  %v7477 = vpop.f32.mrf.mxu0
  %7478 = vmatprep.mubr.bf16.mxu0 %v7118
  %7479 = vmatmul.mubr.bf16.gmra.mxu0 %v7022
  %v7480 = vpop.f32.mrf.mxu0
  %v7481 = vadd.f32 0.0, %v7480
  %v7482 = vpop.f32.mrf.mxu0
  %v7483 = vpop.f32.mrf.mxu0
  %v7484 = vadd.f32 0.0, %v7483
  %v7485 = vpop.f32.mrf.mxu0
  %7486 = vmatprep.mubr.bf16.mxu0 %v7119
  %7487 = vmatmul.mubr.bf16.gmra.mxu0 %v7023
  %v7488 = vpop.f32.mrf.mxu0
  %v7489 = vadd.f32 0.0, %v7488
  %v7490 = vpop.f32.mrf.mxu0
  %v7491 = vpop.f32.mrf.mxu0
  %v7492 = vadd.f32 0.0, %v7491
  %v7493 = vpop.f32.mrf.mxu0
  %7494 = vmatprep.mubr.bf16.mxu0 %v7120
  %7495 = vmatmul.mubr.bf16.gmra.mxu0 %v7024
  %v7496 = vpop.f32.mrf.mxu0
  %v7497 = vadd.f32 0.0, %v7496
  %v7498 = vpop.f32.mrf.mxu0
  %v7499 = vpop.f32.mrf.mxu0
  %v7500 = vadd.f32 0.0, %v7499
  %v7501 = vpop.f32.mrf.mxu0
  %7502 = vmatprep.mubr.bf16.mxu0 %v7121
  %7503 = vmatmul.mubr.bf16.gmra.mxu0 %v7025
  %v7504 = vpop.f32.mrf.mxu0
  %v7505 = vadd.f32 0.0, %v7504
  %v7506 = vpop.f32.mrf.mxu0
  %v7507 = vpop.f32.mrf.mxu0
  %v7508 = vadd.f32 0.0, %v7507
  %v7509 = vpop.f32.mrf.mxu0
  %7510 = vmatprep.mubr.bf16.mxu0 %v7122
  %7511 = vmatmul.mubr.bf16.gmra.mxu0 %v7026
  %v7512 = vpop.f32.mrf.mxu0
  %v7513 = vadd.f32 0.0, %v7512
  %v7514 = vpop.f32.mrf.mxu0
  %v7515 = vpop.f32.mrf.mxu0
  %v7516 = vadd.f32 0.0, %v7515
  %v7517 = vpop.f32.mrf.mxu0
  %7518 = vmatprep.mubr.bf16.mxu0 %v7123
  %7519 = vmatmul.mubr.bf16.gmra.mxu0 %v7027
  %v7520 = vpop.f32.mrf.mxu0
  %v7521 = vadd.f32 0.0, %v7520
  %v7522 = vpop.f32.mrf.mxu0
  %v7523 = vpop.f32.mrf.mxu0
  %v7524 = vadd.f32 0.0, %v7523
  %v7525 = vpop.f32.mrf.mxu0
  %7526 = vmatprep.mubr.bf16.mxu0 %v7124
  %7527 = vmatmul.mubr.bf16.gmra.mxu0 %v7028
  %v7528 = vpop.f32.mrf.mxu0
  %v7529 = vadd.f32 0.0, %v7528
  %v7530 = vpop.f32.mrf.mxu0
  %v7531 = vpop.f32.mrf.mxu0
  %v7532 = vadd.f32 0.0, %v7531
  %v7533 = vpop.f32.mrf.mxu0
  %7534 = vmatprep.mubr.bf16.mxu0 %v7125
  %7535 = vmatmul.mubr.bf16.gmra.mxu0 %v7029
  %v7536 = vpop.f32.mrf.mxu0
  %v7537 = vadd.f32 0.0, %v7536
  %v7538 = vpop.f32.mrf.mxu0
  %v7539 = vpop.f32.mrf.mxu0
  %v7540 = vadd.f32 0.0, %v7539
  %v7541 = vpop.f32.mrf.mxu0
  %7542 = vmatprep.mubr.bf16.mxu0 %v7126
  %7543 = vmatmul.mubr.bf16.gmra.mxu0 %v7030
  %v7544 = vpop.f32.mrf.mxu0
  %v7545 = vadd.f32 0.0, %v7544
  %v7546 = vpop.f32.mrf.mxu0
  %v7547 = vpop.f32.mrf.mxu0
  %v7548 = vadd.f32 0.0, %v7547
  %v7549 = vpop.f32.mrf.mxu0
  %7550 = vmatprep.mubr.bf16.mxu0 %v7127
  %7551 = vmatmul.mubr.bf16.gmra.mxu0 %v7031
  %v7552 = vpop.f32.mrf.mxu0
  %v7553 = vadd.f32 0.0, %v7552
  %v7554 = vpop.f32.mrf.mxu0
  %v7555 = vpop.f32.mrf.mxu0
  %v7556 = vadd.f32 0.0, %v7555
  %v7557 = vpop.f32.mrf.mxu0
  %7558 = vmatprep.mubr.bf16.mxu0 %v7128
  %7559 = vmatmul.mubr.bf16.gmra.mxu0 %v7032
  %v7560 = vpop.f32.mrf.mxu0
  %v7561 = vadd.f32 0.0, %v7560
  %v7562 = vpop.f32.mrf.mxu0
  %v7563 = vpop.f32.mrf.mxu0
  %v7564 = vadd.f32 0.0, %v7563
  %v7565 = vpop.f32.mrf.mxu0
  %7566 = vmatprep.mubr.bf16.mxu0 %v7129
  %7567 = vmatmul.mubr.bf16.gmra.mxu0 %v7033
  %v7568 = vpop.f32.mrf.mxu0
  %v7569 = vadd.f32 0.0, %v7568
  %v7570 = vpop.f32.mrf.mxu0
  %v7571 = vpop.f32.mrf.mxu0
  %v7572 = vadd.f32 0.0, %v7571
  %v7573 = vpop.f32.mrf.mxu0
  %7574 = vmatprep.mubr.bf16.mxu0 %v7130
  %7575 = vmatmul.mubr.bf16.gmra.mxu0 %v7034
  %v7576 = vpop.f32.mrf.mxu0
  %v7577 = vadd.f32 0.0, %v7576
  %v7578 = vpop.f32.mrf.mxu0
  %v7579 = vpop.f32.mrf.mxu0
  %v7580 = vadd.f32 0.0, %v7579
  %v7581 = vpop.f32.mrf.mxu0
  %7582 = vmatprep.mubr.bf16.mxu0 %v7131
  %7583 = vmatmul.mubr.bf16.gmra.mxu0 %v7035
  %v7584 = vpop.f32.mrf.mxu0
  %v7585 = vadd.f32 0.0, %v7584
  %v7586 = vpop.f32.mrf.mxu0
  %v7587 = vpop.f32.mrf.mxu0
  %v7588 = vadd.f32 0.0, %v7587
  %v7589 = vpop.f32.mrf.mxu0
  %7590 = vmatprep.mubr.bf16.mxu0 %v7132
  %7591 = vmatmul.mubr.bf16.gmra.mxu0 %v7036
  %v7592 = vpop.f32.mrf.mxu0
  %v7593 = vadd.f32 0.0, %v7592
  %v7594 = vpop.f32.mrf.mxu0
  %v7595 = vpop.f32.mrf.mxu0
  %v7596 = vadd.f32 0.0, %v7595
  %v7597 = vpop.f32.mrf.mxu0
  %7598 = vmatprep.mubr.bf16.mxu0 %v7133
  %7599 = vmatmul.mubr.bf16.gmra.mxu0 %v7037
  %v7600 = vpop.f32.mrf.mxu0
  %v7601 = vadd.f32 0.0, %v7600
  %v7602 = vpop.f32.mrf.mxu0
  %v7603 = vpop.f32.mrf.mxu0
  %v7604 = vadd.f32 0.0, %v7603
  %v7605 = vpop.f32.mrf.mxu0
  %7606 = vmatprep.mubr.bf16.mxu0 %v7134
  %7607 = vmatmul.mubr.bf16.gmra.mxu0 %v7038
  %v7608 = vpop.f32.mrf.mxu0
  %v7609 = vadd.f32 0.0, %v7608
  %v7610 = vpop.f32.mrf.mxu0
  %v7611 = vpop.f32.mrf.mxu0
  %v7612 = vadd.f32 0.0, %v7611
  %v7613 = vpop.f32.mrf.mxu0
  %7614 = vmatprep.mubr.bf16.mxu0 %v7135
  %7615 = vmatmul.mubr.bf16.gmra.mxu0 %v7039
  %v7616 = vpop.f32.mrf.mxu0
  %v7617 = vadd.f32 0.0, %v7616
  %v7618 = vpop.f32.mrf.mxu0
  %v7619 = vpop.f32.mrf.mxu0
  %v7620 = vadd.f32 0.0, %v7619
  %v7621 = vpop.f32.mrf.mxu0
  %7622 = vmatprep.mubr.bf16.mxu0 %v7136
  %7623 = vmatmul.mubr.bf16.gmra.mxu0 %v7040
  %v7624 = vpop.f32.mrf.mxu0
  %v7625 = vadd.f32 0.0, %v7624
  %v7626 = vpop.f32.mrf.mxu0
  %v7627 = vpop.f32.mrf.mxu0
  %v7628 = vadd.f32 0.0, %v7627
  %v7629 = vpop.f32.mrf.mxu0
  %7630 = vmatprep.mubr.bf16.mxu0 %v7137
  %7631 = vmatmul.mubr.bf16.gmra.mxu0 %v7041
  %v7632 = vpop.f32.mrf.mxu0
  %v7633 = vadd.f32 0.0, %v7632
  %v7634 = vpop.f32.mrf.mxu0
  %v7635 = vpop.f32.mrf.mxu0
  %v7636 = vadd.f32 0.0, %v7635
  %v7637 = vpop.f32.mrf.mxu0
  %7638 = vmatprep.mubr.bf16.mxu0 %v7138
  %7639 = vmatmul.mubr.bf16.gmra.mxu0 %v7042
  %v7640 = vpop.f32.mrf.mxu0
  %v7641 = vadd.f32 0.0, %v7640
  %v7642 = vpop.f32.mrf.mxu0
  %v7643 = vpop.f32.mrf.mxu0
  %v7644 = vadd.f32 0.0, %v7643
  %v7645 = vpop.f32.mrf.mxu0
  %7646 = vmatprep.mubr.bf16.mxu0 %v7139
  %7647 = vmatmul.mubr.bf16.gmra.mxu0 %v7043
  %v7648 = vpop.f32.mrf.mxu0
  %v7649 = vadd.f32 0.0, %v7648
  %v7650 = vpop.f32.mrf.mxu0
  %v7651 = vpop.f32.mrf.mxu0
  %v7652 = vadd.f32 0.0, %v7651
  %v7653 = vpop.f32.mrf.mxu0
  %7654 = vmatprep.mubr.bf16.mxu0 %v7140
  %7655 = vmatmul.mubr.bf16.gmra.mxu0 %v7044
  %v7656 = vpop.f32.mrf.mxu0
  %v7657 = vadd.f32 0.0, %v7656
  %v7658 = vpop.f32.mrf.mxu0
  %v7659 = vpop.f32.mrf.mxu0
  %v7660 = vadd.f32 0.0, %v7659
  %v7661 = vpop.f32.mrf.mxu0
  %7662 = vmatprep.mubr.bf16.mxu0 %v7141
  %7663 = vmatmul.mubr.bf16.gmra.mxu0 %v7045
  %v7664 = vpop.f32.mrf.mxu0
  %v7665 = vadd.f32 0.0, %v7664
  %v7666 = vpop.f32.mrf.mxu0
  %v7667 = vpop.f32.mrf.mxu0
  %v7668 = vadd.f32 0.0, %v7667
  %v7669 = vpop.f32.mrf.mxu0
  %7670 = vmatprep.mubr.bf16.mxu0 %v7142
  %7671 = vmatmul.mubr.bf16.gmra.mxu0 %v7046
  %v7672 = vpop.f32.mrf.mxu0
  %v7673 = vadd.f32 0.0, %v7672
  %v7674 = vpop.f32.mrf.mxu0
  %v7675 = vpop.f32.mrf.mxu0
  %v7676 = vadd.f32 0.0, %v7675
  %v7677 = vpop.f32.mrf.mxu0
  %7678 = vmatprep.mubr.bf16.mxu0 %v7143
  %7679 = vmatmul.mubr.bf16.gmra.mxu0 %v7047
  %v7680 = vpop.f32.mrf.mxu0
  %v7681 = vadd.f32 0.0, %v7680
  %v7682 = vpop.f32.mrf.mxu0
  %v7683 = vpop.f32.mrf.mxu0
  %v7684 = vadd.f32 0.0, %v7683
  %v7685 = vpop.f32.mrf.mxu0
  %7686 = vmatprep.mubr.bf16.mxu0 %v7144
  %7687 = vmatmul.mubr.bf16.gmra.mxu0 %v7048
  %v7688 = vpop.f32.mrf.mxu0
  %v7689 = vadd.f32 0.0, %v7688
  %v7690 = vpop.f32.mrf.mxu0
  %v7691 = vpop.f32.mrf.mxu0
  %v7692 = vadd.f32 0.0, %v7691
  %v7693 = vpop.f32.mrf.mxu0
  %7694 = vmatprep.mubr.bf16.mxu0 %v7145
  %7695 = vmatmul.mubr.bf16.gmra.mxu0 %v7049
  %v7696 = vpop.f32.mrf.mxu0
  %v7697 = vadd.f32 0.0, %v7696
  %v7698 = vpop.f32.mrf.mxu0
  %v7699 = vpop.f32.mrf.mxu0
  %v7700 = vadd.f32 0.0, %v7699
  %v7701 = vpop.f32.mrf.mxu0
  %7702 = vmatprep.mubr.bf16.mxu0 %v7146
  %7703 = vmatmul.mubr.bf16.gmra.mxu0 %v7050
  %v7704 = vpop.f32.mrf.mxu0
  %v7705 = vadd.f32 0.0, %v7704
  %v7706 = vpop.f32.mrf.mxu0
  %v7707 = vpop.f32.mrf.mxu0
  %v7708 = vadd.f32 0.0, %v7707
  %v7709 = vpop.f32.mrf.mxu0
  %7710 = vmatprep.mubr.bf16.mxu0 %v7147
  %7711 = vmatmul.mubr.bf16.gmra.mxu0 %v7051
  %v7712 = vpop.f32.mrf.mxu0
  %v7713 = vadd.f32 0.0, %v7712
  %v7714 = vpop.f32.mrf.mxu0
  %v7715 = vpop.f32.mrf.mxu0
  %v7716 = vadd.f32 0.0, %v7715
  %v7717 = vpop.f32.mrf.mxu0
  %7718 = vmatprep.mubr.bf16.mxu0 %v7148
  %7719 = vmatmul.mubr.bf16.gmra.mxu0 %v7052
  %v7720 = vpop.f32.mrf.mxu0
  %v7721 = vadd.f32 0.0, %v7720
  %v7722 = vpop.f32.mrf.mxu0
  %v7723 = vpop.f32.mrf.mxu0
  %v7724 = vadd.f32 0.0, %v7723
  %v7725 = vpop.f32.mrf.mxu0
  %7726 = vdwg.mxu0
  %7727 = vmatprep.subr.bf16.mxu0 0
  %7728 = vmatpush1.bf16.msra.mxu0 %v7413
  %7729 = vmatprep.subr.bf16.mxu0 0
  %7730 = vmatpush1.bf16.msra.mxu0 %v7412
  %7731 = vmatprep.subr.bf16.mxu0 0
  %7732 = vmatpush1.bf16.msra.mxu0 %v7411
  %7733 = vmatprep.subr.bf16.mxu0 0
  %7734 = vmatpush1.bf16.msra.mxu0 %v7410
  %7735 = vmatprep.subr.bf16.mxu0 0
  %7736 = vmatpush1.bf16.msra.mxu0 %v7409
  %7737 = vmatprep.subr.bf16.mxu0 0
  %7738 = vmatpush1.bf16.msra.mxu0 %v7408
  %7739 = vmatprep.subr.bf16.mxu0 0
  %7740 = vmatpush1.bf16.msra.mxu0 %v7407
  %7741 = vmatprep.subr.bf16.mxu0 0
  %7742 = vmatpush1.bf16.msra.mxu0 %v7406
  %7743 = vmatprep.subr.bf16.mxu0 0
  %7744 = vmatpush2.bf16.msra.mxu0 0
  %7745 = vmatprep.subr.bf16.mxu0 0
  %7746 = vmatpush2.bf16.msra.mxu0 0
  %7747 = vmatprep.subr.bf16.mxu0 0
  %7748 = vmatpush2.bf16.msra.mxu0 0
  %7749 = vmatprep.subr.bf16.mxu0 0
  %7750 = vmatpush2.bf16.msra.mxu0 0
  %7751 = vmatprep.subr.bf16.mxu0 0
  %7752 = vmatpush2.bf16.msra.mxu0 0
  %7753 = vmatprep.subr.bf16.mxu0 0
  %7754 = vmatpush2.bf16.msra.mxu0 0
  %7755 = vmatprep.subr.bf16.mxu0 0
  %7756 = vmatpush2.bf16.msra.mxu0 0
  %7757 = vmatprep.subr.bf16.mxu0 0
  %7758 = vmatpush2.bf16.msra.mxu0 0
  %7759 = vmatprep.mubr.bf16.mxu0 0
  %7760 = vmatmul.mubr.bf16.gmra.mxu0 %v7213
  %v7761 = vpop.f32.mrf.mxu0
  %v7762 = vadd.f32 %v7473, %v7761
  %v7763 = vpop.f32.mrf.mxu0
  %v7764 = vpop.f32.mrf.mxu0
  %v7765 = vadd.f32 %v7476, %v7764
  %v7766 = vpop.f32.mrf.mxu0
  %7767 = vmatprep.mubr.bf16.mxu0 0
  %7768 = vmatmul.mubr.bf16.gmra.mxu0 %v7214
  %v7769 = vpop.f32.mrf.mxu0
  %v7770 = vadd.f32 %v7481, %v7769
  %v7771 = vpop.f32.mrf.mxu0
  %v7772 = vpop.f32.mrf.mxu0
  %v7773 = vadd.f32 %v7484, %v7772
  %v7774 = vpop.f32.mrf.mxu0
  %7775 = vmatprep.mubr.bf16.mxu0 0
  %7776 = vmatmul.mubr.bf16.gmra.mxu0 %v7215
  %v7777 = vpop.f32.mrf.mxu0
  %v7778 = vadd.f32 %v7489, %v7777
  %v7779 = vpop.f32.mrf.mxu0
  %v7780 = vpop.f32.mrf.mxu0
  %v7781 = vadd.f32 %v7492, %v7780
  %v7782 = vpop.f32.mrf.mxu0
  %7783 = vmatprep.mubr.bf16.mxu0 0
  %7784 = vmatmul.mubr.bf16.gmra.mxu0 %v7216
  %v7785 = vpop.f32.mrf.mxu0
  %v7786 = vadd.f32 %v7497, %v7785
  %v7787 = vpop.f32.mrf.mxu0
  %v7788 = vpop.f32.mrf.mxu0
  %v7789 = vadd.f32 %v7500, %v7788
  %v7790 = vpop.f32.mrf.mxu0
  %7791 = vmatprep.mubr.bf16.mxu0 0
  %7792 = vmatmul.mubr.bf16.gmra.mxu0 %v7217
  %v7793 = vpop.f32.mrf.mxu0
  %v7794 = vadd.f32 %v7505, %v7793
  %v7795 = vpop.f32.mrf.mxu0
  %v7796 = vpop.f32.mrf.mxu0
  %v7797 = vadd.f32 %v7508, %v7796
  %v7798 = vpop.f32.mrf.mxu0
  %7799 = vmatprep.mubr.bf16.mxu0 0
  %7800 = vmatmul.mubr.bf16.gmra.mxu0 %v7218
  %v7801 = vpop.f32.mrf.mxu0
  %v7802 = vadd.f32 %v7513, %v7801
  %v7803 = vpop.f32.mrf.mxu0
  %v7804 = vpop.f32.mrf.mxu0
  %v7805 = vadd.f32 %v7516, %v7804
  %v7806 = vpop.f32.mrf.mxu0
  %7807 = vmatprep.mubr.bf16.mxu0 0
  %7808 = vmatmul.mubr.bf16.gmra.mxu0 %v7219
  %v7809 = vpop.f32.mrf.mxu0
  %v7810 = vadd.f32 %v7521, %v7809
  %v7811 = vpop.f32.mrf.mxu0
  %v7812 = vpop.f32.mrf.mxu0
  %v7813 = vadd.f32 %v7524, %v7812
  %v7814 = vpop.f32.mrf.mxu0
  %7815 = vmatprep.mubr.bf16.mxu0 0
  %7816 = vmatmul.mubr.bf16.gmra.mxu0 %v7220
  %v7817 = vpop.f32.mrf.mxu0
  %v7818 = vadd.f32 %v7529, %v7817
  %v7819 = vpop.f32.mrf.mxu0
  %v7820 = vpop.f32.mrf.mxu0
  %v7821 = vadd.f32 %v7532, %v7820
  %v7822 = vpop.f32.mrf.mxu0
  %7823 = vmatprep.mubr.bf16.mxu0 0
  %7824 = vmatmul.mubr.bf16.gmra.mxu0 %v7221
  %v7825 = vpop.f32.mrf.mxu0
  %v7826 = vadd.f32 %v7537, %v7825
  %v7827 = vpop.f32.mrf.mxu0
  %v7828 = vpop.f32.mrf.mxu0
  %v7829 = vadd.f32 %v7540, %v7828
  %v7830 = vpop.f32.mrf.mxu0
  %7831 = vmatprep.mubr.bf16.mxu0 0
  %7832 = vmatmul.mubr.bf16.gmra.mxu0 %v7222
  %v7833 = vpop.f32.mrf.mxu0
  %v7834 = vadd.f32 %v7545, %v7833
  %v7835 = vpop.f32.mrf.mxu0
  %v7836 = vpop.f32.mrf.mxu0
  %v7837 = vadd.f32 %v7548, %v7836
  %v7838 = vpop.f32.mrf.mxu0
  %7839 = vmatprep.mubr.bf16.mxu0 0
  %7840 = vmatmul.mubr.bf16.gmra.mxu0 %v7223
  %v7841 = vpop.f32.mrf.mxu0
  %v7842 = vadd.f32 %v7553, %v7841
  %v7843 = vpop.f32.mrf.mxu0
  %v7844 = vpop.f32.mrf.mxu0
  %v7845 = vadd.f32 %v7556, %v7844
  %v7846 = vpop.f32.mrf.mxu0
  %7847 = vmatprep.mubr.bf16.mxu0 0
  %7848 = vmatmul.mubr.bf16.gmra.mxu0 %v7224
  %v7849 = vpop.f32.mrf.mxu0
  %v7850 = vadd.f32 %v7561, %v7849
  %v7851 = vpop.f32.mrf.mxu0
  %v7852 = vpop.f32.mrf.mxu0
  %v7853 = vadd.f32 %v7564, %v7852
  %v7854 = vpop.f32.mrf.mxu0
  %7855 = vmatprep.mubr.bf16.mxu0 0
  %7856 = vmatmul.mubr.bf16.gmra.mxu0 %v7225
  %v7857 = vpop.f32.mrf.mxu0
  %v7858 = vadd.f32 %v7569, %v7857
  %v7859 = vpop.f32.mrf.mxu0
  %v7860 = vpop.f32.mrf.mxu0
  %v7861 = vadd.f32 %v7572, %v7860
  %v7862 = vpop.f32.mrf.mxu0
  %7863 = vmatprep.mubr.bf16.mxu0 0
  %7864 = vmatmul.mubr.bf16.gmra.mxu0 %v7226
  %v7865 = vpop.f32.mrf.mxu0
  %v7866 = vadd.f32 %v7577, %v7865
  %v7867 = vpop.f32.mrf.mxu0
  %v7868 = vpop.f32.mrf.mxu0
  %v7869 = vadd.f32 %v7580, %v7868
  %v7870 = vpop.f32.mrf.mxu0
  %7871 = vmatprep.mubr.bf16.mxu0 0
  %7872 = vmatmul.mubr.bf16.gmra.mxu0 %v7227
  %v7873 = vpop.f32.mrf.mxu0
  %v7874 = vadd.f32 %v7585, %v7873
  %v7875 = vpop.f32.mrf.mxu0
  %v7876 = vpop.f32.mrf.mxu0
  %v7877 = vadd.f32 %v7588, %v7876
  %v7878 = vpop.f32.mrf.mxu0
  %7879 = vmatprep.mubr.bf16.mxu0 0
  %7880 = vmatmul.mubr.bf16.gmra.mxu0 %v7228
  %v7881 = vpop.f32.mrf.mxu0
  %v7882 = vadd.f32 %v7593, %v7881
  %v7883 = vpop.f32.mrf.mxu0
  %v7884 = vpop.f32.mrf.mxu0
  %v7885 = vadd.f32 %v7596, %v7884
  %v7886 = vpop.f32.mrf.mxu0
  %7887 = vmatprep.mubr.bf16.mxu0 0
  %7888 = vmatmul.mubr.bf16.gmra.mxu0 %v7229
  %v7889 = vpop.f32.mrf.mxu0
  %v7890 = vadd.f32 %v7601, %v7889
  %v7891 = vpop.f32.mrf.mxu0
  %v7892 = vpop.f32.mrf.mxu0
  %v7893 = vadd.f32 %v7604, %v7892
  %v7894 = vpop.f32.mrf.mxu0
  %7895 = vmatprep.mubr.bf16.mxu0 0
  %7896 = vmatmul.mubr.bf16.gmra.mxu0 %v7230
  %v7897 = vpop.f32.mrf.mxu0
  %v7898 = vadd.f32 %v7609, %v7897
  %v7899 = vpop.f32.mrf.mxu0
  %v7900 = vpop.f32.mrf.mxu0
  %v7901 = vadd.f32 %v7612, %v7900
  %v7902 = vpop.f32.mrf.mxu0
  %7903 = vmatprep.mubr.bf16.mxu0 0
  %7904 = vmatmul.mubr.bf16.gmra.mxu0 %v7231
  %v7905 = vpop.f32.mrf.mxu0
  %v7906 = vadd.f32 %v7617, %v7905
  %v7907 = vpop.f32.mrf.mxu0
  %v7908 = vpop.f32.mrf.mxu0
  %v7909 = vadd.f32 %v7620, %v7908
  %v7910 = vpop.f32.mrf.mxu0
  %7911 = vmatprep.mubr.bf16.mxu0 0
  %7912 = vmatmul.mubr.bf16.gmra.mxu0 %v7232
  %v7913 = vpop.f32.mrf.mxu0
  %v7914 = vadd.f32 %v7625, %v7913
  %v7915 = vpop.f32.mrf.mxu0
  %v7916 = vpop.f32.mrf.mxu0
  %v7917 = vadd.f32 %v7628, %v7916
  %v7918 = vpop.f32.mrf.mxu0
  %7919 = vmatprep.mubr.bf16.mxu0 0
  %7920 = vmatmul.mubr.bf16.gmra.mxu0 %v7233
  %v7921 = vpop.f32.mrf.mxu0
  %v7922 = vadd.f32 %v7633, %v7921
  %v7923 = vpop.f32.mrf.mxu0
  %v7924 = vpop.f32.mrf.mxu0
  %v7925 = vadd.f32 %v7636, %v7924
  %v7926 = vpop.f32.mrf.mxu0
  %7927 = vmatprep.mubr.bf16.mxu0 0
  %7928 = vmatmul.mubr.bf16.gmra.mxu0 %v7234
  %v7929 = vpop.f32.mrf.mxu0
  %v7930 = vadd.f32 %v7641, %v7929
  %v7931 = vpop.f32.mrf.mxu0
  %v7932 = vpop.f32.mrf.mxu0
  %v7933 = vadd.f32 %v7644, %v7932
  %v7934 = vpop.f32.mrf.mxu0
  %7935 = vmatprep.mubr.bf16.mxu0 0
  %7936 = vmatmul.mubr.bf16.gmra.mxu0 %v7235
  %v7937 = vpop.f32.mrf.mxu0
  %v7938 = vadd.f32 %v7649, %v7937
  %v7939 = vpop.f32.mrf.mxu0
  %v7940 = vpop.f32.mrf.mxu0
  %v7941 = vadd.f32 %v7652, %v7940
  %v7942 = vpop.f32.mrf.mxu0
  %7943 = vmatprep.mubr.bf16.mxu0 0
  %7944 = vmatmul.mubr.bf16.gmra.mxu0 %v7236
  %v7945 = vpop.f32.mrf.mxu0
  %v7946 = vadd.f32 %v7657, %v7945
  %v7947 = vpop.f32.mrf.mxu0
  %v7948 = vpop.f32.mrf.mxu0
  %v7949 = vadd.f32 %v7660, %v7948
  %v7950 = vpop.f32.mrf.mxu0
  %7951 = vmatprep.mubr.bf16.mxu0 0
  %7952 = vmatmul.mubr.bf16.gmra.mxu0 %v7237
  %v7953 = vpop.f32.mrf.mxu0
  %v7954 = vadd.f32 %v7665, %v7953
  %v7955 = vpop.f32.mrf.mxu0
  %v7956 = vpop.f32.mrf.mxu0
  %v7957 = vadd.f32 %v7668, %v7956
  %v7958 = vpop.f32.mrf.mxu0
  %7959 = vmatprep.mubr.bf16.mxu0 0
  %7960 = vmatmul.mubr.bf16.gmra.mxu0 %v7238
  %v7961 = vpop.f32.mrf.mxu0
  %v7962 = vadd.f32 %v7673, %v7961
  %v7963 = vpop.f32.mrf.mxu0
  %v7964 = vpop.f32.mrf.mxu0
  %v7965 = vadd.f32 %v7676, %v7964
  %v7966 = vpop.f32.mrf.mxu0
  %7967 = vmatprep.mubr.bf16.mxu0 0
  %7968 = vmatmul.mubr.bf16.gmra.mxu0 %v7239
  %v7969 = vpop.f32.mrf.mxu0
  %v7970 = vadd.f32 %v7681, %v7969
  %v7971 = vpop.f32.mrf.mxu0
  %v7972 = vpop.f32.mrf.mxu0
  %v7973 = vadd.f32 %v7684, %v7972
  %v7974 = vpop.f32.mrf.mxu0
  %7975 = vmatprep.mubr.bf16.mxu0 0
  %7976 = vmatmul.mubr.bf16.gmra.mxu0 %v7240
  %v7977 = vpop.f32.mrf.mxu0
  %v7978 = vadd.f32 %v7689, %v7977
  %v7979 = vpop.f32.mrf.mxu0
  %v7980 = vpop.f32.mrf.mxu0
  %v7981 = vadd.f32 %v7692, %v7980
  %v7982 = vpop.f32.mrf.mxu0
  %7983 = vmatprep.mubr.bf16.mxu0 0
  %7984 = vmatmul.mubr.bf16.gmra.mxu0 %v7241
  %v7985 = vpop.f32.mrf.mxu0
  %v7986 = vadd.f32 %v7697, %v7985
  %v7987 = vpop.f32.mrf.mxu0
  %v7988 = vpop.f32.mrf.mxu0
  %v7989 = vadd.f32 %v7700, %v7988
  %v7990 = vpop.f32.mrf.mxu0
  %7991 = vmatprep.mubr.bf16.mxu0 0
  %7992 = vmatmul.mubr.bf16.gmra.mxu0 %v7242
  %v7993 = vpop.f32.mrf.mxu0
  %v7994 = vadd.f32 %v7705, %v7993
  %v7995 = vpop.f32.mrf.mxu0
  %v7996 = vpop.f32.mrf.mxu0
  %v7997 = vadd.f32 %v7708, %v7996
  %v7998 = vpop.f32.mrf.mxu0
  %7999 = vmatprep.mubr.bf16.mxu0 0
  %8000 = vmatmul.mubr.bf16.gmra.mxu0 %v7243
  %v8001 = vpop.f32.mrf.mxu0
  %v8002 = vadd.f32 %v7713, %v8001
  %v8003 = vpop.f32.mrf.mxu0
  %v8004 = vpop.f32.mrf.mxu0
  %v8005 = vadd.f32 %v7716, %v8004
  %v8006 = vpop.f32.mrf.mxu0
  %8007 = vmatprep.mubr.bf16.mxu0 0
  %8008 = vmatmul.mubr.bf16.gmra.mxu0 %v7244
  %v8009 = vpop.f32.mrf.mxu0
  %v8010 = vadd.f32 %v7721, %v8009
  %v8011 = vpop.f32.mrf.mxu0
  %v8012 = vpop.f32.mrf.mxu0
  %v8013 = vadd.f32 %v7724, %v8012
  %v8014 = vpop.f32.mrf.mxu0
  %8015 = vdwg.mxu0
  %v8064 = vunpack.c.l.b16 %v6908
  %v8065 = vunpack.c.l.b16 %v6909
  %v8066 = vunpack.c.l.b16 %v6910
  %v8067 = vunpack.c.l.b16 %v6911
  %v8068 = vunpack.c.l.b16 %v6912
  %v8069 = vunpack.c.l.b16 %v6913
  %v8070 = vunpack.c.l.b16 %v6914
  %v8071 = vunpack.c.l.b16 %v6915
  %v8072 = vunpack.c.l.b16 %v6916
  %v8073 = vunpack.c.l.b16 %v6917
  %v8074 = vunpack.c.l.b16 %v6918
  %v8075 = vunpack.c.l.b16 %v6919
  %v8076 = vunpack.c.l.b16 %v6920
  %v8077 = vunpack.c.l.b16 %v6921
  %v8078 = vunpack.c.l.b16 %v6922
  %v8079 = vunpack.c.l.b16 %v6923
  %v8080 = vunpack.c.l.b16 %v6924
  %v8081 = vunpack.c.l.b16 %v6925
  %v8082 = vunpack.c.l.b16 %v6926
  %v8083 = vunpack.c.l.b16 %v6927
  %v8084 = vunpack.c.l.b16 %v6928
  %v8085 = vunpack.c.l.b16 %v6929
  %v8086 = vunpack.c.l.b16 %v6930
  %v8087 = vunpack.c.l.b16 %v6931
  %v8088 = vunpack.c.l.b16 %v6932
  %v8089 = vunpack.c.l.b16 %v6933
  %v8090 = vunpack.c.l.b16 %v6934
  %v8091 = vunpack.c.l.b16 %v6935
  %v8092 = vunpack.c.l.b16 %v6936
  %v8093 = vunpack.c.l.b16 %v6937
  %v8094 = vunpack.c.l.b16 %v6938
  %v8095 = vunpack.c.l.b16 %v6939
  %v8096 = vunpack.c.l.b16 %v6940
  %v8097 = vunpack.c.l.b16 %v6941
  %v8098 = vunpack.c.l.b16 %v6942
  %v8099 = vunpack.c.l.b16 %v6943
  %v8100 = vunpack.c.l.b16 %v6944
  %v8101 = vunpack.c.l.b16 %v6945
  %v8102 = vunpack.c.l.b16 %v6946
  %v8103 = vunpack.c.l.b16 %v6947
  %v8104 = vunpack.c.l.b16 %v6948
  %v8105 = vunpack.c.l.b16 %v6949
  %v8106 = vunpack.c.l.b16 %v6950
  %v8107 = vunpack.c.l.b16 %v6951
  %v8108 = vunpack.c.l.b16 %v6952
  %v8109 = vunpack.c.l.b16 %v6953
  %v8110 = vunpack.c.l.b16 %v6954
  %v8111 = vunpack.c.l.b16 %v6955
  %v8112 = vpack.c.b16 %v8065, %v8064
  %v8113 = vpack.c.b16 %v8067, %v8066
  %v8114 = vpack.c.b16 %v8069, %v8068
  %v8115 = vpack.c.b16 %v8071, %v8070
  %v8116 = vpack.c.b16 %v8073, %v8072
  %v8117 = vpack.c.b16 %v8075, %v8074
  %v8118 = vpack.c.b16 %v8077, %v8076
  %v8119 = vpack.c.b16 %v8079, %v8078
  %v8120 = vpack.c.b16 %v8081, %v8080
  %v8121 = vpack.c.b16 %v8083, %v8082
  %v8122 = vpack.c.b16 %v8085, %v8084
  %v8123 = vpack.c.b16 %v8087, %v8086
  %v8124 = vpack.c.b16 %v8089, %v8088
  %v8125 = vpack.c.b16 %v8091, %v8090
  %v8126 = vpack.c.b16 %v8093, %v8092
  %v8127 = vpack.c.b16 %v8095, %v8094
  %v8128 = vpack.c.b16 %v8097, %v8096
  %v8129 = vpack.c.b16 %v8099, %v8098
  %v8130 = vpack.c.b16 %v8101, %v8100
  %v8131 = vpack.c.b16 %v8103, %v8102
  %v8132 = vpack.c.b16 %v8105, %v8104
  %v8133 = vpack.c.b16 %v8107, %v8106
  %v8134 = vpack.c.b16 %v8109, %v8108
  %v8135 = vpack.c.b16 %v8111, %v8110
  %8160 = vmatprep.subr.bf16.mxu0 0
  %8161 = vmatpush1.bf16.msra.mxu0 %v8119
  %8162 = vmatprep.subr.bf16.mxu0 0
  %8163 = vmatpush1.bf16.msra.mxu0 %v8118
  %8164 = vmatprep.subr.bf16.mxu0 0
  %8165 = vmatpush1.bf16.msra.mxu0 %v8117
  %8166 = vmatprep.subr.bf16.mxu0 0
  %8167 = vmatpush1.bf16.msra.mxu0 %v8116
  %8168 = vmatprep.subr.bf16.mxu0 0
  %8169 = vmatpush1.bf16.msra.mxu0 %v8115
  %8170 = vmatprep.subr.bf16.mxu0 0
  %8171 = vmatpush1.bf16.msra.mxu0 %v8114
  %8172 = vmatprep.subr.bf16.mxu0 0
  %8173 = vmatpush1.bf16.msra.mxu0 %v8113
  %8174 = vmatprep.subr.bf16.mxu0 0
  %8175 = vmatpush1.bf16.msra.mxu0 %v8112
  %8176 = vmatprep.subr.bf16.mxu0 0
  %8177 = vmatpush2.bf16.msra.mxu0 %v8127
  %8178 = vmatprep.subr.bf16.mxu0 0
  %8179 = vmatpush2.bf16.msra.mxu0 %v8126
  %8180 = vmatprep.subr.bf16.mxu0 0
  %8181 = vmatpush2.bf16.msra.mxu0 %v8125
  %8182 = vmatprep.subr.bf16.mxu0 0
  %8183 = vmatpush2.bf16.msra.mxu0 %v8124
  %8184 = vmatprep.subr.bf16.mxu0 0
  %8185 = vmatpush2.bf16.msra.mxu0 %v8123
  %8186 = vmatprep.subr.bf16.mxu0 0
  %8187 = vmatpush2.bf16.msra.mxu0 %v8122
  %8188 = vmatprep.subr.bf16.mxu0 0
  %8189 = vmatpush2.bf16.msra.mxu0 %v8121
  %8190 = vmatprep.subr.bf16.mxu0 0
  %8191 = vmatpush2.bf16.msra.mxu0 %v8120
  %8192 = vmatprep.mubr.bf16.mxu0 %v6780
  %8193 = vmatmul.mubr.bf16.gmra.mxu0 %v6684
  %v8194 = vpop.f32.mrf.mxu0
  %v8195 = vadd.f32 %v7762, %v8194
  %v8196 = vpop.f32.mrf.mxu0
  %v8197 = vpop.f32.mrf.mxu0
  %v8198 = vadd.f32 %v7765, %v8197
  %v8199 = vpop.f32.mrf.mxu0
  %8200 = vmatprep.mubr.bf16.mxu0 %v6781
  %8201 = vmatmul.mubr.bf16.gmra.mxu0 %v6685
  %v8202 = vpop.f32.mrf.mxu0
  %v8203 = vadd.f32 %v7770, %v8202
  %v8204 = vpop.f32.mrf.mxu0
  %v8205 = vpop.f32.mrf.mxu0
  %v8206 = vadd.f32 %v7773, %v8205
  %v8207 = vpop.f32.mrf.mxu0
  %8208 = vmatprep.mubr.bf16.mxu0 %v6782
  %8209 = vmatmul.mubr.bf16.gmra.mxu0 %v6686
  %v8210 = vpop.f32.mrf.mxu0
  %v8211 = vadd.f32 %v7778, %v8210
  %v8212 = vpop.f32.mrf.mxu0
  %v8213 = vpop.f32.mrf.mxu0
  %v8214 = vadd.f32 %v7781, %v8213
  %v8215 = vpop.f32.mrf.mxu0
  %8216 = vmatprep.mubr.bf16.mxu0 %v6783
  %8217 = vmatmul.mubr.bf16.gmra.mxu0 %v6687
  %v8218 = vpop.f32.mrf.mxu0
  %v8219 = vadd.f32 %v7786, %v8218
  %v8220 = vpop.f32.mrf.mxu0
  %v8221 = vpop.f32.mrf.mxu0
  %v8222 = vadd.f32 %v7789, %v8221
  %v8223 = vpop.f32.mrf.mxu0
  %8224 = vmatprep.mubr.bf16.mxu0 %v6784
  %8225 = vmatmul.mubr.bf16.gmra.mxu0 %v6688
  %v8226 = vpop.f32.mrf.mxu0
  %v8227 = vadd.f32 %v7794, %v8226
  %v8228 = vpop.f32.mrf.mxu0
  %v8229 = vpop.f32.mrf.mxu0
  %v8230 = vadd.f32 %v7797, %v8229
  %v8231 = vpop.f32.mrf.mxu0
  %8232 = vmatprep.mubr.bf16.mxu0 %v6785
  %8233 = vmatmul.mubr.bf16.gmra.mxu0 %v6689
  %v8234 = vpop.f32.mrf.mxu0
  %v8235 = vadd.f32 %v7802, %v8234
  %v8236 = vpop.f32.mrf.mxu0
  %v8237 = vpop.f32.mrf.mxu0
  %v8238 = vadd.f32 %v7805, %v8237
  %v8239 = vpop.f32.mrf.mxu0
  %8240 = vmatprep.mubr.bf16.mxu0 %v6786
  %8241 = vmatmul.mubr.bf16.gmra.mxu0 %v6690
  %v8242 = vpop.f32.mrf.mxu0
  %v8243 = vadd.f32 %v7810, %v8242
  %v8244 = vpop.f32.mrf.mxu0
  %v8245 = vpop.f32.mrf.mxu0
  %v8246 = vadd.f32 %v7813, %v8245
  %v8247 = vpop.f32.mrf.mxu0
  %8248 = vmatprep.mubr.bf16.mxu0 %v6787
  %8249 = vmatmul.mubr.bf16.gmra.mxu0 %v6691
  %v8250 = vpop.f32.mrf.mxu0
  %v8251 = vadd.f32 %v7818, %v8250
  %v8252 = vpop.f32.mrf.mxu0
  %v8253 = vpop.f32.mrf.mxu0
  %v8254 = vadd.f32 %v7821, %v8253
  %v8255 = vpop.f32.mrf.mxu0
  %8256 = vmatprep.mubr.bf16.mxu0 %v6788
  %8257 = vmatmul.mubr.bf16.gmra.mxu0 %v6692
  %v8258 = vpop.f32.mrf.mxu0
  %v8259 = vadd.f32 %v7826, %v8258
  %v8260 = vpop.f32.mrf.mxu0
  %v8261 = vpop.f32.mrf.mxu0
  %v8262 = vadd.f32 %v7829, %v8261
  %v8263 = vpop.f32.mrf.mxu0
  %8264 = vmatprep.mubr.bf16.mxu0 %v6789
  %8265 = vmatmul.mubr.bf16.gmra.mxu0 %v6693
  %v8266 = vpop.f32.mrf.mxu0
  %v8267 = vadd.f32 %v7834, %v8266
  %v8268 = vpop.f32.mrf.mxu0
  %v8269 = vpop.f32.mrf.mxu0
  %v8270 = vadd.f32 %v7837, %v8269
  %v8271 = vpop.f32.mrf.mxu0
  %8272 = vmatprep.mubr.bf16.mxu0 %v6790
  %8273 = vmatmul.mubr.bf16.gmra.mxu0 %v6694
  %v8274 = vpop.f32.mrf.mxu0
  %v8275 = vadd.f32 %v7842, %v8274
  %v8276 = vpop.f32.mrf.mxu0
  %v8277 = vpop.f32.mrf.mxu0
  %v8278 = vadd.f32 %v7845, %v8277
  %v8279 = vpop.f32.mrf.mxu0
  %8280 = vmatprep.mubr.bf16.mxu0 %v6791
  %8281 = vmatmul.mubr.bf16.gmra.mxu0 %v6695
  %v8282 = vpop.f32.mrf.mxu0
  %v8283 = vadd.f32 %v7850, %v8282
  %v8284 = vpop.f32.mrf.mxu0
  %v8285 = vpop.f32.mrf.mxu0
  %v8286 = vadd.f32 %v7853, %v8285
  %v8287 = vpop.f32.mrf.mxu0
  %8288 = vmatprep.mubr.bf16.mxu0 %v6792
  %8289 = vmatmul.mubr.bf16.gmra.mxu0 %v6696
  %v8290 = vpop.f32.mrf.mxu0
  %v8291 = vadd.f32 %v7858, %v8290
  %v8292 = vpop.f32.mrf.mxu0
  %v8293 = vpop.f32.mrf.mxu0
  %v8294 = vadd.f32 %v7861, %v8293
  %v8295 = vpop.f32.mrf.mxu0
  %8296 = vmatprep.mubr.bf16.mxu0 %v6793
  %8297 = vmatmul.mubr.bf16.gmra.mxu0 %v6697
  %v8298 = vpop.f32.mrf.mxu0
  %v8299 = vadd.f32 %v7866, %v8298
  %v8300 = vpop.f32.mrf.mxu0
  %v8301 = vpop.f32.mrf.mxu0
  %v8302 = vadd.f32 %v7869, %v8301
  %v8303 = vpop.f32.mrf.mxu0
  %8304 = vmatprep.mubr.bf16.mxu0 %v6794
  %8305 = vmatmul.mubr.bf16.gmra.mxu0 %v6698
  %v8306 = vpop.f32.mrf.mxu0
  %v8307 = vadd.f32 %v7874, %v8306
  %v8308 = vpop.f32.mrf.mxu0
  %v8309 = vpop.f32.mrf.mxu0
  %v8310 = vadd.f32 %v7877, %v8309
  %v8311 = vpop.f32.mrf.mxu0
  %8312 = vmatprep.mubr.bf16.mxu0 %v6795
  %8313 = vmatmul.mubr.bf16.gmra.mxu0 %v6699
  %v8314 = vpop.f32.mrf.mxu0
  %v8315 = vadd.f32 %v7882, %v8314
  %v8316 = vpop.f32.mrf.mxu0
  %v8317 = vpop.f32.mrf.mxu0
  %v8318 = vadd.f32 %v7885, %v8317
  %v8319 = vpop.f32.mrf.mxu0
  %8320 = vmatprep.mubr.bf16.mxu0 %v6796
  %8321 = vmatmul.mubr.bf16.gmra.mxu0 %v6700
  %v8322 = vpop.f32.mrf.mxu0
  %v8323 = vadd.f32 %v7890, %v8322
  %v8324 = vpop.f32.mrf.mxu0
  %v8325 = vpop.f32.mrf.mxu0
  %v8326 = vadd.f32 %v7893, %v8325
  %v8327 = vpop.f32.mrf.mxu0
  %8328 = vmatprep.mubr.bf16.mxu0 %v6797
  %8329 = vmatmul.mubr.bf16.gmra.mxu0 %v6701
  %v8330 = vpop.f32.mrf.mxu0
  %v8331 = vadd.f32 %v7898, %v8330
  %v8332 = vpop.f32.mrf.mxu0
  %v8333 = vpop.f32.mrf.mxu0
  %v8334 = vadd.f32 %v7901, %v8333
  %v8335 = vpop.f32.mrf.mxu0
  %8336 = vmatprep.mubr.bf16.mxu0 %v6798
  %8337 = vmatmul.mubr.bf16.gmra.mxu0 %v6702
  %v8338 = vpop.f32.mrf.mxu0
  %v8339 = vadd.f32 %v7906, %v8338
  %v8340 = vpop.f32.mrf.mxu0
  %v8341 = vpop.f32.mrf.mxu0
  %v8342 = vadd.f32 %v7909, %v8341
  %v8343 = vpop.f32.mrf.mxu0
  %8344 = vmatprep.mubr.bf16.mxu0 %v6799
  %8345 = vmatmul.mubr.bf16.gmra.mxu0 %v6703
  %v8346 = vpop.f32.mrf.mxu0
  %v8347 = vadd.f32 %v7914, %v8346
  %v8348 = vpop.f32.mrf.mxu0
  %v8349 = vpop.f32.mrf.mxu0
  %v8350 = vadd.f32 %v7917, %v8349
  %v8351 = vpop.f32.mrf.mxu0
  %8352 = vmatprep.mubr.bf16.mxu0 %v6800
  %8353 = vmatmul.mubr.bf16.gmra.mxu0 %v6704
  %v8354 = vpop.f32.mrf.mxu0
  %v8355 = vadd.f32 %v7922, %v8354
  %v8356 = vpop.f32.mrf.mxu0
  %v8357 = vpop.f32.mrf.mxu0
  %v8358 = vadd.f32 %v7925, %v8357
  %v8359 = vpop.f32.mrf.mxu0
  %8360 = vmatprep.mubr.bf16.mxu0 %v6801
  %8361 = vmatmul.mubr.bf16.gmra.mxu0 %v6705
  %v8362 = vpop.f32.mrf.mxu0
  %v8363 = vadd.f32 %v7930, %v8362
  %v8364 = vpop.f32.mrf.mxu0
  %v8365 = vpop.f32.mrf.mxu0
  %v8366 = vadd.f32 %v7933, %v8365
  %v8367 = vpop.f32.mrf.mxu0
  %8368 = vmatprep.mubr.bf16.mxu0 %v6802
  %8369 = vmatmul.mubr.bf16.gmra.mxu0 %v6706
  %v8370 = vpop.f32.mrf.mxu0
  %v8371 = vadd.f32 %v7938, %v8370
  %v8372 = vpop.f32.mrf.mxu0
  %v8373 = vpop.f32.mrf.mxu0
  %v8374 = vadd.f32 %v7941, %v8373
  %v8375 = vpop.f32.mrf.mxu0
  %8376 = vmatprep.mubr.bf16.mxu0 %v6803
  %8377 = vmatmul.mubr.bf16.gmra.mxu0 %v6707
  %v8378 = vpop.f32.mrf.mxu0
  %v8379 = vadd.f32 %v7946, %v8378
  %v8380 = vpop.f32.mrf.mxu0
  %v8381 = vpop.f32.mrf.mxu0
  %v8382 = vadd.f32 %v7949, %v8381
  %v8383 = vpop.f32.mrf.mxu0
  %8384 = vmatprep.mubr.bf16.mxu0 %v6804
  %8385 = vmatmul.mubr.bf16.gmra.mxu0 %v6708
  %v8386 = vpop.f32.mrf.mxu0
  %v8387 = vadd.f32 %v7954, %v8386
  %v8388 = vpop.f32.mrf.mxu0
  %v8389 = vpop.f32.mrf.mxu0
  %v8390 = vadd.f32 %v7957, %v8389
  %v8391 = vpop.f32.mrf.mxu0
  %8392 = vmatprep.mubr.bf16.mxu0 %v6805
  %8393 = vmatmul.mubr.bf16.gmra.mxu0 %v6709
  %v8394 = vpop.f32.mrf.mxu0
  %v8395 = vadd.f32 %v7962, %v8394
  %v8396 = vpop.f32.mrf.mxu0
  %v8397 = vpop.f32.mrf.mxu0
  %v8398 = vadd.f32 %v7965, %v8397
  %v8399 = vpop.f32.mrf.mxu0
  %8400 = vmatprep.mubr.bf16.mxu0 %v6806
  %8401 = vmatmul.mubr.bf16.gmra.mxu0 %v6710
  %v8402 = vpop.f32.mrf.mxu0
  %v8403 = vadd.f32 %v7970, %v8402
  %v8404 = vpop.f32.mrf.mxu0
  %v8405 = vpop.f32.mrf.mxu0
  %v8406 = vadd.f32 %v7973, %v8405
  %v8407 = vpop.f32.mrf.mxu0
  %8408 = vmatprep.mubr.bf16.mxu0 %v6807
  %8409 = vmatmul.mubr.bf16.gmra.mxu0 %v6711
  %v8410 = vpop.f32.mrf.mxu0
  %v8411 = vadd.f32 %v7978, %v8410
  %v8412 = vpop.f32.mrf.mxu0
  %v8413 = vpop.f32.mrf.mxu0
  %v8414 = vadd.f32 %v7981, %v8413
  %v8415 = vpop.f32.mrf.mxu0
  %8416 = vmatprep.mubr.bf16.mxu0 %v6808
  %8417 = vmatmul.mubr.bf16.gmra.mxu0 %v6712
  %v8418 = vpop.f32.mrf.mxu0
  %v8419 = vadd.f32 %v7986, %v8418
  %v8420 = vpop.f32.mrf.mxu0
  %v8421 = vpop.f32.mrf.mxu0
  %v8422 = vadd.f32 %v7989, %v8421
  %v8423 = vpop.f32.mrf.mxu0
  %8424 = vmatprep.mubr.bf16.mxu0 %v6809
  %8425 = vmatmul.mubr.bf16.gmra.mxu0 %v6713
  %v8426 = vpop.f32.mrf.mxu0
  %v8427 = vadd.f32 %v7994, %v8426
  %v8428 = vpop.f32.mrf.mxu0
  %v8429 = vpop.f32.mrf.mxu0
  %v8430 = vadd.f32 %v7997, %v8429
  %v8431 = vpop.f32.mrf.mxu0
  %8432 = vmatprep.mubr.bf16.mxu0 %v6810
  %8433 = vmatmul.mubr.bf16.gmra.mxu0 %v6714
  %v8434 = vpop.f32.mrf.mxu0
  %v8435 = vadd.f32 %v8002, %v8434
  %v8436 = vpop.f32.mrf.mxu0
  %v8437 = vpop.f32.mrf.mxu0
  %v8438 = vadd.f32 %v8005, %v8437
  %v8439 = vpop.f32.mrf.mxu0
  %8440 = vmatprep.mubr.bf16.mxu0 %v6811
  %8441 = vmatmul.mubr.bf16.gmra.mxu0 %v6715
  %v8442 = vpop.f32.mrf.mxu0
  %v8443 = vadd.f32 %v8010, %v8442
  %v8444 = vpop.f32.mrf.mxu0
  %v8445 = vpop.f32.mrf.mxu0
  %v8446 = vadd.f32 %v8013, %v8445
  %v8447 = vpop.f32.mrf.mxu0
  %8448 = vdwg.mxu0
  %8449 = vmatprep.subr.bf16.mxu0 0
  %8450 = vmatpush1.bf16.msra.mxu0 %v8135
  %8451 = vmatprep.subr.bf16.mxu0 0
  %8452 = vmatpush1.bf16.msra.mxu0 %v8134
  %8453 = vmatprep.subr.bf16.mxu0 0
  %8454 = vmatpush1.bf16.msra.mxu0 %v8133
  %8455 = vmatprep.subr.bf16.mxu0 0
  %8456 = vmatpush1.bf16.msra.mxu0 %v8132
  %8457 = vmatprep.subr.bf16.mxu0 0
  %8458 = vmatpush1.bf16.msra.mxu0 %v8131
  %8459 = vmatprep.subr.bf16.mxu0 0
  %8460 = vmatpush1.bf16.msra.mxu0 %v8130
  %8461 = vmatprep.subr.bf16.mxu0 0
  %8462 = vmatpush1.bf16.msra.mxu0 %v8129
  %8463 = vmatprep.subr.bf16.mxu0 0
  %8464 = vmatpush1.bf16.msra.mxu0 %v8128
  %8465 = vmatprep.subr.bf16.mxu0 0
  %8466 = vmatpush2.bf16.msra.mxu0 0
  %8467 = vmatprep.subr.bf16.mxu0 0
  %8468 = vmatpush2.bf16.msra.mxu0 0
  %8469 = vmatprep.subr.bf16.mxu0 0
  %8470 = vmatpush2.bf16.msra.mxu0 0
  %8471 = vmatprep.subr.bf16.mxu0 0
  %8472 = vmatpush2.bf16.msra.mxu0 0
  %8473 = vmatprep.subr.bf16.mxu0 0
  %8474 = vmatpush2.bf16.msra.mxu0 0
  %8475 = vmatprep.subr.bf16.mxu0 0
  %8476 = vmatpush2.bf16.msra.mxu0 0
  %8477 = vmatprep.subr.bf16.mxu0 0
  %8478 = vmatpush2.bf16.msra.mxu0 0
  %8479 = vmatprep.subr.bf16.mxu0 0
  %8480 = vmatpush2.bf16.msra.mxu0 0
  %8481 = vmatprep.mubr.bf16.mxu0 0
  %8482 = vmatmul.mubr.bf16.gmra.mxu0 %v6876
  %v8483 = vpop.f32.mrf.mxu0
  %v8484 = vadd.f32 %v8195, %v8483
  %v8485 = vpop.f32.mrf.mxu0
  %v8486 = vpop.f32.mrf.mxu0
  %v8487 = vadd.f32 %v8198, %v8486
  %v8488 = vpop.f32.mrf.mxu0
  %8489 = vmatprep.mubr.bf16.mxu0 0
  %8490 = vmatmul.mubr.bf16.gmra.mxu0 %v6877
  %v8491 = vpop.f32.mrf.mxu0
  %v8492 = vadd.f32 %v8203, %v8491
  %v8493 = vpop.f32.mrf.mxu0
  %v8494 = vpop.f32.mrf.mxu0
  %v8495 = vadd.f32 %v8206, %v8494
  %v8496 = vpop.f32.mrf.mxu0
  %8497 = vmatprep.mubr.bf16.mxu0 0
  %8498 = vmatmul.mubr.bf16.gmra.mxu0 %v6878
  %v8499 = vpop.f32.mrf.mxu0
  %v8500 = vadd.f32 %v8211, %v8499
  %v8501 = vpop.f32.mrf.mxu0
  %v8502 = vpop.f32.mrf.mxu0
  %v8503 = vadd.f32 %v8214, %v8502
  %v8504 = vpop.f32.mrf.mxu0
  %8505 = vmatprep.mubr.bf16.mxu0 0
  %8506 = vmatmul.mubr.bf16.gmra.mxu0 %v6879
  %v8507 = vpop.f32.mrf.mxu0
  %v8508 = vadd.f32 %v8219, %v8507
  %v8509 = vpop.f32.mrf.mxu0
  %v8510 = vpop.f32.mrf.mxu0
  %v8511 = vadd.f32 %v8222, %v8510
  %v8512 = vpop.f32.mrf.mxu0
  %8513 = vmatprep.mubr.bf16.mxu0 0
  %8514 = vmatmul.mubr.bf16.gmra.mxu0 %v6880
  %v8515 = vpop.f32.mrf.mxu0
  %v8516 = vadd.f32 %v8227, %v8515
  %v8517 = vpop.f32.mrf.mxu0
  %v8518 = vpop.f32.mrf.mxu0
  %v8519 = vadd.f32 %v8230, %v8518
  %v8520 = vpop.f32.mrf.mxu0
  %8521 = vmatprep.mubr.bf16.mxu0 0
  %8522 = vmatmul.mubr.bf16.gmra.mxu0 %v6881
  %v8523 = vpop.f32.mrf.mxu0
  %v8524 = vadd.f32 %v8235, %v8523
  %v8525 = vpop.f32.mrf.mxu0
  %v8526 = vpop.f32.mrf.mxu0
  %v8527 = vadd.f32 %v8238, %v8526
  %v8528 = vpop.f32.mrf.mxu0
  %8529 = vmatprep.mubr.bf16.mxu0 0
  %8530 = vmatmul.mubr.bf16.gmra.mxu0 %v6882
  %v8531 = vpop.f32.mrf.mxu0
  %v8532 = vadd.f32 %v8243, %v8531
  %v8533 = vpop.f32.mrf.mxu0
  %v8534 = vpop.f32.mrf.mxu0
  %v8535 = vadd.f32 %v8246, %v8534
  %v8536 = vpop.f32.mrf.mxu0
  %8537 = vmatprep.mubr.bf16.mxu0 0
  %8538 = vmatmul.mubr.bf16.gmra.mxu0 %v6883
  %v8539 = vpop.f32.mrf.mxu0
  %v8540 = vadd.f32 %v8251, %v8539
  %v8541 = vpop.f32.mrf.mxu0
  %v8542 = vpop.f32.mrf.mxu0
  %v8543 = vadd.f32 %v8254, %v8542
  %v8544 = vpop.f32.mrf.mxu0
  %8545 = vmatprep.mubr.bf16.mxu0 0
  %8546 = vmatmul.mubr.bf16.gmra.mxu0 %v6884
  %v8547 = vpop.f32.mrf.mxu0
  %v8548 = vadd.f32 %v8259, %v8547
  %v8549 = vpop.f32.mrf.mxu0
  %v8550 = vpop.f32.mrf.mxu0
  %v8551 = vadd.f32 %v8262, %v8550
  %v8552 = vpop.f32.mrf.mxu0
  %8553 = vmatprep.mubr.bf16.mxu0 0
  %8554 = vmatmul.mubr.bf16.gmra.mxu0 %v6885
  %v8555 = vpop.f32.mrf.mxu0
  %v8556 = vadd.f32 %v8267, %v8555
  %v8557 = vpop.f32.mrf.mxu0
  %v8558 = vpop.f32.mrf.mxu0
  %v8559 = vadd.f32 %v8270, %v8558
  %v8560 = vpop.f32.mrf.mxu0
  %8561 = vmatprep.mubr.bf16.mxu0 0
  %8562 = vmatmul.mubr.bf16.gmra.mxu0 %v6886
  %v8563 = vpop.f32.mrf.mxu0
  %v8564 = vadd.f32 %v8275, %v8563
  %v8565 = vpop.f32.mrf.mxu0
  %v8566 = vpop.f32.mrf.mxu0
  %v8567 = vadd.f32 %v8278, %v8566
  %v8568 = vpop.f32.mrf.mxu0
  %8569 = vmatprep.mubr.bf16.mxu0 0
  %8570 = vmatmul.mubr.bf16.gmra.mxu0 %v6887
  %v8571 = vpop.f32.mrf.mxu0
  %v8572 = vadd.f32 %v8283, %v8571
  %v8573 = vpop.f32.mrf.mxu0
  %v8574 = vpop.f32.mrf.mxu0
  %v8575 = vadd.f32 %v8286, %v8574
  %v8576 = vpop.f32.mrf.mxu0
  %8577 = vmatprep.mubr.bf16.mxu0 0
  %8578 = vmatmul.mubr.bf16.gmra.mxu0 %v6888
  %v8579 = vpop.f32.mrf.mxu0
  %v8580 = vadd.f32 %v8291, %v8579
  %v8581 = vpop.f32.mrf.mxu0
  %v8582 = vpop.f32.mrf.mxu0
  %v8583 = vadd.f32 %v8294, %v8582
  %v8584 = vpop.f32.mrf.mxu0
  %8585 = vmatprep.mubr.bf16.mxu0 0
  %8586 = vmatmul.mubr.bf16.gmra.mxu0 %v6889
  %v8587 = vpop.f32.mrf.mxu0
  %v8588 = vadd.f32 %v8299, %v8587
  %v8589 = vpop.f32.mrf.mxu0
  %v8590 = vpop.f32.mrf.mxu0
  %v8591 = vadd.f32 %v8302, %v8590
  %v8592 = vpop.f32.mrf.mxu0
  %8593 = vmatprep.mubr.bf16.mxu0 0
  %8594 = vmatmul.mubr.bf16.gmra.mxu0 %v6890
  %v8595 = vpop.f32.mrf.mxu0
  %v8596 = vadd.f32 %v8307, %v8595
  %v8597 = vpop.f32.mrf.mxu0
  %v8598 = vpop.f32.mrf.mxu0
  %v8599 = vadd.f32 %v8310, %v8598
  %v8600 = vpop.f32.mrf.mxu0
  %8601 = vmatprep.mubr.bf16.mxu0 0
  %8602 = vmatmul.mubr.bf16.gmra.mxu0 %v6891
  %v8603 = vpop.f32.mrf.mxu0
  %v8604 = vadd.f32 %v8315, %v8603
  %v8605 = vpop.f32.mrf.mxu0
  %v8606 = vpop.f32.mrf.mxu0
  %v8607 = vadd.f32 %v8318, %v8606
  %v8608 = vpop.f32.mrf.mxu0
  %8609 = vmatprep.mubr.bf16.mxu0 0
  %8610 = vmatmul.mubr.bf16.gmra.mxu0 %v6892
  %v8611 = vpop.f32.mrf.mxu0
  %v8612 = vadd.f32 %v8323, %v8611
  %v8613 = vpop.f32.mrf.mxu0
  %v8614 = vpop.f32.mrf.mxu0
  %v8615 = vadd.f32 %v8326, %v8614
  %v8616 = vpop.f32.mrf.mxu0
  %8617 = vmatprep.mubr.bf16.mxu0 0
  %8618 = vmatmul.mubr.bf16.gmra.mxu0 %v6893
  %v8619 = vpop.f32.mrf.mxu0
  %v8620 = vadd.f32 %v8331, %v8619
  %v8621 = vpop.f32.mrf.mxu0
  %v8622 = vpop.f32.mrf.mxu0
  %v8623 = vadd.f32 %v8334, %v8622
  %v8624 = vpop.f32.mrf.mxu0
  %8625 = vmatprep.mubr.bf16.mxu0 0
  %8626 = vmatmul.mubr.bf16.gmra.mxu0 %v6894
  %v8627 = vpop.f32.mrf.mxu0
  %v8628 = vadd.f32 %v8339, %v8627
  %v8629 = vpop.f32.mrf.mxu0
  %v8630 = vpop.f32.mrf.mxu0
  %v8631 = vadd.f32 %v8342, %v8630
  %v8632 = vpop.f32.mrf.mxu0
  %8633 = vmatprep.mubr.bf16.mxu0 0
  %8634 = vmatmul.mubr.bf16.gmra.mxu0 %v6895
  %v8635 = vpop.f32.mrf.mxu0
  %v8636 = vadd.f32 %v8347, %v8635
  %v8637 = vpop.f32.mrf.mxu0
  %v8638 = vpop.f32.mrf.mxu0
  %v8639 = vadd.f32 %v8350, %v8638
  %v8640 = vpop.f32.mrf.mxu0
  %8641 = vmatprep.mubr.bf16.mxu0 0
  %8642 = vmatmul.mubr.bf16.gmra.mxu0 %v6896
  %v8643 = vpop.f32.mrf.mxu0
  %v8644 = vadd.f32 %v8355, %v8643
  %v8645 = vpop.f32.mrf.mxu0
  %v8646 = vpop.f32.mrf.mxu0
  %v8647 = vadd.f32 %v8358, %v8646
  %v8648 = vpop.f32.mrf.mxu0
  %8649 = vmatprep.mubr.bf16.mxu0 0
  %8650 = vmatmul.mubr.bf16.gmra.mxu0 %v6897
  %v8651 = vpop.f32.mrf.mxu0
  %v8652 = vadd.f32 %v8363, %v8651
  %v8653 = vpop.f32.mrf.mxu0
  %v8654 = vpop.f32.mrf.mxu0
  %v8655 = vadd.f32 %v8366, %v8654
  %v8656 = vpop.f32.mrf.mxu0
  %8657 = vmatprep.mubr.bf16.mxu0 0
  %8658 = vmatmul.mubr.bf16.gmra.mxu0 %v6898
  %v8659 = vpop.f32.mrf.mxu0
  %v8660 = vadd.f32 %v8371, %v8659
  %v8661 = vpop.f32.mrf.mxu0
  %v8662 = vpop.f32.mrf.mxu0
  %v8663 = vadd.f32 %v8374, %v8662
  %v8664 = vpop.f32.mrf.mxu0
  %8665 = vmatprep.mubr.bf16.mxu0 0
  %8666 = vmatmul.mubr.bf16.gmra.mxu0 %v6899
  %v8667 = vpop.f32.mrf.mxu0
  %v8668 = vadd.f32 %v8379, %v8667
  %v8669 = vpop.f32.mrf.mxu0
  %v8670 = vpop.f32.mrf.mxu0
  %v8671 = vadd.f32 %v8382, %v8670
  %v8672 = vpop.f32.mrf.mxu0
  %8673 = vmatprep.mubr.bf16.mxu0 0
  %8674 = vmatmul.mubr.bf16.gmra.mxu0 %v6900
  %v8675 = vpop.f32.mrf.mxu0
  %v8676 = vadd.f32 %v8387, %v8675
  %v8677 = vpop.f32.mrf.mxu0
  %v8678 = vpop.f32.mrf.mxu0
  %v8679 = vadd.f32 %v8390, %v8678
  %v8680 = vpop.f32.mrf.mxu0
  %8681 = vmatprep.mubr.bf16.mxu0 0
  %8682 = vmatmul.mubr.bf16.gmra.mxu0 %v6901
  %v8683 = vpop.f32.mrf.mxu0
  %v8684 = vadd.f32 %v8395, %v8683
  %v8685 = vpop.f32.mrf.mxu0
  %v8686 = vpop.f32.mrf.mxu0
  %v8687 = vadd.f32 %v8398, %v8686
  %v8688 = vpop.f32.mrf.mxu0
  %8689 = vmatprep.mubr.bf16.mxu0 0
  %8690 = vmatmul.mubr.bf16.gmra.mxu0 %v6902
  %v8691 = vpop.f32.mrf.mxu0
  %v8692 = vadd.f32 %v8403, %v8691
  %v8693 = vpop.f32.mrf.mxu0
  %v8694 = vpop.f32.mrf.mxu0
  %v8695 = vadd.f32 %v8406, %v8694
  %v8696 = vpop.f32.mrf.mxu0
  %8697 = vmatprep.mubr.bf16.mxu0 0
  %8698 = vmatmul.mubr.bf16.gmra.mxu0 %v6903
  %v8699 = vpop.f32.mrf.mxu0
  %v8700 = vadd.f32 %v8411, %v8699
  %v8701 = vpop.f32.mrf.mxu0
  %v8702 = vpop.f32.mrf.mxu0
  %v8703 = vadd.f32 %v8414, %v8702
  %v8704 = vpop.f32.mrf.mxu0
  %8705 = vmatprep.mubr.bf16.mxu0 0
  %8706 = vmatmul.mubr.bf16.gmra.mxu0 %v6904
  %v8707 = vpop.f32.mrf.mxu0
  %v8708 = vadd.f32 %v8419, %v8707
  %v8709 = vpop.f32.mrf.mxu0
  %v8710 = vpop.f32.mrf.mxu0
  %v8711 = vadd.f32 %v8422, %v8710
  %v8712 = vpop.f32.mrf.mxu0
  %8713 = vmatprep.mubr.bf16.mxu0 0
  %8714 = vmatmul.mubr.bf16.gmra.mxu0 %v6905
  %v8715 = vpop.f32.mrf.mxu0
  %v8716 = vadd.f32 %v8427, %v8715
  %v8717 = vpop.f32.mrf.mxu0
  %v8718 = vpop.f32.mrf.mxu0
  %v8719 = vadd.f32 %v8430, %v8718
  %v8720 = vpop.f32.mrf.mxu0
  %8721 = vmatprep.mubr.bf16.mxu0 0
  %8722 = vmatmul.mubr.bf16.gmra.mxu0 %v6906
  %v8723 = vpop.f32.mrf.mxu0
  %v8724 = vadd.f32 %v8435, %v8723
  %v8725 = vpop.f32.mrf.mxu0
  %v8726 = vpop.f32.mrf.mxu0
  %v8727 = vadd.f32 %v8438, %v8726
  %v8728 = vpop.f32.mrf.mxu0
  %8729 = vmatprep.mubr.bf16.mxu0 0
  %8730 = vmatmul.mubr.bf16.gmra.mxu0 %v6907
  %v8731 = vpop.f32.mrf.mxu0
  %v8732 = vadd.f32 %v8443, %v8731
  %v8733 = vpop.f32.mrf.mxu0
  %v8734 = vpop.f32.mrf.mxu0
  %v8735 = vadd.f32 %v8446, %v8734
  %v8736 = vpop.f32.mrf.mxu0
  %8737 = vdwg.mxu0
  %s8738 = scalar_lea.vmem [#allocation2], 48
  %v8739 = vld [vmem:[%s8738] sm:$0xff]
  %v8740 = vld [vmem:[%s8738 + $0x8] sm:$0xff]
  %v8741 = vld [vmem:[%s8738 + $0x18] sm:$0xff]
  %v8742 = vld [vmem:[%s8738 + $0x20] sm:$0xff]
  %v8743 = vld [vmem:[%s8738 + $0x30] sm:$0xff]
  %v8744 = vld [vmem:[%s8738 + $0x38] sm:$0xff]
  %v8745 = vld [vmem:[%s8738 + $0x48] sm:$0xff]
  %v8746 = vld [vmem:[%s8738 + $0x50] sm:$0xff]
  %v8747 = vld [vmem:[%s8738 + $0x60] sm:$0xff]
  %v8748 = vld [vmem:[%s8738 + $0x68] sm:$0xff]
  %v8749 = vld [vmem:[%s8738 + $0x78] sm:$0xff]
  %v8750 = vld [vmem:[%s8738 + $0x80] sm:$0xff]
  %v8751 = vld [vmem:[%s8738 + $0x90] sm:$0xff]
  %v8752 = vld [vmem:[%s8738 + $0x98] sm:$0xff]
  %v8753 = vld [vmem:[%s8738 + $0xa8] sm:$0xff]
  %v8754 = vld [vmem:[%s8738 + $0xb0] sm:$0xff]
  %v8755 = vld [vmem:[%s8738 + $0xc0] sm:$0xff]
  %v8756 = vld [vmem:[%s8738 + $0xc8] sm:$0xff]
  %v8757 = vld [vmem:[%s8738 + $0xd8] sm:$0xff]
  %v8758 = vld [vmem:[%s8738 + $0xe0] sm:$0xff]
  %v8759 = vld [vmem:[%s8738 + $0xf0] sm:$0xff]
  %v8760 = vld [vmem:[%s8738 + $0xf8] sm:$0xff]
  %v8761 = vld [vmem:[%s8738 + $0x108] sm:$0xff]
  %v8762 = vld [vmem:[%s8738 + $0x110] sm:$0xff]
  %v8763 = vld [vmem:[%s8738 + $0x120] sm:$0xff]
  %v8764 = vld [vmem:[%s8738 + $0x128] sm:$0xff]
  %v8765 = vld [vmem:[%s8738 + $0x138] sm:$0xff]
  %v8766 = vld [vmem:[%s8738 + $0x140] sm:$0xff]
  %v8767 = vld [vmem:[%s8738 + $0x150] sm:$0xff]
  %v8768 = vld [vmem:[%s8738 + $0x158] sm:$0xff]
  %v8769 = vld [vmem:[%s8738 + $0x168] sm:$0xff]
  %v8770 = vld [vmem:[%s8738 + $0x170] sm:$0xff]
  %v8771 = vld [vmem:[%s8738 + $0x1b0] sm:$0xff]
  %v8772 = vld [vmem:[%s8738 + $0x1b8] sm:$0xff]
  %v8773 = vld [vmem:[%s8738 + $0x1c8] sm:$0xff]
  %v8774 = vld [vmem:[%s8738 + $0x1d0] sm:$0xff]
  %v8775 = vld [vmem:[%s8738 + $0x1e0] sm:$0xff]
  %v8776 = vld [vmem:[%s8738 + $0x1e8] sm:$0xff]
  %v8777 = vld [vmem:[%s8738 + $0x1f8] sm:$0xff]
  %v8778 = vld [vmem:[%s8738 + $0x200] sm:$0xff]
  %v8779 = vld [vmem:[%s8738 + $0x210] sm:$0xff]
  %v8780 = vld [vmem:[%s8738 + $0x218] sm:$0xff]
  %v8781 = vld [vmem:[%s8738 + $0x228] sm:$0xff]
  %v8782 = vld [vmem:[%s8738 + $0x230] sm:$0xff]
  %v8783 = vld [vmem:[%s8738 + $0x240] sm:$0xff]
  %v8784 = vld [vmem:[%s8738 + $0x248] sm:$0xff]
  %v8785 = vld [vmem:[%s8738 + $0x258] sm:$0xff]
  %v8786 = vld [vmem:[%s8738 + $0x260] sm:$0xff]
  %v8787 = vld [vmem:[%s8738 + $0x270] sm:$0xff]
  %v8788 = vld [vmem:[%s8738 + $0x278] sm:$0xff]
  %v8789 = vld [vmem:[%s8738 + $0x288] sm:$0xff]
  %v8790 = vld [vmem:[%s8738 + $0x290] sm:$0xff]
  %v8791 = vld [vmem:[%s8738 + $0x2a0] sm:$0xff]
  %v8792 = vld [vmem:[%s8738 + $0x2a8] sm:$0xff]
  %v8793 = vld [vmem:[%s8738 + $0x2b8] sm:$0xff]
  %v8794 = vld [vmem:[%s8738 + $0x2c0] sm:$0xff]
  %v8795 = vld [vmem:[%s8738 + $0x2d0] sm:$0xff]
  %v8796 = vld [vmem:[%s8738 + $0x2d8] sm:$0xff]
  %v8797 = vld [vmem:[%s8738 + $0x2e8] sm:$0xff]
  %v8798 = vld [vmem:[%s8738 + $0x2f0] sm:$0xff]
  %v8799 = vld [vmem:[%s8738 + $0x300] sm:$0xff]
  %v8800 = vld [vmem:[%s8738 + $0x308] sm:$0xff]
  %v8801 = vld [vmem:[%s8738 + $0x318] sm:$0xff]
  %v8802 = vld [vmem:[%s8738 + $0x320] sm:$0xff]
  %v8803 = vpack.c.bf16 %v8740, %v8739
  %v8804 = vpack.c.bf16 %v8742, %v8741
  %v8805 = vpack.c.bf16 %v8744, %v8743
  %v8806 = vpack.c.bf16 %v8746, %v8745
  %v8807 = vpack.c.bf16 %v8748, %v8747
  %v8808 = vpack.c.bf16 %v8750, %v8749
  %v8809 = vpack.c.bf16 %v8752, %v8751
  %v8810 = vpack.c.bf16 %v8754, %v8753
  %v8811 = vpack.c.bf16 %v8756, %v8755
  %v8812 = vpack.c.bf16 %v8758, %v8757
  %v8813 = vpack.c.bf16 %v8760, %v8759
  %v8814 = vpack.c.bf16 %v8762, %v8761
  %v8815 = vpack.c.bf16 %v8764, %v8763
  %v8816 = vpack.c.bf16 %v8766, %v8765
  %v8817 = vpack.c.bf16 %v8768, %v8767
  %v8818 = vpack.c.bf16 %v8770, %v8769
  %v8819 = vpack.c.bf16 %v8772, %v8771
  %v8820 = vpack.c.bf16 %v8774, %v8773
  %v8821 = vpack.c.bf16 %v8776, %v8775
  %v8822 = vpack.c.bf16 %v8778, %v8777
  %v8823 = vpack.c.bf16 %v8780, %v8779
  %v8824 = vpack.c.bf16 %v8782, %v8781
  %v8825 = vpack.c.bf16 %v8784, %v8783
  %v8826 = vpack.c.bf16 %v8786, %v8785
  %v8827 = vpack.c.bf16 %v8788, %v8787
  %v8828 = vpack.c.bf16 %v8790, %v8789
  %v8829 = vpack.c.bf16 %v8792, %v8791
  %v8830 = vpack.c.bf16 %v8794, %v8793
  %v8831 = vpack.c.bf16 %v8796, %v8795
  %v8832 = vpack.c.bf16 %v8798, %v8797
  %v8833 = vpack.c.bf16 %v8800, %v8799
  %v8834 = vpack.c.bf16 %v8802, %v8801
  %v8835 = vld [vmem:[%s8738 + $0x1] sm:$0xff]
  %v8836 = vld [vmem:[%s8738 + $0x9] sm:$0xff]
  %v8837 = vld [vmem:[%s8738 + $0x19] sm:$0xff]
  %v8838 = vld [vmem:[%s8738 + $0x21] sm:$0xff]
  %v8839 = vld [vmem:[%s8738 + $0x31] sm:$0xff]
  %v8840 = vld [vmem:[%s8738 + $0x39] sm:$0xff]
  %v8841 = vld [vmem:[%s8738 + $0x49] sm:$0xff]
  %v8842 = vld [vmem:[%s8738 + $0x51] sm:$0xff]
  %v8843 = vld [vmem:[%s8738 + $0x61] sm:$0xff]
  %v8844 = vld [vmem:[%s8738 + $0x69] sm:$0xff]
  %v8845 = vld [vmem:[%s8738 + $0x79] sm:$0xff]
  %v8846 = vld [vmem:[%s8738 + $0x81] sm:$0xff]
  %v8847 = vld [vmem:[%s8738 + $0x91] sm:$0xff]
  %v8848 = vld [vmem:[%s8738 + $0x99] sm:$0xff]
  %v8849 = vld [vmem:[%s8738 + $0xa9] sm:$0xff]
  %v8850 = vld [vmem:[%s8738 + $0xb1] sm:$0xff]
  %v8851 = vld [vmem:[%s8738 + $0xc1] sm:$0xff]
  %v8852 = vld [vmem:[%s8738 + $0xc9] sm:$0xff]
  %v8853 = vld [vmem:[%s8738 + $0xd9] sm:$0xff]
  %v8854 = vld [vmem:[%s8738 + $0xe1] sm:$0xff]
  %v8855 = vld [vmem:[%s8738 + $0xf1] sm:$0xff]
  %v8856 = vld [vmem:[%s8738 + $0xf9] sm:$0xff]
  %v8857 = vld [vmem:[%s8738 + $0x109] sm:$0xff]
  %v8858 = vld [vmem:[%s8738 + $0x111] sm:$0xff]
  %v8859 = vld [vmem:[%s8738 + $0x121] sm:$0xff]
  %v8860 = vld [vmem:[%s8738 + $0x129] sm:$0xff]
  %v8861 = vld [vmem:[%s8738 + $0x139] sm:$0xff]
  %v8862 = vld [vmem:[%s8738 + $0x141] sm:$0xff]
  %v8863 = vld [vmem:[%s8738 + $0x151] sm:$0xff]
  %v8864 = vld [vmem:[%s8738 + $0x159] sm:$0xff]
  %v8865 = vld [vmem:[%s8738 + $0x169] sm:$0xff]
  %v8866 = vld [vmem:[%s8738 + $0x171] sm:$0xff]
  %v8867 = vld [vmem:[%s8738 + $0x1b1] sm:$0xff]
  %v8868 = vld [vmem:[%s8738 + $0x1b9] sm:$0xff]
  %v8869 = vld [vmem:[%s8738 + $0x1c9] sm:$0xff]
  %v8870 = vld [vmem:[%s8738 + $0x1d1] sm:$0xff]
  %v8871 = vld [vmem:[%s8738 + $0x1e1] sm:$0xff]
  %v8872 = vld [vmem:[%s8738 + $0x1e9] sm:$0xff]
  %v8873 = vld [vmem:[%s8738 + $0x1f9] sm:$0xff]
  %v8874 = vld [vmem:[%s8738 + $0x201] sm:$0xff]
  %v8875 = vld [vmem:[%s8738 + $0x211] sm:$0xff]
  %v8876 = vld [vmem:[%s8738 + $0x219] sm:$0xff]
  %v8877 = vld [vmem:[%s8738 + $0x229] sm:$0xff]
  %v8878 = vld [vmem:[%s8738 + $0x231] sm:$0xff]
  %v8879 = vld [vmem:[%s8738 + $0x241] sm:$0xff]
  %v8880 = vld [vmem:[%s8738 + $0x249] sm:$0xff]
  %v8881 = vld [vmem:[%s8738 + $0x259] sm:$0xff]
  %v8882 = vld [vmem:[%s8738 + $0x261] sm:$0xff]
  %v8883 = vld [vmem:[%s8738 + $0x271] sm:$0xff]
  %v8884 = vld [vmem:[%s8738 + $0x279] sm:$0xff]
  %v8885 = vld [vmem:[%s8738 + $0x289] sm:$0xff]
  %v8886 = vld [vmem:[%s8738 + $0x291] sm:$0xff]
  %v8887 = vld [vmem:[%s8738 + $0x2a1] sm:$0xff]
  %v8888 = vld [vmem:[%s8738 + $0x2a9] sm:$0xff]
  %v8889 = vld [vmem:[%s8738 + $0x2b9] sm:$0xff]
  %v8890 = vld [vmem:[%s8738 + $0x2c1] sm:$0xff]
  %v8891 = vld [vmem:[%s8738 + $0x2d1] sm:$0xff]
  %v8892 = vld [vmem:[%s8738 + $0x2d9] sm:$0xff]
  %v8893 = vld [vmem:[%s8738 + $0x2e9] sm:$0xff]
  %v8894 = vld [vmem:[%s8738 + $0x2f1] sm:$0xff]
  %v8895 = vld [vmem:[%s8738 + $0x301] sm:$0xff]
  %v8896 = vld [vmem:[%s8738 + $0x309] sm:$0xff]
  %v8897 = vld [vmem:[%s8738 + $0x319] sm:$0xff]
  %v8898 = vld [vmem:[%s8738 + $0x321] sm:$0xff]
  %v8899 = vpack.c.bf16 %v8836, %v8835
  %v8900 = vpack.c.bf16 %v8838, %v8837
  %v8901 = vpack.c.bf16 %v8840, %v8839
  %v8902 = vpack.c.bf16 %v8842, %v8841
  %v8903 = vpack.c.bf16 %v8844, %v8843
  %v8904 = vpack.c.bf16 %v8846, %v8845
  %v8905 = vpack.c.bf16 %v8848, %v8847
  %v8906 = vpack.c.bf16 %v8850, %v8849
  %v8907 = vpack.c.bf16 %v8852, %v8851
  %v8908 = vpack.c.bf16 %v8854, %v8853
  %v8909 = vpack.c.bf16 %v8856, %v8855
  %v8910 = vpack.c.bf16 %v8858, %v8857
  %v8911 = vpack.c.bf16 %v8860, %v8859
  %v8912 = vpack.c.bf16 %v8862, %v8861
  %v8913 = vpack.c.bf16 %v8864, %v8863
  %v8914 = vpack.c.bf16 %v8866, %v8865
  %v8915 = vpack.c.bf16 %v8868, %v8867
  %v8916 = vpack.c.bf16 %v8870, %v8869
  %v8917 = vpack.c.bf16 %v8872, %v8871
  %v8918 = vpack.c.bf16 %v8874, %v8873
  %v8919 = vpack.c.bf16 %v8876, %v8875
  %v8920 = vpack.c.bf16 %v8878, %v8877
  %v8921 = vpack.c.bf16 %v8880, %v8879
  %v8922 = vpack.c.bf16 %v8882, %v8881
  %v8923 = vpack.c.bf16 %v8884, %v8883
  %v8924 = vpack.c.bf16 %v8886, %v8885
  %v8925 = vpack.c.bf16 %v8888, %v8887
  %v8926 = vpack.c.bf16 %v8890, %v8889
  %v8927 = vpack.c.bf16 %v8892, %v8891
  %v8928 = vpack.c.bf16 %v8894, %v8893
  %v8929 = vpack.c.bf16 %v8896, %v8895
  %v8930 = vpack.c.bf16 %v8898, %v8897
  %v8931 = vld [vmem:[%s8738 + $0x2] sm:$0xff]
  %v8932 = vld [vmem:[%s8738 + $0xa] sm:$0xff]
  %v8933 = vld [vmem:[%s8738 + $0x1a] sm:$0xff]
  %v8934 = vld [vmem:[%s8738 + $0x22] sm:$0xff]
  %v8935 = vld [vmem:[%s8738 + $0x32] sm:$0xff]
  %v8936 = vld [vmem:[%s8738 + $0x3a] sm:$0xff]
  %v8937 = vld [vmem:[%s8738 + $0x4a] sm:$0xff]
  %v8938 = vld [vmem:[%s8738 + $0x52] sm:$0xff]
  %v8939 = vld [vmem:[%s8738 + $0x62] sm:$0xff]
  %v8940 = vld [vmem:[%s8738 + $0x6a] sm:$0xff]
  %v8941 = vld [vmem:[%s8738 + $0x7a] sm:$0xff]
  %v8942 = vld [vmem:[%s8738 + $0x82] sm:$0xff]
  %v8943 = vld [vmem:[%s8738 + $0x92] sm:$0xff]
  %v8944 = vld [vmem:[%s8738 + $0x9a] sm:$0xff]
  %v8945 = vld [vmem:[%s8738 + $0xaa] sm:$0xff]
  %v8946 = vld [vmem:[%s8738 + $0xb2] sm:$0xff]
  %v8947 = vld [vmem:[%s8738 + $0xc2] sm:$0xff]
  %v8948 = vld [vmem:[%s8738 + $0xca] sm:$0xff]
  %v8949 = vld [vmem:[%s8738 + $0xda] sm:$0xff]
  %v8950 = vld [vmem:[%s8738 + $0xe2] sm:$0xff]
  %v8951 = vld [vmem:[%s8738 + $0xf2] sm:$0xff]
  %v8952 = vld [vmem:[%s8738 + $0xfa] sm:$0xff]
  %v8953 = vld [vmem:[%s8738 + $0x10a] sm:$0xff]
  %v8954 = vld [vmem:[%s8738 + $0x112] sm:$0xff]
  %v8955 = vld [vmem:[%s8738 + $0x122] sm:$0xff]
  %v8956 = vld [vmem:[%s8738 + $0x12a] sm:$0xff]
  %v8957 = vld [vmem:[%s8738 + $0x13a] sm:$0xff]
  %v8958 = vld [vmem:[%s8738 + $0x142] sm:$0xff]
  %v8959 = vld [vmem:[%s8738 + $0x152] sm:$0xff]
  %v8960 = vld [vmem:[%s8738 + $0x15a] sm:$0xff]
  %v8961 = vld [vmem:[%s8738 + $0x16a] sm:$0xff]
  %v8962 = vld [vmem:[%s8738 + $0x172] sm:$0xff]
  %v8963 = vld [vmem:[%s8738 + $0x1b2] sm:$0xff]
  %v8964 = vld [vmem:[%s8738 + $0x1ba] sm:$0xff]
  %v8965 = vld [vmem:[%s8738 + $0x1ca] sm:$0xff]
  %v8966 = vld [vmem:[%s8738 + $0x1d2] sm:$0xff]
  %v8967 = vld [vmem:[%s8738 + $0x1e2] sm:$0xff]
  %v8968 = vld [vmem:[%s8738 + $0x1ea] sm:$0xff]
  %v8969 = vld [vmem:[%s8738 + $0x1fa] sm:$0xff]
  %v8970 = vld [vmem:[%s8738 + $0x202] sm:$0xff]
  %v8971 = vld [vmem:[%s8738 + $0x212] sm:$0xff]
  %v8972 = vld [vmem:[%s8738 + $0x21a] sm:$0xff]
  %v8973 = vld [vmem:[%s8738 + $0x22a] sm:$0xff]
  %v8974 = vld [vmem:[%s8738 + $0x232] sm:$0xff]
  %v8975 = vld [vmem:[%s8738 + $0x242] sm:$0xff]
  %v8976 = vld [vmem:[%s8738 + $0x24a] sm:$0xff]
  %v8977 = vld [vmem:[%s8738 + $0x25a] sm:$0xff]
  %v8978 = vld [vmem:[%s8738 + $0x262] sm:$0xff]
  %v8979 = vld [vmem:[%s8738 + $0x272] sm:$0xff]
  %v8980 = vld [vmem:[%s8738 + $0x27a] sm:$0xff]
  %v8981 = vld [vmem:[%s8738 + $0x28a] sm:$0xff]
  %v8982 = vld [vmem:[%s8738 + $0x292] sm:$0xff]
  %v8983 = vld [vmem:[%s8738 + $0x2a2] sm:$0xff]
  %v8984 = vld [vmem:[%s8738 + $0x2aa] sm:$0xff]
  %v8985 = vld [vmem:[%s8738 + $0x2ba] sm:$0xff]
  %v8986 = vld [vmem:[%s8738 + $0x2c2] sm:$0xff]
  %v8987 = vld [vmem:[%s8738 + $0x2d2] sm:$0xff]
  %v8988 = vld [vmem:[%s8738 + $0x2da] sm:$0xff]
  %v8989 = vld [vmem:[%s8738 + $0x2ea] sm:$0xff]
  %v8990 = vld [vmem:[%s8738 + $0x2f2] sm:$0xff]
  %v8991 = vld [vmem:[%s8738 + $0x302] sm:$0xff]
  %v8992 = vld [vmem:[%s8738 + $0x30a] sm:$0xff]
  %v8993 = vld [vmem:[%s8738 + $0x31a] sm:$0xff]
  %v8994 = vld [vmem:[%s8738 + $0x322] sm:$0xff]
  %v8995 = vpack.c.bf16 %v8932, %v8931
  %v8996 = vpack.c.bf16 %v8934, %v8933
  %v8997 = vpack.c.bf16 %v8936, %v8935
  %v8998 = vpack.c.bf16 %v8938, %v8937
  %v8999 = vpack.c.bf16 %v8940, %v8939
  %v9000 = vpack.c.bf16 %v8942, %v8941
  %v9001 = vpack.c.bf16 %v8944, %v8943
  %v9002 = vpack.c.bf16 %v8946, %v8945
  %v9003 = vpack.c.bf16 %v8948, %v8947
  %v9004 = vpack.c.bf16 %v8950, %v8949
  %v9005 = vpack.c.bf16 %v8952, %v8951
  %v9006 = vpack.c.bf16 %v8954, %v8953
  %v9007 = vpack.c.bf16 %v8956, %v8955
  %v9008 = vpack.c.bf16 %v8958, %v8957
  %v9009 = vpack.c.bf16 %v8960, %v8959
  %v9010 = vpack.c.bf16 %v8962, %v8961
  %v9011 = vpack.c.bf16 %v8964, %v8963
  %v9012 = vpack.c.bf16 %v8966, %v8965
  %v9013 = vpack.c.bf16 %v8968, %v8967
  %v9014 = vpack.c.bf16 %v8970, %v8969
  %v9015 = vpack.c.bf16 %v8972, %v8971
  %v9016 = vpack.c.bf16 %v8974, %v8973
  %v9017 = vpack.c.bf16 %v8976, %v8975
  %v9018 = vpack.c.bf16 %v8978, %v8977
  %v9019 = vpack.c.bf16 %v8980, %v8979
  %v9020 = vpack.c.bf16 %v8982, %v8981
  %v9021 = vpack.c.bf16 %v8984, %v8983
  %v9022 = vpack.c.bf16 %v8986, %v8985
  %v9023 = vpack.c.bf16 %v8988, %v8987
  %v9024 = vpack.c.bf16 %v8990, %v8989
  %v9025 = vpack.c.bf16 %v8992, %v8991
  %v9026 = vpack.c.bf16 %v8994, %v8993
  %s9027 = scalar_lea.vmem %s5, 384
  %v9028 = vld [vmem:[%s9027] sm:$0xf]
  %v9029 = vld [vmem:[%s9027 + $0x4] sm:$0xf]
  %v9030 = vld [vmem:[%s9027 + $0x8] sm:$0xf]
  %v9031 = vld [vmem:[%s9027 + $0xc] sm:$0xf]
  %v9032 = vld [vmem:[%s9027 + $0x10] sm:$0xf]
  %v9033 = vld [vmem:[%s9027 + $0x14] sm:$0xf]
  %v9034 = vld [vmem:[%s9027 + $0x18] sm:$0xf]
  %v9035 = vld [vmem:[%s9027 + $0x1c] sm:$0xf]
  %v9036 = vld [vmem:[%s9027 + $0x20] sm:$0xf]
  %v9037 = vld [vmem:[%s9027 + $0x24] sm:$0xf]
  %v9038 = vld [vmem:[%s9027 + $0x28] sm:$0xf]
  %v9039 = vld [vmem:[%s9027 + $0x2c] sm:$0xf]
  %v9040 = vld [vmem:[%s9027 + $0x30] sm:$0xf]
  %v9041 = vld [vmem:[%s9027 + $0x34] sm:$0xf]
  %v9042 = vld [vmem:[%s9027 + $0x38] sm:$0xf]
  %v9043 = vld [vmem:[%s9027 + $0x3c] sm:$0xf]
  %v9044 = vld [vmem:[%s9027 + $0x40] sm:$0xf]
  %v9045 = vld [vmem:[%s9027 + $0x44] sm:$0xf]
  %v9046 = vld [vmem:[%s9027 + $0x48] sm:$0xf]
  %v9047 = vld [vmem:[%s9027 + $0x4c] sm:$0xf]
  %v9048 = vld [vmem:[%s9027 + $0x50] sm:$0xf]
  %v9049 = vld [vmem:[%s9027 + $0x54] sm:$0xf]
  %v9050 = vld [vmem:[%s9027 + $0x58] sm:$0xf]
  %v9051 = vld [vmem:[%s9027 + $0x5c] sm:$0xf]
  %v9052 = vld [vmem:[%s9027 + $0x60] sm:$0xf]
  %v9053 = vld [vmem:[%s9027 + $0x64] sm:$0xf]
  %v9054 = vld [vmem:[%s9027 + $0x68] sm:$0xf]
  %v9055 = vld [vmem:[%s9027 + $0x6c] sm:$0xf]
  %v9056 = vld [vmem:[%s9027 + $0x70] sm:$0xf]
  %v9057 = vld [vmem:[%s9027 + $0x74] sm:$0xf]
  %v9058 = vld [vmem:[%s9027 + $0x78] sm:$0xf]
  %v9059 = vld [vmem:[%s9027 + $0x7c] sm:$0xf]
  %v9060 = vld [vmem:[%s9027 + $0x80] sm:$0xf]
  %v9061 = vld [vmem:[%s9027 + $0x84] sm:$0xf]
  %v9062 = vld [vmem:[%s9027 + $0x88] sm:$0xf]
  %v9063 = vld [vmem:[%s9027 + $0x8c] sm:$0xf]
  %v9064 = vld [vmem:[%s9027 + $0x90] sm:$0xf]
  %v9065 = vld [vmem:[%s9027 + $0x94] sm:$0xf]
  %v9066 = vld [vmem:[%s9027 + $0x98] sm:$0xf]
  %v9067 = vld [vmem:[%s9027 + $0x9c] sm:$0xf]
  %v9068 = vld [vmem:[%s9027 + $0xa0] sm:$0xf]
  %v9069 = vld [vmem:[%s9027 + $0xa4] sm:$0xf]
  %v9070 = vld [vmem:[%s9027 + $0xa8] sm:$0xf]
  %v9071 = vld [vmem:[%s9027 + $0xac] sm:$0xf]
  %v9072 = vld [vmem:[%s9027 + $0xb0] sm:$0xf]
  %v9073 = vld [vmem:[%s9027 + $0xb4] sm:$0xf]
  %v9074 = vld [vmem:[%s9027 + $0xb8] sm:$0xf]
  %v9075 = vld [vmem:[%s9027 + $0xbc] sm:$0xf]
  %v9124 = vunpack.c.l.b16 %v9028
  %v9125 = vunpack.c.l.b16 %v9029
  %v9126 = vunpack.c.l.b16 %v9030
  %v9127 = vunpack.c.l.b16 %v9031
  %v9128 = vunpack.c.l.b16 %v9032
  %v9129 = vunpack.c.l.b16 %v9033
  %v9130 = vunpack.c.l.b16 %v9034
  %v9131 = vunpack.c.l.b16 %v9035
  %v9132 = vunpack.c.l.b16 %v9036
  %v9133 = vunpack.c.l.b16 %v9037
  %v9134 = vunpack.c.l.b16 %v9038
  %v9135 = vunpack.c.l.b16 %v9039
  %v9136 = vunpack.c.l.b16 %v9040
  %v9137 = vunpack.c.l.b16 %v9041
  %v9138 = vunpack.c.l.b16 %v9042
  %v9139 = vunpack.c.l.b16 %v9043
  %v9140 = vunpack.c.l.b16 %v9044
  %v9141 = vunpack.c.l.b16 %v9045
  %v9142 = vunpack.c.l.b16 %v9046
  %v9143 = vunpack.c.l.b16 %v9047
  %v9144 = vunpack.c.l.b16 %v9048
  %v9145 = vunpack.c.l.b16 %v9049
  %v9146 = vunpack.c.l.b16 %v9050
  %v9147 = vunpack.c.l.b16 %v9051
  %v9148 = vunpack.c.l.b16 %v9052
  %v9149 = vunpack.c.l.b16 %v9053
  %v9150 = vunpack.c.l.b16 %v9054
  %v9151 = vunpack.c.l.b16 %v9055
  %v9152 = vunpack.c.l.b16 %v9056
  %v9153 = vunpack.c.l.b16 %v9057
  %v9154 = vunpack.c.l.b16 %v9058
  %v9155 = vunpack.c.l.b16 %v9059
  %v9156 = vunpack.c.l.b16 %v9060
  %v9157 = vunpack.c.l.b16 %v9061
  %v9158 = vunpack.c.l.b16 %v9062
  %v9159 = vunpack.c.l.b16 %v9063
  %v9160 = vunpack.c.l.b16 %v9064
  %v9161 = vunpack.c.l.b16 %v9065
  %v9162 = vunpack.c.l.b16 %v9066
  %v9163 = vunpack.c.l.b16 %v9067
  %v9164 = vunpack.c.l.b16 %v9068
  %v9165 = vunpack.c.l.b16 %v9069
  %v9166 = vunpack.c.l.b16 %v9070
  %v9167 = vunpack.c.l.b16 %v9071
  %v9168 = vunpack.c.l.b16 %v9072
  %v9169 = vunpack.c.l.b16 %v9073
  %v9170 = vunpack.c.l.b16 %v9074
  %v9171 = vunpack.c.l.b16 %v9075
  %v9172 = vpack.c.b16 %v9125, %v9124
  %v9173 = vpack.c.b16 %v9127, %v9126
  %v9174 = vpack.c.b16 %v9129, %v9128
  %v9175 = vpack.c.b16 %v9131, %v9130
  %v9176 = vpack.c.b16 %v9133, %v9132
  %v9177 = vpack.c.b16 %v9135, %v9134
  %v9178 = vpack.c.b16 %v9137, %v9136
  %v9179 = vpack.c.b16 %v9139, %v9138
  %v9180 = vpack.c.b16 %v9141, %v9140
  %v9181 = vpack.c.b16 %v9143, %v9142
  %v9182 = vpack.c.b16 %v9145, %v9144
  %v9183 = vpack.c.b16 %v9147, %v9146
  %v9184 = vpack.c.b16 %v9149, %v9148
  %v9185 = vpack.c.b16 %v9151, %v9150
  %v9186 = vpack.c.b16 %v9153, %v9152
  %v9187 = vpack.c.b16 %v9155, %v9154
  %v9188 = vpack.c.b16 %v9157, %v9156
  %v9189 = vpack.c.b16 %v9159, %v9158
  %v9190 = vpack.c.b16 %v9161, %v9160
  %v9191 = vpack.c.b16 %v9163, %v9162
  %v9192 = vpack.c.b16 %v9165, %v9164
  %v9193 = vpack.c.b16 %v9167, %v9166
  %v9194 = vpack.c.b16 %v9169, %v9168
  %v9195 = vpack.c.b16 %v9171, %v9170
  %9220 = vmatprep.subr.bf16.mxu0 0
  %9221 = vmatpush1.bf16.msra.mxu0 %v9179
  %9222 = vmatprep.subr.bf16.mxu0 0
  %9223 = vmatpush1.bf16.msra.mxu0 %v9178
  %9224 = vmatprep.subr.bf16.mxu0 0
  %9225 = vmatpush1.bf16.msra.mxu0 %v9177
  %9226 = vmatprep.subr.bf16.mxu0 0
  %9227 = vmatpush1.bf16.msra.mxu0 %v9176
  %9228 = vmatprep.subr.bf16.mxu0 0
  %9229 = vmatpush1.bf16.msra.mxu0 %v9175
  %9230 = vmatprep.subr.bf16.mxu0 0
  %9231 = vmatpush1.bf16.msra.mxu0 %v9174
  %9232 = vmatprep.subr.bf16.mxu0 0
  %9233 = vmatpush1.bf16.msra.mxu0 %v9173
  %9234 = vmatprep.subr.bf16.mxu0 0
  %9235 = vmatpush1.bf16.msra.mxu0 %v9172
  %9236 = vmatprep.subr.bf16.mxu0 0
  %9237 = vmatpush2.bf16.msra.mxu0 %v9187
  %9238 = vmatprep.subr.bf16.mxu0 0
  %9239 = vmatpush2.bf16.msra.mxu0 %v9186
  %9240 = vmatprep.subr.bf16.mxu0 0
  %9241 = vmatpush2.bf16.msra.mxu0 %v9185
  %9242 = vmatprep.subr.bf16.mxu0 0
  %9243 = vmatpush2.bf16.msra.mxu0 %v9184
  %9244 = vmatprep.subr.bf16.mxu0 0
  %9245 = vmatpush2.bf16.msra.mxu0 %v9183
  %9246 = vmatprep.subr.bf16.mxu0 0
  %9247 = vmatpush2.bf16.msra.mxu0 %v9182
  %9248 = vmatprep.subr.bf16.mxu0 0
  %9249 = vmatpush2.bf16.msra.mxu0 %v9181
  %9250 = vmatprep.subr.bf16.mxu0 0
  %9251 = vmatpush2.bf16.msra.mxu0 %v9180
  %9252 = vmatprep.mubr.bf16.mxu0 %v8899
  %9253 = vmatmul.mubr.bf16.gmra.mxu0 %v8803
  %v9254 = vpop.f32.mrf.mxu0
  %v9255 = vadd.f32 0.0, %v9254
  %v9256 = vpop.f32.mrf.mxu0
  %v9257 = vpop.f32.mrf.mxu0
  %v9258 = vadd.f32 0.0, %v9257
  %v9259 = vpop.f32.mrf.mxu0
  %9260 = vmatprep.mubr.bf16.mxu0 %v8900
  %9261 = vmatmul.mubr.bf16.gmra.mxu0 %v8804
  %v9262 = vpop.f32.mrf.mxu0
  %v9263 = vadd.f32 0.0, %v9262
  %v9264 = vpop.f32.mrf.mxu0
  %v9265 = vpop.f32.mrf.mxu0
  %v9266 = vadd.f32 0.0, %v9265
  %v9267 = vpop.f32.mrf.mxu0
  %9268 = vmatprep.mubr.bf16.mxu0 %v8901
  %9269 = vmatmul.mubr.bf16.gmra.mxu0 %v8805
  %v9270 = vpop.f32.mrf.mxu0
  %v9271 = vadd.f32 0.0, %v9270
  %v9272 = vpop.f32.mrf.mxu0
  %v9273 = vpop.f32.mrf.mxu0
  %v9274 = vadd.f32 0.0, %v9273
  %v9275 = vpop.f32.mrf.mxu0
  %9276 = vmatprep.mubr.bf16.mxu0 %v8902
  %9277 = vmatmul.mubr.bf16.gmra.mxu0 %v8806
  %v9278 = vpop.f32.mrf.mxu0
  %v9279 = vadd.f32 0.0, %v9278
  %v9280 = vpop.f32.mrf.mxu0
  %v9281 = vpop.f32.mrf.mxu0
  %v9282 = vadd.f32 0.0, %v9281
  %v9283 = vpop.f32.mrf.mxu0
  %9284 = vmatprep.mubr.bf16.mxu0 %v8903
  %9285 = vmatmul.mubr.bf16.gmra.mxu0 %v8807
  %v9286 = vpop.f32.mrf.mxu0
  %v9287 = vadd.f32 0.0, %v9286
  %v9288 = vpop.f32.mrf.mxu0
  %v9289 = vpop.f32.mrf.mxu0
  %v9290 = vadd.f32 0.0, %v9289
  %v9291 = vpop.f32.mrf.mxu0
  %9292 = vmatprep.mubr.bf16.mxu0 %v8904
  %9293 = vmatmul.mubr.bf16.gmra.mxu0 %v8808
  %v9294 = vpop.f32.mrf.mxu0
  %v9295 = vadd.f32 0.0, %v9294
  %v9296 = vpop.f32.mrf.mxu0
  %v9297 = vpop.f32.mrf.mxu0
  %v9298 = vadd.f32 0.0, %v9297
  %v9299 = vpop.f32.mrf.mxu0
  %9300 = vmatprep.mubr.bf16.mxu0 %v8905
  %9301 = vmatmul.mubr.bf16.gmra.mxu0 %v8809
  %v9302 = vpop.f32.mrf.mxu0
  %v9303 = vadd.f32 0.0, %v9302
  %v9304 = vpop.f32.mrf.mxu0
  %v9305 = vpop.f32.mrf.mxu0
  %v9306 = vadd.f32 0.0, %v9305
  %v9307 = vpop.f32.mrf.mxu0
  %9308 = vmatprep.mubr.bf16.mxu0 %v8906
  %9309 = vmatmul.mubr.bf16.gmra.mxu0 %v8810
  %v9310 = vpop.f32.mrf.mxu0
  %v9311 = vadd.f32 0.0, %v9310
  %v9312 = vpop.f32.mrf.mxu0
  %v9313 = vpop.f32.mrf.mxu0
  %v9314 = vadd.f32 0.0, %v9313
  %v9315 = vpop.f32.mrf.mxu0
  %9316 = vmatprep.mubr.bf16.mxu0 %v8907
  %9317 = vmatmul.mubr.bf16.gmra.mxu0 %v8811
  %v9318 = vpop.f32.mrf.mxu0
  %v9319 = vadd.f32 0.0, %v9318
  %v9320 = vpop.f32.mrf.mxu0
  %v9321 = vpop.f32.mrf.mxu0
  %v9322 = vadd.f32 0.0, %v9321
  %v9323 = vpop.f32.mrf.mxu0
  %9324 = vmatprep.mubr.bf16.mxu0 %v8908
  %9325 = vmatmul.mubr.bf16.gmra.mxu0 %v8812
  %v9326 = vpop.f32.mrf.mxu0
  %v9327 = vadd.f32 0.0, %v9326
  %v9328 = vpop.f32.mrf.mxu0
  %v9329 = vpop.f32.mrf.mxu0
  %v9330 = vadd.f32 0.0, %v9329
  %v9331 = vpop.f32.mrf.mxu0
  %9332 = vmatprep.mubr.bf16.mxu0 %v8909
  %9333 = vmatmul.mubr.bf16.gmra.mxu0 %v8813
  %v9334 = vpop.f32.mrf.mxu0
  %v9335 = vadd.f32 0.0, %v9334
  %v9336 = vpop.f32.mrf.mxu0
  %v9337 = vpop.f32.mrf.mxu0
  %v9338 = vadd.f32 0.0, %v9337
  %v9339 = vpop.f32.mrf.mxu0
  %9340 = vmatprep.mubr.bf16.mxu0 %v8910
  %9341 = vmatmul.mubr.bf16.gmra.mxu0 %v8814
  %v9342 = vpop.f32.mrf.mxu0
  %v9343 = vadd.f32 0.0, %v9342
  %v9344 = vpop.f32.mrf.mxu0
  %v9345 = vpop.f32.mrf.mxu0
  %v9346 = vadd.f32 0.0, %v9345
  %v9347 = vpop.f32.mrf.mxu0
  %9348 = vmatprep.mubr.bf16.mxu0 %v8911
  %9349 = vmatmul.mubr.bf16.gmra.mxu0 %v8815
  %v9350 = vpop.f32.mrf.mxu0
  %v9351 = vadd.f32 0.0, %v9350
  %v9352 = vpop.f32.mrf.mxu0
  %v9353 = vpop.f32.mrf.mxu0
  %v9354 = vadd.f32 0.0, %v9353
  %v9355 = vpop.f32.mrf.mxu0
  %9356 = vmatprep.mubr.bf16.mxu0 %v8912
  %9357 = vmatmul.mubr.bf16.gmra.mxu0 %v8816
  %v9358 = vpop.f32.mrf.mxu0
  %v9359 = vadd.f32 0.0, %v9358
  %v9360 = vpop.f32.mrf.mxu0
  %v9361 = vpop.f32.mrf.mxu0
  %v9362 = vadd.f32 0.0, %v9361
  %v9363 = vpop.f32.mrf.mxu0
  %9364 = vmatprep.mubr.bf16.mxu0 %v8913
  %9365 = vmatmul.mubr.bf16.gmra.mxu0 %v8817
  %v9366 = vpop.f32.mrf.mxu0
  %v9367 = vadd.f32 0.0, %v9366
  %v9368 = vpop.f32.mrf.mxu0
  %v9369 = vpop.f32.mrf.mxu0
  %v9370 = vadd.f32 0.0, %v9369
  %v9371 = vpop.f32.mrf.mxu0
  %9372 = vmatprep.mubr.bf16.mxu0 %v8914
  %9373 = vmatmul.mubr.bf16.gmra.mxu0 %v8818
  %v9374 = vpop.f32.mrf.mxu0
  %v9375 = vadd.f32 0.0, %v9374
  %v9376 = vpop.f32.mrf.mxu0
  %v9377 = vpop.f32.mrf.mxu0
  %v9378 = vadd.f32 0.0, %v9377
  %v9379 = vpop.f32.mrf.mxu0
  %9380 = vmatprep.mubr.bf16.mxu0 %v8915
  %9381 = vmatmul.mubr.bf16.gmra.mxu0 %v8819
  %v9382 = vpop.f32.mrf.mxu0
  %v9383 = vadd.f32 0.0, %v9382
  %v9384 = vpop.f32.mrf.mxu0
  %v9385 = vpop.f32.mrf.mxu0
  %v9386 = vadd.f32 0.0, %v9385
  %v9387 = vpop.f32.mrf.mxu0
  %9388 = vmatprep.mubr.bf16.mxu0 %v8916
  %9389 = vmatmul.mubr.bf16.gmra.mxu0 %v8820
  %v9390 = vpop.f32.mrf.mxu0
  %v9391 = vadd.f32 0.0, %v9390
  %v9392 = vpop.f32.mrf.mxu0
  %v9393 = vpop.f32.mrf.mxu0
  %v9394 = vadd.f32 0.0, %v9393
  %v9395 = vpop.f32.mrf.mxu0
  %9396 = vmatprep.mubr.bf16.mxu0 %v8917
  %9397 = vmatmul.mubr.bf16.gmra.mxu0 %v8821
  %v9398 = vpop.f32.mrf.mxu0
  %v9399 = vadd.f32 0.0, %v9398
  %v9400 = vpop.f32.mrf.mxu0
  %v9401 = vpop.f32.mrf.mxu0
  %v9402 = vadd.f32 0.0, %v9401
  %v9403 = vpop.f32.mrf.mxu0
  %9404 = vmatprep.mubr.bf16.mxu0 %v8918
  %9405 = vmatmul.mubr.bf16.gmra.mxu0 %v8822
  %v9406 = vpop.f32.mrf.mxu0
  %v9407 = vadd.f32 0.0, %v9406
  %v9408 = vpop.f32.mrf.mxu0
  %v9409 = vpop.f32.mrf.mxu0
  %v9410 = vadd.f32 0.0, %v9409
  %v9411 = vpop.f32.mrf.mxu0
  %9412 = vmatprep.mubr.bf16.mxu0 %v8919
  %9413 = vmatmul.mubr.bf16.gmra.mxu0 %v8823
  %v9414 = vpop.f32.mrf.mxu0
  %v9415 = vadd.f32 0.0, %v9414
  %v9416 = vpop.f32.mrf.mxu0
  %v9417 = vpop.f32.mrf.mxu0
  %v9418 = vadd.f32 0.0, %v9417
  %v9419 = vpop.f32.mrf.mxu0
  %9420 = vmatprep.mubr.bf16.mxu0 %v8920
  %9421 = vmatmul.mubr.bf16.gmra.mxu0 %v8824
  %v9422 = vpop.f32.mrf.mxu0
  %v9423 = vadd.f32 0.0, %v9422
  %v9424 = vpop.f32.mrf.mxu0
  %v9425 = vpop.f32.mrf.mxu0
  %v9426 = vadd.f32 0.0, %v9425
  %v9427 = vpop.f32.mrf.mxu0
  %9428 = vmatprep.mubr.bf16.mxu0 %v8921
  %9429 = vmatmul.mubr.bf16.gmra.mxu0 %v8825
  %v9430 = vpop.f32.mrf.mxu0
  %v9431 = vadd.f32 0.0, %v9430
  %v9432 = vpop.f32.mrf.mxu0
  %v9433 = vpop.f32.mrf.mxu0
  %v9434 = vadd.f32 0.0, %v9433
  %v9435 = vpop.f32.mrf.mxu0
  %9436 = vmatprep.mubr.bf16.mxu0 %v8922
  %9437 = vmatmul.mubr.bf16.gmra.mxu0 %v8826
  %v9438 = vpop.f32.mrf.mxu0
  %v9439 = vadd.f32 0.0, %v9438
  %v9440 = vpop.f32.mrf.mxu0
  %v9441 = vpop.f32.mrf.mxu0
  %v9442 = vadd.f32 0.0, %v9441
  %v9443 = vpop.f32.mrf.mxu0
  %9444 = vmatprep.mubr.bf16.mxu0 %v8923
  %9445 = vmatmul.mubr.bf16.gmra.mxu0 %v8827
  %v9446 = vpop.f32.mrf.mxu0
  %v9447 = vadd.f32 0.0, %v9446
  %v9448 = vpop.f32.mrf.mxu0
  %v9449 = vpop.f32.mrf.mxu0
  %v9450 = vadd.f32 0.0, %v9449
  %v9451 = vpop.f32.mrf.mxu0
  %9452 = vmatprep.mubr.bf16.mxu0 %v8924
  %9453 = vmatmul.mubr.bf16.gmra.mxu0 %v8828
  %v9454 = vpop.f32.mrf.mxu0
  %v9455 = vadd.f32 0.0, %v9454
  %v9456 = vpop.f32.mrf.mxu0
  %v9457 = vpop.f32.mrf.mxu0
  %v9458 = vadd.f32 0.0, %v9457
  %v9459 = vpop.f32.mrf.mxu0
  %9460 = vmatprep.mubr.bf16.mxu0 %v8925
  %9461 = vmatmul.mubr.bf16.gmra.mxu0 %v8829
  %v9462 = vpop.f32.mrf.mxu0
  %v9463 = vadd.f32 0.0, %v9462
  %v9464 = vpop.f32.mrf.mxu0
  %v9465 = vpop.f32.mrf.mxu0
  %v9466 = vadd.f32 0.0, %v9465
  %v9467 = vpop.f32.mrf.mxu0
  %9468 = vmatprep.mubr.bf16.mxu0 %v8926
  %9469 = vmatmul.mubr.bf16.gmra.mxu0 %v8830
  %v9470 = vpop.f32.mrf.mxu0
  %v9471 = vadd.f32 0.0, %v9470
  %v9472 = vpop.f32.mrf.mxu0
  %v9473 = vpop.f32.mrf.mxu0
  %v9474 = vadd.f32 0.0, %v9473
  %v9475 = vpop.f32.mrf.mxu0
  %9476 = vmatprep.mubr.bf16.mxu0 %v8927
  %9477 = vmatmul.mubr.bf16.gmra.mxu0 %v8831
  %v9478 = vpop.f32.mrf.mxu0
  %v9479 = vadd.f32 0.0, %v9478
  %v9480 = vpop.f32.mrf.mxu0
  %v9481 = vpop.f32.mrf.mxu0
  %v9482 = vadd.f32 0.0, %v9481
  %v9483 = vpop.f32.mrf.mxu0
  %9484 = vmatprep.mubr.bf16.mxu0 %v8928
  %9485 = vmatmul.mubr.bf16.gmra.mxu0 %v8832
  %v9486 = vpop.f32.mrf.mxu0
  %v9487 = vadd.f32 0.0, %v9486
  %v9488 = vpop.f32.mrf.mxu0
  %v9489 = vpop.f32.mrf.mxu0
  %v9490 = vadd.f32 0.0, %v9489
  %v9491 = vpop.f32.mrf.mxu0
  %9492 = vmatprep.mubr.bf16.mxu0 %v8929
  %9493 = vmatmul.mubr.bf16.gmra.mxu0 %v8833
  %v9494 = vpop.f32.mrf.mxu0
  %v9495 = vadd.f32 0.0, %v9494
  %v9496 = vpop.f32.mrf.mxu0
  %v9497 = vpop.f32.mrf.mxu0
  %v9498 = vadd.f32 0.0, %v9497
  %v9499 = vpop.f32.mrf.mxu0
  %9500 = vmatprep.mubr.bf16.mxu0 %v8930
  %9501 = vmatmul.mubr.bf16.gmra.mxu0 %v8834
  %v9502 = vpop.f32.mrf.mxu0
  %v9503 = vadd.f32 0.0, %v9502
  %v9504 = vpop.f32.mrf.mxu0
  %v9505 = vpop.f32.mrf.mxu0
  %v9506 = vadd.f32 0.0, %v9505
  %v9507 = vpop.f32.mrf.mxu0
  %9508 = vdwg.mxu0
  %9509 = vmatprep.subr.bf16.mxu0 0
  %9510 = vmatpush1.bf16.msra.mxu0 %v9195
  %9511 = vmatprep.subr.bf16.mxu0 0
  %9512 = vmatpush1.bf16.msra.mxu0 %v9194
  %9513 = vmatprep.subr.bf16.mxu0 0
  %9514 = vmatpush1.bf16.msra.mxu0 %v9193
  %9515 = vmatprep.subr.bf16.mxu0 0
  %9516 = vmatpush1.bf16.msra.mxu0 %v9192
  %9517 = vmatprep.subr.bf16.mxu0 0
  %9518 = vmatpush1.bf16.msra.mxu0 %v9191
  %9519 = vmatprep.subr.bf16.mxu0 0
  %9520 = vmatpush1.bf16.msra.mxu0 %v9190
  %9521 = vmatprep.subr.bf16.mxu0 0
  %9522 = vmatpush1.bf16.msra.mxu0 %v9189
  %9523 = vmatprep.subr.bf16.mxu0 0
  %9524 = vmatpush1.bf16.msra.mxu0 %v9188
  %9525 = vmatprep.subr.bf16.mxu0 0
  %9526 = vmatpush2.bf16.msra.mxu0 0
  %9527 = vmatprep.subr.bf16.mxu0 0
  %9528 = vmatpush2.bf16.msra.mxu0 0
  %9529 = vmatprep.subr.bf16.mxu0 0
  %9530 = vmatpush2.bf16.msra.mxu0 0
  %9531 = vmatprep.subr.bf16.mxu0 0
  %9532 = vmatpush2.bf16.msra.mxu0 0
  %9533 = vmatprep.subr.bf16.mxu0 0
  %9534 = vmatpush2.bf16.msra.mxu0 0
  %9535 = vmatprep.subr.bf16.mxu0 0
  %9536 = vmatpush2.bf16.msra.mxu0 0
  %9537 = vmatprep.subr.bf16.mxu0 0
  %9538 = vmatpush2.bf16.msra.mxu0 0
  %9539 = vmatprep.subr.bf16.mxu0 0
  %9540 = vmatpush2.bf16.msra.mxu0 0
  %9541 = vmatprep.mubr.bf16.mxu0 0
  %9542 = vmatmul.mubr.bf16.gmra.mxu0 %v8995
  %v9543 = vpop.f32.mrf.mxu0
  %v9544 = vadd.f32 %v9255, %v9543
  %v9545 = vpop.f32.mrf.mxu0
  %v9546 = vpop.f32.mrf.mxu0
  %v9547 = vadd.f32 %v9258, %v9546
  %v9548 = vpop.f32.mrf.mxu0
  %9549 = vmatprep.mubr.bf16.mxu0 0
  %9550 = vmatmul.mubr.bf16.gmra.mxu0 %v8996
  %v9551 = vpop.f32.mrf.mxu0
  %v9552 = vadd.f32 %v9263, %v9551
  %v9553 = vpop.f32.mrf.mxu0
  %v9554 = vpop.f32.mrf.mxu0
  %v9555 = vadd.f32 %v9266, %v9554
  %v9556 = vpop.f32.mrf.mxu0
  %9557 = vmatprep.mubr.bf16.mxu0 0
  %9558 = vmatmul.mubr.bf16.gmra.mxu0 %v8997
  %v9559 = vpop.f32.mrf.mxu0
  %v9560 = vadd.f32 %v9271, %v9559
  %v9561 = vpop.f32.mrf.mxu0
  %v9562 = vpop.f32.mrf.mxu0
  %v9563 = vadd.f32 %v9274, %v9562
  %v9564 = vpop.f32.mrf.mxu0
  %9565 = vmatprep.mubr.bf16.mxu0 0
  %9566 = vmatmul.mubr.bf16.gmra.mxu0 %v8998
  %v9567 = vpop.f32.mrf.mxu0
  %v9568 = vadd.f32 %v9279, %v9567
  %v9569 = vpop.f32.mrf.mxu0
  %v9570 = vpop.f32.mrf.mxu0
  %v9571 = vadd.f32 %v9282, %v9570
  %v9572 = vpop.f32.mrf.mxu0
  %9573 = vmatprep.mubr.bf16.mxu0 0
  %9574 = vmatmul.mubr.bf16.gmra.mxu0 %v8999
  %v9575 = vpop.f32.mrf.mxu0
  %v9576 = vadd.f32 %v9287, %v9575
  %v9577 = vpop.f32.mrf.mxu0
  %v9578 = vpop.f32.mrf.mxu0
  %v9579 = vadd.f32 %v9290, %v9578
  %v9580 = vpop.f32.mrf.mxu0
  %9581 = vmatprep.mubr.bf16.mxu0 0
  %9582 = vmatmul.mubr.bf16.gmra.mxu0 %v9000
  %v9583 = vpop.f32.mrf.mxu0
  %v9584 = vadd.f32 %v9295, %v9583
  %v9585 = vpop.f32.mrf.mxu0
  %v9586 = vpop.f32.mrf.mxu0
  %v9587 = vadd.f32 %v9298, %v9586
  %v9588 = vpop.f32.mrf.mxu0
  %9589 = vmatprep.mubr.bf16.mxu0 0
  %9590 = vmatmul.mubr.bf16.gmra.mxu0 %v9001
  %v9591 = vpop.f32.mrf.mxu0
  %v9592 = vadd.f32 %v9303, %v9591
  %v9593 = vpop.f32.mrf.mxu0
  %v9594 = vpop.f32.mrf.mxu0
  %v9595 = vadd.f32 %v9306, %v9594
  %v9596 = vpop.f32.mrf.mxu0
  %9597 = vmatprep.mubr.bf16.mxu0 0
  %9598 = vmatmul.mubr.bf16.gmra.mxu0 %v9002
  %v9599 = vpop.f32.mrf.mxu0
  %v9600 = vadd.f32 %v9311, %v9599
  %v9601 = vpop.f32.mrf.mxu0
  %v9602 = vpop.f32.mrf.mxu0
  %v9603 = vadd.f32 %v9314, %v9602
  %v9604 = vpop.f32.mrf.mxu0
  %9605 = vmatprep.mubr.bf16.mxu0 0
  %9606 = vmatmul.mubr.bf16.gmra.mxu0 %v9003
  %v9607 = vpop.f32.mrf.mxu0
  %v9608 = vadd.f32 %v9319, %v9607
  %v9609 = vpop.f32.mrf.mxu0
  %v9610 = vpop.f32.mrf.mxu0
  %v9611 = vadd.f32 %v9322, %v9610
  %v9612 = vpop.f32.mrf.mxu0
  %9613 = vmatprep.mubr.bf16.mxu0 0
  %9614 = vmatmul.mubr.bf16.gmra.mxu0 %v9004
  %v9615 = vpop.f32.mrf.mxu0
  %v9616 = vadd.f32 %v9327, %v9615
  %v9617 = vpop.f32.mrf.mxu0
  %v9618 = vpop.f32.mrf.mxu0
  %v9619 = vadd.f32 %v9330, %v9618
  %v9620 = vpop.f32.mrf.mxu0
  %9621 = vmatprep.mubr.bf16.mxu0 0
  %9622 = vmatmul.mubr.bf16.gmra.mxu0 %v9005
  %v9623 = vpop.f32.mrf.mxu0
  %v9624 = vadd.f32 %v9335, %v9623
  %v9625 = vpop.f32.mrf.mxu0
  %v9626 = vpop.f32.mrf.mxu0
  %v9627 = vadd.f32 %v9338, %v9626
  %v9628 = vpop.f32.mrf.mxu0
  %9629 = vmatprep.mubr.bf16.mxu0 0
  %9630 = vmatmul.mubr.bf16.gmra.mxu0 %v9006
  %v9631 = vpop.f32.mrf.mxu0
  %v9632 = vadd.f32 %v9343, %v9631
  %v9633 = vpop.f32.mrf.mxu0
  %v9634 = vpop.f32.mrf.mxu0
  %v9635 = vadd.f32 %v9346, %v9634
  %v9636 = vpop.f32.mrf.mxu0
  %9637 = vmatprep.mubr.bf16.mxu0 0
  %9638 = vmatmul.mubr.bf16.gmra.mxu0 %v9007
  %v9639 = vpop.f32.mrf.mxu0
  %v9640 = vadd.f32 %v9351, %v9639
  %v9641 = vpop.f32.mrf.mxu0
  %v9642 = vpop.f32.mrf.mxu0
  %v9643 = vadd.f32 %v9354, %v9642
  %v9644 = vpop.f32.mrf.mxu0
  %9645 = vmatprep.mubr.bf16.mxu0 0
  %9646 = vmatmul.mubr.bf16.gmra.mxu0 %v9008
  %v9647 = vpop.f32.mrf.mxu0
  %v9648 = vadd.f32 %v9359, %v9647
  %v9649 = vpop.f32.mrf.mxu0
  %v9650 = vpop.f32.mrf.mxu0
  %v9651 = vadd.f32 %v9362, %v9650
  %v9652 = vpop.f32.mrf.mxu0
  %9653 = vmatprep.mubr.bf16.mxu0 0
  %9654 = vmatmul.mubr.bf16.gmra.mxu0 %v9009
  %v9655 = vpop.f32.mrf.mxu0
  %v9656 = vadd.f32 %v9367, %v9655
  %v9657 = vpop.f32.mrf.mxu0
  %v9658 = vpop.f32.mrf.mxu0
  %v9659 = vadd.f32 %v9370, %v9658
  %v9660 = vpop.f32.mrf.mxu0
  %9661 = vmatprep.mubr.bf16.mxu0 0
  %9662 = vmatmul.mubr.bf16.gmra.mxu0 %v9010
  %v9663 = vpop.f32.mrf.mxu0
  %v9664 = vadd.f32 %v9375, %v9663
  %v9665 = vpop.f32.mrf.mxu0
  %v9666 = vpop.f32.mrf.mxu0
  %v9667 = vadd.f32 %v9378, %v9666
  %v9668 = vpop.f32.mrf.mxu0
  %9669 = vmatprep.mubr.bf16.mxu0 0
  %9670 = vmatmul.mubr.bf16.gmra.mxu0 %v9011
  %v9671 = vpop.f32.mrf.mxu0
  %v9672 = vadd.f32 %v9383, %v9671
  %v9673 = vpop.f32.mrf.mxu0
  %v9674 = vpop.f32.mrf.mxu0
  %v9675 = vadd.f32 %v9386, %v9674
  %v9676 = vpop.f32.mrf.mxu0
  %9677 = vmatprep.mubr.bf16.mxu0 0
  %9678 = vmatmul.mubr.bf16.gmra.mxu0 %v9012
  %v9679 = vpop.f32.mrf.mxu0
  %v9680 = vadd.f32 %v9391, %v9679
  %v9681 = vpop.f32.mrf.mxu0
  %v9682 = vpop.f32.mrf.mxu0
  %v9683 = vadd.f32 %v9394, %v9682
  %v9684 = vpop.f32.mrf.mxu0
  %9685 = vmatprep.mubr.bf16.mxu0 0
  %9686 = vmatmul.mubr.bf16.gmra.mxu0 %v9013
  %v9687 = vpop.f32.mrf.mxu0
  %v9688 = vadd.f32 %v9399, %v9687
  %v9689 = vpop.f32.mrf.mxu0
  %v9690 = vpop.f32.mrf.mxu0
  %v9691 = vadd.f32 %v9402, %v9690
  %v9692 = vpop.f32.mrf.mxu0
  %9693 = vmatprep.mubr.bf16.mxu0 0
  %9694 = vmatmul.mubr.bf16.gmra.mxu0 %v9014
  %v9695 = vpop.f32.mrf.mxu0
  %v9696 = vadd.f32 %v9407, %v9695
  %v9697 = vpop.f32.mrf.mxu0
  %v9698 = vpop.f32.mrf.mxu0
  %v9699 = vadd.f32 %v9410, %v9698
  %v9700 = vpop.f32.mrf.mxu0
  %9701 = vmatprep.mubr.bf16.mxu0 0
  %9702 = vmatmul.mubr.bf16.gmra.mxu0 %v9015
  %v9703 = vpop.f32.mrf.mxu0
  %v9704 = vadd.f32 %v9415, %v9703
  %v9705 = vpop.f32.mrf.mxu0
  %v9706 = vpop.f32.mrf.mxu0
  %v9707 = vadd.f32 %v9418, %v9706
  %v9708 = vpop.f32.mrf.mxu0
  %9709 = vmatprep.mubr.bf16.mxu0 0
  %9710 = vmatmul.mubr.bf16.gmra.mxu0 %v9016
  %v9711 = vpop.f32.mrf.mxu0
  %v9712 = vadd.f32 %v9423, %v9711
  %v9713 = vpop.f32.mrf.mxu0
  %v9714 = vpop.f32.mrf.mxu0
  %v9715 = vadd.f32 %v9426, %v9714
  %v9716 = vpop.f32.mrf.mxu0
  %9717 = vmatprep.mubr.bf16.mxu0 0
  %9718 = vmatmul.mubr.bf16.gmra.mxu0 %v9017
  %v9719 = vpop.f32.mrf.mxu0
  %v9720 = vadd.f32 %v9431, %v9719
  %v9721 = vpop.f32.mrf.mxu0
  %v9722 = vpop.f32.mrf.mxu0
  %v9723 = vadd.f32 %v9434, %v9722
  %v9724 = vpop.f32.mrf.mxu0
  %9725 = vmatprep.mubr.bf16.mxu0 0
  %9726 = vmatmul.mubr.bf16.gmra.mxu0 %v9018
  %v9727 = vpop.f32.mrf.mxu0
  %v9728 = vadd.f32 %v9439, %v9727
  %v9729 = vpop.f32.mrf.mxu0
  %v9730 = vpop.f32.mrf.mxu0
  %v9731 = vadd.f32 %v9442, %v9730
  %v9732 = vpop.f32.mrf.mxu0
  %9733 = vmatprep.mubr.bf16.mxu0 0
  %9734 = vmatmul.mubr.bf16.gmra.mxu0 %v9019
  %v9735 = vpop.f32.mrf.mxu0
  %v9736 = vadd.f32 %v9447, %v9735
  %v9737 = vpop.f32.mrf.mxu0
  %v9738 = vpop.f32.mrf.mxu0
  %v9739 = vadd.f32 %v9450, %v9738
  %v9740 = vpop.f32.mrf.mxu0
  %9741 = vmatprep.mubr.bf16.mxu0 0
  %9742 = vmatmul.mubr.bf16.gmra.mxu0 %v9020
  %v9743 = vpop.f32.mrf.mxu0
  %v9744 = vadd.f32 %v9455, %v9743
  %v9745 = vpop.f32.mrf.mxu0
  %v9746 = vpop.f32.mrf.mxu0
  %v9747 = vadd.f32 %v9458, %v9746
  %v9748 = vpop.f32.mrf.mxu0
  %9749 = vmatprep.mubr.bf16.mxu0 0
  %9750 = vmatmul.mubr.bf16.gmra.mxu0 %v9021
  %v9751 = vpop.f32.mrf.mxu0
  %v9752 = vadd.f32 %v9463, %v9751
  %v9753 = vpop.f32.mrf.mxu0
  %v9754 = vpop.f32.mrf.mxu0
  %v9755 = vadd.f32 %v9466, %v9754
  %v9756 = vpop.f32.mrf.mxu0
  %9757 = vmatprep.mubr.bf16.mxu0 0
  %9758 = vmatmul.mubr.bf16.gmra.mxu0 %v9022
  %v9759 = vpop.f32.mrf.mxu0
  %v9760 = vadd.f32 %v9471, %v9759
  %v9761 = vpop.f32.mrf.mxu0
  %v9762 = vpop.f32.mrf.mxu0
  %v9763 = vadd.f32 %v9474, %v9762
  %v9764 = vpop.f32.mrf.mxu0
  %9765 = vmatprep.mubr.bf16.mxu0 0
  %9766 = vmatmul.mubr.bf16.gmra.mxu0 %v9023
  %v9767 = vpop.f32.mrf.mxu0
  %v9768 = vadd.f32 %v9479, %v9767
  %v9769 = vpop.f32.mrf.mxu0
  %v9770 = vpop.f32.mrf.mxu0
  %v9771 = vadd.f32 %v9482, %v9770
  %v9772 = vpop.f32.mrf.mxu0
  %9773 = vmatprep.mubr.bf16.mxu0 0
  %9774 = vmatmul.mubr.bf16.gmra.mxu0 %v9024
  %v9775 = vpop.f32.mrf.mxu0
  %v9776 = vadd.f32 %v9487, %v9775
  %v9777 = vpop.f32.mrf.mxu0
  %v9778 = vpop.f32.mrf.mxu0
  %v9779 = vadd.f32 %v9490, %v9778
  %v9780 = vpop.f32.mrf.mxu0
  %9781 = vmatprep.mubr.bf16.mxu0 0
  %9782 = vmatmul.mubr.bf16.gmra.mxu0 %v9025
  %v9783 = vpop.f32.mrf.mxu0
  %v9784 = vadd.f32 %v9495, %v9783
  %v9785 = vpop.f32.mrf.mxu0
  %v9786 = vpop.f32.mrf.mxu0
  %v9787 = vadd.f32 %v9498, %v9786
  %v9788 = vpop.f32.mrf.mxu0
  %9789 = vmatprep.mubr.bf16.mxu0 0
  %9790 = vmatmul.mubr.bf16.gmra.mxu0 %v9026
  %v9791 = vpop.f32.mrf.mxu0
  %v9792 = vadd.f32 %v9503, %v9791
  %v9793 = vpop.f32.mrf.mxu0
  %v9794 = vpop.f32.mrf.mxu0
  %v9795 = vadd.f32 %v9506, %v9794
  %v9796 = vpop.f32.mrf.mxu0
  %9797 = vdwg.mxu0
  %v9798 = vadd.f32 %v8484, %v9544
  %v9799 = vadd.f32 %v8487, %v9547
  %v9800 = vadd.f32 %v8492, %v9552
  %v9801 = vadd.f32 %v8495, %v9555
  %v9802 = vadd.f32 %v8500, %v9560
  %v9803 = vadd.f32 %v8503, %v9563
  %v9804 = vadd.f32 %v8508, %v9568
  %v9805 = vadd.f32 %v8511, %v9571
  %v9806 = vadd.f32 %v8516, %v9576
  %v9807 = vadd.f32 %v8519, %v9579
  %v9808 = vadd.f32 %v8524, %v9584
  %v9809 = vadd.f32 %v8527, %v9587
  %v9810 = vadd.f32 %v8532, %v9592
  %v9811 = vadd.f32 %v8535, %v9595
  %v9812 = vadd.f32 %v8540, %v9600
  %v9813 = vadd.f32 %v8543, %v9603
  %v9814 = vadd.f32 %v8548, %v9608
  %v9815 = vadd.f32 %v8551, %v9611
  %v9816 = vadd.f32 %v8556, %v9616
  %v9817 = vadd.f32 %v8559, %v9619
  %v9818 = vadd.f32 %v8564, %v9624
  %v9819 = vadd.f32 %v8567, %v9627
  %v9820 = vadd.f32 %v8572, %v9632
  %v9821 = vadd.f32 %v8575, %v9635
  %v9822 = vadd.f32 %v8580, %v9640
  %v9823 = vadd.f32 %v8583, %v9643
  %v9824 = vadd.f32 %v8588, %v9648
  %v9825 = vadd.f32 %v8591, %v9651
  %v9826 = vadd.f32 %v8596, %v9656
  %v9827 = vadd.f32 %v8599, %v9659
  %v9828 = vadd.f32 %v8604, %v9664
  %v9829 = vadd.f32 %v8607, %v9667
  %v9830 = vadd.f32 %v8612, %v9672
  %v9831 = vadd.f32 %v8615, %v9675
  %v9832 = vadd.f32 %v8620, %v9680
  %v9833 = vadd.f32 %v8623, %v9683
  %v9834 = vadd.f32 %v8628, %v9688
  %v9835 = vadd.f32 %v8631, %v9691
  %v9836 = vadd.f32 %v8636, %v9696
  %v9837 = vadd.f32 %v8639, %v9699
  %v9838 = vadd.f32 %v8644, %v9704
  %v9839 = vadd.f32 %v8647, %v9707
  %v9840 = vadd.f32 %v8652, %v9712
  %v9841 = vadd.f32 %v8655, %v9715
  %v9842 = vadd.f32 %v8660, %v9720
  %v9843 = vadd.f32 %v8663, %v9723
  %v9844 = vadd.f32 %v8668, %v9728
  %v9845 = vadd.f32 %v8671, %v9731
  %v9846 = vadd.f32 %v8676, %v9736
  %v9847 = vadd.f32 %v8679, %v9739
  %v9848 = vadd.f32 %v8684, %v9744
  %v9849 = vadd.f32 %v8687, %v9747
  %v9850 = vadd.f32 %v8692, %v9752
  %v9851 = vadd.f32 %v8695, %v9755
  %v9852 = vadd.f32 %v8700, %v9760
  %v9853 = vadd.f32 %v8703, %v9763
  %v9854 = vadd.f32 %v8708, %v9768
  %v9855 = vadd.f32 %v8711, %v9771
  %v9856 = vadd.f32 %v8716, %v9776
  %v9857 = vadd.f32 %v8719, %v9779
  %v9858 = vadd.f32 %v8724, %v9784
  %v9859 = vadd.f32 %v8727, %v9787
  %v9860 = vadd.f32 %v8732, %v9792
  %v9861 = vadd.f32 %v8735, %v9795
  %v9862 = vadd.f32 %v9798, %v9799
  %v9863 = vadd.f32 %v9862, %v9800
  %v9864 = vadd.f32 %v9863, %v9801
  %v9865 = vadd.f32 %v9864, %v9802
  %v9866 = vadd.f32 %v9865, %v9803
  %v9867 = vadd.f32 %v9866, %v9804
  %v9868 = vadd.f32 %v9867, %v9805
  %v9869 = vadd.f32 %v9868, %v9806
  %v9870 = vadd.f32 %v9869, %v9807
  %v9871 = vadd.f32 %v9870, %v9808
  %v9872 = vadd.f32 %v9871, %v9809
  %v9873 = vadd.f32 %v9872, %v9810
  %v9874 = vadd.f32 %v9873, %v9811
  %v9875 = vadd.f32 %v9874, %v9812
  %v9876 = vadd.f32 %v9875, %v9813
  %v9877 = vadd.f32 %v9876, %v9814
  %v9878 = vadd.f32 %v9877, %v9815
  %v9879 = vadd.f32 %v9878, %v9816
  %v9880 = vadd.f32 %v9879, %v9817
  %v9881 = vadd.f32 %v9880, %v9818
  %v9882 = vadd.f32 %v9881, %v9819
  %v9883 = vadd.f32 %v9882, %v9820
  %v9884 = vadd.f32 %v9883, %v9821
  %v9885 = vadd.f32 %v9884, %v9822
  %v9886 = vadd.f32 %v9885, %v9823
  %v9887 = vadd.f32 %v9886, %v9824
  %v9888 = vadd.f32 %v9887, %v9825
  %v9889 = vadd.f32 %v9888, %v9826
  %v9890 = vadd.f32 %v9889, %v9827
  %v9891 = vadd.f32 %v9890, %v9828
  %v9892 = vadd.f32 %v9891, %v9829
  %v9893 = vadd.f32 %v9892, %v9830
  %v9894 = vadd.f32 %v9893, %v9831
  %v9895 = vadd.f32 %v9894, %v9832
  %v9896 = vadd.f32 %v9895, %v9833
  %v9897 = vadd.f32 %v9896, %v9834
  %v9898 = vadd.f32 %v9897, %v9835
  %v9899 = vadd.f32 %v9898, %v9836
  %v9900 = vadd.f32 %v9899, %v9837
  %v9901 = vadd.f32 %v9900, %v9838
  %v9902 = vadd.f32 %v9901, %v9839
  %v9903 = vadd.f32 %v9902, %v9840
  %v9904 = vadd.f32 %v9903, %v9841
  %v9905 = vadd.f32 %v9904, %v9842
  %v9906 = vadd.f32 %v9905, %v9843
  %v9907 = vadd.f32 %v9906, %v9844
  %v9908 = vadd.f32 %v9907, %v9845
  %v9909 = vadd.f32 %v9908, %v9846
  %v9910 = vadd.f32 %v9909, %v9847
  %v9911 = vadd.f32 %v9910, %v9848
  %v9912 = vadd.f32 %v9911, %v9849
  %v9913 = vadd.f32 %v9912, %v9850
  %v9914 = vadd.f32 %v9913, %v9851
  %v9915 = vadd.f32 %v9914, %v9852
  %v9916 = vadd.f32 %v9915, %v9853
  %v9917 = vadd.f32 %v9916, %v9854
  %v9918 = vadd.f32 %v9917, %v9855
  %v9919 = vadd.f32 %v9918, %v9856
  %v9920 = vadd.f32 %v9919, %v9857
  %v9921 = vadd.f32 %v9920, %v9858
  %v9922 = vadd.f32 %v9921, %v9859
  %v9923 = vadd.f32 %v9922, %v9860
  %v9924 = vadd.f32 %v9923, %v9861
  %v9925 = vrot.slane %v9924, 4
  %v9926 = vadd.f32 %v9924, %v9925
  %v9927 = vrot.slane %v9926, 2
  %v9928 = vadd.f32 %v9926, %v9927
  %v9929 = vrot.slane %v9928, 1
  %v9930 = vadd.f32 %v9928, %v9929
  %v9931 = vmul.f32 %v9798, %v9798
  %v9932 = vmul.f32 %v9799, %v9799
  %v9933 = vmul.f32 %v9800, %v9800
  %v9934 = vmul.f32 %v9801, %v9801
  %v9935 = vmul.f32 %v9802, %v9802
  %v9936 = vmul.f32 %v9803, %v9803
  %v9937 = vmul.f32 %v9804, %v9804
  %v9938 = vmul.f32 %v9805, %v9805
  %v9939 = vmul.f32 %v9806, %v9806
  %v9940 = vmul.f32 %v9807, %v9807
  %v9941 = vmul.f32 %v9808, %v9808
  %v9942 = vmul.f32 %v9809, %v9809
  %v9943 = vmul.f32 %v9810, %v9810
  %v9944 = vmul.f32 %v9811, %v9811
  %v9945 = vmul.f32 %v9812, %v9812
  %v9946 = vmul.f32 %v9813, %v9813
  %v9947 = vmul.f32 %v9814, %v9814
  %v9948 = vmul.f32 %v9815, %v9815
  %v9949 = vmul.f32 %v9816, %v9816
  %v9950 = vmul.f32 %v9817, %v9817
  %v9951 = vmul.f32 %v9818, %v9818
  %v9952 = vmul.f32 %v9819, %v9819
  %v9953 = vmul.f32 %v9820, %v9820
  %v9954 = vmul.f32 %v9821, %v9821
  %v9955 = vmul.f32 %v9822, %v9822
  %v9956 = vmul.f32 %v9823, %v9823
  %v9957 = vmul.f32 %v9824, %v9824
  %v9958 = vmul.f32 %v9825, %v9825
  %v9959 = vmul.f32 %v9826, %v9826
  %v9960 = vmul.f32 %v9827, %v9827
  %v9961 = vmul.f32 %v9828, %v9828
  %v9962 = vmul.f32 %v9829, %v9829
  %v9963 = vmul.f32 %v9830, %v9830
  %v9964 = vmul.f32 %v9831, %v9831
  %v9965 = vmul.f32 %v9832, %v9832
  %v9966 = vmul.f32 %v9833, %v9833
  %v9967 = vmul.f32 %v9834, %v9834
  %v9968 = vmul.f32 %v9835, %v9835
  %v9969 = vmul.f32 %v9836, %v9836
  %v9970 = vmul.f32 %v9837, %v9837
  %v9971 = vmul.f32 %v9838, %v9838
  %v9972 = vmul.f32 %v9839, %v9839
  %v9973 = vmul.f32 %v9840, %v9840
  %v9974 = vmul.f32 %v9841, %v9841
  %v9975 = vmul.f32 %v9842, %v9842
  %v9976 = vmul.f32 %v9843, %v9843
  %v9977 = vmul.f32 %v9844, %v9844
  %v9978 = vmul.f32 %v9845, %v9845
  %v9979 = vmul.f32 %v9846, %v9846
  %v9980 = vmul.f32 %v9847, %v9847
  %v9981 = vmul.f32 %v9848, %v9848
  %v9982 = vmul.f32 %v9849, %v9849
  %v9983 = vmul.f32 %v9850, %v9850
  %v9984 = vmul.f32 %v9851, %v9851
  %v9985 = vmul.f32 %v9852, %v9852
  %v9986 = vmul.f32 %v9853, %v9853
  %v9987 = vmul.f32 %v9854, %v9854
  %v9988 = vmul.f32 %v9855, %v9855
  %v9989 = vmul.f32 %v9856, %v9856
  %v9990 = vmul.f32 %v9857, %v9857
  %v9991 = vmul.f32 %v9858, %v9858
  %v9992 = vmul.f32 %v9859, %v9859
  %v9993 = vmul.f32 %v9860, %v9860
  %v9994 = vmul.f32 %v9861, %v9861
  %v9995 = vadd.f32 %v9931, %v9932
  %v9996 = vadd.f32 %v9995, %v9933
  %v9997 = vadd.f32 %v9996, %v9934
  %v9998 = vadd.f32 %v9997, %v9935
  %v9999 = vadd.f32 %v9998, %v9936
  %v10000 = vadd.f32 %v9999, %v9937
  %v10001 = vadd.f32 %v10000, %v9938
  %v10002 = vadd.f32 %v10001, %v9939
  %v10003 = vadd.f32 %v10002, %v9940
  %v10004 = vadd.f32 %v10003, %v9941
  %v10005 = vadd.f32 %v10004, %v9942
  %v10006 = vadd.f32 %v10005, %v9943
  %v10007 = vadd.f32 %v10006, %v9944
  %v10008 = vadd.f32 %v10007, %v9945
  %v10009 = vadd.f32 %v10008, %v9946
  %v10010 = vadd.f32 %v10009, %v9947
  %v10011 = vadd.f32 %v10010, %v9948
  %v10012 = vadd.f32 %v10011, %v9949
  %v10013 = vadd.f32 %v10012, %v9950
  %v10014 = vadd.f32 %v10013, %v9951
  %v10015 = vadd.f32 %v10014, %v9952
  %v10016 = vadd.f32 %v10015, %v9953
  %v10017 = vadd.f32 %v10016, %v9954
  %v10018 = vadd.f32 %v10017, %v9955
  %v10019 = vadd.f32 %v10018, %v9956
  %v10020 = vadd.f32 %v10019, %v9957
  %v10021 = vadd.f32 %v10020, %v9958
  %v10022 = vadd.f32 %v10021, %v9959
  %v10023 = vadd.f32 %v10022, %v9960
  %v10024 = vadd.f32 %v10023, %v9961
  %v10025 = vadd.f32 %v10024, %v9962
  %v10026 = vadd.f32 %v10025, %v9963
  %v10027 = vadd.f32 %v10026, %v9964
  %v10028 = vadd.f32 %v10027, %v9965
  %v10029 = vadd.f32 %v10028, %v9966
  %v10030 = vadd.f32 %v10029, %v9967
  %v10031 = vadd.f32 %v10030, %v9968
  %v10032 = vadd.f32 %v10031, %v9969
  %v10033 = vadd.f32 %v10032, %v9970
  %v10034 = vadd.f32 %v10033, %v9971
  %v10035 = vadd.f32 %v10034, %v9972
  %v10036 = vadd.f32 %v10035, %v9973
  %v10037 = vadd.f32 %v10036, %v9974
  %v10038 = vadd.f32 %v10037, %v9975
  %v10039 = vadd.f32 %v10038, %v9976
  %v10040 = vadd.f32 %v10039, %v9977
  %v10041 = vadd.f32 %v10040, %v9978
  %v10042 = vadd.f32 %v10041, %v9979
  %v10043 = vadd.f32 %v10042, %v9980
  %v10044 = vadd.f32 %v10043, %v9981
  %v10045 = vadd.f32 %v10044, %v9982
  %v10046 = vadd.f32 %v10045, %v9983
  %v10047 = vadd.f32 %v10046, %v9984
  %v10048 = vadd.f32 %v10047, %v9985
  %v10049 = vadd.f32 %v10048, %v9986
  %v10050 = vadd.f32 %v10049, %v9987
  %v10051 = vadd.f32 %v10050, %v9988
  %v10052 = vadd.f32 %v10051, %v9989
  %v10053 = vadd.f32 %v10052, %v9990
  %v10054 = vadd.f32 %v10053, %v9991
  %v10055 = vadd.f32 %v10054, %v9992
  %v10056 = vadd.f32 %v10055, %v9993
  %v10057 = vadd.f32 %v10056, %v9994
  %v10058 = vrot.slane %v10057, 4
  %v10059 = vadd.f32 %v10057, %v10058
  %v10060 = vrot.slane %v10059, 2
  %v10061 = vadd.f32 %v10059, %v10060
  %v10062 = vrot.slane %v10061, 1
  %v10063 = vadd.f32 %v10061, %v10062
  %v10064 = vmul.f32 %v9930, 0.001953125
  %v10065 = vmul.f32 %v10063, 0.001953125
  %v10066 = vmul.f32 %v10064, %v10064
  %v10067 = vsub.f32 %v10065, %v10066
  %v10068 = vmax.f32 %v10067, 0.0
  %v10069 = vld [vmem:[%s6] sm:$0x1]
  %v10070 = vadd.f32 %v10068, 1e-05
  %v10071 = vrsqrt.pop %v10070
  %v10072 = vmul.f32 %v10069, %v10071
  %v10073 = vld [vmem:[%s7] sm:$0x1]
  %v10074 = vmul.f32 %v10064, %v10072
  %v10075 = vsub.f32 %v10073, %v10074
  %v10077 = vlaneseq
  %v10078 = vshrl.u32 %v10077, 7
  %v10079 = vsub.s32 0, %v10078
  %v10080 = vrot.slane %v10072, %v10079
  %v10082 = vmul.f32 %v9798, %v10080
  %v10083 = vmul.f32 %v9799, %v10080
  %v10084 = vmul.f32 %v9800, %v10080
  %v10085 = vmul.f32 %v9801, %v10080
  %v10086 = vmul.f32 %v9802, %v10080
  %v10087 = vmul.f32 %v9803, %v10080
  %v10088 = vmul.f32 %v9804, %v10080
  %v10089 = vmul.f32 %v9805, %v10080
  %v10090 = vmul.f32 %v9806, %v10080
  %v10091 = vmul.f32 %v9807, %v10080
  %v10092 = vmul.f32 %v9808, %v10080
  %v10093 = vmul.f32 %v9809, %v10080
  %v10094 = vmul.f32 %v9810, %v10080
  %v10095 = vmul.f32 %v9811, %v10080
  %v10096 = vmul.f32 %v9812, %v10080
  %v10097 = vmul.f32 %v9813, %v10080
  %v10098 = vmul.f32 %v9814, %v10080
  %v10099 = vmul.f32 %v9815, %v10080
  %v10100 = vmul.f32 %v9816, %v10080
  %v10101 = vmul.f32 %v9817, %v10080
  %v10102 = vmul.f32 %v9818, %v10080
  %v10103 = vmul.f32 %v9819, %v10080
  %v10104 = vmul.f32 %v9820, %v10080
  %v10105 = vmul.f32 %v9821, %v10080
  %v10106 = vmul.f32 %v9822, %v10080
  %v10107 = vmul.f32 %v9823, %v10080
  %v10108 = vmul.f32 %v9824, %v10080
  %v10109 = vmul.f32 %v9825, %v10080
  %v10110 = vmul.f32 %v9826, %v10080
  %v10111 = vmul.f32 %v9827, %v10080
  %v10112 = vmul.f32 %v9828, %v10080
  %v10113 = vmul.f32 %v9829, %v10080
  %v10114 = vmul.f32 %v9830, %v10080
  %v10115 = vmul.f32 %v9831, %v10080
  %v10116 = vmul.f32 %v9832, %v10080
  %v10117 = vmul.f32 %v9833, %v10080
  %v10118 = vmul.f32 %v9834, %v10080
  %v10119 = vmul.f32 %v9835, %v10080
  %v10120 = vmul.f32 %v9836, %v10080
  %v10121 = vmul.f32 %v9837, %v10080
  %v10122 = vmul.f32 %v9838, %v10080
  %v10123 = vmul.f32 %v9839, %v10080
  %v10124 = vmul.f32 %v9840, %v10080
  %v10125 = vmul.f32 %v9841, %v10080
  %v10126 = vmul.f32 %v9842, %v10080
  %v10127 = vmul.f32 %v9843, %v10080
  %v10128 = vmul.f32 %v9844, %v10080
  %v10129 = vmul.f32 %v9845, %v10080
  %v10130 = vmul.f32 %v9846, %v10080
  %v10131 = vmul.f32 %v9847, %v10080
  %v10132 = vmul.f32 %v9848, %v10080
  %v10133 = vmul.f32 %v9849, %v10080
  %v10134 = vmul.f32 %v9850, %v10080
  %v10135 = vmul.f32 %v9851, %v10080
  %v10136 = vmul.f32 %v9852, %v10080
  %v10137 = vmul.f32 %v9853, %v10080
  %v10138 = vmul.f32 %v9854, %v10080
  %v10139 = vmul.f32 %v9855, %v10080
  %v10140 = vmul.f32 %v9856, %v10080
  %v10141 = vmul.f32 %v9857, %v10080
  %v10142 = vmul.f32 %v9858, %v10080
  %v10143 = vmul.f32 %v9859, %v10080
  %v10144 = vmul.f32 %v9860, %v10080
  %v10145 = vmul.f32 %v9861, %v10080
  %v10147 = vlaneseq
  %v10148 = vshrl.u32 %v10147, 7
  %v10149 = vsub.s32 0, %v10148
  %v10150 = vrot.slane %v10075, %v10149
  %v10152 = vadd.f32 %v10082, %v10150
  %v10153 = vadd.f32 %v10083, %v10150
  %v10154 = vadd.f32 %v10084, %v10150
  %v10155 = vadd.f32 %v10085, %v10150
  %v10156 = vadd.f32 %v10086, %v10150
  %v10157 = vadd.f32 %v10087, %v10150
  %v10158 = vadd.f32 %v10088, %v10150
  %v10159 = vadd.f32 %v10089, %v10150
  %v10160 = vadd.f32 %v10090, %v10150
  %v10161 = vadd.f32 %v10091, %v10150
  %v10162 = vadd.f32 %v10092, %v10150
  %v10163 = vadd.f32 %v10093, %v10150
  %v10164 = vadd.f32 %v10094, %v10150
  %v10165 = vadd.f32 %v10095, %v10150
  %v10166 = vadd.f32 %v10096, %v10150
  %v10167 = vadd.f32 %v10097, %v10150
  %v10168 = vadd.f32 %v10098, %v10150
  %v10169 = vadd.f32 %v10099, %v10150
  %v10170 = vadd.f32 %v10100, %v10150
  %v10171 = vadd.f32 %v10101, %v10150
  %v10172 = vadd.f32 %v10102, %v10150
  %v10173 = vadd.f32 %v10103, %v10150
  %v10174 = vadd.f32 %v10104, %v10150
  %v10175 = vadd.f32 %v10105, %v10150
  %v10176 = vadd.f32 %v10106, %v10150
  %v10177 = vadd.f32 %v10107, %v10150
  %v10178 = vadd.f32 %v10108, %v10150
  %v10179 = vadd.f32 %v10109, %v10150
  %v10180 = vadd.f32 %v10110, %v10150
  %v10181 = vadd.f32 %v10111, %v10150
  %v10182 = vadd.f32 %v10112, %v10150
  %v10183 = vadd.f32 %v10113, %v10150
  %v10184 = vadd.f32 %v10114, %v10150
  %v10185 = vadd.f32 %v10115, %v10150
  %v10186 = vadd.f32 %v10116, %v10150
  %v10187 = vadd.f32 %v10117, %v10150
  %v10188 = vadd.f32 %v10118, %v10150
  %v10189 = vadd.f32 %v10119, %v10150
  %v10190 = vadd.f32 %v10120, %v10150
  %v10191 = vadd.f32 %v10121, %v10150
  %v10192 = vadd.f32 %v10122, %v10150
  %v10193 = vadd.f32 %v10123, %v10150
  %v10194 = vadd.f32 %v10124, %v10150
  %v10195 = vadd.f32 %v10125, %v10150
  %v10196 = vadd.f32 %v10126, %v10150
  %v10197 = vadd.f32 %v10127, %v10150
  %v10198 = vadd.f32 %v10128, %v10150
  %v10199 = vadd.f32 %v10129, %v10150
  %v10200 = vadd.f32 %v10130, %v10150
  %v10201 = vadd.f32 %v10131, %v10150
  %v10202 = vadd.f32 %v10132, %v10150
  %v10203 = vadd.f32 %v10133, %v10150
  %v10204 = vadd.f32 %v10134, %v10150
  %v10205 = vadd.f32 %v10135, %v10150
  %v10206 = vadd.f32 %v10136, %v10150
  %v10207 = vadd.f32 %v10137, %v10150
  %v10208 = vadd.f32 %v10138, %v10150
  %v10209 = vadd.f32 %v10139, %v10150
  %v10210 = vadd.f32 %v10140, %v10150
  %v10211 = vadd.f32 %v10141, %v10150
  %v10212 = vadd.f32 %v10142, %v10150
  %v10213 = vadd.f32 %v10143, %v10150
  %v10214 = vadd.f32 %v10144, %v10150
  %v10215 = vadd.f32 %v10145, %v10150
  %v10216 = vld [vmem:[%s3356 + $0x2] sm:$0xff]
  %v10217 = vld [vmem:[%s3356 + $0xa] sm:$0xff]
  %v10218 = vld [vmem:[%s3356 + $0x22] sm:$0xff]
  %v10219 = vld [vmem:[%s3356 + $0x2a] sm:$0xff]
  %v10220 = vld [vmem:[%s3356 + $0x42] sm:$0xff]
  %v10221 = vld [vmem:[%s3356 + $0x4a] sm:$0xff]
  %v10222 = vld [vmem:[%s3356 + $0x62] sm:$0xff]
  %v10223 = vld [vmem:[%s3356 + $0x6a] sm:$0xff]
  %v10224 = vld [vmem:[%s3356 + $0x82] sm:$0xff]
  %v10225 = vld [vmem:[%s3356 + $0x8a] sm:$0xff]
  %v10226 = vld [vmem:[%s3356 + $0xa2] sm:$0xff]
  %v10227 = vld [vmem:[%s3356 + $0xaa] sm:$0xff]
  %v10228 = vld [vmem:[%s3356 + $0xc2] sm:$0xff]
  %v10229 = vld [vmem:[%s3356 + $0xca] sm:$0xff]
  %v10230 = vld [vmem:[%s3356 + $0xe2] sm:$0xff]
  %v10231 = vld [vmem:[%s3356 + $0xea] sm:$0xff]
  %v10232 = vld [vmem:[%s3356 + $0x102] sm:$0xff]
  %v10233 = vld [vmem:[%s3356 + $0x10a] sm:$0xff]
  %v10234 = vld [vmem:[%s3356 + $0x122] sm:$0xff]
  %v10235 = vld [vmem:[%s3356 + $0x12a] sm:$0xff]
  %v10236 = vld [vmem:[%s3356 + $0x142] sm:$0xff]
  %v10237 = vld [vmem:[%s3356 + $0x14a] sm:$0xff]
  %v10238 = vld [vmem:[%s3356 + $0x162] sm:$0xff]
  %v10239 = vld [vmem:[%s3356 + $0x16a] sm:$0xff]
  %v10240 = vld [vmem:[%s3356 + $0x182] sm:$0xff]
  %v10241 = vld [vmem:[%s3356 + $0x18a] sm:$0xff]
  %v10242 = vld [vmem:[%s3356 + $0x1a2] sm:$0xff]
  %v10243 = vld [vmem:[%s3356 + $0x1aa] sm:$0xff]
  %v10244 = vld [vmem:[%s3356 + $0x1c2] sm:$0xff]
  %v10245 = vld [vmem:[%s3356 + $0x1ca] sm:$0xff]
  %v10246 = vld [vmem:[%s3356 + $0x1e2] sm:$0xff]
  %v10247 = vld [vmem:[%s3356 + $0x1ea] sm:$0xff]
  %v10248 = vld [vmem:[%s3356 + $0x282] sm:$0xff]
  %v10249 = vld [vmem:[%s3356 + $0x28a] sm:$0xff]
  %v10250 = vld [vmem:[%s3356 + $0x2a2] sm:$0xff]
  %v10251 = vld [vmem:[%s3356 + $0x2aa] sm:$0xff]
  %v10252 = vld [vmem:[%s3356 + $0x2c2] sm:$0xff]
  %v10253 = vld [vmem:[%s3356 + $0x2ca] sm:$0xff]
  %v10254 = vld [vmem:[%s3356 + $0x2e2] sm:$0xff]
  %v10255 = vld [vmem:[%s3356 + $0x2ea] sm:$0xff]
  %v10256 = vld [vmem:[%s3356 + $0x302] sm:$0xff]
  %v10257 = vld [vmem:[%s3356 + $0x30a] sm:$0xff]
  %v10258 = vld [vmem:[%s3356 + $0x322] sm:$0xff]
  %v10259 = vld [vmem:[%s3356 + $0x32a] sm:$0xff]
  %v10260 = vld [vmem:[%s3356 + $0x342] sm:$0xff]
  %v10261 = vld [vmem:[%s3356 + $0x34a] sm:$0xff]
  %v10262 = vld [vmem:[%s3356 + $0x362] sm:$0xff]
  %v10263 = vld [vmem:[%s3356 + $0x36a] sm:$0xff]
  %v10264 = vld [vmem:[%s3356 + $0x382] sm:$0xff]
  %v10265 = vld [vmem:[%s3356 + $0x38a] sm:$0xff]
  %v10266 = vld [vmem:[%s3356 + $0x3a2] sm:$0xff]
  %v10267 = vld [vmem:[%s3356 + $0x3aa] sm:$0xff]
  %v10268 = vld [vmem:[%s3356 + $0x3c2] sm:$0xff]
  %v10269 = vld [vmem:[%s3356 + $0x3ca] sm:$0xff]
  %v10270 = vld [vmem:[%s3356 + $0x3e2] sm:$0xff]
  %v10271 = vld [vmem:[%s3356 + $0x3ea] sm:$0xff]
  %v10272 = vld [vmem:[%s3356 + $0x402] sm:$0xff]
  %v10273 = vld [vmem:[%s3356 + $0x40a] sm:$0xff]
  %v10274 = vld [vmem:[%s3356 + $0x422] sm:$0xff]
  %v10275 = vld [vmem:[%s3356 + $0x42a] sm:$0xff]
  %v10276 = vld [vmem:[%s3356 + $0x442] sm:$0xff]
  %v10277 = vld [vmem:[%s3356 + $0x44a] sm:$0xff]
  %v10278 = vld [vmem:[%s3356 + $0x462] sm:$0xff]
  %v10279 = vld [vmem:[%s3356 + $0x46a] sm:$0xff]
  %v10280 = vadd.f32 %v10152, %v10216
  %v10281 = vadd.f32 %v10153, %v10217
  %v10282 = vadd.f32 %v10154, %v10218
  %v10283 = vadd.f32 %v10155, %v10219
  %v10284 = vadd.f32 %v10156, %v10220
  %v10285 = vadd.f32 %v10157, %v10221
  %v10286 = vadd.f32 %v10158, %v10222
  %v10287 = vadd.f32 %v10159, %v10223
  %v10288 = vadd.f32 %v10160, %v10224
  %v10289 = vadd.f32 %v10161, %v10225
  %v10290 = vadd.f32 %v10162, %v10226
  %v10291 = vadd.f32 %v10163, %v10227
  %v10292 = vadd.f32 %v10164, %v10228
  %v10293 = vadd.f32 %v10165, %v10229
  %v10294 = vadd.f32 %v10166, %v10230
  %v10295 = vadd.f32 %v10167, %v10231
  %v10296 = vadd.f32 %v10168, %v10232
  %v10297 = vadd.f32 %v10169, %v10233
  %v10298 = vadd.f32 %v10170, %v10234
  %v10299 = vadd.f32 %v10171, %v10235
  %v10300 = vadd.f32 %v10172, %v10236
  %v10301 = vadd.f32 %v10173, %v10237
  %v10302 = vadd.f32 %v10174, %v10238
  %v10303 = vadd.f32 %v10175, %v10239
  %v10304 = vadd.f32 %v10176, %v10240
  %v10305 = vadd.f32 %v10177, %v10241
  %v10306 = vadd.f32 %v10178, %v10242
  %v10307 = vadd.f32 %v10179, %v10243
  %v10308 = vadd.f32 %v10180, %v10244
  %v10309 = vadd.f32 %v10181, %v10245
  %v10310 = vadd.f32 %v10182, %v10246
  %v10311 = vadd.f32 %v10183, %v10247
  %v10312 = vadd.f32 %v10184, %v10248
  %v10313 = vadd.f32 %v10185, %v10249
  %v10314 = vadd.f32 %v10186, %v10250
  %v10315 = vadd.f32 %v10187, %v10251
  %v10316 = vadd.f32 %v10188, %v10252
  %v10317 = vadd.f32 %v10189, %v10253
  %v10318 = vadd.f32 %v10190, %v10254
  %v10319 = vadd.f32 %v10191, %v10255
  %v10320 = vadd.f32 %v10192, %v10256
  %v10321 = vadd.f32 %v10193, %v10257
  %v10322 = vadd.f32 %v10194, %v10258
  %v10323 = vadd.f32 %v10195, %v10259
  %v10324 = vadd.f32 %v10196, %v10260
  %v10325 = vadd.f32 %v10197, %v10261
  %v10326 = vadd.f32 %v10198, %v10262
  %v10327 = vadd.f32 %v10199, %v10263
  %v10328 = vadd.f32 %v10200, %v10264
  %v10329 = vadd.f32 %v10201, %v10265
  %v10330 = vadd.f32 %v10202, %v10266
  %v10331 = vadd.f32 %v10203, %v10267
  %v10332 = vadd.f32 %v10204, %v10268
  %v10333 = vadd.f32 %v10205, %v10269
  %v10334 = vadd.f32 %v10206, %v10270
  %v10335 = vadd.f32 %v10207, %v10271
  %v10336 = vadd.f32 %v10208, %v10272
  %v10337 = vadd.f32 %v10209, %v10273
  %v10338 = vadd.f32 %v10210, %v10274
  %v10339 = vadd.f32 %v10211, %v10275
  %v10340 = vadd.f32 %v10212, %v10276
  %v10341 = vadd.f32 %v10213, %v10277
  %v10342 = vadd.f32 %v10214, %v10278
  %v10343 = vadd.f32 %v10215, %v10279
  %v10344 = vmax.f32 %v10280, 0.0
  %v10345 = vmax.f32 %v10281, 0.0
  %v10346 = vmax.f32 %v10282, 0.0
  %v10347 = vmax.f32 %v10283, 0.0
  %v10348 = vmax.f32 %v10284, 0.0
  %v10349 = vmax.f32 %v10285, 0.0
  %v10350 = vmax.f32 %v10286, 0.0
  %v10351 = vmax.f32 %v10287, 0.0
  %v10352 = vmax.f32 %v10288, 0.0
  %v10353 = vmax.f32 %v10289, 0.0
  %v10354 = vmax.f32 %v10290, 0.0
  %v10355 = vmax.f32 %v10291, 0.0
  %v10356 = vmax.f32 %v10292, 0.0
  %v10357 = vmax.f32 %v10293, 0.0
  %v10358 = vmax.f32 %v10294, 0.0
  %v10359 = vmax.f32 %v10295, 0.0
  %v10360 = vmax.f32 %v10296, 0.0
  %v10361 = vmax.f32 %v10297, 0.0
  %v10362 = vmax.f32 %v10298, 0.0
  %v10363 = vmax.f32 %v10299, 0.0
  %v10364 = vmax.f32 %v10300, 0.0
  %v10365 = vmax.f32 %v10301, 0.0
  %v10366 = vmax.f32 %v10302, 0.0
  %v10367 = vmax.f32 %v10303, 0.0
  %v10368 = vmax.f32 %v10304, 0.0
  %v10369 = vmax.f32 %v10305, 0.0
  %v10370 = vmax.f32 %v10306, 0.0
  %v10371 = vmax.f32 %v10307, 0.0
  %v10372 = vmax.f32 %v10308, 0.0
  %v10373 = vmax.f32 %v10309, 0.0
  %v10374 = vmax.f32 %v10310, 0.0
  %v10375 = vmax.f32 %v10311, 0.0
  %v10376 = vmax.f32 %v10312, 0.0
  %v10377 = vmax.f32 %v10313, 0.0
  %v10378 = vmax.f32 %v10314, 0.0
  %v10379 = vmax.f32 %v10315, 0.0
  %v10380 = vmax.f32 %v10316, 0.0
  %v10381 = vmax.f32 %v10317, 0.0
  %v10382 = vmax.f32 %v10318, 0.0
  %v10383 = vmax.f32 %v10319, 0.0
  %v10384 = vmax.f32 %v10320, 0.0
  %v10385 = vmax.f32 %v10321, 0.0
  %v10386 = vmax.f32 %v10322, 0.0
  %v10387 = vmax.f32 %v10323, 0.0
  %v10388 = vmax.f32 %v10324, 0.0
  %v10389 = vmax.f32 %v10325, 0.0
  %v10390 = vmax.f32 %v10326, 0.0
  %v10391 = vmax.f32 %v10327, 0.0
  %v10392 = vmax.f32 %v10328, 0.0
  %v10393 = vmax.f32 %v10329, 0.0
  %v10394 = vmax.f32 %v10330, 0.0
  %v10395 = vmax.f32 %v10331, 0.0
  %v10396 = vmax.f32 %v10332, 0.0
  %v10397 = vmax.f32 %v10333, 0.0
  %v10398 = vmax.f32 %v10334, 0.0
  %v10399 = vmax.f32 %v10335, 0.0
  %v10400 = vmax.f32 %v10336, 0.0
  %v10401 = vmax.f32 %v10337, 0.0
  %v10402 = vmax.f32 %v10338, 0.0
  %v10403 = vmax.f32 %v10339, 0.0
  %v10404 = vmax.f32 %v10340, 0.0
  %v10405 = vmax.f32 %v10341, 0.0
  %v10406 = vmax.f32 %v10342, 0.0
  %v10407 = vmax.f32 %v10343, 0.0
  %10408 = vst [vmem:[%s8] sm:$0xff] %v10344
  %10409 = vst [vmem:[%s8 + $0x8] sm:$0xff] %v10345
  %10410 = vst [vmem:[%s8 + $0x10] sm:$0xff] %v10346
  %10411 = vst [vmem:[%s8 + $0x18] sm:$0xff] %v10347
  %10412 = vst [vmem:[%s8 + $0x20] sm:$0xff] %v10348
  %10413 = vst [vmem:[%s8 + $0x28] sm:$0xff] %v10349
  %10414 = vst [vmem:[%s8 + $0x30] sm:$0xff] %v10350
  %10415 = vst [vmem:[%s8 + $0x38] sm:$0xff] %v10351
  %10416 = vst [vmem:[%s8 + $0x40] sm:$0xff] %v10352
  %10417 = vst [vmem:[%s8 + $0x48] sm:$0xff] %v10353
  %10418 = vst [vmem:[%s8 + $0x50] sm:$0xff] %v10354
  %10419 = vst [vmem:[%s8 + $0x58] sm:$0xff] %v10355
  %10420 = vst [vmem:[%s8 + $0x60] sm:$0xff] %v10356
  %10421 = vst [vmem:[%s8 + $0x68] sm:$0xff] %v10357
  %10422 = vst [vmem:[%s8 + $0x70] sm:$0xff] %v10358
  %10423 = vst [vmem:[%s8 + $0x78] sm:$0xff] %v10359
  %10424 = vst [vmem:[%s8 + $0x80] sm:$0xff] %v10360
  %10425 = vst [vmem:[%s8 + $0x88] sm:$0xff] %v10361
  %10426 = vst [vmem:[%s8 + $0x90] sm:$0xff] %v10362
  %10427 = vst [vmem:[%s8 + $0x98] sm:$0xff] %v10363
  %10428 = vst [vmem:[%s8 + $0xa0] sm:$0xff] %v10364
  %10429 = vst [vmem:[%s8 + $0xa8] sm:$0xff] %v10365
  %10430 = vst [vmem:[%s8 + $0xb0] sm:$0xff] %v10366
  %10431 = vst [vmem:[%s8 + $0xb8] sm:$0xff] %v10367
  %10432 = vst [vmem:[%s8 + $0xc0] sm:$0xff] %v10368
  %10433 = vst [vmem:[%s8 + $0xc8] sm:$0xff] %v10369
  %10434 = vst [vmem:[%s8 + $0xd0] sm:$0xff] %v10370
  %10435 = vst [vmem:[%s8 + $0xd8] sm:$0xff] %v10371
  %10436 = vst [vmem:[%s8 + $0xe0] sm:$0xff] %v10372
  %10437 = vst [vmem:[%s8 + $0xe8] sm:$0xff] %v10373
  %10438 = vst [vmem:[%s8 + $0xf0] sm:$0xff] %v10374
  %10439 = vst [vmem:[%s8 + $0xf8] sm:$0xff] %v10375
  %10440 = vst [vmem:[%s8 + $0x100] sm:$0xff] %v10376
  %10441 = vst [vmem:[%s8 + $0x108] sm:$0xff] %v10377
  %10442 = vst [vmem:[%s8 + $0x110] sm:$0xff] %v10378
  %10443 = vst [vmem:[%s8 + $0x118] sm:$0xff] %v10379
  %10444 = vst [vmem:[%s8 + $0x120] sm:$0xff] %v10380
  %10445 = vst [vmem:[%s8 + $0x128] sm:$0xff] %v10381
  %10446 = vst [vmem:[%s8 + $0x130] sm:$0xff] %v10382
  %10447 = vst [vmem:[%s8 + $0x138] sm:$0xff] %v10383
  %10448 = vst [vmem:[%s8 + $0x140] sm:$0xff] %v10384
  %10449 = vst [vmem:[%s8 + $0x148] sm:$0xff] %v10385
  %10450 = vst [vmem:[%s8 + $0x150] sm:$0xff] %v10386
  %10451 = vst [vmem:[%s8 + $0x158] sm:$0xff] %v10387
  %10452 = vst [vmem:[%s8 + $0x160] sm:$0xff] %v10388
  %10453 = vst [vmem:[%s8 + $0x168] sm:$0xff] %v10389
  %10454 = vst [vmem:[%s8 + $0x170] sm:$0xff] %v10390
  %10455 = vst [vmem:[%s8 + $0x178] sm:$0xff] %v10391
  %10456 = vst [vmem:[%s8 + $0x180] sm:$0xff] %v10392
  %10457 = vst [vmem:[%s8 + $0x188] sm:$0xff] %v10393
  %10458 = vst [vmem:[%s8 + $0x190] sm:$0xff] %v10394
  %10459 = vst [vmem:[%s8 + $0x198] sm:$0xff] %v10395
  %10460 = vst [vmem:[%s8 + $0x1a0] sm:$0xff] %v10396
  %10461 = vst [vmem:[%s8 + $0x1a8] sm:$0xff] %v10397
  %10462 = vst [vmem:[%s8 + $0x1b0] sm:$0xff] %v10398
  %10463 = vst [vmem:[%s8 + $0x1b8] sm:$0xff] %v10399
  %10464 = vst [vmem:[%s8 + $0x1c0] sm:$0xff] %v10400
  %10465 = vst [vmem:[%s8 + $0x1c8] sm:$0xff] %v10401
  %10466 = vst [vmem:[%s8 + $0x1d0] sm:$0xff] %v10402
  %10467 = vst [vmem:[%s8 + $0x1d8] sm:$0xff] %v10403
  %10468 = vst [vmem:[%s8 + $0x1e0] sm:$0xff] %v10404
  %10469 = vst [vmem:[%s8 + $0x1e8] sm:$0xff] %v10405
  %10470 = vst [vmem:[%s8 + $0x1f0] sm:$0xff] %v10406
  %10471 = vst [vmem:[%s8 + $0x1f8] sm:$0xff] %v10407
  // Predicated region
  $region34: #{basic_block.1} parent=0 // pred_check
    _
  $region35: #{basic_block.1} parent=0 // pred_check_branch
    %10473 = sbr.rel (0) target = $region37
  $region36: #{basic_block.1} parent=0 // pred_region
    _
  $region37: #{basic_block.1} parent=0 // pred_fallthru
    _
  // Predicated region
  $region38: #{basic_block.1} parent=0 // pred_check
    _
  $region39: #{basic_block.1} parent=0 // pred_check_branch
    %10475 = sbr.rel (0) target = $region41
  $region40: #{basic_block.1} parent=0 // pred_region
    _
  $region41: #{basic_block.1} parent=0 // pred_fallthru
    _

</llo_original>
